<compile_context>
chip_gen: v7x
topology: tpu7x:2x2x1
jax: 0.10.0
libtpu: 0.0.40
codegen_flags: <defaults>
</compile_context>

<pallas_src>
import functools

import jax
import jax.numpy as jnp
from jax.experimental import pallas as pl
from jax.experimental.pallas import tpu as pltpu


def _round_up(x, m):
    return ((x + m - 1) // m) * m


def _pick_tile(dim, cap, align=128):
    """Largest multiple of `align` that divides `dim` and is <= cap."""
    if dim <= cap:
        return dim
    t = (cap // align) * align
    while t > align:
        if dim % t == 0:
            return t
        t -= align
    return align


# --------------------------------------------------------------------------
# Pallas kernels: tiled matmul with fused epilogues
# --------------------------------------------------------------------------
def _mm_kernel(x_ref, w_ref, b_ref, o_ref, acc_ref, *, epilogue):
    """o = x @ w + b, optionally followed by tanh."""
    @pl.when(pl.program_id(2) == 0)
    def _():
        acc_ref[...] = jnp.zeros_like(acc_ref)

    acc_ref[...] += jnp.dot(x_ref[...], w_ref[...],
                            preferred_element_type=jnp.float32)

    @pl.when(pl.program_id(2) == pl.num_programs(2) - 1)
    def _():
        y = acc_ref[...] + b_ref[...]
        if epilogue == "tanh":
            y = jnp.tanh(y)
        o_ref[...] = y.astype(o_ref.dtype)


def _mm_bn_relu_kernel(x_ref, w_ref, b_ref, g_ref, beta_ref, o_ref, acc_ref,
                       *, m_valid, groups, eps=1e-5):
    """o = ReLU(BatchNorm(x @ w + b)) with training-mode batch statistics.

    Requires all rows resident in one M tile (grid i == 1).  For groups > 1
    (deconv phase layout: column = phase*C + channel) the whole N extent is in
    one tile and per-channel stats are pooled across the phase column groups
    via a small constant pooling matmul.  Zero-padded batch rows (row index
    >= m_valid) are masked out of the statistics.
    """
    @pl.when(pl.program_id(2) == 0)
    def _():
        acc_ref[...] = jnp.zeros_like(acc_ref)

    acc_ref[...] += jnp.dot(x_ref[...], w_ref[...],
                            preferred_element_type=jnp.float32)

    @pl.when(pl.program_id(2) == pl.num_programs(2) - 1)
    def _():
        y = acc_ref[...] + b_ref[...]                    # (tm, tn) f32
        tm, tn = y.shape
        inv_n = 1.0 / float(m_valid * groups)

        if m_valid < tm:
            row_ok = jax.lax.broadcasted_iota(jnp.int32, (tm, tn), 0) < m_valid
        else:
            row_ok = None

        if groups > 1:
            cpg = tn // groups                           # channels per group
            li = jax.lax.broadcasted_iota(jnp.int32, (tn, tn), 0)
            lj = jax.lax.broadcasted_iota(jnp.int32, (tn, tn), 1)
            pool = (jax.lax.rem(li, cpg) ==
                    jax.lax.rem(lj, cpg)).astype(jnp.float32)

        def channel_mean(v):
            if row_ok is not None:
                v = jnp.where(row_ok, v, 0.0)
            if groups > 1:
                # pool + broadcast per-channel sums across phase groups
                v = jnp.dot(v, pool, preferred_element_type=jnp.float32)
            return jnp.sum(v, axis=0, keepdims=True) * inv_n

        mean = channel_mean(y)
        d = y - mean
        var = channel_mean(d * d)                        # biased variance
        yn = d * jax.lax.rsqrt(var + eps) * g_ref[...] + beta_ref[...]
        o_ref[...] = jnp.maximum(yn, 0.0).astype(o_ref.dtype)


def fused_matmul(x, w_pad, b_pad, *, gamma_pad=None, beta_pad=None,
                 epilogue="none", groups=1, n_real=None,
                 n_cap=1024, k_cap=2048):
    """One pallas_call: y = x @ w + b with a fused (tanh | BN+ReLU) epilogue.

    `w_pad` is pre-padded (Kp, Np) bf16; `b_pad`/`gamma_pad`/`beta_pad` are
    pre-padded (1, Np) f32 — all prepared once at init.  Only the small
    activation `x` is cast/padded per call.
    """
    M, K = x.shape
    Kp, Np = w_pad.shape
    assert Kp >= K and Kp % 128 == 0 and Np % 128 == 0
    n_real = Np if n_real is None else n_real

    Mp = _round_up(M, 8)
    xb = x.astype(jnp.bfloat16)
    if (Mp, Kp) != (M, K):
        xb = jnp.zeros((Mp, Kp), jnp.bfloat16).at[:M, :K].set(xb)

    tm = Mp                              # whole batch resident in one M tile
    if epilogue == "bn_relu" and groups > 1:
        tn = Np                          # BN pools across phase column groups
    else:
        tn = _pick_tile(Np, n_cap)
        if tn == Np and Np >= 256 and Np % 256 == 0:
            tn = Np // 2                 # keep >=2 parallel N steps (v7x: 2 TCs)
    tk = _pick_tile(Kp, k_cap)
    grid = (Mp // tm, Np // tn, Kp // tk)

    vec_spec = pl.BlockSpec((1, tn), lambda i, j, k: (0, j))
    in_specs = [
        pl.BlockSpec((tm, tk), lambda i, j, k: (i, k)),
        pl.BlockSpec((tk, tn), lambda i, j, k: (k, j)),
        vec_spec,
    ]
    args = [xb, w_pad, b_pad]
    if epilogue == "bn_relu":
        assert grid[0] == 1, "fused BN needs all rows in one M tile"
        in_specs += [vec_spec, vec_spec]
        args += [gamma_pad, beta_pad]
        kern = functools.partial(_mm_bn_relu_kernel, m_valid=M, groups=groups)
    else:
        kern = functools.partial(_mm_kernel, epilogue=epilogue)

    out = pl.pallas_call(
        kern,
        out_shape=jax.ShapeDtypeStruct((Mp, Np), jnp.float32),
        grid_spec=pltpu.PrefetchScalarGridSpec(
            num_scalar_prefetch=0,
            grid=grid,
            in_specs=in_specs,
            out_specs=pl.BlockSpec((tm, tn), lambda i, j, k: (i, j)),
            scratch_shapes=[pltpu.VMEM((tm, tn), jnp.float32)],
        ),
        compiler_params=pltpu.CompilerParams(
            dimension_semantics=("parallel", "parallel", "arbitrary")),
    )(*args)
    return out[:M, :n_real]


# --------------------------------------------------------------------------
# ConvTranspose2d(4, 4, stride=2, padding=1) via sub-pixel phase folding.
# Output pixel (2p+r, 2q+s) only depends on a 2x2 input window; the four
# phases are folded into ONE matmul over 3x3 input patches with a
# (9*Cin, 4*Cout) weight matrix (phase-major output columns).
# --------------------------------------------------------------------------
_PHASE_TAPS = {0: ((1, 1), (0, 3)),    # r (or s) = 0 -> ((patch_offset, kernel_idx), ...)
               1: ((1, 2), (2, 0))}    # r (or s) = 1


def make_deconv_wmat(w_t):
    """PyTorch ConvTranspose2d weight (Cin, Cout, 4, 4) -> (9*Cin, 4*Cout)."""
    cin, cout = w_t.shape[0], w_t.shape[1]
    w_t = w_t.astype(jnp.float32)
    wmat = jnp.zeros((9, cin, 4, cout), jnp.float32)
    for r in (0, 1):
        for s in (0, 1):
            ph = r * 2 + s
            for (di, kh) in _PHASE_TAPS[r]:
                for (dj, kw) in _PHASE_TAPS[s]:
                    wmat = wmat.at[di * 3 + dj, :, ph, :].set(w_t[:, :, kh, kw])
    return wmat.reshape(9 * cin, 4 * cout)


def deconv_im2col(x_cl):
    """(B, H, W, C) channels-last -> (B*H*W, 9*C) rows of 3x3 patches."""
    B, H, W, C = x_cl.shape
    xp = jnp.pad(x_cl, ((0, 0), (1, 1), (1, 1), (0, 0)))
    patches = [xp[:, i:i + H, j:j + W, :] for i in range(3) for j in range(3)]
    return jnp.concatenate(patches, axis=-1).reshape(B * H * W, 9 * C)


def pixel_shuffle_phases(y, B, H, W, cout):
    """(B*H*W, 4*cout) with phase-major columns -> (B, 2H, 2W, cout)."""
    y = y.reshape(B, H, W, 2, 2, cout)
    y = y.transpose(0, 1, 3, 2, 4, 5)
    return y.reshape(B, 2 * H, 2 * W, cout)


# --------------------------------------------------------------------------
# Parameter init (DCGAN-style, replacing o_utils.initialize_weights) and the
# one-time weight preprocessing for the Pallas forward path.
# --------------------------------------------------------------------------
def init_generator_params(key, input_dim, output_dim, input_size,
                          len_discrete_code, len_continuous_code):
    s4 = input_size // 4
    fc2_out = 128 * s4 * s4
    in_feat = input_dim + len_discrete_code + len_continuous_code
    ks = jax.random.split(key, 8)

    def normal(k, shape, std=0.02, mean=0.0):
        return mean + std * jax.random.normal(k, shape, jnp.float32)

    return dict(
        fc1_w=normal(ks[0], (1024, in_feat)),          # PyTorch Linear: (out, in)
        fc1_b=jnp.zeros((1024,), jnp.float32),
        bn1_g=normal(ks[1], (1024,), mean=1.0),
        bn1_b=jnp.zeros((1024,), jnp.float32),
        fc2_w=normal(ks[2], (fc2_out, 1024)),
        fc2_b=jnp.zeros((fc2_out,), jnp.float32),
        bn2_g=normal(ks[3], (fc2_out,), mean=1.0),
        bn2_b=jnp.zeros((fc2_out,), jnp.float32),
        dc1_w=normal(ks[4], (128, 64, 4, 4)),          # ConvTranspose2d: (Cin, Cout, kH, kW)
        dc1_b=jnp.zeros((64,), jnp.float32),
        bn3_g=normal(ks[5], (64,), mean=1.0),
        bn3_b=jnp.zeros((64,), jnp.float32),
        dc2_w=normal(ks[6], (64, output_dim, 4, 4)),
        dc2_b=jnp.zeros((output_dim,), jnp.float32),
    )


def prepare_params(raw, input_size, output_dim):
    """One-time weight prep: transpose / phase-fold / pad / cast to bf16 so the
    forward path never touches the weights with XLA glue again."""
    def pad_weight(w):                          # (K, N) -> (Kp, Np) bf16
        K, N = w.shape
        Kp, Np = _round_up(K, 128), _round_up(N, 128)
        out = jnp.zeros((Kp, Np), jnp.bfloat16)
        return out.at[:K, :N].set(w.astype(jnp.bfloat16))

    def pad_vec(v):                             # (N,) -> (1, Np) f32
        N = v.shape[0]
        out = jnp.zeros((1, _round_up(N, 128)), jnp.float32)
        return out.at[:, :N].set(v.astype(jnp.float32)[None, :])

    def tile4(v):                               # per-channel vec -> phase-major x4
        return jnp.tile(v.astype(jnp.float32), 4)

    p = {}
    p["fc1_w"] = pad_weight(raw["fc1_w"].T)
    p["fc1_b"] = pad_vec(raw["fc1_b"])
    p["bn1_g"] = pad_vec(raw["bn1_g"])
    p["bn1_b"] = pad_vec(raw["bn1_b"])

    p["fc2_w"] = pad_weight(raw["fc2_w"].T)
    p["fc2_b"] = pad_vec(raw["fc2_b"])
    p["bn2_g"] = pad_vec(raw["bn2_g"])
    p["bn2_b"] = pad_vec(raw["bn2_b"])

    p["dc1_w"] = pad_weight(make_deconv_wmat(raw["dc1_w"]))   # (1152, 256)
    p["dc1_b"] = pad_vec(tile4(raw["dc1_b"]))
    p["bn3_g"] = pad_vec(tile4(raw["bn3_g"]))
    p["bn3_b"] = pad_vec(tile4(raw["bn3_b"]))

    p["dc2_w"] = pad_weight(make_deconv_wmat(raw["dc2_w"]))   # (640, 128) padded
    p["dc2_b"] = pad_vec(tile4(raw["dc2_b"]))
    return p


# --------------------------------------------------------------------------
# Forward pass mirroring generator.forward(input, cont_code, dist_code)
#   4 pallas_calls total: fc1+BN+ReLU, fc2+BN+ReLU, deconv1+BN+ReLU, deconv2+Tanh
# --------------------------------------------------------------------------
def generator_forward(prep, z, cont_code, dist_code, input_size, output_dim):
    B = z.shape[0]
    s4 = input_size // 4

    x = jnp.concatenate([z, cont_code, dist_code], axis=1)       # (B, in_feat)

    # fc: Linear -> BN1d -> ReLU (fused) x2
    x = fused_matmul(x, prep["fc1_w"], prep["fc1_b"],
                     gamma_pad=prep["bn1_g"], beta_pad=prep["bn1_b"],
                     epilogue="bn_relu", groups=1, n_real=1024)
    x = fused_matmul(x, prep["fc2_w"], prep["fc2_b"],
                     gamma_pad=prep["bn2_g"], beta_pad=prep["bn2_b"],
                     epilogue="bn_relu", groups=1, n_real=128 * s4 * s4)

    # view(-1, 128, s4, s4) then channels-last for the deconv matmuls
    x = x.reshape(B, 128, s4, s4).transpose(0, 2, 3, 1)          # (B, s4, s4, 128)

    # deconv1: ConvT(128->64, 4, 2, 1) -> BN2d -> ReLU, one fused pallas_call
    y = fused_matmul(deconv_im2col(x), prep["dc1_w"], prep["dc1_b"],
                     gamma_pad=prep["bn3_g"], beta_pad=prep["bn3_b"],
                     epilogue="bn_relu", groups=4, n_real=4 * 64)
    x = pixel_shuffle_phases(y, B, s4, s4, 64)                   # (B, 2*s4, 2*s4, 64)

    # deconv2: ConvT(64->output_dim, 4, 2, 1) -> Tanh, one fused pallas_call
    y = fused_matmul(deconv_im2col(x), prep["dc2_w"], prep["dc2_b"],
                     epilogue="tanh", n_real=4 * output_dim)
    x = pixel_shuffle_phases(y, B, 2 * s4, 2 * s4, output_dim)   # (B, S, S, out)

    return x.transpose(0, 3, 1, 2)    # NCHW: (B, output_dim, input_size, input_size)


if __name__ == "__main__":
    # small shapes consistent with the module (input_size must be divisible by 4)
    INPUT_DIM, OUTPUT_DIM, INPUT_SIZE = 16, 1, 16
    LEN_DISC, LEN_CONT = 10, 2
    B = 2

    key = jax.random.PRNGKey(0)
    kp, kz, kc, kd = jax.random.split(key, 4)
    raw = init_generator_params(kp, INPUT_DIM, OUTPUT_DIM, INPUT_SIZE,
                                LEN_DISC, LEN_CONT)
    params = prepare_params(raw, INPUT_SIZE, OUTPUT_DIM)

    z = jax.random.normal(kz, (B, INPUT_DIM), jnp.float32)
    cont_code = jax.random.uniform(kc, (B, LEN_CONT), jnp.float32, -1.0, 1.0)
    dist_code = jax.nn.one_hot(jax.random.randint(kd, (B,), 0, LEN_DISC),
                               LEN_DISC, dtype=jnp.float32)

    fwd = jax.jit(functools.partial(generator_forward,
                                    input_size=INPUT_SIZE,
                                    output_dim=OUTPUT_DIM))
    out = jax.block_until_ready(fwd(params, z, cont_code, dist_code))

    assert out.shape == (B, OUTPUT_DIM, INPUT_SIZE, INPUT_SIZE), out.shape
    assert bool(jnp.all(jnp.isfinite(out)))
    assert bool(jnp.all(jnp.abs(out) <= 1.0))        # tanh output range
    print("KERNEL_OK")
</pallas_src>

<mosaic_0001>
module attributes {stable_mosaic.version = 11 : i64} {
  func.func @_mm_bn_relu_kernel(%arg0: i32, %arg1: i32, %arg2: i32, %arg3: memref<8x128xbf16, #tpu.memory_space<vmem>>, %arg4: memref<128x512xbf16, #tpu.memory_space<vmem>>, %arg5: memref<1x512xf32, #tpu.memory_space<vmem>>, %arg6: memref<1x512xf32, #tpu.memory_space<vmem>>, %arg7: memref<1x512xf32, #tpu.memory_space<vmem>>, %arg8: memref<8x512xf32, #tpu.memory_space<vmem>>, %arg9: memref<8x512xf32, #tpu.memory_space<vmem>>) attributes {dimension_semantics = [#tpu.dimension_semantics<parallel>, #tpu.dimension_semantics<parallel>, #tpu.dimension_semantics<arbitrary>], iteration_bounds = array<i64: 1, 2, 1>, scalar_prefetch = 0 : i64, scratch_operands = 1 : i64, tpu.core_type = #tpu.core_type<tc>, window_params = [{transform_indices = @transform_0, window_bounds = array<i64: 8, 128>}, {transform_indices = @transform_1, window_bounds = array<i64: 128, 512>}, {transform_indices = @transform_2, window_bounds = array<i64: 1, 512>}, {transform_indices = @transform_3, window_bounds = array<i64: 1, 512>}, {transform_indices = @transform_4, window_bounds = array<i64: 1, 512>}, {transform_indices = @transform_5, window_bounds = array<i64: 8, 512>}]} {
    %c0_i32 = arith.constant 0 : i32
    %0 = arith.cmpi eq, %arg2, %c0_i32 : i32
    %1 = arith.extui %0 : i1 to i32
    %c0_i32_0 = arith.constant 0 : i32
    %2 = arith.cmpi ne, %1, %c0_i32_0 : i32
    scf.if %2 {
      %cst_10 = arith.constant 0.000000e+00 : f32
      %12 = vector.broadcast %cst_10 : f32 to vector<8x512xf32>
      %c0_11 = arith.constant 0 : index
      %c0_12 = arith.constant 0 : index
      %13 = vector.load %arg9[%c0_11, %c0_12] : memref<8x512xf32, #tpu.memory_space<vmem>>, vector<8x512xf32>
      tpu.vector_store %arg9[%c0_11, %c0_12], %12 {strides = array<i32>} : memref<8x512xf32, #tpu.memory_space<vmem>>, vector<8x512xf32>,
    } else {
    }
    %c0 = arith.constant 0 : index
    %c0_1 = arith.constant 0 : index
    %3 = vector.load %arg9[%c0, %c0_1] : memref<8x512xf32, #tpu.memory_space<vmem>>, vector<8x512xf32>
    %c0_2 = arith.constant 0 : index
    %c0_3 = arith.constant 0 : index
    %4 = vector.load %arg3[%c0_2, %c0_3] : memref<8x128xbf16, #tpu.memory_space<vmem>>, vector<8x128xbf16>
    %c0_4 = arith.constant 0 : index
    %c0_5 = arith.constant 0 : index
    %5 = vector.load %arg4[%c0_4, %c0_5] : memref<128x512xbf16, #tpu.memory_space<vmem>>, vector<128x512xbf16>
    %cst = arith.constant dense<0.000000e+00> : vector<8x512xf32>
    %6 = tpu.matmul %4, %5, %cst {dimension_numbers = #tpu.dot_dimension_numbers<[1], [0], [0], [1], [0, 0, 1, 1], [], []>} : vector<8x128xbf16>, vector<128x512xbf16>, vector<8x512xf32> -> vector<8x512xf32>
    %7 = arith.addf %3, %6 : vector<8x512xf32>
    %c0_6 = arith.constant 0 : index
    %c0_7 = arith.constant 0 : index
    %8 = vector.load %arg9[%c0_6, %c0_7] : memref<8x512xf32, #tpu.memory_space<vmem>>, vector<8x512xf32>
    tpu.vector_store %arg9[%c0_6, %c0_7], %7 {strides = array<i32>} : memref<8x512xf32, #tpu.memory_space<vmem>>, vector<8x512xf32>,
    %c0_i32_8 = arith.constant 0 : i32
    %9 = arith.cmpi eq, %arg2, %c0_i32_8 : i32
    %10 = arith.extui %9 : i1 to i32
    %c0_i32_9 = arith.constant 0 : i32
    %11 = arith.cmpi ne, %10, %c0_i32_9 : i32
    scf.if %11 {
      %c0_10 = arith.constant 0 : index
      %c0_11 = arith.constant 0 : index
      %12 = vector.load %arg9[%c0_10, %c0_11] : memref<8x512xf32, #tpu.memory_space<vmem>>, vector<8x512xf32>
      %c0_12 = arith.constant 0 : index
      %c0_13 = arith.constant 0 : index
      %13 = vector.load %arg5[%c0_12, %c0_13] : memref<1x512xf32, #tpu.memory_space<vmem>>, vector<1x512xf32>
      %14 = vector.broadcast %13 : vector<1x512xf32> to vector<8x512xf32>
      %15 = arith.addf %12, %14 : vector<8x512xf32>
      %16 = tpu.iota {dimensions = array<i32: 0>} : vector<8x512xi32>
      %c2_i32 = arith.constant 2 : i32
      %17 = vector.broadcast %c2_i32 : i32 to vector<8x512xi32>
      %18 = arith.cmpi slt, %16, %17 : vector<8x512xi32>
      %cst_14 = arith.constant 0.000000e+00 : f32
      %19 = vector.broadcast %cst_14 : f32 to vector<8x512xf32>
      %20 = arith.select %18, %15, %19 : vector<8x512xi1>, vector<8x512xf32>
      %cst_15 = arith.constant dense<0.000000e+00> : vector<512xf32>
      %21 = vector.multi_reduction <add>, %20, %cst_15 [0] : vector<8x512xf32> to vector<512xf32>
      %22 = vector.shape_cast %21 : vector<512xf32> to vector<1x512xf32>
      %cst_16 = arith.constant 5.000000e-01 : f32
      %23 = vector.broadcast %cst_16 : f32 to vector<1x512xf32>
      %24 = arith.mulf %22, %23 : vector<1x512xf32>
      %25 = vector.broadcast %24 : vector<1x512xf32> to vector<8x512xf32>
      %26 = arith.subf %15, %25 : vector<8x512xf32>
      %27 = arith.mulf %26, %26 : vector<8x512xf32>
      %cst_17 = arith.constant 0.000000e+00 : f32
      %28 = vector.broadcast %cst_17 : f32 to vector<8x512xf32>
      %29 = arith.select %18, %27, %28 : vector<8x512xi1>, vector<8x512xf32>
      %cst_18 = arith.constant dense<0.000000e+00> : vector<512xf32>
      %30 = vector.multi_reduction <add>, %29, %cst_18 [0] : vector<8x512xf32> to vector<512xf32>
      %31 = vector.shape_cast %30 : vector<512xf32> to vector<1x512xf32>
      %cst_19 = arith.constant 5.000000e-01 : f32
      %32 = vector.broadcast %cst_19 : f32 to vector<1x512xf32>
      %33 = arith.mulf %31, %32 : vector<1x512xf32>
      %cst_20 = arith.constant 9.99999974E-6 : f32
      %34 = vector.broadcast %cst_20 : f32 to vector<1x512xf32>
      %35 = arith.addf %33, %34 : vector<1x512xf32>
      %36 = math.rsqrt %35 : vector<1x512xf32>
      %37 = vector.broadcast %36 : vector<1x512xf32> to vector<8x512xf32>
      %38 = arith.mulf %26, %37 : vector<8x512xf32>
      %c0_21 = arith.constant 0 : index
      %c0_22 = arith.constant 0 : index
      %39 = vector.load %arg6[%c0_21, %c0_22] : memref<1x512xf32, #tpu.memory_space<vmem>>, vector<1x512xf32>
      %40 = vector.broadcast %39 : vector<1x512xf32> to vector<8x512xf32>
      %41 = arith.mulf %38, %40 : vector<8x512xf32>
      %c0_23 = arith.constant 0 : index
      %c0_24 = arith.constant 0 : index
      %42 = vector.load %arg7[%c0_23, %c0_24] : memref<1x512xf32, #tpu.memory_space<vmem>>, vector<1x512xf32>
      %43 = vector.broadcast %42 : vector<1x512xf32> to vector<8x512xf32>
      %44 = arith.addf %41, %43 : vector<8x512xf32>
      %cst_25 = arith.constant 0.000000e+00 : f32
      %45 = vector.broadcast %cst_25 : f32 to vector<8x512xf32>
      %46 = arith.maximumf %44, %45 : vector<8x512xf32>
      %c0_26 = arith.constant 0 : index
      %c0_27 = arith.constant 0 : index
      %47 = vector.load %arg8[%c0_26, %c0_27] : memref<8x512xf32, #tpu.memory_space<vmem>>, vector<8x512xf32>
      tpu.vector_store %arg8[%c0_26, %c0_27], %46 {strides = array<i32>} : memref<8x512xf32, #tpu.memory_space<vmem>>, vector<8x512xf32>,
    } else {
    }
    return
  }
  func.func @transform_0(%arg0: i32, %arg1: i32, %arg2: i32) -> (i32, i32) {
    %c0_i32 = arith.constant 0 : i32
    return %arg0, %arg2 : i32, i32
  }
  func.func @transform_1(%arg0: i32, %arg1: i32, %arg2: i32) -> (i32, i32) {
    %c0_i32 = arith.constant 0 : i32
    return %arg2, %arg1 : i32, i32
  }
  func.func @transform_2(%arg0: i32, %arg1: i32, %arg2: i32) -> (i32, i32) {
    %c0_i32 = arith.constant 0 : i32
    %c0_i32_0 = arith.constant 0 : i32
    return %c0_i32, %arg1 : i32, i32
  }
  func.func @transform_3(%arg0: i32, %arg1: i32, %arg2: i32) -> (i32, i32) {
    %c0_i32 = arith.constant 0 : i32
    %c0_i32_0 = arith.constant 0 : i32
    return %c0_i32, %arg1 : i32, i32
  }
  func.func @transform_4(%arg0: i32, %arg1: i32, %arg2: i32) -> (i32, i32) {
    %c0_i32 = arith.constant 0 : i32
    %c0_i32_0 = arith.constant 0 : i32
    return %c0_i32, %arg1 : i32, i32
  }
  func.func @transform_5(%arg0: i32, %arg1: i32, %arg2: i32) -> (i32, i32) {
    %c0_i32 = arith.constant 0 : i32
    return %arg0, %arg1 : i32, i32
  }
}

module attributes {stable_mosaic.version = 11 : i64} {
  func.func @_mm_bn_relu_kernel(%arg0: i32, %arg1: i32, %arg2: i32, %arg3: memref<8x1024xbf16, #tpu.memory_space<vmem>>, %arg4: memref<1024x1024xbf16, #tpu.memory_space<vmem>>, %arg5: memref<1x1024xf32, #tpu.memory_space<vmem>>, %arg6: memref<1x1024xf32, #tpu.memory_space<vmem>>, %arg7: memref<1x1024xf32, #tpu.memory_space<vmem>>, %arg8: memref<8x1024xf32, #tpu.memory_space<vmem>>, %arg9: memref<8x1024xf32, #tpu.memory_space<vmem>>) attributes {dimension_semantics = [#tpu.dimension_semantics<parallel>, #tpu.dimension_semantics<parallel>, #tpu.dimension_semantics<arbitrary>], iteration_bounds = array<i64: 1, 2, 1>, scalar_prefetch = 0 : i64, scratch_operands = 1 : i64, tpu.core_type = #tpu.core_type<tc>, window_params = [{transform_indices = @transform_0, window_bounds = array<i64: 8, 1024>}, {transform_indices = @transform_1, window_bounds = array<i64: 1024, 1024>}, {transform_indices = @transform_2, window_bounds = array<i64: 1, 1024>}, {transform_indices = @transform_3, window_bounds = array<i64: 1, 1024>}, {transform_indices = @transform_4, window_bounds = array<i64: 1, 1024>}, {transform_indices = @transform_5, window_bounds = array<i64: 8, 1024>}]} {
    %c0_i32 = arith.constant 0 : i32
    %0 = arith.cmpi eq, %arg2, %c0_i32 : i32
    %1 = arith.extui %0 : i1 to i32
    %c0_i32_0 = arith.constant 0 : i32
    %2 = arith.cmpi ne, %1, %c0_i32_0 : i32
    scf.if %2 {
      %cst_10 = arith.constant 0.000000e+00 : f32
      %12 = vector.broadcast %cst_10 : f32 to vector<8x1024xf32>
      %c0_11 = arith.constant 0 : index
      %c0_12 = arith.constant 0 : index
      %13 = vector.load %arg9[%c0_11, %c0_12] : memref<8x1024xf32, #tpu.memory_space<vmem>>, vector<8x1024xf32>
      tpu.vector_store %arg9[%c0_11, %c0_12], %12 {strides = array<i32>} : memref<8x1024xf32, #tpu.memory_space<vmem>>, vector<8x1024xf32>,
    } else {
    }
    %c0 = arith.constant 0 : index
    %c0_1 = arith.constant 0 : index
    %3 = vector.load %arg9[%c0, %c0_1] : memref<8x1024xf32, #tpu.memory_space<vmem>>, vector<8x1024xf32>
    %c0_2 = arith.constant 0 : index
    %c0_3 = arith.constant 0 : index
    %4 = vector.load %arg3[%c0_2, %c0_3] : memref<8x1024xbf16, #tpu.memory_space<vmem>>, vector<8x1024xbf16>
    %c0_4 = arith.constant 0 : index
    %c0_5 = arith.constant 0 : index
    %5 = vector.load %arg4[%c0_4, %c0_5] : memref<1024x1024xbf16, #tpu.memory_space<vmem>>, vector<1024x1024xbf16>
    %cst = arith.constant dense<0.000000e+00> : vector<8x1024xf32>
    %6 = tpu.matmul %4, %5, %cst {dimension_numbers = #tpu.dot_dimension_numbers<[1], [0], [0], [1], [0, 0, 1, 1], [], []>} : vector<8x1024xbf16>, vector<1024x1024xbf16>, vector<8x1024xf32> -> vector<8x1024xf32>
    %7 = arith.addf %3, %6 : vector<8x1024xf32>
    %c0_6 = arith.constant 0 : index
    %c0_7 = arith.constant 0 : index
    %8 = vector.load %arg9[%c0_6, %c0_7] : memref<8x1024xf32, #tpu.memory_space<vmem>>, vector<8x1024xf32>
    tpu.vector_store %arg9[%c0_6, %c0_7], %7 {strides = array<i32>} : memref<8x1024xf32, #tpu.memory_space<vmem>>, vector<8x1024xf32>,
    %c0_i32_8 = arith.constant 0 : i32
    %9 = arith.cmpi eq, %arg2, %c0_i32_8 : i32
    %10 = arith.extui %9 : i1 to i32
    %c0_i32_9 = arith.constant 0 : i32
    %11 = arith.cmpi ne, %10, %c0_i32_9 : i32
    scf.if %11 {
      %c0_10 = arith.constant 0 : index
      %c0_11 = arith.constant 0 : index
      %12 = vector.load %arg9[%c0_10, %c0_11] : memref<8x1024xf32, #tpu.memory_space<vmem>>, vector<8x1024xf32>
      %c0_12 = arith.constant 0 : index
      %c0_13 = arith.constant 0 : index
      %13 = vector.load %arg5[%c0_12, %c0_13] : memref<1x1024xf32, #tpu.memory_space<vmem>>, vector<1x1024xf32>
      %14 = vector.broadcast %13 : vector<1x1024xf32> to vector<8x1024xf32>
      %15 = arith.addf %12, %14 : vector<8x1024xf32>
      %16 = tpu.iota {dimensions = array<i32: 0>} : vector<8x1024xi32>
      %c2_i32 = arith.constant 2 : i32
      %17 = vector.broadcast %c2_i32 : i32 to vector<8x1024xi32>
      %18 = arith.cmpi slt, %16, %17 : vector<8x1024xi32>
      %cst_14 = arith.constant 0.000000e+00 : f32
      %19 = vector.broadcast %cst_14 : f32 to vector<8x1024xf32>
      %20 = arith.select %18, %15, %19 : vector<8x1024xi1>, vector<8x1024xf32>
      %cst_15 = arith.constant dense<0.000000e+00> : vector<1024xf32>
      %21 = vector.multi_reduction <add>, %20, %cst_15 [0] : vector<8x1024xf32> to vector<1024xf32>
      %22 = vector.shape_cast %21 : vector<1024xf32> to vector<1x1024xf32>
      %cst_16 = arith.constant 5.000000e-01 : f32
      %23 = vector.broadcast %cst_16 : f32 to vector<1x1024xf32>
      %24 = arith.mulf %22, %23 : vector<1x1024xf32>
      %25 = vector.broadcast %24 : vector<1x1024xf32> to vector<8x1024xf32>
      %26 = arith.subf %15, %25 : vector<8x1024xf32>
      %27 = arith.mulf %26, %26 : vector<8x1024xf32>
      %cst_17 = arith.constant 0.000000e+00 : f32
      %28 = vector.broadcast %cst_17 : f32 to vector<8x1024xf32>
      %29 = arith.select %18, %27, %28 : vector<8x1024xi1>, vector<8x1024xf32>
      %cst_18 = arith.constant dense<0.000000e+00> : vector<1024xf32>
      %30 = vector.multi_reduction <add>, %29, %cst_18 [0] : vector<8x1024xf32> to vector<1024xf32>
      %31 = vector.shape_cast %30 : vector<1024xf32> to vector<1x1024xf32>
      %cst_19 = arith.constant 5.000000e-01 : f32
      %32 = vector.broadcast %cst_19 : f32 to vector<1x1024xf32>
      %33 = arith.mulf %31, %32 : vector<1x1024xf32>
      %cst_20 = arith.constant 9.99999974E-6 : f32
      %34 = vector.broadcast %cst_20 : f32 to vector<1x1024xf32>
      %35 = arith.addf %33, %34 : vector<1x1024xf32>
      %36 = math.rsqrt %35 : vector<1x1024xf32>
      %37 = vector.broadcast %36 : vector<1x1024xf32> to vector<8x1024xf32>
      %38 = arith.mulf %26, %37 : vector<8x1024xf32>
      %c0_21 = arith.constant 0 : index
      %c0_22 = arith.constant 0 : index
      %39 = vector.load %arg6[%c0_21, %c0_22] : memref<1x1024xf32, #tpu.memory_space<vmem>>, vector<1x1024xf32>
      %40 = vector.broadcast %39 : vector<1x1024xf32> to vector<8x1024xf32>
      %41 = arith.mulf %38, %40 : vector<8x1024xf32>
      %c0_23 = arith.constant 0 : index
      %c0_24 = arith.constant 0 : index
      %42 = vector.load %arg7[%c0_23, %c0_24] : memref<1x1024xf32, #tpu.memory_space<vmem>>, vector<1x1024xf32>
      %43 = vector.broadcast %42 : vector<1x1024xf32> to vector<8x1024xf32>
      %44 = arith.addf %41, %43 : vector<8x1024xf32>
      %cst_25 = arith.constant 0.000000e+00 : f32
      %45 = vector.broadcast %cst_25 : f32 to vector<8x1024xf32>
      %46 = arith.maximumf %44, %45 : vector<8x1024xf32>
      %c0_26 = arith.constant 0 : index
      %c0_27 = arith.constant 0 : index
      %47 = vector.load %arg8[%c0_26, %c0_27] : memref<8x1024xf32, #tpu.memory_space<vmem>>, vector<8x1024xf32>
      tpu.vector_store %arg8[%c0_26, %c0_27], %46 {strides = array<i32>} : memref<8x1024xf32, #tpu.memory_space<vmem>>, vector<8x1024xf32>,
    } else {
    }
    return
  }
  func.func @transform_0(%arg0: i32, %arg1: i32, %arg2: i32) -> (i32, i32) {
    %c0_i32 = arith.constant 0 : i32
    return %arg0, %arg2 : i32, i32
  }
  func.func @transform_1(%arg0: i32, %arg1: i32, %arg2: i32) -> (i32, i32) {
    %c0_i32 = arith.constant 0 : i32
    return %arg2, %arg1 : i32, i32
  }
  func.func @transform_2(%arg0: i32, %arg1: i32, %arg2: i32) -> (i32, i32) {
    %c0_i32 = arith.constant 0 : i32
    %c0_i32_0 = arith.constant 0 : i32
    return %c0_i32, %arg1 : i32, i32
  }
  func.func @transform_3(%arg0: i32, %arg1: i32, %arg2: i32) -> (i32, i32) {
    %c0_i32 = arith.constant 0 : i32
    %c0_i32_0 = arith.constant 0 : i32
    return %c0_i32, %arg1 : i32, i32
  }
  func.func @transform_4(%arg0: i32, %arg1: i32, %arg2: i32) -> (i32, i32) {
    %c0_i32 = arith.constant 0 : i32
    %c0_i32_0 = arith.constant 0 : i32
    return %c0_i32, %arg1 : i32, i32
  }
  func.func @transform_5(%arg0: i32, %arg1: i32, %arg2: i32) -> (i32, i32) {
    %c0_i32 = arith.constant 0 : i32
    return %arg0, %arg1 : i32, i32
  }
}

module attributes {stable_mosaic.version = 11 : i64} {
  func.func @_mm_bn_relu_kernel(%arg0: i32, %arg1: i32, %arg2: i32, %arg3: memref<32x1152xbf16, #tpu.memory_space<vmem>>, %arg4: memref<1152x256xbf16, #tpu.memory_space<vmem>>, %arg5: memref<1x256xf32, #tpu.memory_space<vmem>>, %arg6: memref<1x256xf32, #tpu.memory_space<vmem>>, %arg7: memref<1x256xf32, #tpu.memory_space<vmem>>, %arg8: memref<32x256xf32, #tpu.memory_space<vmem>>, %arg9: memref<32x256xf32, #tpu.memory_space<vmem>>) attributes {dimension_semantics = [#tpu.dimension_semantics<parallel>, #tpu.dimension_semantics<parallel>, #tpu.dimension_semantics<arbitrary>], iteration_bounds = array<i64: 1, 1, 1>, scalar_prefetch = 0 : i64, scratch_operands = 1 : i64, tpu.core_type = #tpu.core_type<tc>, window_params = [{transform_indices = @transform_0, window_bounds = array<i64: 32, 1152>}, {transform_indices = @transform_1, window_bounds = array<i64: 1152, 256>}, {transform_indices = @transform_2, window_bounds = array<i64: 1, 256>}, {transform_indices = @transform_3, window_bounds = array<i64: 1, 256>}, {transform_indices = @transform_4, window_bounds = array<i64: 1, 256>}, {transform_indices = @transform_5, window_bounds = array<i64: 32, 256>}]} {
    %c0_i32 = arith.constant 0 : i32
    %0 = arith.cmpi eq, %arg2, %c0_i32 : i32
    %1 = arith.extui %0 : i1 to i32
    %c0_i32_0 = arith.constant 0 : i32
    %2 = arith.cmpi ne, %1, %c0_i32_0 : i32
    scf.if %2 {
      %cst_10 = arith.constant 0.000000e+00 : f32
      %12 = vector.broadcast %cst_10 : f32 to vector<32x256xf32>
      %c0_11 = arith.constant 0 : index
      %c0_12 = arith.constant 0 : index
      %13 = vector.load %arg9[%c0_11, %c0_12] : memref<32x256xf32, #tpu.memory_space<vmem>>, vector<32x256xf32>
      tpu.vector_store %arg9[%c0_11, %c0_12], %12 {strides = array<i32>} : memref<32x256xf32, #tpu.memory_space<vmem>>, vector<32x256xf32>,
    } else {
    }
    %c0 = arith.constant 0 : index
    %c0_1 = arith.constant 0 : index
    %3 = vector.load %arg9[%c0, %c0_1] : memref<32x256xf32, #tpu.memory_space<vmem>>, vector<32x256xf32>
    %c0_2 = arith.constant 0 : index
    %c0_3 = arith.constant 0 : index
    %4 = vector.load %arg3[%c0_2, %c0_3] : memref<32x1152xbf16, #tpu.memory_space<vmem>>, vector<32x1152xbf16>
    %c0_4 = arith.constant 0 : index
    %c0_5 = arith.constant 0 : index
    %5 = vector.load %arg4[%c0_4, %c0_5] : memref<1152x256xbf16, #tpu.memory_space<vmem>>, vector<1152x256xbf16>
    %cst = arith.constant dense<0.000000e+00> : vector<32x256xf32>
    %6 = tpu.matmul %4, %5, %cst {dimension_numbers = #tpu.dot_dimension_numbers<[1], [0], [0], [1], [0, 0, 1, 1], [], []>} : vector<32x1152xbf16>, vector<1152x256xbf16>, vector<32x256xf32> -> vector<32x256xf32>
    %7 = arith.addf %3, %6 : vector<32x256xf32>
    %c0_6 = arith.constant 0 : index
    %c0_7 = arith.constant 0 : index
    %8 = vector.load %arg9[%c0_6, %c0_7] : memref<32x256xf32, #tpu.memory_space<vmem>>, vector<32x256xf32>
    tpu.vector_store %arg9[%c0_6, %c0_7], %7 {strides = array<i32>} : memref<32x256xf32, #tpu.memory_space<vmem>>, vector<32x256xf32>,
    %c0_i32_8 = arith.constant 0 : i32
    %9 = arith.cmpi eq, %arg2, %c0_i32_8 : i32
    %10 = arith.extui %9 : i1 to i32
    %c0_i32_9 = arith.constant 0 : i32
    %11 = arith.cmpi ne, %10, %c0_i32_9 : i32
    scf.if %11 {
      %c0_10 = arith.constant 0 : index
      %c0_11 = arith.constant 0 : index
      %12 = vector.load %arg9[%c0_10, %c0_11] : memref<32x256xf32, #tpu.memory_space<vmem>>, vector<32x256xf32>
      %c0_12 = arith.constant 0 : index
      %c0_13 = arith.constant 0 : index
      %13 = vector.load %arg5[%c0_12, %c0_13] : memref<1x256xf32, #tpu.memory_space<vmem>>, vector<1x256xf32>
      %14 = vector.broadcast %13 : vector<1x256xf32> to vector<32x256xf32>
      %15 = arith.addf %12, %14 : vector<32x256xf32>
      %16 = tpu.iota {dimensions = array<i32: 0>} : vector<256x256xi32>
      %17 = tpu.iota {dimensions = array<i32: 1>} : vector<256x256xi32>
      %c64_i32 = arith.constant 64 : i32
      %18 = vector.broadcast %c64_i32 : i32 to vector<256x256xi32>
      %19 = arith.remsi %16, %18 : vector<256x256xi32>
      %c64_i32_14 = arith.constant 64 : i32
      %20 = vector.broadcast %c64_i32_14 : i32 to vector<256x256xi32>
      %21 = arith.remsi %17, %20 : vector<256x256xi32>
      %22 = arith.cmpi eq, %19, %21 : vector<256x256xi32>
      %23 = arith.extui %22 : vector<256x256xi1> to vector<256x256xi32>
      %24 = arith.sitofp %23 : vector<256x256xi32> to vector<256x256xf32>
      %cst_15 = arith.constant dense<0.000000e+00> : vector<32x256xf32>
      %25 = tpu.matmul %15, %24, %cst_15 {dimension_numbers = #tpu.dot_dimension_numbers<[1], [0], [0], [1], [0, 0, 1, 1], [], []>} : vector<32x256xf32>, vector<256x256xf32>, vector<32x256xf32> -> vector<32x256xf32>
      %cst_16 = arith.constant dense<0.000000e+00> : vector<256xf32>
      %26 = vector.multi_reduction <add>, %25, %cst_16 [0] : vector<32x256xf32> to vector<256xf32>
      %27 = vector.shape_cast %26 : vector<256xf32> to vector<1x256xf32>
      %cst_17 = arith.constant 7.812500e-03 : f32
      %28 = vector.broadcast %cst_17 : f32 to vector<1x256xf32>
      %29 = arith.mulf %27, %28 : vector<1x256xf32>
      %30 = vector.broadcast %29 : vector<1x256xf32> to vector<32x256xf32>
      %31 = arith.subf %15, %30 : vector<32x256xf32>
      %32 = arith.mulf %31, %31 : vector<32x256xf32>
      %cst_18 = arith.constant dense<0.000000e+00> : vector<32x256xf32>
      %33 = tpu.matmul %32, %24, %cst_18 {dimension_numbers = #tpu.dot_dimension_numbers<[1], [0], [0], [1], [0, 0, 1, 1], [], []>} : vector<32x256xf32>, vector<256x256xf32>, vector<32x256xf32> -> vector<32x256xf32>
      %cst_19 = arith.constant dense<0.000000e+00> : vector<256xf32>
      %34 = vector.multi_reduction <add>, %33, %cst_19 [0] : vector<32x256xf32> to vector<256xf32>
      %35 = vector.shape_cast %34 : vector<256xf32> to vector<1x256xf32>
      %cst_20 = arith.constant 7.812500e-03 : f32
      %36 = vector.broadcast %cst_20 : f32 to vector<1x256xf32>
      %37 = arith.mulf %35, %36 : vector<1x256xf32>
      %cst_21 = arith.constant 9.99999974E-6 : f32
      %38 = vector.broadcast %cst_21 : f32 to vector<1x256xf32>
      %39 = arith.addf %37, %38 : vector<1x256xf32>
      %40 = math.rsqrt %39 : vector<1x256xf32>
      %41 = vector.broadcast %40 : vector<1x256xf32> to vector<32x256xf32>
      %42 = arith.mulf %31, %41 : vector<32x256xf32>
      %c0_22 = arith.constant 0 : index
      %c0_23 = arith.constant 0 : index
      %43 = vector.load %arg6[%c0_22, %c0_23] : memref<1x256xf32, #tpu.memory_space<vmem>>, vector<1x256xf32>
      %44 = vector.broadcast %43 : vector<1x256xf32> to vector<32x256xf32>
      %45 = arith.mulf %42, %44 : vector<32x256xf32>
      %c0_24 = arith.constant 0 : index
      %c0_25 = arith.constant 0 : index
      %46 = vector.load %arg7[%c0_24, %c0_25] : memref<1x256xf32, #tpu.memory_space<vmem>>, vector<1x256xf32>
      %47 = vector.broadcast %46 : vector<1x256xf32> to vector<32x256xf32>
      %48 = arith.addf %45, %47 : vector<32x256xf32>
      %cst_26 = arith.constant 0.000000e+00 : f32
      %49 = vector.broadcast %cst_26 : f32 to vector<32x256xf32>
      %50 = arith.maximumf %48, %49 : vector<32x256xf32>
      %c0_27 = arith.constant 0 : index
      %c0_28 = arith.constant 0 : index
      %51 = vector.load %arg8[%c0_27, %c0_28] : memref<32x256xf32, #tpu.memory_space<vmem>>, vector<32x256xf32>
      tpu.vector_store %arg8[%c0_27, %c0_28], %50 {strides = array<i32>} : memref<32x256xf32, #tpu.memory_space<vmem>>, vector<32x256xf32>,
    } else {
    }
    return
  }
  func.func @transform_0(%arg0: i32, %arg1: i32, %arg2: i32) -> (i32, i32) {
    %c0_i32 = arith.constant 0 : i32
    return %arg0, %arg2 : i32, i32
  }
  func.func @transform_1(%arg0: i32, %arg1: i32, %arg2: i32) -> (i32, i32) {
    %c0_i32 = arith.constant 0 : i32
    return %arg2, %arg1 : i32, i32
  }
  func.func @transform_2(%arg0: i32, %arg1: i32, %arg2: i32) -> (i32, i32) {
    %c0_i32 = arith.constant 0 : i32
    %c0_i32_0 = arith.constant 0 : i32
    return %c0_i32, %arg1 : i32, i32
  }
  func.func @transform_3(%arg0: i32, %arg1: i32, %arg2: i32) -> (i32, i32) {
    %c0_i32 = arith.constant 0 : i32
    %c0_i32_0 = arith.constant 0 : i32
    return %c0_i32, %arg1 : i32, i32
  }
  func.func @transform_4(%arg0: i32, %arg1: i32, %arg2: i32) -> (i32, i32) {
    %c0_i32 = arith.constant 0 : i32
    %c0_i32_0 = arith.constant 0 : i32
    return %c0_i32, %arg1 : i32, i32
  }
  func.func @transform_5(%arg0: i32, %arg1: i32, %arg2: i32) -> (i32, i32) {
    %c0_i32 = arith.constant 0 : i32
    return %arg0, %arg1 : i32, i32
  }
}

module attributes {stable_mosaic.version = 11 : i64} {
  func.func @_mm_kernel(%arg0: i32, %arg1: i32, %arg2: i32, %arg3: memref<128x640xbf16, #tpu.memory_space<vmem>>, %arg4: memref<640x128xbf16, #tpu.memory_space<vmem>>, %arg5: memref<1x128xf32, #tpu.memory_space<vmem>>, %arg6: memref<128x128xf32, #tpu.memory_space<vmem>>, %arg7: memref<128x128xf32, #tpu.memory_space<vmem>>) attributes {dimension_semantics = [#tpu.dimension_semantics<parallel>, #tpu.dimension_semantics<parallel>, #tpu.dimension_semantics<arbitrary>], iteration_bounds = array<i64: 1, 1, 1>, scalar_prefetch = 0 : i64, scratch_operands = 1 : i64, tpu.core_type = #tpu.core_type<tc>, window_params = [{transform_indices = @transform_0, window_bounds = array<i64: 128, 640>}, {transform_indices = @transform_1, window_bounds = array<i64: 640, 128>}, {transform_indices = @transform_2, window_bounds = array<i64: 1, 128>}, {transform_indices = @transform_3, window_bounds = array<i64: 128, 128>}]} {
    %c0_i32 = arith.constant 0 : i32
    %0 = arith.cmpi eq, %arg2, %c0_i32 : i32
    %1 = arith.extui %0 : i1 to i32
    %c0_i32_0 = arith.constant 0 : i32
    %2 = arith.cmpi ne, %1, %c0_i32_0 : i32
    scf.if %2 {
      %cst_10 = arith.constant 0.000000e+00 : f32
      %12 = vector.broadcast %cst_10 : f32 to vector<128x128xf32>
      %c0_11 = arith.constant 0 : index
      %c0_12 = arith.constant 0 : index
      %13 = vector.load %arg7[%c0_11, %c0_12] : memref<128x128xf32, #tpu.memory_space<vmem>>, vector<128x128xf32>
      tpu.vector_store %arg7[%c0_11, %c0_12], %12 {strides = array<i32>} : memref<128x128xf32, #tpu.memory_space<vmem>>, vector<128x128xf32>,
    } else {
    }
    %c0 = arith.constant 0 : index
    %c0_1 = arith.constant 0 : index
    %3 = vector.load %arg7[%c0, %c0_1] : memref<128x128xf32, #tpu.memory_space<vmem>>, vector<128x128xf32>
    %c0_2 = arith.constant 0 : index
    %c0_3 = arith.constant 0 : index
    %4 = vector.load %arg3[%c0_2, %c0_3] : memref<128x640xbf16, #tpu.memory_space<vmem>>, vector<128x640xbf16>
    %c0_4 = arith.constant 0 : index
    %c0_5 = arith.constant 0 : index
    %5 = vector.load %arg4[%c0_4, %c0_5] : memref<640x128xbf16, #tpu.memory_space<vmem>>, vector<640x128xbf16>
    %cst = arith.constant dense<0.000000e+00> : vector<128x128xf32>
    %6 = tpu.matmul %4, %5, %cst {dimension_numbers = #tpu.dot_dimension_numbers<[1], [0], [0], [1], [0, 0, 1, 1], [], []>} : vector<128x640xbf16>, vector<640x128xbf16>, vector<128x128xf32> -> vector<128x128xf32>
    %7 = arith.addf %3, %6 : vector<128x128xf32>
    %c0_6 = arith.constant 0 : index
    %c0_7 = arith.constant 0 : index
    %8 = vector.load %arg7[%c0_6, %c0_7] : memref<128x128xf32, #tpu.memory_space<vmem>>, vector<128x128xf32>
    tpu.vector_store %arg7[%c0_6, %c0_7], %7 {strides = array<i32>} : memref<128x128xf32, #tpu.memory_space<vmem>>, vector<128x128xf32>,
    %c0_i32_8 = arith.constant 0 : i32
    %9 = arith.cmpi eq, %arg2, %c0_i32_8 : i32
    %10 = arith.extui %9 : i1 to i32
    %c0_i32_9 = arith.constant 0 : i32
    %11 = arith.cmpi ne, %10, %c0_i32_9 : i32
    scf.if %11 {
      %c0_10 = arith.constant 0 : index
      %c0_11 = arith.constant 0 : index
      %12 = vector.load %arg7[%c0_10, %c0_11] : memref<128x128xf32, #tpu.memory_space<vmem>>, vector<128x128xf32>
      %c0_12 = arith.constant 0 : index
      %c0_13 = arith.constant 0 : index
      %13 = vector.load %arg5[%c0_12, %c0_13] : memref<1x128xf32, #tpu.memory_space<vmem>>, vector<1x128xf32>
      %14 = vector.broadcast %13 : vector<1x128xf32> to vector<128x128xf32>
      %15 = arith.addf %12, %14 : vector<128x128xf32>
      %16 = math.tanh %15 : vector<128x128xf32>
      %c0_14 = arith.constant 0 : index
      %c0_15 = arith.constant 0 : index
      %17 = vector.load %arg6[%c0_14, %c0_15] : memref<128x128xf32, #tpu.memory_space<vmem>>, vector<128x128xf32>
      tpu.vector_store %arg6[%c0_14, %c0_15], %16 {strides = array<i32>} : memref<128x128xf32, #tpu.memory_space<vmem>>, vector<128x128xf32>,
    } else {
    }
    return
  }
  func.func @transform_0(%arg0: i32, %arg1: i32, %arg2: i32) -> (i32, i32) {
    %c0_i32 = arith.constant 0 : i32
    return %arg0, %arg2 : i32, i32
  }
  func.func @transform_1(%arg0: i32, %arg1: i32, %arg2: i32) -> (i32, i32) {
    %c0_i32 = arith.constant 0 : i32
    return %arg2, %arg1 : i32, i32
  }
  func.func @transform_2(%arg0: i32, %arg1: i32, %arg2: i32) -> (i32, i32) {
    %c0_i32 = arith.constant 0 : i32
    %c0_i32_0 = arith.constant 0 : i32
    return %c0_i32, %arg1 : i32, i32
  }
  func.func @transform_3(%arg0: i32, %arg1: i32, %arg2: i32) -> (i32, i32) {
    %c0_i32 = arith.constant 0 : i32
    return %arg0, %arg1 : i32, i32
  }
}

</mosaic_0001>

<llo_original>
// kernel: generator_forward.4
$region0: #{generator_forward.4}
  #allocation0 [shape = 'u32[]', space=smem, size = 0x4, offset = 0x4, fixed_abs, tag = 'smem constant byte address 0x4 - core index']
  #allocation1 [shape = 'u32[144,128]{1,0:T(1,128)}', space=vmem, size = 0x12000, scoped, tag = 'internal scratch']
  #allocation2 [shape = 'f32[8,512]{1,0:T(8,128)}', space=vmem, size = 0x4000, scoped, tag = 'scratch operand']
  %s0 = inlined_call_operand.vmem [shape: bf16[8,128], index: 0, kind: input, shape index: {}]
  %s1 = inlined_call_operand.hbm [shape: bf16[128,1024], index: 1, kind: input, shape index: {}]
  %s2 = inlined_call_operand.hbm [shape: f32[1,1024], index: 2, kind: input, shape index: {}]
  %s3 = inlined_call_operand.hbm [shape: f32[1,1024], index: 3, kind: input, shape index: {}]
  %s4 = inlined_call_operand.hbm [shape: f32[1,1024], index: 4, kind: input, shape index: {}]
  %s5 = inlined_call_operand.vmem [shape: f32[8,1024], index: 5, kind: output, shape index: {}]
  %s6 = sld [smem:[#allocation0]]
  $region77: #{generator_forward.4} parent=0
    _
  %s8 = ssub.s32 1, %s6
  %s9 = scalar_select 0, %s8, %s6
  $region1: #{generator_forward.4} parent=0
    #allocation3 [shape = 'u8[262144]{0}', space=vmem, size = 0x40000, scoped, tag = 'input window, operand 1']
    #allocation4 [shape = 's32[2]{0}', space=sflag, size = 0x8, scoped, tag = 'scoped memory for generator_forward.4']
    #allocation5 [shape = 'u8[4096]{0}', space=vmem, size = 0x1000, scoped, tag = 'input window, operand 2']
    #allocation6 [shape = 's32[2]{0}', space=sflag, size = 0x8, scoped, tag = 'scoped memory for generator_forward.4']
    #allocation7 [shape = 'u8[4096]{0}', space=vmem, size = 0x1000, scoped, tag = 'input window, operand 3']
    #allocation8 [shape = 'u8[4096]{0}', space=vmem, size = 0x1000, scoped, tag = 'input window, operand 4']
    #allocation9 [shape = 's32[2]{0}', space=sflag, size = 0x8, scoped, tag = 'scoped memory for generator_forward.4']
    %10 = vsyncpa [#allocation4], 0
    %s11 = scalar_lea.sflag [#allocation4], 1
    %12 = vsyncpa %s11, 0
    %13 = vsyncpa [#allocation6], 0
    %s14 = scalar_lea.sflag [#allocation6], 1
    %15 = vsyncpa %s14, 0
    %16 = vsyncpa [#allocation9], 0
    %s17 = scalar_lea.sflag [#allocation9], 1
    %18 = vsyncpa %s17, 0
    loop: start=0, step=1, limit=4
    $region2: #{generator_forward.4} parent=1 // loop_pre_header
      _
    $region3: #{generator_forward.4} parent=1 // loop_header
      %s20 = sphi 0, %s24
      %p21 = scmp.ge.s32.totalorder %s20, 4
      %s27 = sphi 0, %s46
      %s28 = sphi 0, %s42
      %s29 = sphi 0, %s38
      %s30 = sphi 0, %s27
      %s31 = sphi 0, %s28
      %s32 = sphi 0, %s29
      %s33 = sphi 0, %s30
      %s34 = sphi 0, %s31
      %s35 = sphi 0, %s32
      %s51 = sphi 0, %s53
      %s54 = sphi 0, %s51
      %s55 = sphi 0, %s54
      %s71 = sphi 0, %s55
      %s79 = sphi 0, %s81
      %s82 = sphi 0, %s79
      %s83 = sphi 0, %s82
      %s99 = sphi 0, %s83
      %s105 = sphi 0, %s107
      %s108 = sphi 0, %s105
      %s109 = sphi 0, %s108
      %s125 = sphi 0, %s109
      %s131 = sphi 0, %s133
      %s134 = sphi 0, %s131
      %s135 = sphi 0, %s134
      %s151 = sphi 0, %s135
      %s157 = sphi 0, %s159
      %s160 = sphi 0, %s157
      %s161 = sphi 0, %s160
      %s177 = sphi 0, %s161
      %s185 = sphi 0, %s187
      %s188 = sphi 0, %s185
      %s189 = sphi 0, %s188
      %s205 = sphi 0, %s189
    $region4: #{generator_forward.4} parent=1 // loop_header_branch
      %23 = sbr.rel (%p21) target = $region8
    $region5: #{generator_forward.4} parent=1 // loop_body
      %s25 = ssub.s32 %s20, 1
      %s26 = ssub.s32 %s20, 2
      %s36 = sadd.s32 1, %s29
      %p37 = scmp.ge.s32.totalorder %s36, 1
      %s38 = scalar_select %p37, 0, %s36
      %s39 = sadd.s32 1, %s28
      %s40 = scalar_select %p37, %s39, %s28
      %p41 = scmp.ge.s32.totalorder %s40, 2
      %s42 = scalar_select %p41, 0, %s40
      %s43 = sadd.s32 1, %s27
      %s44 = scalar_select %p41, %s43, %s27
      %p45 = scmp.ge.s32.totalorder %s44, 1
      %s46 = scalar_select %p45, 0, %s44
      %s47 = ssub.s32 %s27, %s46
      %s48 = ssub.s32 %s29, %s38
      %s49 = sor.u32 %s47, %s48
      %p50 = scmp.eq.s32.totalorder %s49, 0
      %s52 = sadd.s32 %s51, 1
      %s53 = scalar_select %p50, %s51, %s52
      %p56 = pneg %p50
      %p57 = scmp.eq.s32.totalorder %s20, 1
      %p58 = por %p56, %p57
      %p59 = scmp.ne.s32.totalorder %s51, %s54
      %p60 = scmp.eq.s32.totalorder %s20, 0
      %p61 = por %p59, %p60
      %p62 = scmp.ne.s32.totalorder %s51, %s54
      %p63 = scmp.eq.s32.totalorder %s25, 1
      %p64 = por %p62, %p63
      %p65 = scmp.ne.s32.totalorder %s54, %s55
      %p66 = scmp.eq.s32.totalorder %s25, 0
      %p67 = por %p65, %p66
      %p68 = scmp.ne.s32.totalorder %s54, %s55
      %p69 = scmp.eq.s32.totalorder %s26, 1
      %p70 = por %p68, %p69
      %p72 = scmp.ne.s32.totalorder %s55, %s71
      %p73 = scmp.eq.s32.totalorder %s26, 0
      %p74 = por %p72, %p73
      %s75 = ssub.s32 %s29, %s38
      %s76 = ssub.s32 %s28, %s42
      %s77 = sor.u32 %s75, %s76
      %p78 = scmp.eq.s32.totalorder %s77, 0
      %s80 = sadd.s32 %s79, 1
      %s81 = scalar_select %p78, %s79, %s80
      %p84 = pneg %p78
      %p85 = scmp.eq.s32.totalorder %s20, 1
      %p86 = por %p84, %p85
      %p87 = scmp.ne.s32.totalorder %s79, %s82
      %p88 = scmp.eq.s32.totalorder %s20, 0
      %p89 = por %p87, %p88
      %p90 = scmp.ne.s32.totalorder %s79, %s82
      %p91 = scmp.eq.s32.totalorder %s25, 1
      %p92 = por %p90, %p91
      %p93 = scmp.ne.s32.totalorder %s82, %s83
      %p94 = scmp.eq.s32.totalorder %s25, 0
      %p95 = por %p93, %p94
      %p96 = scmp.ne.s32.totalorder %s82, %s83
      %p97 = scmp.eq.s32.totalorder %s26, 1
      %p98 = por %p96, %p97
      %p100 = scmp.ne.s32.totalorder %s83, %s99
      %p101 = scmp.eq.s32.totalorder %s26, 0
      %p102 = por %p100, %p101
      %s103 = ssub.s32 %s28, %s42
      %p104 = scmp.eq.s32.totalorder %s103, 0
      %s106 = sadd.s32 %s105, 1
      %s107 = scalar_select %p104, %s105, %s106
      %p110 = pneg %p104
      %p111 = scmp.eq.s32.totalorder %s20, 1
      %p112 = por %p110, %p111
      %p113 = scmp.ne.s32.totalorder %s105, %s108
      %p114 = scmp.eq.s32.totalorder %s20, 0
      %p115 = por %p113, %p114
      %p116 = scmp.ne.s32.totalorder %s105, %s108
      %p117 = scmp.eq.s32.totalorder %s25, 1
      %p118 = por %p116, %p117
      %p119 = scmp.ne.s32.totalorder %s108, %s109
      %p120 = scmp.eq.s32.totalorder %s25, 0
      %p121 = por %p119, %p120
      %p122 = scmp.ne.s32.totalorder %s108, %s109
      %p123 = scmp.eq.s32.totalorder %s26, 1
      %p124 = por %p122, %p123
      %p126 = scmp.ne.s32.totalorder %s109, %s125
      %p127 = scmp.eq.s32.totalorder %s26, 0
      %p128 = por %p126, %p127
      %s129 = ssub.s32 %s28, %s42
      %p130 = scmp.eq.s32.totalorder %s129, 0
      %s132 = sadd.s32 %s131, 1
      %s133 = scalar_select %p130, %s131, %s132
      %p136 = pneg %p130
      %p137 = scmp.eq.s32.totalorder %s20, 1
      %p138 = por %p136, %p137
      %p139 = scmp.ne.s32.totalorder %s131, %s134
      %p140 = scmp.eq.s32.totalorder %s20, 0
      %p141 = por %p139, %p140
      %p142 = scmp.ne.s32.totalorder %s131, %s134
      %p143 = scmp.eq.s32.totalorder %s25, 1
      %p144 = por %p142, %p143
      %p145 = scmp.ne.s32.totalorder %s134, %s135
      %p146 = scmp.eq.s32.totalorder %s25, 0
      %p147 = por %p145, %p146
      %p148 = scmp.ne.s32.totalorder %s134, %s135
      %p149 = scmp.eq.s32.totalorder %s26, 1
      %p150 = por %p148, %p149
      %p152 = scmp.ne.s32.totalorder %s135, %s151
      %p153 = scmp.eq.s32.totalorder %s26, 0
      %p154 = por %p152, %p153
      %s155 = ssub.s32 %s28, %s42
      %p156 = scmp.eq.s32.totalorder %s155, 0
      %s158 = sadd.s32 %s157, 1
      %s159 = scalar_select %p156, %s157, %s158
      %p162 = pneg %p156
      %p163 = scmp.eq.s32.totalorder %s20, 1
      %p164 = por %p162, %p163
      %p165 = scmp.ne.s32.totalorder %s157, %s160
      %p166 = scmp.eq.s32.totalorder %s20, 0
      %p167 = por %p165, %p166
      %p168 = scmp.ne.s32.totalorder %s157, %s160
      %p169 = scmp.eq.s32.totalorder %s25, 1
      %p170 = por %p168, %p169
      %p171 = scmp.ne.s32.totalorder %s160, %s161
      %p172 = scmp.eq.s32.totalorder %s25, 0
      %p173 = por %p171, %p172
      %p174 = scmp.ne.s32.totalorder %s160, %s161
      %p175 = scmp.eq.s32.totalorder %s26, 1
      %p176 = por %p174, %p175
      %p178 = scmp.ne.s32.totalorder %s161, %s177
      %p179 = scmp.eq.s32.totalorder %s26, 0
      %p180 = por %p178, %p179
      %s181 = ssub.s32 %s27, %s46
      %s182 = ssub.s32 %s28, %s42
      %s183 = sor.u32 %s181, %s182
      %p184 = scmp.eq.s32.totalorder %s183, 0
      %s186 = sadd.s32 %s185, 1
      %s187 = scalar_select %p184, %s185, %s186
      %p190 = pneg %p184
      %p191 = scmp.eq.s32.totalorder %s20, 1
      %p192 = por %p190, %p191
      %p193 = scmp.ne.s32.totalorder %s185, %s188
      %p194 = scmp.eq.s32.totalorder %s20, 0
      %p195 = por %p193, %p194
      %p196 = scmp.ne.s32.totalorder %s185, %s188
      %p197 = scmp.eq.s32.totalorder %s25, 1
      %p198 = por %p196, %p197
      %p199 = scmp.ne.s32.totalorder %s188, %s189
      %p200 = scmp.eq.s32.totalorder %s25, 0
      %p201 = por %p199, %p200
      %p202 = scmp.ne.s32.totalorder %s188, %s189
      %p203 = scmp.eq.s32.totalorder %s26, 1
      %p204 = por %p202, %p203
      %p206 = scmp.ne.s32.totalorder %s189, %s205
      %p207 = scmp.eq.s32.totalorder %s26, 0
      %p208 = por %p206, %p207
      %p209 = scmp.le.s32.totalorder 1, %s20
      %p210 = scmp.lt.s32.totalorder %s20, 3
      %p211 = pnand %p209, %p210
      %p212 = pneg %p211
      // Predicated region
      $region9: #{generator_forward.4} parent=5 // pred_check
        _
      $region10: #{generator_forward.4} parent=5 // pred_check_branch
        %214 = sbr.rel (%p211) target = $region12
      $region11: #{generator_forward.4} parent=5 // pred_region
        %s215 = ssub.s32 %s20, 1
        // Predicated region
        $region13: #{generator_forward.4} parent=11 // pred_check
          %p216 = pneg %p67
        $region14: #{generator_forward.4} parent=11 // pred_check_branch
          %218 = sbr.rel (%p216) target = $region16
        $region15: #{generator_forward.4} parent=11 // pred_region
          %p219 = scmp.lt.s32.totalorder %s30, 0
          %s220 = scalar_select %p219, %s30, 0
          %p221 = scmp.lt.s32.totalorder %s32, 0
          %s222 = scalar_select %p221, %s32, 0
          %s223 = sadd.s32 %s222, %s220
          %s224 = smul.addr %s223, 4
          %s225 = scalar_lea.vmem %s0, %s224
        $region16: #{generator_forward.4} parent=11 // pred_fallthru
          _
      $region12: #{generator_forward.4} parent=5 // pred_fallthru
        _
      %p226 = scmp.lt.s32.totalorder %s20, 2
      // Predicated region
      $region17: #{generator_forward.4} parent=5 // pred_check
        %p227 = pneg %p226
      $region18: #{generator_forward.4} parent=5 // pred_check_branch
        %229 = sbr.rel (%p227) target = $region20
      $region19: #{generator_forward.4} parent=5 // pred_region
        // Predicated region
        $region21: #{generator_forward.4} parent=19 // pred_check
          %p230 = pneg %p89
        $region22: #{generator_forward.4} parent=19 // pred_check_branch
          %232 = sbr.rel (%p230) target = $region24
        $region23: #{generator_forward.4} parent=19 // pred_region
          %s233 = sand.u32 %s79, 1
          %s234 = scalar_lea.sflag [#allocation4], %s233
          %s235 = sand.u32 %s79, 1
          %s236 = smul.addr %s235, 256
          %s237 = scalar_lea.vmem [#allocation3], %s236
          %s238 = smul.u32 16, %s29
          %s239 = smul.u32 4, %s28
          %s241 = ssub.s32 4096, 4096
          %242 = vsyncadd %s234, %s241
          %s243 = smul.addr %s238, 8
          %s244 = sadd.s32 %s239, %s243
          %s245 = smul.addr %s244, 64
          %s246 = scalar_lea.hbm %s1, %s245
          %s247 = sshll.u32 %s237, 4
          %s248 = int_to_ptr.vmem [resolvable:$true] %s247
          %253 = dma.hbm_to_vmem [thread:$0]  %s246, 4096, %s248, %s234, 512, 256, 16
        $region24: #{generator_forward.4} parent=19 // pred_fallthru
          _
        // Predicated region
        $region25: #{generator_forward.4} parent=19 // pred_check
          %p254 = pneg %p115
        $region26: #{generator_forward.4} parent=19 // pred_check_branch
          %256 = sbr.rel (%p254) target = $region28
        $region27: #{generator_forward.4} parent=19 // pred_region
          %s257 = sand.u32 %s20, 1
          %s258 = scalar_lea.sflag [#allocation6], %s257
          %s259 = sand.u32 %s105, 1
          %s260 = smul.addr %s259, 4
          %s261 = scalar_lea.vmem [#allocation5], %s260
          %s262 = smul.u32 4, %s28
          %s264 = ssub.s32 64, 64
          %265 = vsyncadd %s258, %s264
          %s266 = smul.addr %s262, 16
          %s267 = scalar_lea.hbm %s2, %s266
          %s269 = sshll.u32 %s261, 4
          %s270 = int_to_ptr.vmem [resolvable:$true] %s269
          %272 = dma.hbm_to_vmem [thread:$0]  %s267, 64, %s270, %s258
        $region28: #{generator_forward.4} parent=19 // pred_fallthru
          _
        // Predicated region
        $region29: #{generator_forward.4} parent=19 // pred_check
          %p273 = pneg %p141
        $region30: #{generator_forward.4} parent=19 // pred_check_branch
          %275 = sbr.rel (%p273) target = $region32
        $region31: #{generator_forward.4} parent=19 // pred_region
          %s276 = sand.u32 %s20, 1
          %s277 = scalar_lea.sflag [#allocation6], %s276
          %s278 = sand.u32 %s131, 1
          %s279 = smul.addr %s278, 4
          %s280 = scalar_lea.vmem [#allocation7], %s279
          %s281 = smul.u32 4, %s28
          %s283 = ssub.s32 64, 64
          %284 = vsyncadd %s277, %s283
          %s285 = smul.addr %s281, 16
          %s286 = scalar_lea.hbm %s3, %s285
          %s288 = sshll.u32 %s280, 4
          %s289 = int_to_ptr.vmem [resolvable:$true] %s288
          %291 = dma.hbm_to_vmem [thread:$0]  %s286, 64, %s289, %s277
        $region32: #{generator_forward.4} parent=19 // pred_fallthru
          _
        // Predicated region
        $region33: #{generator_forward.4} parent=19 // pred_check
          %p292 = pneg %p167
        $region34: #{generator_forward.4} parent=19 // pred_check_branch
          %294 = sbr.rel (%p292) target = $region36
        $region35: #{generator_forward.4} parent=19 // pred_region
          %s295 = sand.u32 %s157, 1
          %s296 = scalar_lea.sflag [#allocation9], %s295
          %s297 = sand.u32 %s157, 1
          %s298 = smul.addr %s297, 4
          %s299 = scalar_lea.vmem [#allocation8], %s298
          %s300 = smul.u32 4, %s28
          %s302 = ssub.s32 64, 64
          %303 = vsyncadd %s296, %s302
          %s304 = smul.addr %s300, 16
          %s305 = scalar_lea.hbm %s4, %s304
          %s307 = sshll.u32 %s299, 4
          %s308 = int_to_ptr.vmem [resolvable:$true] %s307
          %310 = dma.hbm_to_vmem [thread:$0]  %s305, 64, %s308, %s296
        $region36: #{generator_forward.4} parent=19 // pred_fallthru
          _
      $region20: #{generator_forward.4} parent=5 // pred_fallthru
        _
      %p311 = scmp.le.s32.totalorder 1, %s20
      %p312 = scmp.lt.s32.totalorder %s20, 3
      %p313 = pnand %p311, %p312
      %p314 = pneg %p313
      // Predicated region
      $region37: #{generator_forward.4} parent=5 // pred_check
        _
      $region38: #{generator_forward.4} parent=5 // pred_check_branch
        %316 = sbr.rel (%p313) target = $region40
      $region39: #{generator_forward.4} parent=5 // pred_region
        %s317 = ssub.s32 %s20, 1
        %s318 = sand.u32 %s82, 1
        %s319 = scalar_lea.sflag [#allocation4], %s318
        %s320 = sand.u32 %s82, 1
        %s321 = smul.addr %s320, 256
        %s322 = scalar_lea.vmem [#allocation3], %s321
        // Predicated region
        $region41: #{generator_forward.4} parent=39 // pred_check
          %p323 = pneg %p95
        $region42: #{generator_forward.4} parent=39 // pred_check_branch
          %325 = sbr.rel (%p323) target = $region44
        $region43: #{generator_forward.4} parent=39 // pred_region
          %326 = dma.done %s319, 4096
        $region44: #{generator_forward.4} parent=39 // pred_fallthru
          _
        %s327 = sand.u32 %s25, 1
        %s328 = scalar_lea.sflag [#allocation6], %s327
        %s329 = sand.u32 %s108, 1
        %s330 = smul.addr %s329, 4
        %s331 = scalar_lea.vmem [#allocation5], %s330
        // Predicated region
        $region45: #{generator_forward.4} parent=39 // pred_check
          %p332 = pneg %p121
        $region46: #{generator_forward.4} parent=39 // pred_check_branch
          %334 = sbr.rel (%p332) target = $region48
        $region47: #{generator_forward.4} parent=39 // pred_region
          %335 = dma.done %s328, 64
        $region48: #{generator_forward.4} parent=39 // pred_fallthru
          _
        %s336 = sand.u32 %s25, 1
        %s337 = scalar_lea.sflag [#allocation6], %s336
        %s338 = sand.u32 %s134, 1
        %s339 = smul.addr %s338, 4
        %s340 = scalar_lea.vmem [#allocation7], %s339
        // Predicated region
        $region49: #{generator_forward.4} parent=39 // pred_check
          %p341 = pneg %p147
        $region50: #{generator_forward.4} parent=39 // pred_check_branch
          %343 = sbr.rel (%p341) target = $region52
        $region51: #{generator_forward.4} parent=39 // pred_region
          %344 = dma.done %s337, 64
        $region52: #{generator_forward.4} parent=39 // pred_fallthru
          _
        %s345 = sand.u32 %s160, 1
        %s346 = scalar_lea.sflag [#allocation9], %s345
        %s347 = sand.u32 %s160, 1
        %s348 = smul.addr %s347, 4
        %s349 = scalar_lea.vmem [#allocation8], %s348
        // Predicated region
        $region53: #{generator_forward.4} parent=39 // pred_check
          %p350 = pneg %p173
        $region54: #{generator_forward.4} parent=39 // pred_check_branch
          %352 = sbr.rel (%p350) target = $region56
        $region55: #{generator_forward.4} parent=39 // pred_region
          %353 = dma.done %s346, 64
        $region56: #{generator_forward.4} parent=39 // pred_fallthru
          _
        %p354 = scmp.lt.s32.totalorder %s30, 0
        %s355 = scalar_select %p354, %s30, 0
        %p356 = scmp.lt.s32.totalorder %s32, 0
        %s357 = scalar_select %p356, %s32, 0
        %s358 = sadd.s32 %s357, %s355
        %s359 = smul.addr %s358, 4
        %s360 = scalar_lea.vmem %s0, %s359
        %p361 = pneg %p67
        %p362 = pneg %p64
        %s363 = sand.u32 %s82, 1
        %s364 = scalar_lea.sflag [#allocation4], %s363
        %s365 = sand.u32 %s82, 1
        %s366 = smul.addr %s365, 256
        %s367 = scalar_lea.vmem [#allocation3], %s366
        %p368 = pneg %p95
        %p369 = pneg %p92
        %s370 = sand.u32 %s25, 1
        %s371 = scalar_lea.sflag [#allocation6], %s370
        %s372 = sand.u32 %s108, 1
        %s373 = smul.addr %s372, 4
        %s374 = scalar_lea.vmem [#allocation5], %s373
        %p375 = pneg %p121
        %p376 = pneg %p118
        %s377 = sand.u32 %s25, 1
        %s378 = scalar_lea.sflag [#allocation6], %s377
        %s379 = sand.u32 %s134, 1
        %s380 = smul.addr %s379, 4
        %s381 = scalar_lea.vmem [#allocation7], %s380
        %p382 = pneg %p147
        %p383 = pneg %p144
        %s384 = sand.u32 %s160, 1
        %s385 = scalar_lea.sflag [#allocation9], %s384
        %s386 = sand.u32 %s160, 1
        %s387 = smul.addr %s386, 4
        %s388 = scalar_lea.vmem [#allocation8], %s387
        %p389 = pneg %p173
        %p390 = pneg %p170
        %p391 = pneg %p201
        %p392 = pneg %p198
        %s393 = smul.u32 4, %s31
        %p394 = scmp.lt.s32.totalorder %s30, 0
        %s395 = scalar_select %p394, %s30, 0
        %p396 = scmp.lt.s32.totalorder %s393, 7
        %s397 = scalar_select %p396, %s393, 7
        %s398 = smul.addr %s395, 8
        %s399 = sadd.s32 %s397, %s398
        %s400 = smul.addr %s399, 8
        %s401 = scalar_lea.vmem %s5, %s400
        %p402 = scmp.lt.s32.totalorder %s30, 0
        %s403 = scalar_select %p402, %s30, 0
        %p404 = scmp.lt.s32.totalorder %s32, 0
        %s405 = scalar_select %p404, %s32, 0
        %s406 = sadd.s32 %s405, %s403
        %s407 = smul.addr %s406, 4
        %s408 = scalar_lea.vmem %s0, %s407
        %s409 = smul.u32 16, %s32
        %s410 = smul.u32 4, %s31
        %s411 = smul.u32 4, %s31
        %s412 = smul.u32 4, %s31
        %s413 = smul.u32 4, %s31
        %s414 = smul.u32 4, %s31
        %p415 = scmp.lt.s32.totalorder %s30, 0
        %s416 = scalar_select %p415, %s30, 0
        %p417 = scmp.lt.s32.totalorder %s414, 7
        %s418 = scalar_select %p417, %s414, 7
        %s419 = smul.addr %s416, 8
        %s420 = sadd.s32 %s418, %s419
        %s421 = smul.addr %s420, 8
        %s422 = scalar_lea.vmem %s5, %s421
        %s423 = smul.u32 4, %s31
        %p425 = scmp.eq.s32.totalorder %s32, 0
        // Predicated region
        $region57: #{generator_forward.4} parent=39 // pred_check
          %p426 = pneg %p425
        $region58: #{generator_forward.4} parent=39 // pred_check_branch
          %428 = sbr.rel (%p426) target = $region60
        $region59: #{generator_forward.4} parent=39 // pred_region
          %429 = vst [vmem:[#allocation2] sm:$0xff] 0.0
          %430 = vst [vmem:[#allocation2 + $0x8] sm:$0xff] 0.0
          %431 = vst [vmem:[#allocation2 + $0x10] sm:$0xff] 0.0
          %432 = vst [vmem:[#allocation2 + $0x18] sm:$0xff] 0.0
        $region60: #{generator_forward.4} parent=39 // pred_fallthru
          _
        %v433 = vld [vmem:[#allocation2] sm:$0xff]
        %v434 = vld [vmem:[#allocation2 + $0x8] sm:$0xff]
        %v435 = vld [vmem:[#allocation2 + $0x10] sm:$0xff]
        %v436 = vld [vmem:[#allocation2 + $0x18] sm:$0xff]
        %v437 = vld [vmem:[%s408] sm:$0xf]
        %v438 = vld [vmem:[%s322] sm:$0xff]
        %v439 = vld [vmem:[%s322 + $0x8] sm:$0xff]
        %v440 = vld [vmem:[%s322 + $0x10] sm:$0xff]
        %v441 = vld [vmem:[%s322 + $0x18] sm:$0xff]
        %v442 = vld [vmem:[%s322 + $0x20] sm:$0xff]
        %v443 = vld [vmem:[%s322 + $0x28] sm:$0xff]
        %v444 = vld [vmem:[%s322 + $0x30] sm:$0xff]
        %v445 = vld [vmem:[%s322 + $0x38] sm:$0xff]
        %v446 = vld [vmem:[%s322 + $0x40] sm:$0xff]
        %v447 = vld [vmem:[%s322 + $0x48] sm:$0xff]
        %v448 = vld [vmem:[%s322 + $0x50] sm:$0xff]
        %v449 = vld [vmem:[%s322 + $0x58] sm:$0xff]
        %v450 = vld [vmem:[%s322 + $0x60] sm:$0xff]
        %v451 = vld [vmem:[%s322 + $0x68] sm:$0xff]
        %v452 = vld [vmem:[%s322 + $0x70] sm:$0xff]
        %v453 = vld [vmem:[%s322 + $0x78] sm:$0xff]
        %v454 = vld [vmem:[%s322 + $0x80] sm:$0xff]
        %v455 = vld [vmem:[%s322 + $0x88] sm:$0xff]
        %v456 = vld [vmem:[%s322 + $0x90] sm:$0xff]
        %v457 = vld [vmem:[%s322 + $0x98] sm:$0xff]
        %v458 = vld [vmem:[%s322 + $0xa0] sm:$0xff]
        %v459 = vld [vmem:[%s322 + $0xa8] sm:$0xff]
        %v460 = vld [vmem:[%s322 + $0xb0] sm:$0xff]
        %v461 = vld [vmem:[%s322 + $0xb8] sm:$0xff]
        %v462 = vld [vmem:[%s322 + $0xc0] sm:$0xff]
        %v463 = vld [vmem:[%s322 + $0xc8] sm:$0xff]
        %v464 = vld [vmem:[%s322 + $0xd0] sm:$0xff]
        %v465 = vld [vmem:[%s322 + $0xd8] sm:$0xff]
        %v466 = vld [vmem:[%s322 + $0xe0] sm:$0xff]
        %v467 = vld [vmem:[%s322 + $0xe8] sm:$0xff]
        %v468 = vld [vmem:[%s322 + $0xf0] sm:$0xff]
        %v469 = vld [vmem:[%s322 + $0xf8] sm:$0xff]
        %v502 = vunpack.c.l.b16 %v438
        %v503 = vunpack.c.h.b16 %v438
        %v504 = vunpack.c.l.b16 %v439
        %v505 = vunpack.c.h.b16 %v439
        %v506 = vunpack.c.l.b16 %v440
        %v507 = vunpack.c.h.b16 %v440
        %v508 = vunpack.c.l.b16 %v441
        %v509 = vunpack.c.h.b16 %v441
        %v510 = vunpack.c.l.b16 %v442
        %v511 = vunpack.c.h.b16 %v442
        %v512 = vunpack.c.l.b16 %v443
        %v513 = vunpack.c.h.b16 %v443
        %v514 = vunpack.c.l.b16 %v444
        %v515 = vunpack.c.h.b16 %v444
        %v516 = vunpack.c.l.b16 %v445
        %v517 = vunpack.c.h.b16 %v445
        %v518 = vunpack.c.l.b16 %v446
        %v519 = vunpack.c.h.b16 %v446
        %v520 = vunpack.c.l.b16 %v447
        %v521 = vunpack.c.h.b16 %v447
        %v522 = vunpack.c.l.b16 %v448
        %v523 = vunpack.c.h.b16 %v448
        %v524 = vunpack.c.l.b16 %v449
        %v525 = vunpack.c.h.b16 %v449
        %v526 = vunpack.c.l.b16 %v450
        %v527 = vunpack.c.h.b16 %v450
        %v528 = vunpack.c.l.b16 %v451
        %v529 = vunpack.c.h.b16 %v451
        %v530 = vunpack.c.l.b16 %v452
        %v531 = vunpack.c.h.b16 %v452
        %v532 = vunpack.c.l.b16 %v453
        %v533 = vunpack.c.h.b16 %v453
        %v534 = vunpack.c.l.b16 %v454
        %v535 = vunpack.c.h.b16 %v454
        %v536 = vunpack.c.l.b16 %v455
        %v537 = vunpack.c.h.b16 %v455
        %v538 = vunpack.c.l.b16 %v456
        %v539 = vunpack.c.h.b16 %v456
        %v540 = vunpack.c.l.b16 %v457
        %v541 = vunpack.c.h.b16 %v457
        %v542 = vunpack.c.l.b16 %v458
        %v543 = vunpack.c.h.b16 %v458
        %v544 = vunpack.c.l.b16 %v459
        %v545 = vunpack.c.h.b16 %v459
        %v546 = vunpack.c.l.b16 %v460
        %v547 = vunpack.c.h.b16 %v460
        %v548 = vunpack.c.l.b16 %v461
        %v549 = vunpack.c.h.b16 %v461
        %v550 = vunpack.c.l.b16 %v462
        %v551 = vunpack.c.h.b16 %v462
        %v552 = vunpack.c.l.b16 %v463
        %v553 = vunpack.c.h.b16 %v463
        %v554 = vunpack.c.l.b16 %v464
        %v555 = vunpack.c.h.b16 %v464
        %v556 = vunpack.c.l.b16 %v465
        %v557 = vunpack.c.h.b16 %v465
        %v558 = vunpack.c.l.b16 %v466
        %v559 = vunpack.c.h.b16 %v466
        %v560 = vunpack.c.l.b16 %v467
        %v561 = vunpack.c.h.b16 %v467
        %v562 = vunpack.c.l.b16 %v468
        %v563 = vunpack.c.h.b16 %v468
        %v564 = vunpack.c.l.b16 %v469
        %v565 = vunpack.c.h.b16 %v469
        %v566 = vpack.c.b16 %v506, %v502
        %v567 = vpack.c.b16 %v507, %v503
        %v568 = vpack.c.b16 %v508, %v504
        %v569 = vpack.c.b16 %v509, %v505
        %v570 = vpack.c.b16 %v514, %v510
        %v571 = vpack.c.b16 %v515, %v511
        %v572 = vpack.c.b16 %v516, %v512
        %v573 = vpack.c.b16 %v517, %v513
        %v574 = vpack.c.b16 %v522, %v518
        %v575 = vpack.c.b16 %v523, %v519
        %v576 = vpack.c.b16 %v524, %v520
        %v577 = vpack.c.b16 %v525, %v521
        %v578 = vpack.c.b16 %v530, %v526
        %v579 = vpack.c.b16 %v531, %v527
        %v580 = vpack.c.b16 %v532, %v528
        %v581 = vpack.c.b16 %v533, %v529
        %v582 = vpack.c.b16 %v538, %v534
        %v583 = vpack.c.b16 %v539, %v535
        %v584 = vpack.c.b16 %v540, %v536
        %v585 = vpack.c.b16 %v541, %v537
        %v586 = vpack.c.b16 %v546, %v542
        %v587 = vpack.c.b16 %v547, %v543
        %v588 = vpack.c.b16 %v548, %v544
        %v589 = vpack.c.b16 %v549, %v545
        %v590 = vpack.c.b16 %v554, %v550
        %v591 = vpack.c.b16 %v555, %v551
        %v592 = vpack.c.b16 %v556, %v552
        %v593 = vpack.c.b16 %v557, %v553
        %v594 = vpack.c.b16 %v562, %v558
        %v595 = vpack.c.b16 %v563, %v559
        %v596 = vpack.c.b16 %v564, %v560
        %v597 = vpack.c.b16 %v565, %v561
        %630 = vmatprep.subr.bf16.mxu0 %v567
        %631 = vmatpush1.bf16.msra.mxu0 %v566
        %632 = vmatprep.subr.bf16.mxu0 %v571
        %633 = vmatpush1.bf16.msra.mxu0 %v570
        %634 = vmatprep.subr.bf16.mxu0 %v575
        %635 = vmatpush1.bf16.msra.mxu0 %v574
        %636 = vmatprep.subr.bf16.mxu0 %v579
        %637 = vmatpush1.bf16.msra.mxu0 %v578
        %638 = vmatprep.subr.bf16.mxu0 %v583
        %639 = vmatpush1.bf16.msra.mxu0 %v582
        %640 = vmatprep.subr.bf16.mxu0 %v587
        %641 = vmatpush1.bf16.msra.mxu0 %v586
        %642 = vmatprep.subr.bf16.mxu0 %v591
        %643 = vmatpush1.bf16.msra.mxu0 %v590
        %644 = vmatprep.subr.bf16.mxu0 %v595
        %645 = vmatpush1.bf16.msra.mxu0 %v594
        %646 = vmatprep.subr.bf16.mxu0 0
        %647 = vmatpush1.bf16.msra.mxu0 0
        %648 = vmatprep.subr.bf16.mxu0 0
        %649 = vmatpush1.bf16.msra.mxu0 0
        %650 = vmatprep.subr.bf16.mxu0 0
        %651 = vmatpush1.bf16.msra.mxu0 0
        %652 = vmatprep.subr.bf16.mxu0 0
        %653 = vmatpush1.bf16.msra.mxu0 0
        %654 = vmatprep.subr.bf16.mxu0 0
        %655 = vmatpush1.bf16.msra.mxu0 0
        %656 = vmatprep.subr.bf16.mxu0 0
        %657 = vmatpush1.bf16.msra.mxu0 0
        %658 = vmatprep.subr.bf16.mxu0 0
        %659 = vmatpush1.bf16.msra.mxu0 0
        %660 = vmatprep.subr.bf16.mxu0 0
        %661 = vmatpush1.bf16.msra.mxu0 0
        %662 = vmatprep.mubr.bf16.mxu0 0
        %663 = vmatmul.mubr.bf16.gmra.mrb[0].mxu0 %v437
        %v664 = vpop.f32.mrb[0].mxu0
        %v665 = vadd.f32 0.0, %v664
        %v666 = vpop.f32.mrb[0].mxu0
        %v667 = vadd.f32 0.0, %v666
        %v668 = vpop.f32.mrb[0].mxu0
        %v669 = vpop.f32.mrb[0].mxu0
        %670 = vdwg.mxu0
        %671 = vmatprep.subr.bf16.mxu0 %v569
        %672 = vmatpush1.bf16.msra.mxu0 %v568
        %673 = vmatprep.subr.bf16.mxu0 %v573
        %674 = vmatpush1.bf16.msra.mxu0 %v572
        %675 = vmatprep.subr.bf16.mxu0 %v577
        %676 = vmatpush1.bf16.msra.mxu0 %v576
        %677 = vmatprep.subr.bf16.mxu0 %v581
        %678 = vmatpush1.bf16.msra.mxu0 %v580
        %679 = vmatprep.subr.bf16.mxu0 %v585
        %680 = vmatpush1.bf16.msra.mxu0 %v584
        %681 = vmatprep.subr.bf16.mxu0 %v589
        %682 = vmatpush1.bf16.msra.mxu0 %v588
        %683 = vmatprep.subr.bf16.mxu0 %v593
        %684 = vmatpush1.bf16.msra.mxu0 %v592
        %685 = vmatprep.subr.bf16.mxu0 %v597
        %686 = vmatpush1.bf16.msra.mxu0 %v596
        %687 = vmatprep.subr.bf16.mxu0 0
        %688 = vmatpush1.bf16.msra.mxu0 0
        %689 = vmatprep.subr.bf16.mxu0 0
        %690 = vmatpush1.bf16.msra.mxu0 0
        %691 = vmatprep.subr.bf16.mxu0 0
        %692 = vmatpush1.bf16.msra.mxu0 0
        %693 = vmatprep.subr.bf16.mxu0 0
        %694 = vmatpush1.bf16.msra.mxu0 0
        %695 = vmatprep.subr.bf16.mxu0 0
        %696 = vmatpush1.bf16.msra.mxu0 0
        %697 = vmatprep.subr.bf16.mxu0 0
        %698 = vmatpush1.bf16.msra.mxu0 0
        %699 = vmatprep.subr.bf16.mxu0 0
        %700 = vmatpush1.bf16.msra.mxu0 0
        %701 = vmatprep.subr.bf16.mxu0 0
        %702 = vmatpush1.bf16.msra.mxu0 0
        %703 = vmatprep.mubr.bf16.mxu0 0
        %704 = vmatmul.mubr.bf16.gmra.mrb[0].mxu0 %v437
        %v705 = vpop.f32.mrb[0].mxu0
        %v706 = vadd.f32 0.0, %v705
        %v707 = vpop.f32.mrb[0].mxu0
        %v708 = vadd.f32 0.0, %v707
        %v709 = vpop.f32.mrb[0].mxu0
        %v710 = vpop.f32.mrb[0].mxu0
        %711 = vdwg.mxu0
        %v712 = vadd.f32 %v433, %v665
        %v713 = vadd.f32 %v434, %v667
        %v714 = vadd.f32 %v435, %v706
        %v715 = vadd.f32 %v436, %v708
        %716 = vst [vmem:[#allocation2] sm:$0xff] %v712
        %717 = vst [vmem:[#allocation2 + $0x8] sm:$0xff] %v713
        %718 = vst [vmem:[#allocation2 + $0x10] sm:$0xff] %v714
        %719 = vst [vmem:[#allocation2 + $0x18] sm:$0xff] %v715
        // Predicated region
        $region61: #{generator_forward.4} parent=39 // pred_check
          %p720 = pneg %p425
        $region62: #{generator_forward.4} parent=39 // pred_check_branch
          %722 = sbr.rel (%p720) target = $region64
        $region63: #{generator_forward.4} parent=39 // pred_region
          %v723 = vld [vmem:[#allocation2] sm:$0xff]
          %v724 = vld [vmem:[#allocation2 + $0x8] sm:$0xff]
          %v725 = vld [vmem:[#allocation2 + $0x10] sm:$0xff]
          %v726 = vld [vmem:[#allocation2 + $0x18] sm:$0xff]
          %v727 = vld [vmem:[%s331] sm:$0xf]
          %v729 = vlaneseq
          %v730 = vshrl.u32 %v729, 7
          %v731 = vsub.s32 0, %v730
          %v732 = vrot.slane %v727, %v731
          %v733 = vlaneseq
          %v734 = vshrl.u32 %v733, 7
          %v735 = vsub.s32 1, %v734
          %v736 = vrot.slane %v727, %v735
          %v737 = vlaneseq
          %v738 = vshrl.u32 %v737, 7
          %v739 = vsub.s32 2, %v738
          %v740 = vrot.slane %v727, %v739
          %v741 = vlaneseq
          %v742 = vshrl.u32 %v741, 7
          %v743 = vsub.s32 3, %v742
          %v744 = vrot.slane %v727, %v743
          %v749 = vadd.f32 %v723, %v732
          %v750 = vadd.f32 %v724, %v736
          %v751 = vadd.f32 %v725, %v740
          %v752 = vadd.f32 %v726, %v744
          %v753 = vlaneseq
          %v754 = vshrl.u32 %v753, 7
          %vm755 = vcmp.lt.s32.totalorder %v754, 2
          %v756 = vsel %vm755, %v749, 0.0
          %v757 = vsel %vm755, %v750, 0.0
          %v758 = vsel %vm755, %v751, 0.0
          %v759 = vsel %vm755, %v752, 0.0
          %v760 = vrot.slane %v756, 4
          %v761 = vadd.f32 %v756, %v760
          %v762 = vrot.slane %v761, 2
          %v763 = vadd.f32 %v761, %v762
          %v764 = vrot.slane %v763, 1
          %v765 = vadd.f32 %v763, %v764
          %v766 = vrot.slane %v757, 4
          %v767 = vadd.f32 %v757, %v766
          %v768 = vrot.slane %v767, 2
          %v769 = vadd.f32 %v767, %v768
          %v770 = vrot.slane %v769, 1
          %v771 = vadd.f32 %v769, %v770
          %v772 = vrot.slane %v758, 4
          %v773 = vadd.f32 %v758, %v772
          %v774 = vrot.slane %v773, 2
          %v775 = vadd.f32 %v773, %v774
          %v776 = vrot.slane %v775, 1
          %v777 = vadd.f32 %v775, %v776
          %v778 = vrot.slane %v759, 4
          %v779 = vadd.f32 %v759, %v778
          %v780 = vrot.slane %v779, 2
          %v781 = vadd.f32 %v779, %v780
          %v782 = vrot.slane %v781, 1
          %v783 = vadd.f32 %v781, %v782
          %v784 = vmul.f32 %v765, 0.5
          %v785 = vmul.f32 %v771, 0.5
          %v786 = vmul.f32 %v777, 0.5
          %v787 = vmul.f32 %v783, 0.5
          %v788 = vsub.f32 %v749, %v784
          %v789 = vsub.f32 %v750, %v785
          %v790 = vsub.f32 %v751, %v786
          %v791 = vsub.f32 %v752, %v787
          %v792 = vmul.f32 %v788, %v788
          %v793 = vmul.f32 %v789, %v789
          %v794 = vmul.f32 %v790, %v790
          %v795 = vmul.f32 %v791, %v791
          %v796 = vsel %vm755, %v792, 0.0
          %v797 = vsel %vm755, %v793, 0.0
          %v798 = vsel %vm755, %v794, 0.0
          %v799 = vsel %vm755, %v795, 0.0
          %v800 = vrot.slane %v796, 4
          %v801 = vadd.f32 %v796, %v800
          %v802 = vrot.slane %v801, 2
          %v803 = vadd.f32 %v801, %v802
          %v804 = vrot.slane %v803, 1
          %v805 = vadd.f32 %v803, %v804
          %v806 = vrot.slane %v797, 4
          %v807 = vadd.f32 %v797, %v806
          %v808 = vrot.slane %v807, 2
          %v809 = vadd.f32 %v807, %v808
          %v810 = vrot.slane %v809, 1
          %v811 = vadd.f32 %v809, %v810
          %v812 = vrot.slane %v798, 4
          %v813 = vadd.f32 %v798, %v812
          %v814 = vrot.slane %v813, 2
          %v815 = vadd.f32 %v813, %v814
          %v816 = vrot.slane %v815, 1
          %v817 = vadd.f32 %v815, %v816
          %v818 = vrot.slane %v799, 4
          %v819 = vadd.f32 %v799, %v818
          %v820 = vrot.slane %v819, 2
          %v821 = vadd.f32 %v819, %v820
          %v822 = vrot.slane %v821, 1
          %v823 = vadd.f32 %v821, %v822
          %v824 = vmul.f32 %v805, 0.5
          %v825 = vmul.f32 %v811, 0.5
          %v826 = vmul.f32 %v817, 0.5
          %v827 = vmul.f32 %v823, 0.5
          %v828 = vadd.f32 %v824, 1e-05
          %v829 = vadd.f32 %v825, 1e-05
          %v830 = vadd.f32 %v826, 1e-05
          %v831 = vadd.f32 %v827, 1e-05
          %v832 = vrsqrt.pop %v828
          %v833 = vrsqrt.pop %v829
          %v834 = vrsqrt.pop %v830
          %v835 = vrsqrt.pop %v831
          %v836 = vmul.f32 %v788, %v832
          %v837 = vmul.f32 %v789, %v833
          %v838 = vmul.f32 %v790, %v834
          %v839 = vmul.f32 %v791, %v835
          %v840 = vld [vmem:[%s340] sm:$0xf]
          %v842 = vlaneseq
          %v843 = vshrl.u32 %v842, 7
          %v844 = vsub.s32 0, %v843
          %v845 = vrot.slane %v840, %v844
          %v846 = vlaneseq
          %v847 = vshrl.u32 %v846, 7
          %v848 = vsub.s32 1, %v847
          %v849 = vrot.slane %v840, %v848
          %v850 = vlaneseq
          %v851 = vshrl.u32 %v850, 7
          %v852 = vsub.s32 2, %v851
          %v853 = vrot.slane %v840, %v852
          %v854 = vlaneseq
          %v855 = vshrl.u32 %v854, 7
          %v856 = vsub.s32 3, %v855
          %v857 = vrot.slane %v840, %v856
          %v862 = vmul.f32 %v836, %v845
          %v863 = vmul.f32 %v837, %v849
          %v864 = vmul.f32 %v838, %v853
          %v865 = vmul.f32 %v839, %v857
          %v866 = vld [vmem:[%s349] sm:$0xf]
          %v868 = vlaneseq
          %v869 = vshrl.u32 %v868, 7
          %v870 = vsub.s32 0, %v869
          %v871 = vrot.slane %v866, %v870
          %v872 = vlaneseq
          %v873 = vshrl.u32 %v872, 7
          %v874 = vsub.s32 1, %v873
          %v875 = vrot.slane %v866, %v874
          %v876 = vlaneseq
          %v877 = vshrl.u32 %v876, 7
          %v878 = vsub.s32 2, %v877
          %v879 = vrot.slane %v866, %v878
          %v880 = vlaneseq
          %v881 = vshrl.u32 %v880, 7
          %v882 = vsub.s32 3, %v881
          %v883 = vrot.slane %v866, %v882
          %v888 = vadd.f32 %v862, %v871
          %v889 = vadd.f32 %v863, %v875
          %v890 = vadd.f32 %v864, %v879
          %v891 = vadd.f32 %v865, %v883
          %v892 = vmax.f32 %v888, 0.0
          %v893 = vmax.f32 %v889, 0.0
          %v894 = vmax.f32 %v890, 0.0
          %v895 = vmax.f32 %v891, 0.0
          %896 = vst [vmem:[%s422] sm:$0xff] %v892
          %897 = vst [vmem:[%s422 + $0x8] sm:$0xff] %v893
          %898 = vst [vmem:[%s422 + $0x10] sm:$0xff] %v894
          %899 = vst [vmem:[%s422 + $0x18] sm:$0xff] %v895
        $region64: #{generator_forward.4} parent=39 // pred_fallthru
          _
        %s900 = smul.u32 4, %s31
        %p901 = scmp.lt.s32.totalorder %s30, 0
        %s902 = scalar_select %p901, %s30, 0
        %p903 = scmp.lt.s32.totalorder %s900, 7
        %s904 = scalar_select %p903, %s900, 7
        %s905 = smul.addr %s902, 8
        %s906 = sadd.s32 %s904, %s905
        %s907 = smul.addr %s906, 8
        %s908 = scalar_lea.vmem %s5, %s907
        // Predicated region
        $region65: #{generator_forward.4} parent=39 // pred_check
          %p909 = pneg %p198
        $region66: #{generator_forward.4} parent=39 // pred_check_branch
          %911 = sbr.rel (%p909) target = $region68
        $region67: #{generator_forward.4} parent=39 // pred_region
          %s912 = smul.u32 4, %s31
        $region68: #{generator_forward.4} parent=39 // pred_fallthru
          _
      $region40: #{generator_forward.4} parent=5 // pred_fallthru
        _
      %p913 = scmp.le.s32.totalorder 2, %s20
      // Predicated region
      $region69: #{generator_forward.4} parent=5 // pred_check
        %p914 = pneg %p913
      $region70: #{generator_forward.4} parent=5 // pred_check_branch
        %916 = sbr.rel (%p914) target = $region72
      $region71: #{generator_forward.4} parent=5 // pred_region
        %s917 = ssub.s32 %s20, 2
        // Predicated region
        $region73: #{generator_forward.4} parent=71 // pred_check
          %p918 = pneg %p204
        $region74: #{generator_forward.4} parent=71 // pred_check_branch
          %920 = sbr.rel (%p918) target = $region76
        $region75: #{generator_forward.4} parent=71 // pred_region
          %s921 = smul.u32 4, %s34
          %p922 = scmp.lt.s32.totalorder %s33, 0
          %s923 = scalar_select %p922, %s33, 0
          %p924 = scmp.lt.s32.totalorder %s921, 7
          %s925 = scalar_select %p924, %s921, 7
          %s926 = smul.addr %s923, 8
          %s927 = sadd.s32 %s925, %s926
          %s928 = smul.addr %s927, 8
          %s929 = scalar_lea.vmem %s5, %s928
        $region76: #{generator_forward.4} parent=71 // pred_fallthru
          _
      $region72: #{generator_forward.4} parent=5 // pred_fallthru
        _
    $region6: #{generator_forward.4} parent=1 // loop_footer
      %s24 = sadd.s32 1, %s20
    $region7: #{generator_forward.4} parent=1 // loop_footer_branch
      %19 = sbr.rel target = $region3
    $region8: #{generator_forward.4} parent=1 // loop_exit
      _
    %930 = vsyncpa [#allocation4], 1
    %s931 = scalar_lea.sflag [#allocation4], 1
    %932 = vsyncpa %s931, 1
    %933 = vsyncpa [#allocation6], 1
    %s934 = scalar_lea.sflag [#allocation6], 1
    %935 = vsyncpa %s934, 1
    %936 = vsyncpa [#allocation9], 1
    %s937 = scalar_lea.sflag [#allocation9], 1
    %938 = vsyncpa %s937, 1

// kernel: generator_forward.5
$region0: #{generator_forward.5}
  #allocation0 [shape = 'u32[]', space=smem, size = 0x4, offset = 0x4, fixed_abs, tag = 'smem constant byte address 0x4 - core index']
  #allocation1 [shape = 'u32[144,128]{1,0:T(1,128)}', space=vmem, size = 0x12000, scoped, tag = 'internal scratch']
  #allocation2 [shape = 'f32[8,1024]{1,0:T(8,128)}', space=vmem, size = 0x8000, scoped, tag = 'scratch operand']
  %s0 = inlined_call_operand.vmem [shape: bf16[8,1024], index: 0, kind: input, shape index: {}]
  %s1 = inlined_call_operand.hbm [shape: bf16[1024,2048], index: 1, kind: input, shape index: {}]
  %s2 = inlined_call_operand.hbm [shape: f32[1,2048], index: 2, kind: input, shape index: {}]
  %s3 = inlined_call_operand.hbm [shape: f32[1,2048], index: 3, kind: input, shape index: {}]
  %s4 = inlined_call_operand.hbm [shape: f32[1,2048], index: 4, kind: input, shape index: {}]
  %s5 = inlined_call_operand.vmem [shape: f32[8,2048], index: 5, kind: output, shape index: {}]
  %s6 = sld [smem:[#allocation0]]
  $region77: #{generator_forward.5} parent=0
    _
  %s8 = ssub.s32 1, %s6
  %s9 = scalar_select 0, %s8, %s6
  $region1: #{generator_forward.5} parent=0
    #allocation3 [shape = 'u8[4194304]{0}', space=vmem, size = 0x400000, scoped, tag = 'input window, operand 1']
    #allocation4 [shape = 's32[2]{0}', space=sflag, size = 0x8, scoped, tag = 'scoped memory for generator_forward.5']
    #allocation5 [shape = 'u8[8192]{0}', space=vmem, size = 0x2000, scoped, tag = 'input window, operand 2']
    #allocation6 [shape = 's32[2]{0}', space=sflag, size = 0x8, scoped, tag = 'scoped memory for generator_forward.5']
    #allocation7 [shape = 'u8[8192]{0}', space=vmem, size = 0x2000, scoped, tag = 'input window, operand 3']
    #allocation8 [shape = 'u8[8192]{0}', space=vmem, size = 0x2000, scoped, tag = 'input window, operand 4']
    #allocation9 [shape = 's32[2]{0}', space=sflag, size = 0x8, scoped, tag = 'scoped memory for generator_forward.5']
    %10 = vsyncpa [#allocation4], 0
    %s11 = scalar_lea.sflag [#allocation4], 1
    %12 = vsyncpa %s11, 0
    %13 = vsyncpa [#allocation6], 0
    %s14 = scalar_lea.sflag [#allocation6], 1
    %15 = vsyncpa %s14, 0
    %16 = vsyncpa [#allocation9], 0
    %s17 = scalar_lea.sflag [#allocation9], 1
    %18 = vsyncpa %s17, 0
    loop: start=0, step=1, limit=4
    $region2: #{generator_forward.5} parent=1 // loop_pre_header
      _
    $region3: #{generator_forward.5} parent=1 // loop_header
      %s20 = sphi 0, %s24
      %p21 = scmp.ge.s32.totalorder %s20, 4
      %s27 = sphi 0, %s46
      %s28 = sphi 0, %s42
      %s29 = sphi 0, %s38
      %s30 = sphi 0, %s27
      %s31 = sphi 0, %s28
      %s32 = sphi 0, %s29
      %s33 = sphi 0, %s30
      %s34 = sphi 0, %s31
      %s35 = sphi 0, %s32
      %s51 = sphi 0, %s53
      %s54 = sphi 0, %s51
      %s55 = sphi 0, %s54
      %s71 = sphi 0, %s55
      %s79 = sphi 0, %s81
      %s82 = sphi 0, %s79
      %s83 = sphi 0, %s82
      %s99 = sphi 0, %s83
      %s105 = sphi 0, %s107
      %s108 = sphi 0, %s105
      %s109 = sphi 0, %s108
      %s125 = sphi 0, %s109
      %s131 = sphi 0, %s133
      %s134 = sphi 0, %s131
      %s135 = sphi 0, %s134
      %s151 = sphi 0, %s135
      %s157 = sphi 0, %s159
      %s160 = sphi 0, %s157
      %s161 = sphi 0, %s160
      %s177 = sphi 0, %s161
      %s185 = sphi 0, %s187
      %s188 = sphi 0, %s185
      %s189 = sphi 0, %s188
      %s205 = sphi 0, %s189
    $region4: #{generator_forward.5} parent=1 // loop_header_branch
      %23 = sbr.rel (%p21) target = $region8
    $region5: #{generator_forward.5} parent=1 // loop_body
      %s25 = ssub.s32 %s20, 1
      %s26 = ssub.s32 %s20, 2
      %s36 = sadd.s32 1, %s29
      %p37 = scmp.ge.s32.totalorder %s36, 1
      %s38 = scalar_select %p37, 0, %s36
      %s39 = sadd.s32 1, %s28
      %s40 = scalar_select %p37, %s39, %s28
      %p41 = scmp.ge.s32.totalorder %s40, 2
      %s42 = scalar_select %p41, 0, %s40
      %s43 = sadd.s32 1, %s27
      %s44 = scalar_select %p41, %s43, %s27
      %p45 = scmp.ge.s32.totalorder %s44, 1
      %s46 = scalar_select %p45, 0, %s44
      %s47 = ssub.s32 %s27, %s46
      %s48 = ssub.s32 %s29, %s38
      %s49 = sor.u32 %s47, %s48
      %p50 = scmp.eq.s32.totalorder %s49, 0
      %s52 = sadd.s32 %s51, 1
      %s53 = scalar_select %p50, %s51, %s52
      %p56 = pneg %p50
      %p57 = scmp.eq.s32.totalorder %s20, 1
      %p58 = por %p56, %p57
      %p59 = scmp.ne.s32.totalorder %s51, %s54
      %p60 = scmp.eq.s32.totalorder %s20, 0
      %p61 = por %p59, %p60
      %p62 = scmp.ne.s32.totalorder %s51, %s54
      %p63 = scmp.eq.s32.totalorder %s25, 1
      %p64 = por %p62, %p63
      %p65 = scmp.ne.s32.totalorder %s54, %s55
      %p66 = scmp.eq.s32.totalorder %s25, 0
      %p67 = por %p65, %p66
      %p68 = scmp.ne.s32.totalorder %s54, %s55
      %p69 = scmp.eq.s32.totalorder %s26, 1
      %p70 = por %p68, %p69
      %p72 = scmp.ne.s32.totalorder %s55, %s71
      %p73 = scmp.eq.s32.totalorder %s26, 0
      %p74 = por %p72, %p73
      %s75 = ssub.s32 %s29, %s38
      %s76 = ssub.s32 %s28, %s42
      %s77 = sor.u32 %s75, %s76
      %p78 = scmp.eq.s32.totalorder %s77, 0
      %s80 = sadd.s32 %s79, 1
      %s81 = scalar_select %p78, %s79, %s80
      %p84 = pneg %p78
      %p85 = scmp.eq.s32.totalorder %s20, 1
      %p86 = por %p84, %p85
      %p87 = scmp.ne.s32.totalorder %s79, %s82
      %p88 = scmp.eq.s32.totalorder %s20, 0
      %p89 = por %p87, %p88
      %p90 = scmp.ne.s32.totalorder %s79, %s82
      %p91 = scmp.eq.s32.totalorder %s25, 1
      %p92 = por %p90, %p91
      %p93 = scmp.ne.s32.totalorder %s82, %s83
      %p94 = scmp.eq.s32.totalorder %s25, 0
      %p95 = por %p93, %p94
      %p96 = scmp.ne.s32.totalorder %s82, %s83
      %p97 = scmp.eq.s32.totalorder %s26, 1
      %p98 = por %p96, %p97
      %p100 = scmp.ne.s32.totalorder %s83, %s99
      %p101 = scmp.eq.s32.totalorder %s26, 0
      %p102 = por %p100, %p101
      %s103 = ssub.s32 %s28, %s42
      %p104 = scmp.eq.s32.totalorder %s103, 0
      %s106 = sadd.s32 %s105, 1
      %s107 = scalar_select %p104, %s105, %s106
      %p110 = pneg %p104
      %p111 = scmp.eq.s32.totalorder %s20, 1
      %p112 = por %p110, %p111
      %p113 = scmp.ne.s32.totalorder %s105, %s108
      %p114 = scmp.eq.s32.totalorder %s20, 0
      %p115 = por %p113, %p114
      %p116 = scmp.ne.s32.totalorder %s105, %s108
      %p117 = scmp.eq.s32.totalorder %s25, 1
      %p118 = por %p116, %p117
      %p119 = scmp.ne.s32.totalorder %s108, %s109
      %p120 = scmp.eq.s32.totalorder %s25, 0
      %p121 = por %p119, %p120
      %p122 = scmp.ne.s32.totalorder %s108, %s109
      %p123 = scmp.eq.s32.totalorder %s26, 1
      %p124 = por %p122, %p123
      %p126 = scmp.ne.s32.totalorder %s109, %s125
      %p127 = scmp.eq.s32.totalorder %s26, 0
      %p128 = por %p126, %p127
      %s129 = ssub.s32 %s28, %s42
      %p130 = scmp.eq.s32.totalorder %s129, 0
      %s132 = sadd.s32 %s131, 1
      %s133 = scalar_select %p130, %s131, %s132
      %p136 = pneg %p130
      %p137 = scmp.eq.s32.totalorder %s20, 1
      %p138 = por %p136, %p137
      %p139 = scmp.ne.s32.totalorder %s131, %s134
      %p140 = scmp.eq.s32.totalorder %s20, 0
      %p141 = por %p139, %p140
      %p142 = scmp.ne.s32.totalorder %s131, %s134
      %p143 = scmp.eq.s32.totalorder %s25, 1
      %p144 = por %p142, %p143
      %p145 = scmp.ne.s32.totalorder %s134, %s135
      %p146 = scmp.eq.s32.totalorder %s25, 0
      %p147 = por %p145, %p146
      %p148 = scmp.ne.s32.totalorder %s134, %s135
      %p149 = scmp.eq.s32.totalorder %s26, 1
      %p150 = por %p148, %p149
      %p152 = scmp.ne.s32.totalorder %s135, %s151
      %p153 = scmp.eq.s32.totalorder %s26, 0
      %p154 = por %p152, %p153
      %s155 = ssub.s32 %s28, %s42
      %p156 = scmp.eq.s32.totalorder %s155, 0
      %s158 = sadd.s32 %s157, 1
      %s159 = scalar_select %p156, %s157, %s158
      %p162 = pneg %p156
      %p163 = scmp.eq.s32.totalorder %s20, 1
      %p164 = por %p162, %p163
      %p165 = scmp.ne.s32.totalorder %s157, %s160
      %p166 = scmp.eq.s32.totalorder %s20, 0
      %p167 = por %p165, %p166
      %p168 = scmp.ne.s32.totalorder %s157, %s160
      %p169 = scmp.eq.s32.totalorder %s25, 1
      %p170 = por %p168, %p169
      %p171 = scmp.ne.s32.totalorder %s160, %s161
      %p172 = scmp.eq.s32.totalorder %s25, 0
      %p173 = por %p171, %p172
      %p174 = scmp.ne.s32.totalorder %s160, %s161
      %p175 = scmp.eq.s32.totalorder %s26, 1
      %p176 = por %p174, %p175
      %p178 = scmp.ne.s32.totalorder %s161, %s177
      %p179 = scmp.eq.s32.totalorder %s26, 0
      %p180 = por %p178, %p179
      %s181 = ssub.s32 %s27, %s46
      %s182 = ssub.s32 %s28, %s42
      %s183 = sor.u32 %s181, %s182
      %p184 = scmp.eq.s32.totalorder %s183, 0
      %s186 = sadd.s32 %s185, 1
      %s187 = scalar_select %p184, %s185, %s186
      %p190 = pneg %p184
      %p191 = scmp.eq.s32.totalorder %s20, 1
      %p192 = por %p190, %p191
      %p193 = scmp.ne.s32.totalorder %s185, %s188
      %p194 = scmp.eq.s32.totalorder %s20, 0
      %p195 = por %p193, %p194
      %p196 = scmp.ne.s32.totalorder %s185, %s188
      %p197 = scmp.eq.s32.totalorder %s25, 1
      %p198 = por %p196, %p197
      %p199 = scmp.ne.s32.totalorder %s188, %s189
      %p200 = scmp.eq.s32.totalorder %s25, 0
      %p201 = por %p199, %p200
      %p202 = scmp.ne.s32.totalorder %s188, %s189
      %p203 = scmp.eq.s32.totalorder %s26, 1
      %p204 = por %p202, %p203
      %p206 = scmp.ne.s32.totalorder %s189, %s205
      %p207 = scmp.eq.s32.totalorder %s26, 0
      %p208 = por %p206, %p207
      %p209 = scmp.le.s32.totalorder 1, %s20
      %p210 = scmp.lt.s32.totalorder %s20, 3
      %p211 = pnand %p209, %p210
      %p212 = pneg %p211
      // Predicated region
      $region9: #{generator_forward.5} parent=5 // pred_check
        _
      $region10: #{generator_forward.5} parent=5 // pred_check_branch
        %214 = sbr.rel (%p211) target = $region12
      $region11: #{generator_forward.5} parent=5 // pred_region
        %s215 = ssub.s32 %s20, 1
        // Predicated region
        $region13: #{generator_forward.5} parent=11 // pred_check
          %p216 = pneg %p67
        $region14: #{generator_forward.5} parent=11 // pred_check_branch
          %218 = sbr.rel (%p216) target = $region16
        $region15: #{generator_forward.5} parent=11 // pred_region
          %s219 = smul.u32 8, %s32
          %p220 = scmp.lt.s32.totalorder %s30, 0
          %s221 = scalar_select %p220, %s30, 0
          %p222 = scmp.lt.s32.totalorder %s219, 7
          %s223 = scalar_select %p222, %s219, 7
          %s224 = smul.addr %s221, 8
          %s225 = sadd.s32 %s223, %s224
          %s226 = smul.addr %s225, 4
          %s227 = scalar_lea.vmem %s0, %s226
          %s228 = smul.u32 8, %s32
        $region16: #{generator_forward.5} parent=11 // pred_fallthru
          _
      $region12: #{generator_forward.5} parent=5 // pred_fallthru
        _
      %p229 = scmp.lt.s32.totalorder %s20, 2
      // Predicated region
      $region17: #{generator_forward.5} parent=5 // pred_check
        %p230 = pneg %p229
      $region18: #{generator_forward.5} parent=5 // pred_check_branch
        %232 = sbr.rel (%p230) target = $region20
      $region19: #{generator_forward.5} parent=5 // pred_region
        // Predicated region
        $region21: #{generator_forward.5} parent=19 // pred_check
          %p233 = pneg %p89
        $region22: #{generator_forward.5} parent=19 // pred_check_branch
          %235 = sbr.rel (%p233) target = $region24
        $region23: #{generator_forward.5} parent=19 // pred_region
          %s236 = sand.u32 %s79, 1
          %s237 = scalar_lea.sflag [#allocation4], %s236
          %s238 = sand.u32 %s79, 1
          %s239 = smul.addr %s238, 4096
          %s240 = scalar_lea.vmem [#allocation3], %s239
          %s241 = smul.u32 128, %s29
          %s242 = smul.u32 8, %s28
          %s244 = ssub.s32 65536, 65536
          %245 = vsyncadd %s237, %s244
          %s246 = smul.addr %s241, 16
          %s247 = sadd.s32 %s242, %s246
          %s248 = smul.addr %s247, 64
          %s249 = scalar_lea.hbm %s1, %s248
          %s250 = sshll.u32 %s240, 4
          %s251 = int_to_ptr.vmem [resolvable:$true] %s250
          %256 = dma.hbm_to_vmem [thread:$0]  %s249, 65536, %s251, %s237, 1024, 512, 32
        $region24: #{generator_forward.5} parent=19 // pred_fallthru
          _
        // Predicated region
        $region25: #{generator_forward.5} parent=19 // pred_check
          %p257 = pneg %p115
        $region26: #{generator_forward.5} parent=19 // pred_check_branch
          %259 = sbr.rel (%p257) target = $region28
        $region27: #{generator_forward.5} parent=19 // pred_region
          %s260 = sand.u32 %s20, 1
          %s261 = scalar_lea.sflag [#allocation6], %s260
          %s262 = sand.u32 %s105, 1
          %s263 = smul.addr %s262, 8
          %s264 = scalar_lea.vmem [#allocation5], %s263
          %s265 = smul.u32 8, %s28
          %s267 = ssub.s32 128, 128
          %268 = vsyncadd %s261, %s267
          %s269 = smul.addr %s265, 16
          %s270 = scalar_lea.hbm %s2, %s269
          %s272 = sshll.u32 %s264, 4
          %s273 = int_to_ptr.vmem [resolvable:$true] %s272
          %275 = dma.hbm_to_vmem [thread:$0]  %s270, 128, %s273, %s261
        $region28: #{generator_forward.5} parent=19 // pred_fallthru
          _
        // Predicated region
        $region29: #{generator_forward.5} parent=19 // pred_check
          %p276 = pneg %p141
        $region30: #{generator_forward.5} parent=19 // pred_check_branch
          %278 = sbr.rel (%p276) target = $region32
        $region31: #{generator_forward.5} parent=19 // pred_region
          %s279 = sand.u32 %s20, 1
          %s280 = scalar_lea.sflag [#allocation6], %s279
          %s281 = sand.u32 %s131, 1
          %s282 = smul.addr %s281, 8
          %s283 = scalar_lea.vmem [#allocation7], %s282
          %s284 = smul.u32 8, %s28
          %s286 = ssub.s32 128, 128
          %287 = vsyncadd %s280, %s286
          %s288 = smul.addr %s284, 16
          %s289 = scalar_lea.hbm %s3, %s288
          %s291 = sshll.u32 %s283, 4
          %s292 = int_to_ptr.vmem [resolvable:$true] %s291
          %294 = dma.hbm_to_vmem [thread:$0]  %s289, 128, %s292, %s280
        $region32: #{generator_forward.5} parent=19 // pred_fallthru
          _
        // Predicated region
        $region33: #{generator_forward.5} parent=19 // pred_check
          %p295 = pneg %p167
        $region34: #{generator_forward.5} parent=19 // pred_check_branch
          %297 = sbr.rel (%p295) target = $region36
        $region35: #{generator_forward.5} parent=19 // pred_region
          %s298 = sand.u32 %s157, 1
          %s299 = scalar_lea.sflag [#allocation9], %s298
          %s300 = sand.u32 %s157, 1
          %s301 = smul.addr %s300, 8
          %s302 = scalar_lea.vmem [#allocation8], %s301
          %s303 = smul.u32 8, %s28
          %s305 = ssub.s32 128, 128
          %306 = vsyncadd %s299, %s305
          %s307 = smul.addr %s303, 16
          %s308 = scalar_lea.hbm %s4, %s307
          %s310 = sshll.u32 %s302, 4
          %s311 = int_to_ptr.vmem [resolvable:$true] %s310
          %313 = dma.hbm_to_vmem [thread:$0]  %s308, 128, %s311, %s299
        $region36: #{generator_forward.5} parent=19 // pred_fallthru
          _
      $region20: #{generator_forward.5} parent=5 // pred_fallthru
        _
      %p314 = scmp.le.s32.totalorder 1, %s20
      %p315 = scmp.lt.s32.totalorder %s20, 3
      %p316 = pnand %p314, %p315
      %p317 = pneg %p316
      // Predicated region
      $region37: #{generator_forward.5} parent=5 // pred_check
        _
      $region38: #{generator_forward.5} parent=5 // pred_check_branch
        %319 = sbr.rel (%p316) target = $region40
      $region39: #{generator_forward.5} parent=5 // pred_region
        %s320 = ssub.s32 %s20, 1
        %s321 = sand.u32 %s82, 1
        %s322 = scalar_lea.sflag [#allocation4], %s321
        %s323 = sand.u32 %s82, 1
        %s324 = smul.addr %s323, 4096
        %s325 = scalar_lea.vmem [#allocation3], %s324
        // Predicated region
        $region41: #{generator_forward.5} parent=39 // pred_check
          %p326 = pneg %p95
        $region42: #{generator_forward.5} parent=39 // pred_check_branch
          %328 = sbr.rel (%p326) target = $region44
        $region43: #{generator_forward.5} parent=39 // pred_region
          %329 = dma.done %s322, 65536
        $region44: #{generator_forward.5} parent=39 // pred_fallthru
          _
        %s330 = sand.u32 %s25, 1
        %s331 = scalar_lea.sflag [#allocation6], %s330
        %s332 = sand.u32 %s108, 1
        %s333 = smul.addr %s332, 8
        %s334 = scalar_lea.vmem [#allocation5], %s333
        // Predicated region
        $region45: #{generator_forward.5} parent=39 // pred_check
          %p335 = pneg %p121
        $region46: #{generator_forward.5} parent=39 // pred_check_branch
          %337 = sbr.rel (%p335) target = $region48
        $region47: #{generator_forward.5} parent=39 // pred_region
          %338 = dma.done %s331, 128
        $region48: #{generator_forward.5} parent=39 // pred_fallthru
          _
        %s339 = sand.u32 %s25, 1
        %s340 = scalar_lea.sflag [#allocation6], %s339
        %s341 = sand.u32 %s134, 1
        %s342 = smul.addr %s341, 8
        %s343 = scalar_lea.vmem [#allocation7], %s342
        // Predicated region
        $region49: #{generator_forward.5} parent=39 // pred_check
          %p344 = pneg %p147
        $region50: #{generator_forward.5} parent=39 // pred_check_branch
          %346 = sbr.rel (%p344) target = $region52
        $region51: #{generator_forward.5} parent=39 // pred_region
          %347 = dma.done %s340, 128
        $region52: #{generator_forward.5} parent=39 // pred_fallthru
          _
        %s348 = sand.u32 %s160, 1
        %s349 = scalar_lea.sflag [#allocation9], %s348
        %s350 = sand.u32 %s160, 1
        %s351 = smul.addr %s350, 8
        %s352 = scalar_lea.vmem [#allocation8], %s351
        // Predicated region
        $region53: #{generator_forward.5} parent=39 // pred_check
          %p353 = pneg %p173
        $region54: #{generator_forward.5} parent=39 // pred_check_branch
          %355 = sbr.rel (%p353) target = $region56
        $region55: #{generator_forward.5} parent=39 // pred_region
          %356 = dma.done %s349, 128
        $region56: #{generator_forward.5} parent=39 // pred_fallthru
          _
        %s357 = smul.u32 8, %s32
        %p358 = scmp.lt.s32.totalorder %s30, 0
        %s359 = scalar_select %p358, %s30, 0
        %p360 = scmp.lt.s32.totalorder %s357, 7
        %s361 = scalar_select %p360, %s357, 7
        %s362 = smul.addr %s359, 8
        %s363 = sadd.s32 %s361, %s362
        %s364 = smul.addr %s363, 4
        %s365 = scalar_lea.vmem %s0, %s364
        %p366 = pneg %p67
        %p367 = pneg %p64
        %s368 = sand.u32 %s82, 1
        %s369 = scalar_lea.sflag [#allocation4], %s368
        %s370 = sand.u32 %s82, 1
        %s371 = smul.addr %s370, 4096
        %s372 = scalar_lea.vmem [#allocation3], %s371
        %p373 = pneg %p95
        %p374 = pneg %p92
        %s375 = sand.u32 %s25, 1
        %s376 = scalar_lea.sflag [#allocation6], %s375
        %s377 = sand.u32 %s108, 1
        %s378 = smul.addr %s377, 8
        %s379 = scalar_lea.vmem [#allocation5], %s378
        %p380 = pneg %p121
        %p381 = pneg %p118
        %s382 = sand.u32 %s25, 1
        %s383 = scalar_lea.sflag [#allocation6], %s382
        %s384 = sand.u32 %s134, 1
        %s385 = smul.addr %s384, 8
        %s386 = scalar_lea.vmem [#allocation7], %s385
        %p387 = pneg %p147
        %p388 = pneg %p144
        %s389 = sand.u32 %s160, 1
        %s390 = scalar_lea.sflag [#allocation9], %s389
        %s391 = sand.u32 %s160, 1
        %s392 = smul.addr %s391, 8
        %s393 = scalar_lea.vmem [#allocation8], %s392
        %p394 = pneg %p173
        %p395 = pneg %p170
        %p396 = pneg %p201
        %p397 = pneg %p198
        %s398 = smul.u32 8, %s31
        %p399 = scmp.lt.s32.totalorder %s30, 0
        %s400 = scalar_select %p399, %s30, 0
        %p401 = scmp.lt.s32.totalorder %s398, 15
        %s402 = scalar_select %p401, %s398, 15
        %s403 = smul.addr %s400, 16
        %s404 = sadd.s32 %s402, %s403
        %s405 = smul.addr %s404, 8
        %s406 = scalar_lea.vmem %s5, %s405
        %s407 = smul.u32 8, %s32
        %p408 = scmp.lt.s32.totalorder %s30, 0
        %s409 = scalar_select %p408, %s30, 0
        %p410 = scmp.lt.s32.totalorder %s407, 7
        %s411 = scalar_select %p410, %s407, 7
        %s412 = smul.addr %s409, 8
        %s413 = sadd.s32 %s411, %s412
        %s414 = smul.addr %s413, 4
        %s415 = scalar_lea.vmem %s0, %s414
        %s416 = smul.u32 8, %s32
        %s417 = smul.u32 128, %s32
        %s418 = smul.u32 8, %s31
        %s419 = smul.u32 8, %s31
        %s420 = smul.u32 8, %s31
        %s421 = smul.u32 8, %s31
        %s422 = smul.u32 8, %s31
        %p423 = scmp.lt.s32.totalorder %s30, 0
        %s424 = scalar_select %p423, %s30, 0
        %p425 = scmp.lt.s32.totalorder %s422, 15
        %s426 = scalar_select %p425, %s422, 15
        %s427 = smul.addr %s424, 16
        %s428 = sadd.s32 %s426, %s427
        %s429 = smul.addr %s428, 8
        %s430 = scalar_lea.vmem %s5, %s429
        %s431 = smul.u32 8, %s31
        %p432 = scmp.eq.s32.totalorder %s32, 0
        // Predicated region
        $region57: #{generator_forward.5} parent=39 // pred_check
          %p433 = pneg %p432
        $region58: #{generator_forward.5} parent=39 // pred_check_branch
          %435 = sbr.rel (%p433) target = $region60
        $region59: #{generator_forward.5} parent=39 // pred_region
          %436 = vst [vmem:[#allocation2] sm:$0xff] 0.0
          %437 = vst [vmem:[#allocation2 + $0x8] sm:$0xff] 0.0
          %438 = vst [vmem:[#allocation2 + $0x10] sm:$0xff] 0.0
          %439 = vst [vmem:[#allocation2 + $0x18] sm:$0xff] 0.0
          %440 = vst [vmem:[#allocation2 + $0x20] sm:$0xff] 0.0
          %441 = vst [vmem:[#allocation2 + $0x28] sm:$0xff] 0.0
          %442 = vst [vmem:[#allocation2 + $0x30] sm:$0xff] 0.0
          %443 = vst [vmem:[#allocation2 + $0x38] sm:$0xff] 0.0
        $region60: #{generator_forward.5} parent=39 // pred_fallthru
          _
        %v444 = vld [vmem:[#allocation2] sm:$0xff]
        %v445 = vld [vmem:[#allocation2 + $0x8] sm:$0xff]
        %v446 = vld [vmem:[#allocation2 + $0x10] sm:$0xff]
        %v447 = vld [vmem:[#allocation2 + $0x18] sm:$0xff]
        %v448 = vld [vmem:[#allocation2 + $0x20] sm:$0xff]
        %v449 = vld [vmem:[#allocation2 + $0x28] sm:$0xff]
        %v450 = vld [vmem:[#allocation2 + $0x30] sm:$0xff]
        %v451 = vld [vmem:[#allocation2 + $0x38] sm:$0xff]
        %v452 = vld [vmem:[%s415] sm:$0xff]
        %v453 = vld [vmem:[%s415 + $0x8] sm:$0xff]
        %v454 = vld [vmem:[%s415 + $0x10] sm:$0xff]
        %v455 = vld [vmem:[%s415 + $0x18] sm:$0xff]
        %v456 = vld [vmem:[%s325] sm:$0xff]
        %v457 = vld [vmem:[%s325 + $0x8] sm:$0xff]
        %v458 = vld [vmem:[%s325 + $0x10] sm:$0xff]
        %v459 = vld [vmem:[%s325 + $0x18] sm:$0xff]
        %v460 = vld [vmem:[%s325 + $0x20] sm:$0xff]
        %v461 = vld [vmem:[%s325 + $0x28] sm:$0xff]
        %v462 = vld [vmem:[%s325 + $0x30] sm:$0xff]
        %v463 = vld [vmem:[%s325 + $0x38] sm:$0xff]
        %v464 = vld [vmem:[%s325 + $0x40] sm:$0xff]
        %v465 = vld [vmem:[%s325 + $0x48] sm:$0xff]
        %v466 = vld [vmem:[%s325 + $0x50] sm:$0xff]
        %v467 = vld [vmem:[%s325 + $0x58] sm:$0xff]
        %v468 = vld [vmem:[%s325 + $0x60] sm:$0xff]
        %v469 = vld [vmem:[%s325 + $0x68] sm:$0xff]
        %v470 = vld [vmem:[%s325 + $0x70] sm:$0xff]
        %v471 = vld [vmem:[%s325 + $0x78] sm:$0xff]
        %v472 = vld [vmem:[%s325 + $0x80] sm:$0xff]
        %v473 = vld [vmem:[%s325 + $0x88] sm:$0xff]
        %v474 = vld [vmem:[%s325 + $0x90] sm:$0xff]
        %v475 = vld [vmem:[%s325 + $0x98] sm:$0xff]
        %v476 = vld [vmem:[%s325 + $0xa0] sm:$0xff]
        %v477 = vld [vmem:[%s325 + $0xa8] sm:$0xff]
        %v478 = vld [vmem:[%s325 + $0xb0] sm:$0xff]
        %v479 = vld [vmem:[%s325 + $0xb8] sm:$0xff]
        %v480 = vld [vmem:[%s325 + $0xc0] sm:$0xff]
        %v481 = vld [vmem:[%s325 + $0xc8] sm:$0xff]
        %v482 = vld [vmem:[%s325 + $0xd0] sm:$0xff]
        %v483 = vld [vmem:[%s325 + $0xd8] sm:$0xff]
        %v484 = vld [vmem:[%s325 + $0xe0] sm:$0xff]
        %v485 = vld [vmem:[%s325 + $0xe8] sm:$0xff]
        %v486 = vld [vmem:[%s325 + $0xf0] sm:$0xff]
        %v487 = vld [vmem:[%s325 + $0xf8] sm:$0xff]
        %v488 = vld [vmem:[%s325 + $0x100] sm:$0xff]
        %v489 = vld [vmem:[%s325 + $0x108] sm:$0xff]
        %v490 = vld [vmem:[%s325 + $0x110] sm:$0xff]
        %v491 = vld [vmem:[%s325 + $0x118] sm:$0xff]
        %v492 = vld [vmem:[%s325 + $0x120] sm:$0xff]
        %v493 = vld [vmem:[%s325 + $0x128] sm:$0xff]
        %v494 = vld [vmem:[%s325 + $0x130] sm:$0xff]
        %v495 = vld [vmem:[%s325 + $0x138] sm:$0xff]
        %v496 = vld [vmem:[%s325 + $0x140] sm:$0xff]
        %v497 = vld [vmem:[%s325 + $0x148] sm:$0xff]
        %v498 = vld [vmem:[%s325 + $0x150] sm:$0xff]
        %v499 = vld [vmem:[%s325 + $0x158] sm:$0xff]
        %v500 = vld [vmem:[%s325 + $0x160] sm:$0xff]
        %v501 = vld [vmem:[%s325 + $0x168] sm:$0xff]
        %v502 = vld [vmem:[%s325 + $0x170] sm:$0xff]
        %v503 = vld [vmem:[%s325 + $0x178] sm:$0xff]
        %v504 = vld [vmem:[%s325 + $0x180] sm:$0xff]
        %v505 = vld [vmem:[%s325 + $0x188] sm:$0xff]
        %v506 = vld [vmem:[%s325 + $0x190] sm:$0xff]
        %v507 = vld [vmem:[%s325 + $0x198] sm:$0xff]
        %v508 = vld [vmem:[%s325 + $0x1a0] sm:$0xff]
        %v509 = vld [vmem:[%s325 + $0x1a8] sm:$0xff]
        %v510 = vld [vmem:[%s325 + $0x1b0] sm:$0xff]
        %v511 = vld [vmem:[%s325 + $0x1b8] sm:$0xff]
        %v512 = vld [vmem:[%s325 + $0x1c0] sm:$0xff]
        %v513 = vld [vmem:[%s325 + $0x1c8] sm:$0xff]
        %v514 = vld [vmem:[%s325 + $0x1d0] sm:$0xff]
        %v515 = vld [vmem:[%s325 + $0x1d8] sm:$0xff]
        %v516 = vld [vmem:[%s325 + $0x1e0] sm:$0xff]
        %v517 = vld [vmem:[%s325 + $0x1e8] sm:$0xff]
        %v518 = vld [vmem:[%s325 + $0x1f0] sm:$0xff]
        %v519 = vld [vmem:[%s325 + $0x1f8] sm:$0xff]
        %v520 = vld [vmem:[%s325 + $0x200] sm:$0xff]
        %v521 = vld [vmem:[%s325 + $0x208] sm:$0xff]
        %v522 = vld [vmem:[%s325 + $0x210] sm:$0xff]
        %v523 = vld [vmem:[%s325 + $0x218] sm:$0xff]
        %v524 = vld [vmem:[%s325 + $0x220] sm:$0xff]
        %v525 = vld [vmem:[%s325 + $0x228] sm:$0xff]
        %v526 = vld [vmem:[%s325 + $0x230] sm:$0xff]
        %v527 = vld [vmem:[%s325 + $0x238] sm:$0xff]
        %v528 = vld [vmem:[%s325 + $0x240] sm:$0xff]
        %v529 = vld [vmem:[%s325 + $0x248] sm:$0xff]
        %v530 = vld [vmem:[%s325 + $0x250] sm:$0xff]
        %v531 = vld [vmem:[%s325 + $0x258] sm:$0xff]
        %v532 = vld [vmem:[%s325 + $0x260] sm:$0xff]
        %v533 = vld [vmem:[%s325 + $0x268] sm:$0xff]
        %v534 = vld [vmem:[%s325 + $0x270] sm:$0xff]
        %v535 = vld [vmem:[%s325 + $0x278] sm:$0xff]
        %v536 = vld [vmem:[%s325 + $0x280] sm:$0xff]
        %v537 = vld [vmem:[%s325 + $0x288] sm:$0xff]
        %v538 = vld [vmem:[%s325 + $0x290] sm:$0xff]
        %v539 = vld [vmem:[%s325 + $0x298] sm:$0xff]
        %v540 = vld [vmem:[%s325 + $0x2a0] sm:$0xff]
        %v541 = vld [vmem:[%s325 + $0x2a8] sm:$0xff]
        %v542 = vld [vmem:[%s325 + $0x2b0] sm:$0xff]
        %v543 = vld [vmem:[%s325 + $0x2b8] sm:$0xff]
        %v544 = vld [vmem:[%s325 + $0x2c0] sm:$0xff]
        %v545 = vld [vmem:[%s325 + $0x2c8] sm:$0xff]
        %v546 = vld [vmem:[%s325 + $0x2d0] sm:$0xff]
        %v547 = vld [vmem:[%s325 + $0x2d8] sm:$0xff]
        %v548 = vld [vmem:[%s325 + $0x2e0] sm:$0xff]
        %v549 = vld [vmem:[%s325 + $0x2e8] sm:$0xff]
        %v550 = vld [vmem:[%s325 + $0x2f0] sm:$0xff]
        %v551 = vld [vmem:[%s325 + $0x2f8] sm:$0xff]
        %v552 = vld [vmem:[%s325 + $0x300] sm:$0xff]
        %v553 = vld [vmem:[%s325 + $0x308] sm:$0xff]
        %v554 = vld [vmem:[%s325 + $0x310] sm:$0xff]
        %v555 = vld [vmem:[%s325 + $0x318] sm:$0xff]
        %v556 = vld [vmem:[%s325 + $0x320] sm:$0xff]
        %v557 = vld [vmem:[%s325 + $0x328] sm:$0xff]
        %v558 = vld [vmem:[%s325 + $0x330] sm:$0xff]
        %v559 = vld [vmem:[%s325 + $0x338] sm:$0xff]
        %v560 = vld [vmem:[%s325 + $0x340] sm:$0xff]
        %v561 = vld [vmem:[%s325 + $0x348] sm:$0xff]
        %v562 = vld [vmem:[%s325 + $0x350] sm:$0xff]
        %v563 = vld [vmem:[%s325 + $0x358] sm:$0xff]
        %v564 = vld [vmem:[%s325 + $0x360] sm:$0xff]
        %v565 = vld [vmem:[%s325 + $0x368] sm:$0xff]
        %v566 = vld [vmem:[%s325 + $0x370] sm:$0xff]
        %v567 = vld [vmem:[%s325 + $0x378] sm:$0xff]
        %v568 = vld [vmem:[%s325 + $0x380] sm:$0xff]
        %v569 = vld [vmem:[%s325 + $0x388] sm:$0xff]
        %v570 = vld [vmem:[%s325 + $0x390] sm:$0xff]
        %v571 = vld [vmem:[%s325 + $0x398] sm:$0xff]
        %v572 = vld [vmem:[%s325 + $0x3a0] sm:$0xff]
        %v573 = vld [vmem:[%s325 + $0x3a8] sm:$0xff]
        %v574 = vld [vmem:[%s325 + $0x3b0] sm:$0xff]
        %v575 = vld [vmem:[%s325 + $0x3b8] sm:$0xff]
        %v576 = vld [vmem:[%s325 + $0x3c0] sm:$0xff]
        %v577 = vld [vmem:[%s325 + $0x3c8] sm:$0xff]
        %v578 = vld [vmem:[%s325 + $0x3d0] sm:$0xff]
        %v579 = vld [vmem:[%s325 + $0x3d8] sm:$0xff]
        %v580 = vld [vmem:[%s325 + $0x3e0] sm:$0xff]
        %v581 = vld [vmem:[%s325 + $0x3e8] sm:$0xff]
        %v582 = vld [vmem:[%s325 + $0x3f0] sm:$0xff]
        %v583 = vld [vmem:[%s325 + $0x3f8] sm:$0xff]
        %v584 = vld [vmem:[%s325 + $0x400] sm:$0xff]
        %v585 = vld [vmem:[%s325 + $0x408] sm:$0xff]
        %v586 = vld [vmem:[%s325 + $0x410] sm:$0xff]
        %v587 = vld [vmem:[%s325 + $0x418] sm:$0xff]
        %v588 = vld [vmem:[%s325 + $0x420] sm:$0xff]
        %v589 = vld [vmem:[%s325 + $0x428] sm:$0xff]
        %v590 = vld [vmem:[%s325 + $0x430] sm:$0xff]
        %v591 = vld [vmem:[%s325 + $0x438] sm:$0xff]
        %v592 = vld [vmem:[%s325 + $0x440] sm:$0xff]
        %v593 = vld [vmem:[%s325 + $0x448] sm:$0xff]
        %v594 = vld [vmem:[%s325 + $0x450] sm:$0xff]
        %v595 = vld [vmem:[%s325 + $0x458] sm:$0xff]
        %v596 = vld [vmem:[%s325 + $0x460] sm:$0xff]
        %v597 = vld [vmem:[%s325 + $0x468] sm:$0xff]
        %v598 = vld [vmem:[%s325 + $0x470] sm:$0xff]
        %v599 = vld [vmem:[%s325 + $0x478] sm:$0xff]
        %v600 = vld [vmem:[%s325 + $0x480] sm:$0xff]
        %v601 = vld [vmem:[%s325 + $0x488] sm:$0xff]
        %v602 = vld [vmem:[%s325 + $0x490] sm:$0xff]
        %v603 = vld [vmem:[%s325 + $0x498] sm:$0xff]
        %v604 = vld [vmem:[%s325 + $0x4a0] sm:$0xff]
        %v605 = vld [vmem:[%s325 + $0x4a8] sm:$0xff]
        %v606 = vld [vmem:[%s325 + $0x4b0] sm:$0xff]
        %v607 = vld [vmem:[%s325 + $0x4b8] sm:$0xff]
        %v608 = vld [vmem:[%s325 + $0x4c0] sm:$0xff]
        %v609 = vld [vmem:[%s325 + $0x4c8] sm:$0xff]
        %v610 = vld [vmem:[%s325 + $0x4d0] sm:$0xff]
        %v611 = vld [vmem:[%s325 + $0x4d8] sm:$0xff]
        %v612 = vld [vmem:[%s325 + $0x4e0] sm:$0xff]
        %v613 = vld [vmem:[%s325 + $0x4e8] sm:$0xff]
        %v614 = vld [vmem:[%s325 + $0x4f0] sm:$0xff]
        %v615 = vld [vmem:[%s325 + $0x4f8] sm:$0xff]
        %v616 = vld [vmem:[%s325 + $0x500] sm:$0xff]
        %v617 = vld [vmem:[%s325 + $0x508] sm:$0xff]
        %v618 = vld [vmem:[%s325 + $0x510] sm:$0xff]
        %v619 = vld [vmem:[%s325 + $0x518] sm:$0xff]
        %v620 = vld [vmem:[%s325 + $0x520] sm:$0xff]
        %v621 = vld [vmem:[%s325 + $0x528] sm:$0xff]
        %v622 = vld [vmem:[%s325 + $0x530] sm:$0xff]
        %v623 = vld [vmem:[%s325 + $0x538] sm:$0xff]
        %v624 = vld [vmem:[%s325 + $0x540] sm:$0xff]
        %v625 = vld [vmem:[%s325 + $0x548] sm:$0xff]
        %v626 = vld [vmem:[%s325 + $0x550] sm:$0xff]
        %v627 = vld [vmem:[%s325 + $0x558] sm:$0xff]
        %v628 = vld [vmem:[%s325 + $0x560] sm:$0xff]
        %v629 = vld [vmem:[%s325 + $0x568] sm:$0xff]
        %v630 = vld [vmem:[%s325 + $0x570] sm:$0xff]
        %v631 = vld [vmem:[%s325 + $0x578] sm:$0xff]
        %v632 = vld [vmem:[%s325 + $0x580] sm:$0xff]
        %v633 = vld [vmem:[%s325 + $0x588] sm:$0xff]
        %v634 = vld [vmem:[%s325 + $0x590] sm:$0xff]
        %v635 = vld [vmem:[%s325 + $0x598] sm:$0xff]
        %v636 = vld [vmem:[%s325 + $0x5a0] sm:$0xff]
        %v637 = vld [vmem:[%s325 + $0x5a8] sm:$0xff]
        %v638 = vld [vmem:[%s325 + $0x5b0] sm:$0xff]
        %v639 = vld [vmem:[%s325 + $0x5b8] sm:$0xff]
        %v640 = vld [vmem:[%s325 + $0x5c0] sm:$0xff]
        %v641 = vld [vmem:[%s325 + $0x5c8] sm:$0xff]
        %v642 = vld [vmem:[%s325 + $0x5d0] sm:$0xff]
        %v643 = vld [vmem:[%s325 + $0x5d8] sm:$0xff]
        %v644 = vld [vmem:[%s325 + $0x5e0] sm:$0xff]
        %v645 = vld [vmem:[%s325 + $0x5e8] sm:$0xff]
        %v646 = vld [vmem:[%s325 + $0x5f0] sm:$0xff]
        %v647 = vld [vmem:[%s325 + $0x5f8] sm:$0xff]
        %v648 = vld [vmem:[%s325 + $0x600] sm:$0xff]
        %v649 = vld [vmem:[%s325 + $0x608] sm:$0xff]
        %v650 = vld [vmem:[%s325 + $0x610] sm:$0xff]
        %v651 = vld [vmem:[%s325 + $0x618] sm:$0xff]
        %v652 = vld [vmem:[%s325 + $0x620] sm:$0xff]
        %v653 = vld [vmem:[%s325 + $0x628] sm:$0xff]
        %v654 = vld [vmem:[%s325 + $0x630] sm:$0xff]
        %v655 = vld [vmem:[%s325 + $0x638] sm:$0xff]
        %v656 = vld [vmem:[%s325 + $0x640] sm:$0xff]
        %v657 = vld [vmem:[%s325 + $0x648] sm:$0xff]
        %v658 = vld [vmem:[%s325 + $0x650] sm:$0xff]
        %v659 = vld [vmem:[%s325 + $0x658] sm:$0xff]
        %v660 = vld [vmem:[%s325 + $0x660] sm:$0xff]
        %v661 = vld [vmem:[%s325 + $0x668] sm:$0xff]
        %v662 = vld [vmem:[%s325 + $0x670] sm:$0xff]
        %v663 = vld [vmem:[%s325 + $0x678] sm:$0xff]
        %v664 = vld [vmem:[%s325 + $0x680] sm:$0xff]
        %v665 = vld [vmem:[%s325 + $0x688] sm:$0xff]
        %v666 = vld [vmem:[%s325 + $0x690] sm:$0xff]
        %v667 = vld [vmem:[%s325 + $0x698] sm:$0xff]
        %v668 = vld [vmem:[%s325 + $0x6a0] sm:$0xff]
        %v669 = vld [vmem:[%s325 + $0x6a8] sm:$0xff]
        %v670 = vld [vmem:[%s325 + $0x6b0] sm:$0xff]
        %v671 = vld [vmem:[%s325 + $0x6b8] sm:$0xff]
        %v672 = vld [vmem:[%s325 + $0x6c0] sm:$0xff]
        %v673 = vld [vmem:[%s325 + $0x6c8] sm:$0xff]
        %v674 = vld [vmem:[%s325 + $0x6d0] sm:$0xff]
        %v675 = vld [vmem:[%s325 + $0x6d8] sm:$0xff]
        %v676 = vld [vmem:[%s325 + $0x6e0] sm:$0xff]
        %v677 = vld [vmem:[%s325 + $0x6e8] sm:$0xff]
        %v678 = vld [vmem:[%s325 + $0x6f0] sm:$0xff]
        %v679 = vld [vmem:[%s325 + $0x6f8] sm:$0xff]
        %v680 = vld [vmem:[%s325 + $0x700] sm:$0xff]
        %v681 = vld [vmem:[%s325 + $0x708] sm:$0xff]
        %v682 = vld [vmem:[%s325 + $0x710] sm:$0xff]
        %v683 = vld [vmem:[%s325 + $0x718] sm:$0xff]
        %v684 = vld [vmem:[%s325 + $0x720] sm:$0xff]
        %v685 = vld [vmem:[%s325 + $0x728] sm:$0xff]
        %v686 = vld [vmem:[%s325 + $0x730] sm:$0xff]
        %v687 = vld [vmem:[%s325 + $0x738] sm:$0xff]
        %v688 = vld [vmem:[%s325 + $0x740] sm:$0xff]
        %v689 = vld [vmem:[%s325 + $0x748] sm:$0xff]
        %v690 = vld [vmem:[%s325 + $0x750] sm:$0xff]
        %v691 = vld [vmem:[%s325 + $0x758] sm:$0xff]
        %v692 = vld [vmem:[%s325 + $0x760] sm:$0xff]
        %v693 = vld [vmem:[%s325 + $0x768] sm:$0xff]
        %v694 = vld [vmem:[%s325 + $0x770] sm:$0xff]
        %v695 = vld [vmem:[%s325 + $0x778] sm:$0xff]
        %v696 = vld [vmem:[%s325 + $0x780] sm:$0xff]
        %v697 = vld [vmem:[%s325 + $0x788] sm:$0xff]
        %v698 = vld [vmem:[%s325 + $0x790] sm:$0xff]
        %v699 = vld [vmem:[%s325 + $0x798] sm:$0xff]
        %v700 = vld [vmem:[%s325 + $0x7a0] sm:$0xff]
        %v701 = vld [vmem:[%s325 + $0x7a8] sm:$0xff]
        %v702 = vld [vmem:[%s325 + $0x7b0] sm:$0xff]
        %v703 = vld [vmem:[%s325 + $0x7b8] sm:$0xff]
        %v704 = vld [vmem:[%s325 + $0x7c0] sm:$0xff]
        %v705 = vld [vmem:[%s325 + $0x7c8] sm:$0xff]
        %v706 = vld [vmem:[%s325 + $0x7d0] sm:$0xff]
        %v707 = vld [vmem:[%s325 + $0x7d8] sm:$0xff]
        %v708 = vld [vmem:[%s325 + $0x7e0] sm:$0xff]
        %v709 = vld [vmem:[%s325 + $0x7e8] sm:$0xff]
        %v710 = vld [vmem:[%s325 + $0x7f0] sm:$0xff]
        %v711 = vld [vmem:[%s325 + $0x7f8] sm:$0xff]
        %v712 = vld [vmem:[%s325 + $0x800] sm:$0xff]
        %v713 = vld [vmem:[%s325 + $0x808] sm:$0xff]
        %v714 = vld [vmem:[%s325 + $0x810] sm:$0xff]
        %v715 = vld [vmem:[%s325 + $0x818] sm:$0xff]
        %v716 = vld [vmem:[%s325 + $0x820] sm:$0xff]
        %v717 = vld [vmem:[%s325 + $0x828] sm:$0xff]
        %v718 = vld [vmem:[%s325 + $0x830] sm:$0xff]
        %v719 = vld [vmem:[%s325 + $0x838] sm:$0xff]
        %v720 = vld [vmem:[%s325 + $0x840] sm:$0xff]
        %v721 = vld [vmem:[%s325 + $0x848] sm:$0xff]
        %v722 = vld [vmem:[%s325 + $0x850] sm:$0xff]
        %v723 = vld [vmem:[%s325 + $0x858] sm:$0xff]
        %v724 = vld [vmem:[%s325 + $0x860] sm:$0xff]
        %v725 = vld [vmem:[%s325 + $0x868] sm:$0xff]
        %v726 = vld [vmem:[%s325 + $0x870] sm:$0xff]
        %v727 = vld [vmem:[%s325 + $0x878] sm:$0xff]
        %v728 = vld [vmem:[%s325 + $0x880] sm:$0xff]
        %v729 = vld [vmem:[%s325 + $0x888] sm:$0xff]
        %v730 = vld [vmem:[%s325 + $0x890] sm:$0xff]
        %v731 = vld [vmem:[%s325 + $0x898] sm:$0xff]
        %v732 = vld [vmem:[%s325 + $0x8a0] sm:$0xff]
        %v733 = vld [vmem:[%s325 + $0x8a8] sm:$0xff]
        %v734 = vld [vmem:[%s325 + $0x8b0] sm:$0xff]
        %v735 = vld [vmem:[%s325 + $0x8b8] sm:$0xff]
        %v736 = vld [vmem:[%s325 + $0x8c0] sm:$0xff]
        %v737 = vld [vmem:[%s325 + $0x8c8] sm:$0xff]
        %v738 = vld [vmem:[%s325 + $0x8d0] sm:$0xff]
        %v739 = vld [vmem:[%s325 + $0x8d8] sm:$0xff]
        %v740 = vld [vmem:[%s325 + $0x8e0] sm:$0xff]
        %v741 = vld [vmem:[%s325 + $0x8e8] sm:$0xff]
        %v742 = vld [vmem:[%s325 + $0x8f0] sm:$0xff]
        %v743 = vld [vmem:[%s325 + $0x8f8] sm:$0xff]
        %v744 = vld [vmem:[%s325 + $0x900] sm:$0xff]
        %v745 = vld [vmem:[%s325 + $0x908] sm:$0xff]
        %v746 = vld [vmem:[%s325 + $0x910] sm:$0xff]
        %v747 = vld [vmem:[%s325 + $0x918] sm:$0xff]
        %v748 = vld [vmem:[%s325 + $0x920] sm:$0xff]
        %v749 = vld [vmem:[%s325 + $0x928] sm:$0xff]
        %v750 = vld [vmem:[%s325 + $0x930] sm:$0xff]
        %v751 = vld [vmem:[%s325 + $0x938] sm:$0xff]
        %v752 = vld [vmem:[%s325 + $0x940] sm:$0xff]
        %v753 = vld [vmem:[%s325 + $0x948] sm:$0xff]
        %v754 = vld [vmem:[%s325 + $0x950] sm:$0xff]
        %v755 = vld [vmem:[%s325 + $0x958] sm:$0xff]
        %v756 = vld [vmem:[%s325 + $0x960] sm:$0xff]
        %v757 = vld [vmem:[%s325 + $0x968] sm:$0xff]
        %v758 = vld [vmem:[%s325 + $0x970] sm:$0xff]
        %v759 = vld [vmem:[%s325 + $0x978] sm:$0xff]
        %v760 = vld [vmem:[%s325 + $0x980] sm:$0xff]
        %v761 = vld [vmem:[%s325 + $0x988] sm:$0xff]
        %v762 = vld [vmem:[%s325 + $0x990] sm:$0xff]
        %v763 = vld [vmem:[%s325 + $0x998] sm:$0xff]
        %v764 = vld [vmem:[%s325 + $0x9a0] sm:$0xff]
        %v765 = vld [vmem:[%s325 + $0x9a8] sm:$0xff]
        %v766 = vld [vmem:[%s325 + $0x9b0] sm:$0xff]
        %v767 = vld [vmem:[%s325 + $0x9b8] sm:$0xff]
        %v768 = vld [vmem:[%s325 + $0x9c0] sm:$0xff]
        %v769 = vld [vmem:[%s325 + $0x9c8] sm:$0xff]
        %v770 = vld [vmem:[%s325 + $0x9d0] sm:$0xff]
        %v771 = vld [vmem:[%s325 + $0x9d8] sm:$0xff]
        %v772 = vld [vmem:[%s325 + $0x9e0] sm:$0xff]
        %v773 = vld [vmem:[%s325 + $0x9e8] sm:$0xff]
        %v774 = vld [vmem:[%s325 + $0x9f0] sm:$0xff]
        %v775 = vld [vmem:[%s325 + $0x9f8] sm:$0xff]
        %v776 = vld [vmem:[%s325 + $0xa00] sm:$0xff]
        %v777 = vld [vmem:[%s325 + $0xa08] sm:$0xff]
        %v778 = vld [vmem:[%s325 + $0xa10] sm:$0xff]
        %v779 = vld [vmem:[%s325 + $0xa18] sm:$0xff]
        %v780 = vld [vmem:[%s325 + $0xa20] sm:$0xff]
        %v781 = vld [vmem:[%s325 + $0xa28] sm:$0xff]
        %v782 = vld [vmem:[%s325 + $0xa30] sm:$0xff]
        %v783 = vld [vmem:[%s325 + $0xa38] sm:$0xff]
        %v784 = vld [vmem:[%s325 + $0xa40] sm:$0xff]
        %v785 = vld [vmem:[%s325 + $0xa48] sm:$0xff]
        %v786 = vld [vmem:[%s325 + $0xa50] sm:$0xff]
        %v787 = vld [vmem:[%s325 + $0xa58] sm:$0xff]
        %v788 = vld [vmem:[%s325 + $0xa60] sm:$0xff]
        %v789 = vld [vmem:[%s325 + $0xa68] sm:$0xff]
        %v790 = vld [vmem:[%s325 + $0xa70] sm:$0xff]
        %v791 = vld [vmem:[%s325 + $0xa78] sm:$0xff]
        %v792 = vld [vmem:[%s325 + $0xa80] sm:$0xff]
        %v793 = vld [vmem:[%s325 + $0xa88] sm:$0xff]
        %v794 = vld [vmem:[%s325 + $0xa90] sm:$0xff]
        %v795 = vld [vmem:[%s325 + $0xa98] sm:$0xff]
        %v796 = vld [vmem:[%s325 + $0xaa0] sm:$0xff]
        %v797 = vld [vmem:[%s325 + $0xaa8] sm:$0xff]
        %v798 = vld [vmem:[%s325 + $0xab0] sm:$0xff]
        %v799 = vld [vmem:[%s325 + $0xab8] sm:$0xff]
        %v800 = vld [vmem:[%s325 + $0xac0] sm:$0xff]
        %v801 = vld [vmem:[%s325 + $0xac8] sm:$0xff]
        %v802 = vld [vmem:[%s325 + $0xad0] sm:$0xff]
        %v803 = vld [vmem:[%s325 + $0xad8] sm:$0xff]
        %v804 = vld [vmem:[%s325 + $0xae0] sm:$0xff]
        %v805 = vld [vmem:[%s325 + $0xae8] sm:$0xff]
        %v806 = vld [vmem:[%s325 + $0xaf0] sm:$0xff]
        %v807 = vld [vmem:[%s325 + $0xaf8] sm:$0xff]
        %v808 = vld [vmem:[%s325 + $0xb00] sm:$0xff]
        %v809 = vld [vmem:[%s325 + $0xb08] sm:$0xff]
        %v810 = vld [vmem:[%s325 + $0xb10] sm:$0xff]
        %v811 = vld [vmem:[%s325 + $0xb18] sm:$0xff]
        %v812 = vld [vmem:[%s325 + $0xb20] sm:$0xff]
        %v813 = vld [vmem:[%s325 + $0xb28] sm:$0xff]
        %v814 = vld [vmem:[%s325 + $0xb30] sm:$0xff]
        %v815 = vld [vmem:[%s325 + $0xb38] sm:$0xff]
        %v816 = vld [vmem:[%s325 + $0xb40] sm:$0xff]
        %v817 = vld [vmem:[%s325 + $0xb48] sm:$0xff]
        %v818 = vld [vmem:[%s325 + $0xb50] sm:$0xff]
        %v819 = vld [vmem:[%s325 + $0xb58] sm:$0xff]
        %v820 = vld [vmem:[%s325 + $0xb60] sm:$0xff]
        %v821 = vld [vmem:[%s325 + $0xb68] sm:$0xff]
        %v822 = vld [vmem:[%s325 + $0xb70] sm:$0xff]
        %v823 = vld [vmem:[%s325 + $0xb78] sm:$0xff]
        %v824 = vld [vmem:[%s325 + $0xb80] sm:$0xff]
        %v825 = vld [vmem:[%s325 + $0xb88] sm:$0xff]
        %v826 = vld [vmem:[%s325 + $0xb90] sm:$0xff]
        %v827 = vld [vmem:[%s325 + $0xb98] sm:$0xff]
        %v828 = vld [vmem:[%s325 + $0xba0] sm:$0xff]
        %v829 = vld [vmem:[%s325 + $0xba8] sm:$0xff]
        %v830 = vld [vmem:[%s325 + $0xbb0] sm:$0xff]
        %v831 = vld [vmem:[%s325 + $0xbb8] sm:$0xff]
        %v832 = vld [vmem:[%s325 + $0xbc0] sm:$0xff]
        %v833 = vld [vmem:[%s325 + $0xbc8] sm:$0xff]
        %v834 = vld [vmem:[%s325 + $0xbd0] sm:$0xff]
        %v835 = vld [vmem:[%s325 + $0xbd8] sm:$0xff]
        %v836 = vld [vmem:[%s325 + $0xbe0] sm:$0xff]
        %v837 = vld [vmem:[%s325 + $0xbe8] sm:$0xff]
        %v838 = vld [vmem:[%s325 + $0xbf0] sm:$0xff]
        %v839 = vld [vmem:[%s325 + $0xbf8] sm:$0xff]
        %v840 = vld [vmem:[%s325 + $0xc00] sm:$0xff]
        %v841 = vld [vmem:[%s325 + $0xc08] sm:$0xff]
        %v842 = vld [vmem:[%s325 + $0xc10] sm:$0xff]
        %v843 = vld [vmem:[%s325 + $0xc18] sm:$0xff]
        %v844 = vld [vmem:[%s325 + $0xc20] sm:$0xff]
        %v845 = vld [vmem:[%s325 + $0xc28] sm:$0xff]
        %v846 = vld [vmem:[%s325 + $0xc30] sm:$0xff]
        %v847 = vld [vmem:[%s325 + $0xc38] sm:$0xff]
        %v848 = vld [vmem:[%s325 + $0xc40] sm:$0xff]
        %v849 = vld [vmem:[%s325 + $0xc48] sm:$0xff]
        %v850 = vld [vmem:[%s325 + $0xc50] sm:$0xff]
        %v851 = vld [vmem:[%s325 + $0xc58] sm:$0xff]
        %v852 = vld [vmem:[%s325 + $0xc60] sm:$0xff]
        %v853 = vld [vmem:[%s325 + $0xc68] sm:$0xff]
        %v854 = vld [vmem:[%s325 + $0xc70] sm:$0xff]
        %v855 = vld [vmem:[%s325 + $0xc78] sm:$0xff]
        %v856 = vld [vmem:[%s325 + $0xc80] sm:$0xff]
        %v857 = vld [vmem:[%s325 + $0xc88] sm:$0xff]
        %v858 = vld [vmem:[%s325 + $0xc90] sm:$0xff]
        %v859 = vld [vmem:[%s325 + $0xc98] sm:$0xff]
        %v860 = vld [vmem:[%s325 + $0xca0] sm:$0xff]
        %v861 = vld [vmem:[%s325 + $0xca8] sm:$0xff]
        %v862 = vld [vmem:[%s325 + $0xcb0] sm:$0xff]
        %v863 = vld [vmem:[%s325 + $0xcb8] sm:$0xff]
        %v864 = vld [vmem:[%s325 + $0xcc0] sm:$0xff]
        %v865 = vld [vmem:[%s325 + $0xcc8] sm:$0xff]
        %v866 = vld [vmem:[%s325 + $0xcd0] sm:$0xff]
        %v867 = vld [vmem:[%s325 + $0xcd8] sm:$0xff]
        %v868 = vld [vmem:[%s325 + $0xce0] sm:$0xff]
        %v869 = vld [vmem:[%s325 + $0xce8] sm:$0xff]
        %v870 = vld [vmem:[%s325 + $0xcf0] sm:$0xff]
        %v871 = vld [vmem:[%s325 + $0xcf8] sm:$0xff]
        %v872 = vld [vmem:[%s325 + $0xd00] sm:$0xff]
        %v873 = vld [vmem:[%s325 + $0xd08] sm:$0xff]
        %v874 = vld [vmem:[%s325 + $0xd10] sm:$0xff]
        %v875 = vld [vmem:[%s325 + $0xd18] sm:$0xff]
        %v876 = vld [vmem:[%s325 + $0xd20] sm:$0xff]
        %v877 = vld [vmem:[%s325 + $0xd28] sm:$0xff]
        %v878 = vld [vmem:[%s325 + $0xd30] sm:$0xff]
        %v879 = vld [vmem:[%s325 + $0xd38] sm:$0xff]
        %v880 = vld [vmem:[%s325 + $0xd40] sm:$0xff]
        %v881 = vld [vmem:[%s325 + $0xd48] sm:$0xff]
        %v882 = vld [vmem:[%s325 + $0xd50] sm:$0xff]
        %v883 = vld [vmem:[%s325 + $0xd58] sm:$0xff]
        %v884 = vld [vmem:[%s325 + $0xd60] sm:$0xff]
        %v885 = vld [vmem:[%s325 + $0xd68] sm:$0xff]
        %v886 = vld [vmem:[%s325 + $0xd70] sm:$0xff]
        %v887 = vld [vmem:[%s325 + $0xd78] sm:$0xff]
        %v888 = vld [vmem:[%s325 + $0xd80] sm:$0xff]
        %v889 = vld [vmem:[%s325 + $0xd88] sm:$0xff]
        %v890 = vld [vmem:[%s325 + $0xd90] sm:$0xff]
        %v891 = vld [vmem:[%s325 + $0xd98] sm:$0xff]
        %v892 = vld [vmem:[%s325 + $0xda0] sm:$0xff]
        %v893 = vld [vmem:[%s325 + $0xda8] sm:$0xff]
        %v894 = vld [vmem:[%s325 + $0xdb0] sm:$0xff]
        %v895 = vld [vmem:[%s325 + $0xdb8] sm:$0xff]
        %v896 = vld [vmem:[%s325 + $0xdc0] sm:$0xff]
        %v897 = vld [vmem:[%s325 + $0xdc8] sm:$0xff]
        %v898 = vld [vmem:[%s325 + $0xdd0] sm:$0xff]
        %v899 = vld [vmem:[%s325 + $0xdd8] sm:$0xff]
        %v900 = vld [vmem:[%s325 + $0xde0] sm:$0xff]
        %v901 = vld [vmem:[%s325 + $0xde8] sm:$0xff]
        %v902 = vld [vmem:[%s325 + $0xdf0] sm:$0xff]
        %v903 = vld [vmem:[%s325 + $0xdf8] sm:$0xff]
        %v904 = vld [vmem:[%s325 + $0xe00] sm:$0xff]
        %v905 = vld [vmem:[%s325 + $0xe08] sm:$0xff]
        %v906 = vld [vmem:[%s325 + $0xe10] sm:$0xff]
        %v907 = vld [vmem:[%s325 + $0xe18] sm:$0xff]
        %v908 = vld [vmem:[%s325 + $0xe20] sm:$0xff]
        %v909 = vld [vmem:[%s325 + $0xe28] sm:$0xff]
        %v910 = vld [vmem:[%s325 + $0xe30] sm:$0xff]
        %v911 = vld [vmem:[%s325 + $0xe38] sm:$0xff]
        %v912 = vld [vmem:[%s325 + $0xe40] sm:$0xff]
        %v913 = vld [vmem:[%s325 + $0xe48] sm:$0xff]
        %v914 = vld [vmem:[%s325 + $0xe50] sm:$0xff]
        %v915 = vld [vmem:[%s325 + $0xe58] sm:$0xff]
        %v916 = vld [vmem:[%s325 + $0xe60] sm:$0xff]
        %v917 = vld [vmem:[%s325 + $0xe68] sm:$0xff]
        %v918 = vld [vmem:[%s325 + $0xe70] sm:$0xff]
        %v919 = vld [vmem:[%s325 + $0xe78] sm:$0xff]
        %v920 = vld [vmem:[%s325 + $0xe80] sm:$0xff]
        %v921 = vld [vmem:[%s325 + $0xe88] sm:$0xff]
        %v922 = vld [vmem:[%s325 + $0xe90] sm:$0xff]
        %v923 = vld [vmem:[%s325 + $0xe98] sm:$0xff]
        %v924 = vld [vmem:[%s325 + $0xea0] sm:$0xff]
        %v925 = vld [vmem:[%s325 + $0xea8] sm:$0xff]
        %v926 = vld [vmem:[%s325 + $0xeb0] sm:$0xff]
        %v927 = vld [vmem:[%s325 + $0xeb8] sm:$0xff]
        %v928 = vld [vmem:[%s325 + $0xec0] sm:$0xff]
        %v929 = vld [vmem:[%s325 + $0xec8] sm:$0xff]
        %v930 = vld [vmem:[%s325 + $0xed0] sm:$0xff]
        %v931 = vld [vmem:[%s325 + $0xed8] sm:$0xff]
        %v932 = vld [vmem:[%s325 + $0xee0] sm:$0xff]
        %v933 = vld [vmem:[%s325 + $0xee8] sm:$0xff]
        %v934 = vld [vmem:[%s325 + $0xef0] sm:$0xff]
        %v935 = vld [vmem:[%s325 + $0xef8] sm:$0xff]
        %v936 = vld [vmem:[%s325 + $0xf00] sm:$0xff]
        %v937 = vld [vmem:[%s325 + $0xf08] sm:$0xff]
        %v938 = vld [vmem:[%s325 + $0xf10] sm:$0xff]
        %v939 = vld [vmem:[%s325 + $0xf18] sm:$0xff]
        %v940 = vld [vmem:[%s325 + $0xf20] sm:$0xff]
        %v941 = vld [vmem:[%s325 + $0xf28] sm:$0xff]
        %v942 = vld [vmem:[%s325 + $0xf30] sm:$0xff]
        %v943 = vld [vmem:[%s325 + $0xf38] sm:$0xff]
        %v944 = vld [vmem:[%s325 + $0xf40] sm:$0xff]
        %v945 = vld [vmem:[%s325 + $0xf48] sm:$0xff]
        %v946 = vld [vmem:[%s325 + $0xf50] sm:$0xff]
        %v947 = vld [vmem:[%s325 + $0xf58] sm:$0xff]
        %v948 = vld [vmem:[%s325 + $0xf60] sm:$0xff]
        %v949 = vld [vmem:[%s325 + $0xf68] sm:$0xff]
        %v950 = vld [vmem:[%s325 + $0xf70] sm:$0xff]
        %v951 = vld [vmem:[%s325 + $0xf78] sm:$0xff]
        %v952 = vld [vmem:[%s325 + $0xf80] sm:$0xff]
        %v953 = vld [vmem:[%s325 + $0xf88] sm:$0xff]
        %v954 = vld [vmem:[%s325 + $0xf90] sm:$0xff]
        %v955 = vld [vmem:[%s325 + $0xf98] sm:$0xff]
        %v956 = vld [vmem:[%s325 + $0xfa0] sm:$0xff]
        %v957 = vld [vmem:[%s325 + $0xfa8] sm:$0xff]
        %v958 = vld [vmem:[%s325 + $0xfb0] sm:$0xff]
        %v959 = vld [vmem:[%s325 + $0xfb8] sm:$0xff]
        %v960 = vld [vmem:[%s325 + $0xfc0] sm:$0xff]
        %v961 = vld [vmem:[%s325 + $0xfc8] sm:$0xff]
        %v962 = vld [vmem:[%s325 + $0xfd0] sm:$0xff]
        %v963 = vld [vmem:[%s325 + $0xfd8] sm:$0xff]
        %v964 = vld [vmem:[%s325 + $0xfe0] sm:$0xff]
        %v965 = vld [vmem:[%s325 + $0xfe8] sm:$0xff]
        %v966 = vld [vmem:[%s325 + $0xff0] sm:$0xff]
        %v967 = vld [vmem:[%s325 + $0xff8] sm:$0xff]
        %v972 = vunpack.c.l.b16 %v452
        %v973 = vunpack.c.h.b16 %v452
        %v974 = vunpack.c.l.b16 %v453
        %v975 = vunpack.c.h.b16 %v453
        %v976 = vunpack.c.l.b16 %v454
        %v977 = vunpack.c.h.b16 %v454
        %v978 = vunpack.c.l.b16 %v455
        %v979 = vunpack.c.h.b16 %v455
        %v980 = vpack.c.b16 %v972, %v972
        %v981 = vpack.c.b16 %v973, %v973
        %v982 = vpack.c.b16 %v974, %v974
        %v983 = vpack.c.b16 %v975, %v975
        %v984 = vpack.c.b16 %v976, %v976
        %v985 = vpack.c.b16 %v977, %v977
        %v986 = vpack.c.b16 %v978, %v978
        %v987 = vpack.c.b16 %v979, %v979
        %v1508 = vunpack.c.l.b16 %v456
        %v1509 = vunpack.c.h.b16 %v456
        %v1510 = vunpack.c.l.b16 %v457
        %v1511 = vunpack.c.h.b16 %v457
        %v1512 = vunpack.c.l.b16 %v458
        %v1513 = vunpack.c.h.b16 %v458
        %v1514 = vunpack.c.l.b16 %v459
        %v1515 = vunpack.c.h.b16 %v459
        %v1516 = vunpack.c.l.b16 %v460
        %v1517 = vunpack.c.h.b16 %v460
        %v1518 = vunpack.c.l.b16 %v461
        %v1519 = vunpack.c.h.b16 %v461
        %v1520 = vunpack.c.l.b16 %v462
        %v1521 = vunpack.c.h.b16 %v462
        %v1522 = vunpack.c.l.b16 %v463
        %v1523 = vunpack.c.h.b16 %v463
        %v1524 = vunpack.c.l.b16 %v464
        %v1525 = vunpack.c.h.b16 %v464
        %v1526 = vunpack.c.l.b16 %v465
        %v1527 = vunpack.c.h.b16 %v465
        %v1528 = vunpack.c.l.b16 %v466
        %v1529 = vunpack.c.h.b16 %v466
        %v1530 = vunpack.c.l.b16 %v467
        %v1531 = vunpack.c.h.b16 %v467
        %v1532 = vunpack.c.l.b16 %v468
        %v1533 = vunpack.c.h.b16 %v468
        %v1534 = vunpack.c.l.b16 %v469
        %v1535 = vunpack.c.h.b16 %v469
        %v1536 = vunpack.c.l.b16 %v470
        %v1537 = vunpack.c.h.b16 %v470
        %v1538 = vunpack.c.l.b16 %v471
        %v1539 = vunpack.c.h.b16 %v471
        %v1540 = vunpack.c.l.b16 %v472
        %v1541 = vunpack.c.h.b16 %v472
        %v1542 = vunpack.c.l.b16 %v473
        %v1543 = vunpack.c.h.b16 %v473
        %v1544 = vunpack.c.l.b16 %v474
        %v1545 = vunpack.c.h.b16 %v474
        %v1546 = vunpack.c.l.b16 %v475
        %v1547 = vunpack.c.h.b16 %v475
        %v1548 = vunpack.c.l.b16 %v476
        %v1549 = vunpack.c.h.b16 %v476
        %v1550 = vunpack.c.l.b16 %v477
        %v1551 = vunpack.c.h.b16 %v477
        %v1552 = vunpack.c.l.b16 %v478
        %v1553 = vunpack.c.h.b16 %v478
        %v1554 = vunpack.c.l.b16 %v479
        %v1555 = vunpack.c.h.b16 %v479
        %v1556 = vunpack.c.l.b16 %v480
        %v1557 = vunpack.c.h.b16 %v480
        %v1558 = vunpack.c.l.b16 %v481
        %v1559 = vunpack.c.h.b16 %v481
        %v1560 = vunpack.c.l.b16 %v482
        %v1561 = vunpack.c.h.b16 %v482
        %v1562 = vunpack.c.l.b16 %v483
        %v1563 = vunpack.c.h.b16 %v483
        %v1564 = vunpack.c.l.b16 %v484
        %v1565 = vunpack.c.h.b16 %v484
        %v1566 = vunpack.c.l.b16 %v485
        %v1567 = vunpack.c.h.b16 %v485
        %v1568 = vunpack.c.l.b16 %v486
        %v1569 = vunpack.c.h.b16 %v486
        %v1570 = vunpack.c.l.b16 %v487
        %v1571 = vunpack.c.h.b16 %v487
        %v1572 = vunpack.c.l.b16 %v488
        %v1573 = vunpack.c.h.b16 %v488
        %v1574 = vunpack.c.l.b16 %v489
        %v1575 = vunpack.c.h.b16 %v489
        %v1576 = vunpack.c.l.b16 %v490
        %v1577 = vunpack.c.h.b16 %v490
        %v1578 = vunpack.c.l.b16 %v491
        %v1579 = vunpack.c.h.b16 %v491
        %v1580 = vunpack.c.l.b16 %v492
        %v1581 = vunpack.c.h.b16 %v492
        %v1582 = vunpack.c.l.b16 %v493
        %v1583 = vunpack.c.h.b16 %v493
        %v1584 = vunpack.c.l.b16 %v494
        %v1585 = vunpack.c.h.b16 %v494
        %v1586 = vunpack.c.l.b16 %v495
        %v1587 = vunpack.c.h.b16 %v495
        %v1588 = vunpack.c.l.b16 %v496
        %v1589 = vunpack.c.h.b16 %v496
        %v1590 = vunpack.c.l.b16 %v497
        %v1591 = vunpack.c.h.b16 %v497
        %v1592 = vunpack.c.l.b16 %v498
        %v1593 = vunpack.c.h.b16 %v498
        %v1594 = vunpack.c.l.b16 %v499
        %v1595 = vunpack.c.h.b16 %v499
        %v1596 = vunpack.c.l.b16 %v500
        %v1597 = vunpack.c.h.b16 %v500
        %v1598 = vunpack.c.l.b16 %v501
        %v1599 = vunpack.c.h.b16 %v501
        %v1600 = vunpack.c.l.b16 %v502
        %v1601 = vunpack.c.h.b16 %v502
        %v1602 = vunpack.c.l.b16 %v503
        %v1603 = vunpack.c.h.b16 %v503
        %v1604 = vunpack.c.l.b16 %v504
        %v1605 = vunpack.c.h.b16 %v504
        %v1606 = vunpack.c.l.b16 %v505
        %v1607 = vunpack.c.h.b16 %v505
        %v1608 = vunpack.c.l.b16 %v506
        %v1609 = vunpack.c.h.b16 %v506
        %v1610 = vunpack.c.l.b16 %v507
        %v1611 = vunpack.c.h.b16 %v507
        %v1612 = vunpack.c.l.b16 %v508
        %v1613 = vunpack.c.h.b16 %v508
        %v1614 = vunpack.c.l.b16 %v509
        %v1615 = vunpack.c.h.b16 %v509
        %v1616 = vunpack.c.l.b16 %v510
        %v1617 = vunpack.c.h.b16 %v510
        %v1618 = vunpack.c.l.b16 %v511
        %v1619 = vunpack.c.h.b16 %v511
        %v1620 = vunpack.c.l.b16 %v512
        %v1621 = vunpack.c.h.b16 %v512
        %v1622 = vunpack.c.l.b16 %v513
        %v1623 = vunpack.c.h.b16 %v513
        %v1624 = vunpack.c.l.b16 %v514
        %v1625 = vunpack.c.h.b16 %v514
        %v1626 = vunpack.c.l.b16 %v515
        %v1627 = vunpack.c.h.b16 %v515
        %v1628 = vunpack.c.l.b16 %v516
        %v1629 = vunpack.c.h.b16 %v516
        %v1630 = vunpack.c.l.b16 %v517
        %v1631 = vunpack.c.h.b16 %v517
        %v1632 = vunpack.c.l.b16 %v518
        %v1633 = vunpack.c.h.b16 %v518
        %v1634 = vunpack.c.l.b16 %v519
        %v1635 = vunpack.c.h.b16 %v519
        %v1636 = vunpack.c.l.b16 %v520
        %v1637 = vunpack.c.h.b16 %v520
        %v1638 = vunpack.c.l.b16 %v521
        %v1639 = vunpack.c.h.b16 %v521
        %v1640 = vunpack.c.l.b16 %v522
        %v1641 = vunpack.c.h.b16 %v522
        %v1642 = vunpack.c.l.b16 %v523
        %v1643 = vunpack.c.h.b16 %v523
        %v1644 = vunpack.c.l.b16 %v524
        %v1645 = vunpack.c.h.b16 %v524
        %v1646 = vunpack.c.l.b16 %v525
        %v1647 = vunpack.c.h.b16 %v525
        %v1648 = vunpack.c.l.b16 %v526
        %v1649 = vunpack.c.h.b16 %v526
        %v1650 = vunpack.c.l.b16 %v527
        %v1651 = vunpack.c.h.b16 %v527
        %v1652 = vunpack.c.l.b16 %v528
        %v1653 = vunpack.c.h.b16 %v528
        %v1654 = vunpack.c.l.b16 %v529
        %v1655 = vunpack.c.h.b16 %v529
        %v1656 = vunpack.c.l.b16 %v530
        %v1657 = vunpack.c.h.b16 %v530
        %v1658 = vunpack.c.l.b16 %v531
        %v1659 = vunpack.c.h.b16 %v531
        %v1660 = vunpack.c.l.b16 %v532
        %v1661 = vunpack.c.h.b16 %v532
        %v1662 = vunpack.c.l.b16 %v533
        %v1663 = vunpack.c.h.b16 %v533
        %v1664 = vunpack.c.l.b16 %v534
        %v1665 = vunpack.c.h.b16 %v534
        %v1666 = vunpack.c.l.b16 %v535
        %v1667 = vunpack.c.h.b16 %v535
        %v1668 = vunpack.c.l.b16 %v536
        %v1669 = vunpack.c.h.b16 %v536
        %v1670 = vunpack.c.l.b16 %v537
        %v1671 = vunpack.c.h.b16 %v537
        %v1672 = vunpack.c.l.b16 %v538
        %v1673 = vunpack.c.h.b16 %v538
        %v1674 = vunpack.c.l.b16 %v539
        %v1675 = vunpack.c.h.b16 %v539
        %v1676 = vunpack.c.l.b16 %v540
        %v1677 = vunpack.c.h.b16 %v540
        %v1678 = vunpack.c.l.b16 %v541
        %v1679 = vunpack.c.h.b16 %v541
        %v1680 = vunpack.c.l.b16 %v542
        %v1681 = vunpack.c.h.b16 %v542
        %v1682 = vunpack.c.l.b16 %v543
        %v1683 = vunpack.c.h.b16 %v543
        %v1684 = vunpack.c.l.b16 %v544
        %v1685 = vunpack.c.h.b16 %v544
        %v1686 = vunpack.c.l.b16 %v545
        %v1687 = vunpack.c.h.b16 %v545
        %v1688 = vunpack.c.l.b16 %v546
        %v1689 = vunpack.c.h.b16 %v546
        %v1690 = vunpack.c.l.b16 %v547
        %v1691 = vunpack.c.h.b16 %v547
        %v1692 = vunpack.c.l.b16 %v548
        %v1693 = vunpack.c.h.b16 %v548
        %v1694 = vunpack.c.l.b16 %v549
        %v1695 = vunpack.c.h.b16 %v549
        %v1696 = vunpack.c.l.b16 %v550
        %v1697 = vunpack.c.h.b16 %v550
        %v1698 = vunpack.c.l.b16 %v551
        %v1699 = vunpack.c.h.b16 %v551
        %v1700 = vunpack.c.l.b16 %v552
        %v1701 = vunpack.c.h.b16 %v552
        %v1702 = vunpack.c.l.b16 %v553
        %v1703 = vunpack.c.h.b16 %v553
        %v1704 = vunpack.c.l.b16 %v554
        %v1705 = vunpack.c.h.b16 %v554
        %v1706 = vunpack.c.l.b16 %v555
        %v1707 = vunpack.c.h.b16 %v555
        %v1708 = vunpack.c.l.b16 %v556
        %v1709 = vunpack.c.h.b16 %v556
        %v1710 = vunpack.c.l.b16 %v557
        %v1711 = vunpack.c.h.b16 %v557
        %v1712 = vunpack.c.l.b16 %v558
        %v1713 = vunpack.c.h.b16 %v558
        %v1714 = vunpack.c.l.b16 %v559
        %v1715 = vunpack.c.h.b16 %v559
        %v1716 = vunpack.c.l.b16 %v560
        %v1717 = vunpack.c.h.b16 %v560
        %v1718 = vunpack.c.l.b16 %v561
        %v1719 = vunpack.c.h.b16 %v561
        %v1720 = vunpack.c.l.b16 %v562
        %v1721 = vunpack.c.h.b16 %v562
        %v1722 = vunpack.c.l.b16 %v563
        %v1723 = vunpack.c.h.b16 %v563
        %v1724 = vunpack.c.l.b16 %v564
        %v1725 = vunpack.c.h.b16 %v564
        %v1726 = vunpack.c.l.b16 %v565
        %v1727 = vunpack.c.h.b16 %v565
        %v1728 = vunpack.c.l.b16 %v566
        %v1729 = vunpack.c.h.b16 %v566
        %v1730 = vunpack.c.l.b16 %v567
        %v1731 = vunpack.c.h.b16 %v567
        %v1732 = vunpack.c.l.b16 %v568
        %v1733 = vunpack.c.h.b16 %v568
        %v1734 = vunpack.c.l.b16 %v569
        %v1735 = vunpack.c.h.b16 %v569
        %v1736 = vunpack.c.l.b16 %v570
        %v1737 = vunpack.c.h.b16 %v570
        %v1738 = vunpack.c.l.b16 %v571
        %v1739 = vunpack.c.h.b16 %v571
        %v1740 = vunpack.c.l.b16 %v572
        %v1741 = vunpack.c.h.b16 %v572
        %v1742 = vunpack.c.l.b16 %v573
        %v1743 = vunpack.c.h.b16 %v573
        %v1744 = vunpack.c.l.b16 %v574
        %v1745 = vunpack.c.h.b16 %v574
        %v1746 = vunpack.c.l.b16 %v575
        %v1747 = vunpack.c.h.b16 %v575
        %v1748 = vunpack.c.l.b16 %v576
        %v1749 = vunpack.c.h.b16 %v576
        %v1750 = vunpack.c.l.b16 %v577
        %v1751 = vunpack.c.h.b16 %v577
        %v1752 = vunpack.c.l.b16 %v578
        %v1753 = vunpack.c.h.b16 %v578
        %v1754 = vunpack.c.l.b16 %v579
        %v1755 = vunpack.c.h.b16 %v579
        %v1756 = vunpack.c.l.b16 %v580
        %v1757 = vunpack.c.h.b16 %v580
        %v1758 = vunpack.c.l.b16 %v581
        %v1759 = vunpack.c.h.b16 %v581
        %v1760 = vunpack.c.l.b16 %v582
        %v1761 = vunpack.c.h.b16 %v582
        %v1762 = vunpack.c.l.b16 %v583
        %v1763 = vunpack.c.h.b16 %v583
        %v1764 = vunpack.c.l.b16 %v584
        %v1765 = vunpack.c.h.b16 %v584
        %v1766 = vunpack.c.l.b16 %v585
        %v1767 = vunpack.c.h.b16 %v585
        %v1768 = vunpack.c.l.b16 %v586
        %v1769 = vunpack.c.h.b16 %v586
        %v1770 = vunpack.c.l.b16 %v587
        %v1771 = vunpack.c.h.b16 %v587
        %v1772 = vunpack.c.l.b16 %v588
        %v1773 = vunpack.c.h.b16 %v588
        %v1774 = vunpack.c.l.b16 %v589
        %v1775 = vunpack.c.h.b16 %v589
        %v1776 = vunpack.c.l.b16 %v590
        %v1777 = vunpack.c.h.b16 %v590
        %v1778 = vunpack.c.l.b16 %v591
        %v1779 = vunpack.c.h.b16 %v591
        %v1780 = vunpack.c.l.b16 %v592
        %v1781 = vunpack.c.h.b16 %v592
        %v1782 = vunpack.c.l.b16 %v593
        %v1783 = vunpack.c.h.b16 %v593
        %v1784 = vunpack.c.l.b16 %v594
        %v1785 = vunpack.c.h.b16 %v594
        %v1786 = vunpack.c.l.b16 %v595
        %v1787 = vunpack.c.h.b16 %v595
        %v1788 = vunpack.c.l.b16 %v596
        %v1789 = vunpack.c.h.b16 %v596
        %v1790 = vunpack.c.l.b16 %v597
        %v1791 = vunpack.c.h.b16 %v597
        %v1792 = vunpack.c.l.b16 %v598
        %v1793 = vunpack.c.h.b16 %v598
        %v1794 = vunpack.c.l.b16 %v599
        %v1795 = vunpack.c.h.b16 %v599
        %v1796 = vunpack.c.l.b16 %v600
        %v1797 = vunpack.c.h.b16 %v600
        %v1798 = vunpack.c.l.b16 %v601
        %v1799 = vunpack.c.h.b16 %v601
        %v1800 = vunpack.c.l.b16 %v602
        %v1801 = vunpack.c.h.b16 %v602
        %v1802 = vunpack.c.l.b16 %v603
        %v1803 = vunpack.c.h.b16 %v603
        %v1804 = vunpack.c.l.b16 %v604
        %v1805 = vunpack.c.h.b16 %v604
        %v1806 = vunpack.c.l.b16 %v605
        %v1807 = vunpack.c.h.b16 %v605
        %v1808 = vunpack.c.l.b16 %v606
        %v1809 = vunpack.c.h.b16 %v606
        %v1810 = vunpack.c.l.b16 %v607
        %v1811 = vunpack.c.h.b16 %v607
        %v1812 = vunpack.c.l.b16 %v608
        %v1813 = vunpack.c.h.b16 %v608
        %v1814 = vunpack.c.l.b16 %v609
        %v1815 = vunpack.c.h.b16 %v609
        %v1816 = vunpack.c.l.b16 %v610
        %v1817 = vunpack.c.h.b16 %v610
        %v1818 = vunpack.c.l.b16 %v611
        %v1819 = vunpack.c.h.b16 %v611
        %v1820 = vunpack.c.l.b16 %v612
        %v1821 = vunpack.c.h.b16 %v612
        %v1822 = vunpack.c.l.b16 %v613
        %v1823 = vunpack.c.h.b16 %v613
        %v1824 = vunpack.c.l.b16 %v614
        %v1825 = vunpack.c.h.b16 %v614
        %v1826 = vunpack.c.l.b16 %v615
        %v1827 = vunpack.c.h.b16 %v615
        %v1828 = vunpack.c.l.b16 %v616
        %v1829 = vunpack.c.h.b16 %v616
        %v1830 = vunpack.c.l.b16 %v617
        %v1831 = vunpack.c.h.b16 %v617
        %v1832 = vunpack.c.l.b16 %v618
        %v1833 = vunpack.c.h.b16 %v618
        %v1834 = vunpack.c.l.b16 %v619
        %v1835 = vunpack.c.h.b16 %v619
        %v1836 = vunpack.c.l.b16 %v620
        %v1837 = vunpack.c.h.b16 %v620
        %v1838 = vunpack.c.l.b16 %v621
        %v1839 = vunpack.c.h.b16 %v621
        %v1840 = vunpack.c.l.b16 %v622
        %v1841 = vunpack.c.h.b16 %v622
        %v1842 = vunpack.c.l.b16 %v623
        %v1843 = vunpack.c.h.b16 %v623
        %v1844 = vunpack.c.l.b16 %v624
        %v1845 = vunpack.c.h.b16 %v624
        %v1846 = vunpack.c.l.b16 %v625
        %v1847 = vunpack.c.h.b16 %v625
        %v1848 = vunpack.c.l.b16 %v626
        %v1849 = vunpack.c.h.b16 %v626
        %v1850 = vunpack.c.l.b16 %v627
        %v1851 = vunpack.c.h.b16 %v627
        %v1852 = vunpack.c.l.b16 %v628
        %v1853 = vunpack.c.h.b16 %v628
        %v1854 = vunpack.c.l.b16 %v629
        %v1855 = vunpack.c.h.b16 %v629
        %v1856 = vunpack.c.l.b16 %v630
        %v1857 = vunpack.c.h.b16 %v630
        %v1858 = vunpack.c.l.b16 %v631
        %v1859 = vunpack.c.h.b16 %v631
        %v1860 = vunpack.c.l.b16 %v632
        %v1861 = vunpack.c.h.b16 %v632
        %v1862 = vunpack.c.l.b16 %v633
        %v1863 = vunpack.c.h.b16 %v633
        %v1864 = vunpack.c.l.b16 %v634
        %v1865 = vunpack.c.h.b16 %v634
        %v1866 = vunpack.c.l.b16 %v635
        %v1867 = vunpack.c.h.b16 %v635
        %v1868 = vunpack.c.l.b16 %v636
        %v1869 = vunpack.c.h.b16 %v636
        %v1870 = vunpack.c.l.b16 %v637
        %v1871 = vunpack.c.h.b16 %v637
        %v1872 = vunpack.c.l.b16 %v638
        %v1873 = vunpack.c.h.b16 %v638
        %v1874 = vunpack.c.l.b16 %v639
        %v1875 = vunpack.c.h.b16 %v639
        %v1876 = vunpack.c.l.b16 %v640
        %v1877 = vunpack.c.h.b16 %v640
        %v1878 = vunpack.c.l.b16 %v641
        %v1879 = vunpack.c.h.b16 %v641
        %v1880 = vunpack.c.l.b16 %v642
        %v1881 = vunpack.c.h.b16 %v642
        %v1882 = vunpack.c.l.b16 %v643
        %v1883 = vunpack.c.h.b16 %v643
        %v1884 = vunpack.c.l.b16 %v644
        %v1885 = vunpack.c.h.b16 %v644
        %v1886 = vunpack.c.l.b16 %v645
        %v1887 = vunpack.c.h.b16 %v645
        %v1888 = vunpack.c.l.b16 %v646
        %v1889 = vunpack.c.h.b16 %v646
        %v1890 = vunpack.c.l.b16 %v647
        %v1891 = vunpack.c.h.b16 %v647
        %v1892 = vunpack.c.l.b16 %v648
        %v1893 = vunpack.c.h.b16 %v648
        %v1894 = vunpack.c.l.b16 %v649
        %v1895 = vunpack.c.h.b16 %v649
        %v1896 = vunpack.c.l.b16 %v650
        %v1897 = vunpack.c.h.b16 %v650
        %v1898 = vunpack.c.l.b16 %v651
        %v1899 = vunpack.c.h.b16 %v651
        %v1900 = vunpack.c.l.b16 %v652
        %v1901 = vunpack.c.h.b16 %v652
        %v1902 = vunpack.c.l.b16 %v653
        %v1903 = vunpack.c.h.b16 %v653
        %v1904 = vunpack.c.l.b16 %v654
        %v1905 = vunpack.c.h.b16 %v654
        %v1906 = vunpack.c.l.b16 %v655
        %v1907 = vunpack.c.h.b16 %v655
        %v1908 = vunpack.c.l.b16 %v656
        %v1909 = vunpack.c.h.b16 %v656
        %v1910 = vunpack.c.l.b16 %v657
        %v1911 = vunpack.c.h.b16 %v657
        %v1912 = vunpack.c.l.b16 %v658
        %v1913 = vunpack.c.h.b16 %v658
        %v1914 = vunpack.c.l.b16 %v659
        %v1915 = vunpack.c.h.b16 %v659
        %v1916 = vunpack.c.l.b16 %v660
        %v1917 = vunpack.c.h.b16 %v660
        %v1918 = vunpack.c.l.b16 %v661
        %v1919 = vunpack.c.h.b16 %v661
        %v1920 = vunpack.c.l.b16 %v662
        %v1921 = vunpack.c.h.b16 %v662
        %v1922 = vunpack.c.l.b16 %v663
        %v1923 = vunpack.c.h.b16 %v663
        %v1924 = vunpack.c.l.b16 %v664
        %v1925 = vunpack.c.h.b16 %v664
        %v1926 = vunpack.c.l.b16 %v665
        %v1927 = vunpack.c.h.b16 %v665
        %v1928 = vunpack.c.l.b16 %v666
        %v1929 = vunpack.c.h.b16 %v666
        %v1930 = vunpack.c.l.b16 %v667
        %v1931 = vunpack.c.h.b16 %v667
        %v1932 = vunpack.c.l.b16 %v668
        %v1933 = vunpack.c.h.b16 %v668
        %v1934 = vunpack.c.l.b16 %v669
        %v1935 = vunpack.c.h.b16 %v669
        %v1936 = vunpack.c.l.b16 %v670
        %v1937 = vunpack.c.h.b16 %v670
        %v1938 = vunpack.c.l.b16 %v671
        %v1939 = vunpack.c.h.b16 %v671
        %v1940 = vunpack.c.l.b16 %v672
        %v1941 = vunpack.c.h.b16 %v672
        %v1942 = vunpack.c.l.b16 %v673
        %v1943 = vunpack.c.h.b16 %v673
        %v1944 = vunpack.c.l.b16 %v674
        %v1945 = vunpack.c.h.b16 %v674
        %v1946 = vunpack.c.l.b16 %v675
        %v1947 = vunpack.c.h.b16 %v675
        %v1948 = vunpack.c.l.b16 %v676
        %v1949 = vunpack.c.h.b16 %v676
        %v1950 = vunpack.c.l.b16 %v677
        %v1951 = vunpack.c.h.b16 %v677
        %v1952 = vunpack.c.l.b16 %v678
        %v1953 = vunpack.c.h.b16 %v678
        %v1954 = vunpack.c.l.b16 %v679
        %v1955 = vunpack.c.h.b16 %v679
        %v1956 = vunpack.c.l.b16 %v680
        %v1957 = vunpack.c.h.b16 %v680
        %v1958 = vunpack.c.l.b16 %v681
        %v1959 = vunpack.c.h.b16 %v681
        %v1960 = vunpack.c.l.b16 %v682
        %v1961 = vunpack.c.h.b16 %v682
        %v1962 = vunpack.c.l.b16 %v683
        %v1963 = vunpack.c.h.b16 %v683
        %v1964 = vunpack.c.l.b16 %v684
        %v1965 = vunpack.c.h.b16 %v684
        %v1966 = vunpack.c.l.b16 %v685
        %v1967 = vunpack.c.h.b16 %v685
        %v1968 = vunpack.c.l.b16 %v686
        %v1969 = vunpack.c.h.b16 %v686
        %v1970 = vunpack.c.l.b16 %v687
        %v1971 = vunpack.c.h.b16 %v687
        %v1972 = vunpack.c.l.b16 %v688
        %v1973 = vunpack.c.h.b16 %v688
        %v1974 = vunpack.c.l.b16 %v689
        %v1975 = vunpack.c.h.b16 %v689
        %v1976 = vunpack.c.l.b16 %v690
        %v1977 = vunpack.c.h.b16 %v690
        %v1978 = vunpack.c.l.b16 %v691
        %v1979 = vunpack.c.h.b16 %v691
        %v1980 = vunpack.c.l.b16 %v692
        %v1981 = vunpack.c.h.b16 %v692
        %v1982 = vunpack.c.l.b16 %v693
        %v1983 = vunpack.c.h.b16 %v693
        %v1984 = vunpack.c.l.b16 %v694
        %v1985 = vunpack.c.h.b16 %v694
        %v1986 = vunpack.c.l.b16 %v695
        %v1987 = vunpack.c.h.b16 %v695
        %v1988 = vunpack.c.l.b16 %v696
        %v1989 = vunpack.c.h.b16 %v696
        %v1990 = vunpack.c.l.b16 %v697
        %v1991 = vunpack.c.h.b16 %v697
        %v1992 = vunpack.c.l.b16 %v698
        %v1993 = vunpack.c.h.b16 %v698
        %v1994 = vunpack.c.l.b16 %v699
        %v1995 = vunpack.c.h.b16 %v699
        %v1996 = vunpack.c.l.b16 %v700
        %v1997 = vunpack.c.h.b16 %v700
        %v1998 = vunpack.c.l.b16 %v701
        %v1999 = vunpack.c.h.b16 %v701
        %v2000 = vunpack.c.l.b16 %v702
        %v2001 = vunpack.c.h.b16 %v702
        %v2002 = vunpack.c.l.b16 %v703
        %v2003 = vunpack.c.h.b16 %v703
        %v2004 = vunpack.c.l.b16 %v704
        %v2005 = vunpack.c.h.b16 %v704
        %v2006 = vunpack.c.l.b16 %v705
        %v2007 = vunpack.c.h.b16 %v705
        %v2008 = vunpack.c.l.b16 %v706
        %v2009 = vunpack.c.h.b16 %v706
        %v2010 = vunpack.c.l.b16 %v707
        %v2011 = vunpack.c.h.b16 %v707
        %v2012 = vunpack.c.l.b16 %v708
        %v2013 = vunpack.c.h.b16 %v708
        %v2014 = vunpack.c.l.b16 %v709
        %v2015 = vunpack.c.h.b16 %v709
        %v2016 = vunpack.c.l.b16 %v710
        %v2017 = vunpack.c.h.b16 %v710
        %v2018 = vunpack.c.l.b16 %v711
        %v2019 = vunpack.c.h.b16 %v711
        %v2020 = vunpack.c.l.b16 %v712
        %v2021 = vunpack.c.h.b16 %v712
        %v2022 = vunpack.c.l.b16 %v713
        %v2023 = vunpack.c.h.b16 %v713
        %v2024 = vunpack.c.l.b16 %v714
        %v2025 = vunpack.c.h.b16 %v714
        %v2026 = vunpack.c.l.b16 %v715
        %v2027 = vunpack.c.h.b16 %v715
        %v2028 = vunpack.c.l.b16 %v716
        %v2029 = vunpack.c.h.b16 %v716
        %v2030 = vunpack.c.l.b16 %v717
        %v2031 = vunpack.c.h.b16 %v717
        %v2032 = vunpack.c.l.b16 %v718
        %v2033 = vunpack.c.h.b16 %v718
        %v2034 = vunpack.c.l.b16 %v719
        %v2035 = vunpack.c.h.b16 %v719
        %v2036 = vunpack.c.l.b16 %v720
        %v2037 = vunpack.c.h.b16 %v720
        %v2038 = vunpack.c.l.b16 %v721
        %v2039 = vunpack.c.h.b16 %v721
        %v2040 = vunpack.c.l.b16 %v722
        %v2041 = vunpack.c.h.b16 %v722
        %v2042 = vunpack.c.l.b16 %v723
        %v2043 = vunpack.c.h.b16 %v723
        %v2044 = vunpack.c.l.b16 %v724
        %v2045 = vunpack.c.h.b16 %v724
        %v2046 = vunpack.c.l.b16 %v725
        %v2047 = vunpack.c.h.b16 %v725
        %v2048 = vunpack.c.l.b16 %v726
        %v2049 = vunpack.c.h.b16 %v726
        %v2050 = vunpack.c.l.b16 %v727
        %v2051 = vunpack.c.h.b16 %v727
        %v2052 = vunpack.c.l.b16 %v728
        %v2053 = vunpack.c.h.b16 %v728
        %v2054 = vunpack.c.l.b16 %v729
        %v2055 = vunpack.c.h.b16 %v729
        %v2056 = vunpack.c.l.b16 %v730
        %v2057 = vunpack.c.h.b16 %v730
        %v2058 = vunpack.c.l.b16 %v731
        %v2059 = vunpack.c.h.b16 %v731
        %v2060 = vunpack.c.l.b16 %v732
        %v2061 = vunpack.c.h.b16 %v732
        %v2062 = vunpack.c.l.b16 %v733
        %v2063 = vunpack.c.h.b16 %v733
        %v2064 = vunpack.c.l.b16 %v734
        %v2065 = vunpack.c.h.b16 %v734
        %v2066 = vunpack.c.l.b16 %v735
        %v2067 = vunpack.c.h.b16 %v735
        %v2068 = vunpack.c.l.b16 %v736
        %v2069 = vunpack.c.h.b16 %v736
        %v2070 = vunpack.c.l.b16 %v737
        %v2071 = vunpack.c.h.b16 %v737
        %v2072 = vunpack.c.l.b16 %v738
        %v2073 = vunpack.c.h.b16 %v738
        %v2074 = vunpack.c.l.b16 %v739
        %v2075 = vunpack.c.h.b16 %v739
        %v2076 = vunpack.c.l.b16 %v740
        %v2077 = vunpack.c.h.b16 %v740
        %v2078 = vunpack.c.l.b16 %v741
        %v2079 = vunpack.c.h.b16 %v741
        %v2080 = vunpack.c.l.b16 %v742
        %v2081 = vunpack.c.h.b16 %v742
        %v2082 = vunpack.c.l.b16 %v743
        %v2083 = vunpack.c.h.b16 %v743
        %v2084 = vunpack.c.l.b16 %v744
        %v2085 = vunpack.c.h.b16 %v744
        %v2086 = vunpack.c.l.b16 %v745
        %v2087 = vunpack.c.h.b16 %v745
        %v2088 = vunpack.c.l.b16 %v746
        %v2089 = vunpack.c.h.b16 %v746
        %v2090 = vunpack.c.l.b16 %v747
        %v2091 = vunpack.c.h.b16 %v747
        %v2092 = vunpack.c.l.b16 %v748
        %v2093 = vunpack.c.h.b16 %v748
        %v2094 = vunpack.c.l.b16 %v749
        %v2095 = vunpack.c.h.b16 %v749
        %v2096 = vunpack.c.l.b16 %v750
        %v2097 = vunpack.c.h.b16 %v750
        %v2098 = vunpack.c.l.b16 %v751
        %v2099 = vunpack.c.h.b16 %v751
        %v2100 = vunpack.c.l.b16 %v752
        %v2101 = vunpack.c.h.b16 %v752
        %v2102 = vunpack.c.l.b16 %v753
        %v2103 = vunpack.c.h.b16 %v753
        %v2104 = vunpack.c.l.b16 %v754
        %v2105 = vunpack.c.h.b16 %v754
        %v2106 = vunpack.c.l.b16 %v755
        %v2107 = vunpack.c.h.b16 %v755
        %v2108 = vunpack.c.l.b16 %v756
        %v2109 = vunpack.c.h.b16 %v756
        %v2110 = vunpack.c.l.b16 %v757
        %v2111 = vunpack.c.h.b16 %v757
        %v2112 = vunpack.c.l.b16 %v758
        %v2113 = vunpack.c.h.b16 %v758
        %v2114 = vunpack.c.l.b16 %v759
        %v2115 = vunpack.c.h.b16 %v759
        %v2116 = vunpack.c.l.b16 %v760
        %v2117 = vunpack.c.h.b16 %v760
        %v2118 = vunpack.c.l.b16 %v761
        %v2119 = vunpack.c.h.b16 %v761
        %v2120 = vunpack.c.l.b16 %v762
        %v2121 = vunpack.c.h.b16 %v762
        %v2122 = vunpack.c.l.b16 %v763
        %v2123 = vunpack.c.h.b16 %v763
        %v2124 = vunpack.c.l.b16 %v764
        %v2125 = vunpack.c.h.b16 %v764
        %v2126 = vunpack.c.l.b16 %v765
        %v2127 = vunpack.c.h.b16 %v765
        %v2128 = vunpack.c.l.b16 %v766
        %v2129 = vunpack.c.h.b16 %v766
        %v2130 = vunpack.c.l.b16 %v767
        %v2131 = vunpack.c.h.b16 %v767
        %v2132 = vunpack.c.l.b16 %v768
        %v2133 = vunpack.c.h.b16 %v768
        %v2134 = vunpack.c.l.b16 %v769
        %v2135 = vunpack.c.h.b16 %v769
        %v2136 = vunpack.c.l.b16 %v770
        %v2137 = vunpack.c.h.b16 %v770
        %v2138 = vunpack.c.l.b16 %v771
        %v2139 = vunpack.c.h.b16 %v771
        %v2140 = vunpack.c.l.b16 %v772
        %v2141 = vunpack.c.h.b16 %v772
        %v2142 = vunpack.c.l.b16 %v773
        %v2143 = vunpack.c.h.b16 %v773
        %v2144 = vunpack.c.l.b16 %v774
        %v2145 = vunpack.c.h.b16 %v774
        %v2146 = vunpack.c.l.b16 %v775
        %v2147 = vunpack.c.h.b16 %v775
        %v2148 = vunpack.c.l.b16 %v776
        %v2149 = vunpack.c.h.b16 %v776
        %v2150 = vunpack.c.l.b16 %v777
        %v2151 = vunpack.c.h.b16 %v777
        %v2152 = vunpack.c.l.b16 %v778
        %v2153 = vunpack.c.h.b16 %v778
        %v2154 = vunpack.c.l.b16 %v779
        %v2155 = vunpack.c.h.b16 %v779
        %v2156 = vunpack.c.l.b16 %v780
        %v2157 = vunpack.c.h.b16 %v780
        %v2158 = vunpack.c.l.b16 %v781
        %v2159 = vunpack.c.h.b16 %v781
        %v2160 = vunpack.c.l.b16 %v782
        %v2161 = vunpack.c.h.b16 %v782
        %v2162 = vunpack.c.l.b16 %v783
        %v2163 = vunpack.c.h.b16 %v783
        %v2164 = vunpack.c.l.b16 %v784
        %v2165 = vunpack.c.h.b16 %v784
        %v2166 = vunpack.c.l.b16 %v785
        %v2167 = vunpack.c.h.b16 %v785
        %v2168 = vunpack.c.l.b16 %v786
        %v2169 = vunpack.c.h.b16 %v786
        %v2170 = vunpack.c.l.b16 %v787
        %v2171 = vunpack.c.h.b16 %v787
        %v2172 = vunpack.c.l.b16 %v788
        %v2173 = vunpack.c.h.b16 %v788
        %v2174 = vunpack.c.l.b16 %v789
        %v2175 = vunpack.c.h.b16 %v789
        %v2176 = vunpack.c.l.b16 %v790
        %v2177 = vunpack.c.h.b16 %v790
        %v2178 = vunpack.c.l.b16 %v791
        %v2179 = vunpack.c.h.b16 %v791
        %v2180 = vunpack.c.l.b16 %v792
        %v2181 = vunpack.c.h.b16 %v792
        %v2182 = vunpack.c.l.b16 %v793
        %v2183 = vunpack.c.h.b16 %v793
        %v2184 = vunpack.c.l.b16 %v794
        %v2185 = vunpack.c.h.b16 %v794
        %v2186 = vunpack.c.l.b16 %v795
        %v2187 = vunpack.c.h.b16 %v795
        %v2188 = vunpack.c.l.b16 %v796
        %v2189 = vunpack.c.h.b16 %v796
        %v2190 = vunpack.c.l.b16 %v797
        %v2191 = vunpack.c.h.b16 %v797
        %v2192 = vunpack.c.l.b16 %v798
        %v2193 = vunpack.c.h.b16 %v798
        %v2194 = vunpack.c.l.b16 %v799
        %v2195 = vunpack.c.h.b16 %v799
        %v2196 = vunpack.c.l.b16 %v800
        %v2197 = vunpack.c.h.b16 %v800
        %v2198 = vunpack.c.l.b16 %v801
        %v2199 = vunpack.c.h.b16 %v801
        %v2200 = vunpack.c.l.b16 %v802
        %v2201 = vunpack.c.h.b16 %v802
        %v2202 = vunpack.c.l.b16 %v803
        %v2203 = vunpack.c.h.b16 %v803
        %v2204 = vunpack.c.l.b16 %v804
        %v2205 = vunpack.c.h.b16 %v804
        %v2206 = vunpack.c.l.b16 %v805
        %v2207 = vunpack.c.h.b16 %v805
        %v2208 = vunpack.c.l.b16 %v806
        %v2209 = vunpack.c.h.b16 %v806
        %v2210 = vunpack.c.l.b16 %v807
        %v2211 = vunpack.c.h.b16 %v807
        %v2212 = vunpack.c.l.b16 %v808
        %v2213 = vunpack.c.h.b16 %v808
        %v2214 = vunpack.c.l.b16 %v809
        %v2215 = vunpack.c.h.b16 %v809
        %v2216 = vunpack.c.l.b16 %v810
        %v2217 = vunpack.c.h.b16 %v810
        %v2218 = vunpack.c.l.b16 %v811
        %v2219 = vunpack.c.h.b16 %v811
        %v2220 = vunpack.c.l.b16 %v812
        %v2221 = vunpack.c.h.b16 %v812
        %v2222 = vunpack.c.l.b16 %v813
        %v2223 = vunpack.c.h.b16 %v813
        %v2224 = vunpack.c.l.b16 %v814
        %v2225 = vunpack.c.h.b16 %v814
        %v2226 = vunpack.c.l.b16 %v815
        %v2227 = vunpack.c.h.b16 %v815
        %v2228 = vunpack.c.l.b16 %v816
        %v2229 = vunpack.c.h.b16 %v816
        %v2230 = vunpack.c.l.b16 %v817
        %v2231 = vunpack.c.h.b16 %v817
        %v2232 = vunpack.c.l.b16 %v818
        %v2233 = vunpack.c.h.b16 %v818
        %v2234 = vunpack.c.l.b16 %v819
        %v2235 = vunpack.c.h.b16 %v819
        %v2236 = vunpack.c.l.b16 %v820
        %v2237 = vunpack.c.h.b16 %v820
        %v2238 = vunpack.c.l.b16 %v821
        %v2239 = vunpack.c.h.b16 %v821
        %v2240 = vunpack.c.l.b16 %v822
        %v2241 = vunpack.c.h.b16 %v822
        %v2242 = vunpack.c.l.b16 %v823
        %v2243 = vunpack.c.h.b16 %v823
        %v2244 = vunpack.c.l.b16 %v824
        %v2245 = vunpack.c.h.b16 %v824
        %v2246 = vunpack.c.l.b16 %v825
        %v2247 = vunpack.c.h.b16 %v825
        %v2248 = vunpack.c.l.b16 %v826
        %v2249 = vunpack.c.h.b16 %v826
        %v2250 = vunpack.c.l.b16 %v827
        %v2251 = vunpack.c.h.b16 %v827
        %v2252 = vunpack.c.l.b16 %v828
        %v2253 = vunpack.c.h.b16 %v828
        %v2254 = vunpack.c.l.b16 %v829
        %v2255 = vunpack.c.h.b16 %v829
        %v2256 = vunpack.c.l.b16 %v830
        %v2257 = vunpack.c.h.b16 %v830
        %v2258 = vunpack.c.l.b16 %v831
        %v2259 = vunpack.c.h.b16 %v831
        %v2260 = vunpack.c.l.b16 %v832
        %v2261 = vunpack.c.h.b16 %v832
        %v2262 = vunpack.c.l.b16 %v833
        %v2263 = vunpack.c.h.b16 %v833
        %v2264 = vunpack.c.l.b16 %v834
        %v2265 = vunpack.c.h.b16 %v834
        %v2266 = vunpack.c.l.b16 %v835
        %v2267 = vunpack.c.h.b16 %v835
        %v2268 = vunpack.c.l.b16 %v836
        %v2269 = vunpack.c.h.b16 %v836
        %v2270 = vunpack.c.l.b16 %v837
        %v2271 = vunpack.c.h.b16 %v837
        %v2272 = vunpack.c.l.b16 %v838
        %v2273 = vunpack.c.h.b16 %v838
        %v2274 = vunpack.c.l.b16 %v839
        %v2275 = vunpack.c.h.b16 %v839
        %v2276 = vunpack.c.l.b16 %v840
        %v2277 = vunpack.c.h.b16 %v840
        %v2278 = vunpack.c.l.b16 %v841
        %v2279 = vunpack.c.h.b16 %v841
        %v2280 = vunpack.c.l.b16 %v842
        %v2281 = vunpack.c.h.b16 %v842
        %v2282 = vunpack.c.l.b16 %v843
        %v2283 = vunpack.c.h.b16 %v843
        %v2284 = vunpack.c.l.b16 %v844
        %v2285 = vunpack.c.h.b16 %v844
        %v2286 = vunpack.c.l.b16 %v845
        %v2287 = vunpack.c.h.b16 %v845
        %v2288 = vunpack.c.l.b16 %v846
        %v2289 = vunpack.c.h.b16 %v846
        %v2290 = vunpack.c.l.b16 %v847
        %v2291 = vunpack.c.h.b16 %v847
        %v2292 = vunpack.c.l.b16 %v848
        %v2293 = vunpack.c.h.b16 %v848
        %v2294 = vunpack.c.l.b16 %v849
        %v2295 = vunpack.c.h.b16 %v849
        %v2296 = vunpack.c.l.b16 %v850
        %v2297 = vunpack.c.h.b16 %v850
        %v2298 = vunpack.c.l.b16 %v851
        %v2299 = vunpack.c.h.b16 %v851
        %v2300 = vunpack.c.l.b16 %v852
        %v2301 = vunpack.c.h.b16 %v852
        %v2302 = vunpack.c.l.b16 %v853
        %v2303 = vunpack.c.h.b16 %v853
        %v2304 = vunpack.c.l.b16 %v854
        %v2305 = vunpack.c.h.b16 %v854
        %v2306 = vunpack.c.l.b16 %v855
        %v2307 = vunpack.c.h.b16 %v855
        %v2308 = vunpack.c.l.b16 %v856
        %v2309 = vunpack.c.h.b16 %v856
        %v2310 = vunpack.c.l.b16 %v857
        %v2311 = vunpack.c.h.b16 %v857
        %v2312 = vunpack.c.l.b16 %v858
        %v2313 = vunpack.c.h.b16 %v858
        %v2314 = vunpack.c.l.b16 %v859
        %v2315 = vunpack.c.h.b16 %v859
        %v2316 = vunpack.c.l.b16 %v860
        %v2317 = vunpack.c.h.b16 %v860
        %v2318 = vunpack.c.l.b16 %v861
        %v2319 = vunpack.c.h.b16 %v861
        %v2320 = vunpack.c.l.b16 %v862
        %v2321 = vunpack.c.h.b16 %v862
        %v2322 = vunpack.c.l.b16 %v863
        %v2323 = vunpack.c.h.b16 %v863
        %v2324 = vunpack.c.l.b16 %v864
        %v2325 = vunpack.c.h.b16 %v864
        %v2326 = vunpack.c.l.b16 %v865
        %v2327 = vunpack.c.h.b16 %v865
        %v2328 = vunpack.c.l.b16 %v866
        %v2329 = vunpack.c.h.b16 %v866
        %v2330 = vunpack.c.l.b16 %v867
        %v2331 = vunpack.c.h.b16 %v867
        %v2332 = vunpack.c.l.b16 %v868
        %v2333 = vunpack.c.h.b16 %v868
        %v2334 = vunpack.c.l.b16 %v869
        %v2335 = vunpack.c.h.b16 %v869
        %v2336 = vunpack.c.l.b16 %v870
        %v2337 = vunpack.c.h.b16 %v870
        %v2338 = vunpack.c.l.b16 %v871
        %v2339 = vunpack.c.h.b16 %v871
        %v2340 = vunpack.c.l.b16 %v872
        %v2341 = vunpack.c.h.b16 %v872
        %v2342 = vunpack.c.l.b16 %v873
        %v2343 = vunpack.c.h.b16 %v873
        %v2344 = vunpack.c.l.b16 %v874
        %v2345 = vunpack.c.h.b16 %v874
        %v2346 = vunpack.c.l.b16 %v875
        %v2347 = vunpack.c.h.b16 %v875
        %v2348 = vunpack.c.l.b16 %v876
        %v2349 = vunpack.c.h.b16 %v876
        %v2350 = vunpack.c.l.b16 %v877
        %v2351 = vunpack.c.h.b16 %v877
        %v2352 = vunpack.c.l.b16 %v878
        %v2353 = vunpack.c.h.b16 %v878
        %v2354 = vunpack.c.l.b16 %v879
        %v2355 = vunpack.c.h.b16 %v879
        %v2356 = vunpack.c.l.b16 %v880
        %v2357 = vunpack.c.h.b16 %v880
        %v2358 = vunpack.c.l.b16 %v881
        %v2359 = vunpack.c.h.b16 %v881
        %v2360 = vunpack.c.l.b16 %v882
        %v2361 = vunpack.c.h.b16 %v882
        %v2362 = vunpack.c.l.b16 %v883
        %v2363 = vunpack.c.h.b16 %v883
        %v2364 = vunpack.c.l.b16 %v884
        %v2365 = vunpack.c.h.b16 %v884
        %v2366 = vunpack.c.l.b16 %v885
        %v2367 = vunpack.c.h.b16 %v885
        %v2368 = vunpack.c.l.b16 %v886
        %v2369 = vunpack.c.h.b16 %v886
        %v2370 = vunpack.c.l.b16 %v887
        %v2371 = vunpack.c.h.b16 %v887
        %v2372 = vunpack.c.l.b16 %v888
        %v2373 = vunpack.c.h.b16 %v888
        %v2374 = vunpack.c.l.b16 %v889
        %v2375 = vunpack.c.h.b16 %v889
        %v2376 = vunpack.c.l.b16 %v890
        %v2377 = vunpack.c.h.b16 %v890
        %v2378 = vunpack.c.l.b16 %v891
        %v2379 = vunpack.c.h.b16 %v891
        %v2380 = vunpack.c.l.b16 %v892
        %v2381 = vunpack.c.h.b16 %v892
        %v2382 = vunpack.c.l.b16 %v893
        %v2383 = vunpack.c.h.b16 %v893
        %v2384 = vunpack.c.l.b16 %v894
        %v2385 = vunpack.c.h.b16 %v894
        %v2386 = vunpack.c.l.b16 %v895
        %v2387 = vunpack.c.h.b16 %v895
        %v2388 = vunpack.c.l.b16 %v896
        %v2389 = vunpack.c.h.b16 %v896
        %v2390 = vunpack.c.l.b16 %v897
        %v2391 = vunpack.c.h.b16 %v897
        %v2392 = vunpack.c.l.b16 %v898
        %v2393 = vunpack.c.h.b16 %v898
        %v2394 = vunpack.c.l.b16 %v899
        %v2395 = vunpack.c.h.b16 %v899
        %v2396 = vunpack.c.l.b16 %v900
        %v2397 = vunpack.c.h.b16 %v900
        %v2398 = vunpack.c.l.b16 %v901
        %v2399 = vunpack.c.h.b16 %v901
        %v2400 = vunpack.c.l.b16 %v902
        %v2401 = vunpack.c.h.b16 %v902
        %v2402 = vunpack.c.l.b16 %v903
        %v2403 = vunpack.c.h.b16 %v903
        %v2404 = vunpack.c.l.b16 %v904
        %v2405 = vunpack.c.h.b16 %v904
        %v2406 = vunpack.c.l.b16 %v905
        %v2407 = vunpack.c.h.b16 %v905
        %v2408 = vunpack.c.l.b16 %v906
        %v2409 = vunpack.c.h.b16 %v906
        %v2410 = vunpack.c.l.b16 %v907
        %v2411 = vunpack.c.h.b16 %v907
        %v2412 = vunpack.c.l.b16 %v908
        %v2413 = vunpack.c.h.b16 %v908
        %v2414 = vunpack.c.l.b16 %v909
        %v2415 = vunpack.c.h.b16 %v909
        %v2416 = vunpack.c.l.b16 %v910
        %v2417 = vunpack.c.h.b16 %v910
        %v2418 = vunpack.c.l.b16 %v911
        %v2419 = vunpack.c.h.b16 %v911
        %v2420 = vunpack.c.l.b16 %v912
        %v2421 = vunpack.c.h.b16 %v912
        %v2422 = vunpack.c.l.b16 %v913
        %v2423 = vunpack.c.h.b16 %v913
        %v2424 = vunpack.c.l.b16 %v914
        %v2425 = vunpack.c.h.b16 %v914
        %v2426 = vunpack.c.l.b16 %v915
        %v2427 = vunpack.c.h.b16 %v915
        %v2428 = vunpack.c.l.b16 %v916
        %v2429 = vunpack.c.h.b16 %v916
        %v2430 = vunpack.c.l.b16 %v917
        %v2431 = vunpack.c.h.b16 %v917
        %v2432 = vunpack.c.l.b16 %v918
        %v2433 = vunpack.c.h.b16 %v918
        %v2434 = vunpack.c.l.b16 %v919
        %v2435 = vunpack.c.h.b16 %v919
        %v2436 = vunpack.c.l.b16 %v920
        %v2437 = vunpack.c.h.b16 %v920
        %v2438 = vunpack.c.l.b16 %v921
        %v2439 = vunpack.c.h.b16 %v921
        %v2440 = vunpack.c.l.b16 %v922
        %v2441 = vunpack.c.h.b16 %v922
        %v2442 = vunpack.c.l.b16 %v923
        %v2443 = vunpack.c.h.b16 %v923
        %v2444 = vunpack.c.l.b16 %v924
        %v2445 = vunpack.c.h.b16 %v924
        %v2446 = vunpack.c.l.b16 %v925
        %v2447 = vunpack.c.h.b16 %v925
        %v2448 = vunpack.c.l.b16 %v926
        %v2449 = vunpack.c.h.b16 %v926
        %v2450 = vunpack.c.l.b16 %v927
        %v2451 = vunpack.c.h.b16 %v927
        %v2452 = vunpack.c.l.b16 %v928
        %v2453 = vunpack.c.h.b16 %v928
        %v2454 = vunpack.c.l.b16 %v929
        %v2455 = vunpack.c.h.b16 %v929
        %v2456 = vunpack.c.l.b16 %v930
        %v2457 = vunpack.c.h.b16 %v930
        %v2458 = vunpack.c.l.b16 %v931
        %v2459 = vunpack.c.h.b16 %v931
        %v2460 = vunpack.c.l.b16 %v932
        %v2461 = vunpack.c.h.b16 %v932
        %v2462 = vunpack.c.l.b16 %v933
        %v2463 = vunpack.c.h.b16 %v933
        %v2464 = vunpack.c.l.b16 %v934
        %v2465 = vunpack.c.h.b16 %v934
        %v2466 = vunpack.c.l.b16 %v935
        %v2467 = vunpack.c.h.b16 %v935
        %v2468 = vunpack.c.l.b16 %v936
        %v2469 = vunpack.c.h.b16 %v936
        %v2470 = vunpack.c.l.b16 %v937
        %v2471 = vunpack.c.h.b16 %v937
        %v2472 = vunpack.c.l.b16 %v938
        %v2473 = vunpack.c.h.b16 %v938
        %v2474 = vunpack.c.l.b16 %v939
        %v2475 = vunpack.c.h.b16 %v939
        %v2476 = vunpack.c.l.b16 %v940
        %v2477 = vunpack.c.h.b16 %v940
        %v2478 = vunpack.c.l.b16 %v941
        %v2479 = vunpack.c.h.b16 %v941
        %v2480 = vunpack.c.l.b16 %v942
        %v2481 = vunpack.c.h.b16 %v942
        %v2482 = vunpack.c.l.b16 %v943
        %v2483 = vunpack.c.h.b16 %v943
        %v2484 = vunpack.c.l.b16 %v944
        %v2485 = vunpack.c.h.b16 %v944
        %v2486 = vunpack.c.l.b16 %v945
        %v2487 = vunpack.c.h.b16 %v945
        %v2488 = vunpack.c.l.b16 %v946
        %v2489 = vunpack.c.h.b16 %v946
        %v2490 = vunpack.c.l.b16 %v947
        %v2491 = vunpack.c.h.b16 %v947
        %v2492 = vunpack.c.l.b16 %v948
        %v2493 = vunpack.c.h.b16 %v948
        %v2494 = vunpack.c.l.b16 %v949
        %v2495 = vunpack.c.h.b16 %v949
        %v2496 = vunpack.c.l.b16 %v950
        %v2497 = vunpack.c.h.b16 %v950
        %v2498 = vunpack.c.l.b16 %v951
        %v2499 = vunpack.c.h.b16 %v951
        %v2500 = vunpack.c.l.b16 %v952
        %v2501 = vunpack.c.h.b16 %v952
        %v2502 = vunpack.c.l.b16 %v953
        %v2503 = vunpack.c.h.b16 %v953
        %v2504 = vunpack.c.l.b16 %v954
        %v2505 = vunpack.c.h.b16 %v954
        %v2506 = vunpack.c.l.b16 %v955
        %v2507 = vunpack.c.h.b16 %v955
        %v2508 = vunpack.c.l.b16 %v956
        %v2509 = vunpack.c.h.b16 %v956
        %v2510 = vunpack.c.l.b16 %v957
        %v2511 = vunpack.c.h.b16 %v957
        %v2512 = vunpack.c.l.b16 %v958
        %v2513 = vunpack.c.h.b16 %v958
        %v2514 = vunpack.c.l.b16 %v959
        %v2515 = vunpack.c.h.b16 %v959
        %v2516 = vunpack.c.l.b16 %v960
        %v2517 = vunpack.c.h.b16 %v960
        %v2518 = vunpack.c.l.b16 %v961
        %v2519 = vunpack.c.h.b16 %v961
        %v2520 = vunpack.c.l.b16 %v962
        %v2521 = vunpack.c.h.b16 %v962
        %v2522 = vunpack.c.l.b16 %v963
        %v2523 = vunpack.c.h.b16 %v963
        %v2524 = vunpack.c.l.b16 %v964
        %v2525 = vunpack.c.h.b16 %v964
        %v2526 = vunpack.c.l.b16 %v965
        %v2527 = vunpack.c.h.b16 %v965
        %v2528 = vunpack.c.l.b16 %v966
        %v2529 = vunpack.c.h.b16 %v966
        %v2530 = vunpack.c.l.b16 %v967
        %v2531 = vunpack.c.h.b16 %v967
        %v2532 = vpack.c.b16 %v1516, %v1508
        %v2533 = vpack.c.b16 %v1517, %v1509
        %v2534 = vpack.c.b16 %v1518, %v1510
        %v2535 = vpack.c.b16 %v1519, %v1511
        %v2536 = vpack.c.b16 %v1520, %v1512
        %v2537 = vpack.c.b16 %v1521, %v1513
        %v2538 = vpack.c.b16 %v1522, %v1514
        %v2539 = vpack.c.b16 %v1523, %v1515
        %v2540 = vpack.c.b16 %v1532, %v1524
        %v2541 = vpack.c.b16 %v1533, %v1525
        %v2542 = vpack.c.b16 %v1534, %v1526
        %v2543 = vpack.c.b16 %v1535, %v1527
        %v2544 = vpack.c.b16 %v1536, %v1528
        %v2545 = vpack.c.b16 %v1537, %v1529
        %v2546 = vpack.c.b16 %v1538, %v1530
        %v2547 = vpack.c.b16 %v1539, %v1531
        %v2548 = vpack.c.b16 %v1548, %v1540
        %v2549 = vpack.c.b16 %v1549, %v1541
        %v2550 = vpack.c.b16 %v1550, %v1542
        %v2551 = vpack.c.b16 %v1551, %v1543
        %v2552 = vpack.c.b16 %v1552, %v1544
        %v2553 = vpack.c.b16 %v1553, %v1545
        %v2554 = vpack.c.b16 %v1554, %v1546
        %v2555 = vpack.c.b16 %v1555, %v1547
        %v2556 = vpack.c.b16 %v1564, %v1556
        %v2557 = vpack.c.b16 %v1565, %v1557
        %v2558 = vpack.c.b16 %v1566, %v1558
        %v2559 = vpack.c.b16 %v1567, %v1559
        %v2560 = vpack.c.b16 %v1568, %v1560
        %v2561 = vpack.c.b16 %v1569, %v1561
        %v2562 = vpack.c.b16 %v1570, %v1562
        %v2563 = vpack.c.b16 %v1571, %v1563
        %v2564 = vpack.c.b16 %v1580, %v1572
        %v2565 = vpack.c.b16 %v1581, %v1573
        %v2566 = vpack.c.b16 %v1582, %v1574
        %v2567 = vpack.c.b16 %v1583, %v1575
        %v2568 = vpack.c.b16 %v1584, %v1576
        %v2569 = vpack.c.b16 %v1585, %v1577
        %v2570 = vpack.c.b16 %v1586, %v1578
        %v2571 = vpack.c.b16 %v1587, %v1579
        %v2572 = vpack.c.b16 %v1596, %v1588
        %v2573 = vpack.c.b16 %v1597, %v1589
        %v2574 = vpack.c.b16 %v1598, %v1590
        %v2575 = vpack.c.b16 %v1599, %v1591
        %v2576 = vpack.c.b16 %v1600, %v1592
        %v2577 = vpack.c.b16 %v1601, %v1593
        %v2578 = vpack.c.b16 %v1602, %v1594
        %v2579 = vpack.c.b16 %v1603, %v1595
        %v2580 = vpack.c.b16 %v1612, %v1604
        %v2581 = vpack.c.b16 %v1613, %v1605
        %v2582 = vpack.c.b16 %v1614, %v1606
        %v2583 = vpack.c.b16 %v1615, %v1607
        %v2584 = vpack.c.b16 %v1616, %v1608
        %v2585 = vpack.c.b16 %v1617, %v1609
        %v2586 = vpack.c.b16 %v1618, %v1610
        %v2587 = vpack.c.b16 %v1619, %v1611
        %v2588 = vpack.c.b16 %v1628, %v1620
        %v2589 = vpack.c.b16 %v1629, %v1621
        %v2590 = vpack.c.b16 %v1630, %v1622
        %v2591 = vpack.c.b16 %v1631, %v1623
        %v2592 = vpack.c.b16 %v1632, %v1624
        %v2593 = vpack.c.b16 %v1633, %v1625
        %v2594 = vpack.c.b16 %v1634, %v1626
        %v2595 = vpack.c.b16 %v1635, %v1627
        %v2596 = vpack.c.b16 %v1644, %v1636
        %v2597 = vpack.c.b16 %v1645, %v1637
        %v2598 = vpack.c.b16 %v1646, %v1638
        %v2599 = vpack.c.b16 %v1647, %v1639
        %v2600 = vpack.c.b16 %v1648, %v1640
        %v2601 = vpack.c.b16 %v1649, %v1641
        %v2602 = vpack.c.b16 %v1650, %v1642
        %v2603 = vpack.c.b16 %v1651, %v1643
        %v2604 = vpack.c.b16 %v1660, %v1652
        %v2605 = vpack.c.b16 %v1661, %v1653
        %v2606 = vpack.c.b16 %v1662, %v1654
        %v2607 = vpack.c.b16 %v1663, %v1655
        %v2608 = vpack.c.b16 %v1664, %v1656
        %v2609 = vpack.c.b16 %v1665, %v1657
        %v2610 = vpack.c.b16 %v1666, %v1658
        %v2611 = vpack.c.b16 %v1667, %v1659
        %v2612 = vpack.c.b16 %v1676, %v1668
        %v2613 = vpack.c.b16 %v1677, %v1669
        %v2614 = vpack.c.b16 %v1678, %v1670
        %v2615 = vpack.c.b16 %v1679, %v1671
        %v2616 = vpack.c.b16 %v1680, %v1672
        %v2617 = vpack.c.b16 %v1681, %v1673
        %v2618 = vpack.c.b16 %v1682, %v1674
        %v2619 = vpack.c.b16 %v1683, %v1675
        %v2620 = vpack.c.b16 %v1692, %v1684
        %v2621 = vpack.c.b16 %v1693, %v1685
        %v2622 = vpack.c.b16 %v1694, %v1686
        %v2623 = vpack.c.b16 %v1695, %v1687
        %v2624 = vpack.c.b16 %v1696, %v1688
        %v2625 = vpack.c.b16 %v1697, %v1689
        %v2626 = vpack.c.b16 %v1698, %v1690
        %v2627 = vpack.c.b16 %v1699, %v1691
        %v2628 = vpack.c.b16 %v1708, %v1700
        %v2629 = vpack.c.b16 %v1709, %v1701
        %v2630 = vpack.c.b16 %v1710, %v1702
        %v2631 = vpack.c.b16 %v1711, %v1703
        %v2632 = vpack.c.b16 %v1712, %v1704
        %v2633 = vpack.c.b16 %v1713, %v1705
        %v2634 = vpack.c.b16 %v1714, %v1706
        %v2635 = vpack.c.b16 %v1715, %v1707
        %v2636 = vpack.c.b16 %v1724, %v1716
        %v2637 = vpack.c.b16 %v1725, %v1717
        %v2638 = vpack.c.b16 %v1726, %v1718
        %v2639 = vpack.c.b16 %v1727, %v1719
        %v2640 = vpack.c.b16 %v1728, %v1720
        %v2641 = vpack.c.b16 %v1729, %v1721
        %v2642 = vpack.c.b16 %v1730, %v1722
        %v2643 = vpack.c.b16 %v1731, %v1723
        %v2644 = vpack.c.b16 %v1740, %v1732
        %v2645 = vpack.c.b16 %v1741, %v1733
        %v2646 = vpack.c.b16 %v1742, %v1734
        %v2647 = vpack.c.b16 %v1743, %v1735
        %v2648 = vpack.c.b16 %v1744, %v1736
        %v2649 = vpack.c.b16 %v1745, %v1737
        %v2650 = vpack.c.b16 %v1746, %v1738
        %v2651 = vpack.c.b16 %v1747, %v1739
        %v2652 = vpack.c.b16 %v1756, %v1748
        %v2653 = vpack.c.b16 %v1757, %v1749
        %v2654 = vpack.c.b16 %v1758, %v1750
        %v2655 = vpack.c.b16 %v1759, %v1751
        %v2656 = vpack.c.b16 %v1760, %v1752
        %v2657 = vpack.c.b16 %v1761, %v1753
        %v2658 = vpack.c.b16 %v1762, %v1754
        %v2659 = vpack.c.b16 %v1763, %v1755
        %v2660 = vpack.c.b16 %v1772, %v1764
        %v2661 = vpack.c.b16 %v1773, %v1765
        %v2662 = vpack.c.b16 %v1774, %v1766
        %v2663 = vpack.c.b16 %v1775, %v1767
        %v2664 = vpack.c.b16 %v1776, %v1768
        %v2665 = vpack.c.b16 %v1777, %v1769
        %v2666 = vpack.c.b16 %v1778, %v1770
        %v2667 = vpack.c.b16 %v1779, %v1771
        %v2668 = vpack.c.b16 %v1788, %v1780
        %v2669 = vpack.c.b16 %v1789, %v1781
        %v2670 = vpack.c.b16 %v1790, %v1782
        %v2671 = vpack.c.b16 %v1791, %v1783
        %v2672 = vpack.c.b16 %v1792, %v1784
        %v2673 = vpack.c.b16 %v1793, %v1785
        %v2674 = vpack.c.b16 %v1794, %v1786
        %v2675 = vpack.c.b16 %v1795, %v1787
        %v2676 = vpack.c.b16 %v1804, %v1796
        %v2677 = vpack.c.b16 %v1805, %v1797
        %v2678 = vpack.c.b16 %v1806, %v1798
        %v2679 = vpack.c.b16 %v1807, %v1799
        %v2680 = vpack.c.b16 %v1808, %v1800
        %v2681 = vpack.c.b16 %v1809, %v1801
        %v2682 = vpack.c.b16 %v1810, %v1802
        %v2683 = vpack.c.b16 %v1811, %v1803
        %v2684 = vpack.c.b16 %v1820, %v1812
        %v2685 = vpack.c.b16 %v1821, %v1813
        %v2686 = vpack.c.b16 %v1822, %v1814
        %v2687 = vpack.c.b16 %v1823, %v1815
        %v2688 = vpack.c.b16 %v1824, %v1816
        %v2689 = vpack.c.b16 %v1825, %v1817
        %v2690 = vpack.c.b16 %v1826, %v1818
        %v2691 = vpack.c.b16 %v1827, %v1819
        %v2692 = vpack.c.b16 %v1836, %v1828
        %v2693 = vpack.c.b16 %v1837, %v1829
        %v2694 = vpack.c.b16 %v1838, %v1830
        %v2695 = vpack.c.b16 %v1839, %v1831
        %v2696 = vpack.c.b16 %v1840, %v1832
        %v2697 = vpack.c.b16 %v1841, %v1833
        %v2698 = vpack.c.b16 %v1842, %v1834
        %v2699 = vpack.c.b16 %v1843, %v1835
        %v2700 = vpack.c.b16 %v1852, %v1844
        %v2701 = vpack.c.b16 %v1853, %v1845
        %v2702 = vpack.c.b16 %v1854, %v1846
        %v2703 = vpack.c.b16 %v1855, %v1847
        %v2704 = vpack.c.b16 %v1856, %v1848
        %v2705 = vpack.c.b16 %v1857, %v1849
        %v2706 = vpack.c.b16 %v1858, %v1850
        %v2707 = vpack.c.b16 %v1859, %v1851
        %v2708 = vpack.c.b16 %v1868, %v1860
        %v2709 = vpack.c.b16 %v1869, %v1861
        %v2710 = vpack.c.b16 %v1870, %v1862
        %v2711 = vpack.c.b16 %v1871, %v1863
        %v2712 = vpack.c.b16 %v1872, %v1864
        %v2713 = vpack.c.b16 %v1873, %v1865
        %v2714 = vpack.c.b16 %v1874, %v1866
        %v2715 = vpack.c.b16 %v1875, %v1867
        %v2716 = vpack.c.b16 %v1884, %v1876
        %v2717 = vpack.c.b16 %v1885, %v1877
        %v2718 = vpack.c.b16 %v1886, %v1878
        %v2719 = vpack.c.b16 %v1887, %v1879
        %v2720 = vpack.c.b16 %v1888, %v1880
        %v2721 = vpack.c.b16 %v1889, %v1881
        %v2722 = vpack.c.b16 %v1890, %v1882
        %v2723 = vpack.c.b16 %v1891, %v1883
        %v2724 = vpack.c.b16 %v1900, %v1892
        %v2725 = vpack.c.b16 %v1901, %v1893
        %v2726 = vpack.c.b16 %v1902, %v1894
        %v2727 = vpack.c.b16 %v1903, %v1895
        %v2728 = vpack.c.b16 %v1904, %v1896
        %v2729 = vpack.c.b16 %v1905, %v1897
        %v2730 = vpack.c.b16 %v1906, %v1898
        %v2731 = vpack.c.b16 %v1907, %v1899
        %v2732 = vpack.c.b16 %v1916, %v1908
        %v2733 = vpack.c.b16 %v1917, %v1909
        %v2734 = vpack.c.b16 %v1918, %v1910
        %v2735 = vpack.c.b16 %v1919, %v1911
        %v2736 = vpack.c.b16 %v1920, %v1912
        %v2737 = vpack.c.b16 %v1921, %v1913
        %v2738 = vpack.c.b16 %v1922, %v1914
        %v2739 = vpack.c.b16 %v1923, %v1915
        %v2740 = vpack.c.b16 %v1932, %v1924
        %v2741 = vpack.c.b16 %v1933, %v1925
        %v2742 = vpack.c.b16 %v1934, %v1926
        %v2743 = vpack.c.b16 %v1935, %v1927
        %v2744 = vpack.c.b16 %v1936, %v1928
        %v2745 = vpack.c.b16 %v1937, %v1929
        %v2746 = vpack.c.b16 %v1938, %v1930
        %v2747 = vpack.c.b16 %v1939, %v1931
        %v2748 = vpack.c.b16 %v1948, %v1940
        %v2749 = vpack.c.b16 %v1949, %v1941
        %v2750 = vpack.c.b16 %v1950, %v1942
        %v2751 = vpack.c.b16 %v1951, %v1943
        %v2752 = vpack.c.b16 %v1952, %v1944
        %v2753 = vpack.c.b16 %v1953, %v1945
        %v2754 = vpack.c.b16 %v1954, %v1946
        %v2755 = vpack.c.b16 %v1955, %v1947
        %v2756 = vpack.c.b16 %v1964, %v1956
        %v2757 = vpack.c.b16 %v1965, %v1957
        %v2758 = vpack.c.b16 %v1966, %v1958
        %v2759 = vpack.c.b16 %v1967, %v1959
        %v2760 = vpack.c.b16 %v1968, %v1960
        %v2761 = vpack.c.b16 %v1969, %v1961
        %v2762 = vpack.c.b16 %v1970, %v1962
        %v2763 = vpack.c.b16 %v1971, %v1963
        %v2764 = vpack.c.b16 %v1980, %v1972
        %v2765 = vpack.c.b16 %v1981, %v1973
        %v2766 = vpack.c.b16 %v1982, %v1974
        %v2767 = vpack.c.b16 %v1983, %v1975
        %v2768 = vpack.c.b16 %v1984, %v1976
        %v2769 = vpack.c.b16 %v1985, %v1977
        %v2770 = vpack.c.b16 %v1986, %v1978
        %v2771 = vpack.c.b16 %v1987, %v1979
        %v2772 = vpack.c.b16 %v1996, %v1988
        %v2773 = vpack.c.b16 %v1997, %v1989
        %v2774 = vpack.c.b16 %v1998, %v1990
        %v2775 = vpack.c.b16 %v1999, %v1991
        %v2776 = vpack.c.b16 %v2000, %v1992
        %v2777 = vpack.c.b16 %v2001, %v1993
        %v2778 = vpack.c.b16 %v2002, %v1994
        %v2779 = vpack.c.b16 %v2003, %v1995
        %v2780 = vpack.c.b16 %v2012, %v2004
        %v2781 = vpack.c.b16 %v2013, %v2005
        %v2782 = vpack.c.b16 %v2014, %v2006
        %v2783 = vpack.c.b16 %v2015, %v2007
        %v2784 = vpack.c.b16 %v2016, %v2008
        %v2785 = vpack.c.b16 %v2017, %v2009
        %v2786 = vpack.c.b16 %v2018, %v2010
        %v2787 = vpack.c.b16 %v2019, %v2011
        %v2788 = vpack.c.b16 %v2028, %v2020
        %v2789 = vpack.c.b16 %v2029, %v2021
        %v2790 = vpack.c.b16 %v2030, %v2022
        %v2791 = vpack.c.b16 %v2031, %v2023
        %v2792 = vpack.c.b16 %v2032, %v2024
        %v2793 = vpack.c.b16 %v2033, %v2025
        %v2794 = vpack.c.b16 %v2034, %v2026
        %v2795 = vpack.c.b16 %v2035, %v2027
        %v2796 = vpack.c.b16 %v2044, %v2036
        %v2797 = vpack.c.b16 %v2045, %v2037
        %v2798 = vpack.c.b16 %v2046, %v2038
        %v2799 = vpack.c.b16 %v2047, %v2039
        %v2800 = vpack.c.b16 %v2048, %v2040
        %v2801 = vpack.c.b16 %v2049, %v2041
        %v2802 = vpack.c.b16 %v2050, %v2042
        %v2803 = vpack.c.b16 %v2051, %v2043
        %v2804 = vpack.c.b16 %v2060, %v2052
        %v2805 = vpack.c.b16 %v2061, %v2053
        %v2806 = vpack.c.b16 %v2062, %v2054
        %v2807 = vpack.c.b16 %v2063, %v2055
        %v2808 = vpack.c.b16 %v2064, %v2056
        %v2809 = vpack.c.b16 %v2065, %v2057
        %v2810 = vpack.c.b16 %v2066, %v2058
        %v2811 = vpack.c.b16 %v2067, %v2059
        %v2812 = vpack.c.b16 %v2076, %v2068
        %v2813 = vpack.c.b16 %v2077, %v2069
        %v2814 = vpack.c.b16 %v2078, %v2070
        %v2815 = vpack.c.b16 %v2079, %v2071
        %v2816 = vpack.c.b16 %v2080, %v2072
        %v2817 = vpack.c.b16 %v2081, %v2073
        %v2818 = vpack.c.b16 %v2082, %v2074
        %v2819 = vpack.c.b16 %v2083, %v2075
        %v2820 = vpack.c.b16 %v2092, %v2084
        %v2821 = vpack.c.b16 %v2093, %v2085
        %v2822 = vpack.c.b16 %v2094, %v2086
        %v2823 = vpack.c.b16 %v2095, %v2087
        %v2824 = vpack.c.b16 %v2096, %v2088
        %v2825 = vpack.c.b16 %v2097, %v2089
        %v2826 = vpack.c.b16 %v2098, %v2090
        %v2827 = vpack.c.b16 %v2099, %v2091
        %v2828 = vpack.c.b16 %v2108, %v2100
        %v2829 = vpack.c.b16 %v2109, %v2101
        %v2830 = vpack.c.b16 %v2110, %v2102
        %v2831 = vpack.c.b16 %v2111, %v2103
        %v2832 = vpack.c.b16 %v2112, %v2104
        %v2833 = vpack.c.b16 %v2113, %v2105
        %v2834 = vpack.c.b16 %v2114, %v2106
        %v2835 = vpack.c.b16 %v2115, %v2107
        %v2836 = vpack.c.b16 %v2124, %v2116
        %v2837 = vpack.c.b16 %v2125, %v2117
        %v2838 = vpack.c.b16 %v2126, %v2118
        %v2839 = vpack.c.b16 %v2127, %v2119
        %v2840 = vpack.c.b16 %v2128, %v2120
        %v2841 = vpack.c.b16 %v2129, %v2121
        %v2842 = vpack.c.b16 %v2130, %v2122
        %v2843 = vpack.c.b16 %v2131, %v2123
        %v2844 = vpack.c.b16 %v2140, %v2132
        %v2845 = vpack.c.b16 %v2141, %v2133
        %v2846 = vpack.c.b16 %v2142, %v2134
        %v2847 = vpack.c.b16 %v2143, %v2135
        %v2848 = vpack.c.b16 %v2144, %v2136
        %v2849 = vpack.c.b16 %v2145, %v2137
        %v2850 = vpack.c.b16 %v2146, %v2138
        %v2851 = vpack.c.b16 %v2147, %v2139
        %v2852 = vpack.c.b16 %v2156, %v2148
        %v2853 = vpack.c.b16 %v2157, %v2149
        %v2854 = vpack.c.b16 %v2158, %v2150
        %v2855 = vpack.c.b16 %v2159, %v2151
        %v2856 = vpack.c.b16 %v2160, %v2152
        %v2857 = vpack.c.b16 %v2161, %v2153
        %v2858 = vpack.c.b16 %v2162, %v2154
        %v2859 = vpack.c.b16 %v2163, %v2155
        %v2860 = vpack.c.b16 %v2172, %v2164
        %v2861 = vpack.c.b16 %v2173, %v2165
        %v2862 = vpack.c.b16 %v2174, %v2166
        %v2863 = vpack.c.b16 %v2175, %v2167
        %v2864 = vpack.c.b16 %v2176, %v2168
        %v2865 = vpack.c.b16 %v2177, %v2169
        %v2866 = vpack.c.b16 %v2178, %v2170
        %v2867 = vpack.c.b16 %v2179, %v2171
        %v2868 = vpack.c.b16 %v2188, %v2180
        %v2869 = vpack.c.b16 %v2189, %v2181
        %v2870 = vpack.c.b16 %v2190, %v2182
        %v2871 = vpack.c.b16 %v2191, %v2183
        %v2872 = vpack.c.b16 %v2192, %v2184
        %v2873 = vpack.c.b16 %v2193, %v2185
        %v2874 = vpack.c.b16 %v2194, %v2186
        %v2875 = vpack.c.b16 %v2195, %v2187
        %v2876 = vpack.c.b16 %v2204, %v2196
        %v2877 = vpack.c.b16 %v2205, %v2197
        %v2878 = vpack.c.b16 %v2206, %v2198
        %v2879 = vpack.c.b16 %v2207, %v2199
        %v2880 = vpack.c.b16 %v2208, %v2200
        %v2881 = vpack.c.b16 %v2209, %v2201
        %v2882 = vpack.c.b16 %v2210, %v2202
        %v2883 = vpack.c.b16 %v2211, %v2203
        %v2884 = vpack.c.b16 %v2220, %v2212
        %v2885 = vpack.c.b16 %v2221, %v2213
        %v2886 = vpack.c.b16 %v2222, %v2214
        %v2887 = vpack.c.b16 %v2223, %v2215
        %v2888 = vpack.c.b16 %v2224, %v2216
        %v2889 = vpack.c.b16 %v2225, %v2217
        %v2890 = vpack.c.b16 %v2226, %v2218
        %v2891 = vpack.c.b16 %v2227, %v2219
        %v2892 = vpack.c.b16 %v2236, %v2228
        %v2893 = vpack.c.b16 %v2237, %v2229
        %v2894 = vpack.c.b16 %v2238, %v2230
        %v2895 = vpack.c.b16 %v2239, %v2231
        %v2896 = vpack.c.b16 %v2240, %v2232
        %v2897 = vpack.c.b16 %v2241, %v2233
        %v2898 = vpack.c.b16 %v2242, %v2234
        %v2899 = vpack.c.b16 %v2243, %v2235
        %v2900 = vpack.c.b16 %v2252, %v2244
        %v2901 = vpack.c.b16 %v2253, %v2245
        %v2902 = vpack.c.b16 %v2254, %v2246
        %v2903 = vpack.c.b16 %v2255, %v2247
        %v2904 = vpack.c.b16 %v2256, %v2248
        %v2905 = vpack.c.b16 %v2257, %v2249
        %v2906 = vpack.c.b16 %v2258, %v2250
        %v2907 = vpack.c.b16 %v2259, %v2251
        %v2908 = vpack.c.b16 %v2268, %v2260
        %v2909 = vpack.c.b16 %v2269, %v2261
        %v2910 = vpack.c.b16 %v2270, %v2262
        %v2911 = vpack.c.b16 %v2271, %v2263
        %v2912 = vpack.c.b16 %v2272, %v2264
        %v2913 = vpack.c.b16 %v2273, %v2265
        %v2914 = vpack.c.b16 %v2274, %v2266
        %v2915 = vpack.c.b16 %v2275, %v2267
        %v2916 = vpack.c.b16 %v2284, %v2276
        %v2917 = vpack.c.b16 %v2285, %v2277
        %v2918 = vpack.c.b16 %v2286, %v2278
        %v2919 = vpack.c.b16 %v2287, %v2279
        %v2920 = vpack.c.b16 %v2288, %v2280
        %v2921 = vpack.c.b16 %v2289, %v2281
        %v2922 = vpack.c.b16 %v2290, %v2282
        %v2923 = vpack.c.b16 %v2291, %v2283
        %v2924 = vpack.c.b16 %v2300, %v2292
        %v2925 = vpack.c.b16 %v2301, %v2293
        %v2926 = vpack.c.b16 %v2302, %v2294
        %v2927 = vpack.c.b16 %v2303, %v2295
        %v2928 = vpack.c.b16 %v2304, %v2296
        %v2929 = vpack.c.b16 %v2305, %v2297
        %v2930 = vpack.c.b16 %v2306, %v2298
        %v2931 = vpack.c.b16 %v2307, %v2299
        %v2932 = vpack.c.b16 %v2316, %v2308
        %v2933 = vpack.c.b16 %v2317, %v2309
        %v2934 = vpack.c.b16 %v2318, %v2310
        %v2935 = vpack.c.b16 %v2319, %v2311
        %v2936 = vpack.c.b16 %v2320, %v2312
        %v2937 = vpack.c.b16 %v2321, %v2313
        %v2938 = vpack.c.b16 %v2322, %v2314
        %v2939 = vpack.c.b16 %v2323, %v2315
        %v2940 = vpack.c.b16 %v2332, %v2324
        %v2941 = vpack.c.b16 %v2333, %v2325
        %v2942 = vpack.c.b16 %v2334, %v2326
        %v2943 = vpack.c.b16 %v2335, %v2327
        %v2944 = vpack.c.b16 %v2336, %v2328
        %v2945 = vpack.c.b16 %v2337, %v2329
        %v2946 = vpack.c.b16 %v2338, %v2330
        %v2947 = vpack.c.b16 %v2339, %v2331
        %v2948 = vpack.c.b16 %v2348, %v2340
        %v2949 = vpack.c.b16 %v2349, %v2341
        %v2950 = vpack.c.b16 %v2350, %v2342
        %v2951 = vpack.c.b16 %v2351, %v2343
        %v2952 = vpack.c.b16 %v2352, %v2344
        %v2953 = vpack.c.b16 %v2353, %v2345
        %v2954 = vpack.c.b16 %v2354, %v2346
        %v2955 = vpack.c.b16 %v2355, %v2347
        %v2956 = vpack.c.b16 %v2364, %v2356
        %v2957 = vpack.c.b16 %v2365, %v2357
        %v2958 = vpack.c.b16 %v2366, %v2358
        %v2959 = vpack.c.b16 %v2367, %v2359
        %v2960 = vpack.c.b16 %v2368, %v2360
        %v2961 = vpack.c.b16 %v2369, %v2361
        %v2962 = vpack.c.b16 %v2370, %v2362
        %v2963 = vpack.c.b16 %v2371, %v2363
        %v2964 = vpack.c.b16 %v2380, %v2372
        %v2965 = vpack.c.b16 %v2381, %v2373
        %v2966 = vpack.c.b16 %v2382, %v2374
        %v2967 = vpack.c.b16 %v2383, %v2375
        %v2968 = vpack.c.b16 %v2384, %v2376
        %v2969 = vpack.c.b16 %v2385, %v2377
        %v2970 = vpack.c.b16 %v2386, %v2378
        %v2971 = vpack.c.b16 %v2387, %v2379
        %v2972 = vpack.c.b16 %v2396, %v2388
        %v2973 = vpack.c.b16 %v2397, %v2389
        %v2974 = vpack.c.b16 %v2398, %v2390
        %v2975 = vpack.c.b16 %v2399, %v2391
        %v2976 = vpack.c.b16 %v2400, %v2392
        %v2977 = vpack.c.b16 %v2401, %v2393
        %v2978 = vpack.c.b16 %v2402, %v2394
        %v2979 = vpack.c.b16 %v2403, %v2395
        %v2980 = vpack.c.b16 %v2412, %v2404
        %v2981 = vpack.c.b16 %v2413, %v2405
        %v2982 = vpack.c.b16 %v2414, %v2406
        %v2983 = vpack.c.b16 %v2415, %v2407
        %v2984 = vpack.c.b16 %v2416, %v2408
        %v2985 = vpack.c.b16 %v2417, %v2409
        %v2986 = vpack.c.b16 %v2418, %v2410
        %v2987 = vpack.c.b16 %v2419, %v2411
        %v2988 = vpack.c.b16 %v2428, %v2420
        %v2989 = vpack.c.b16 %v2429, %v2421
        %v2990 = vpack.c.b16 %v2430, %v2422
        %v2991 = vpack.c.b16 %v2431, %v2423
        %v2992 = vpack.c.b16 %v2432, %v2424
        %v2993 = vpack.c.b16 %v2433, %v2425
        %v2994 = vpack.c.b16 %v2434, %v2426
        %v2995 = vpack.c.b16 %v2435, %v2427
        %v2996 = vpack.c.b16 %v2444, %v2436
        %v2997 = vpack.c.b16 %v2445, %v2437
        %v2998 = vpack.c.b16 %v2446, %v2438
        %v2999 = vpack.c.b16 %v2447, %v2439
        %v3000 = vpack.c.b16 %v2448, %v2440
        %v3001 = vpack.c.b16 %v2449, %v2441
        %v3002 = vpack.c.b16 %v2450, %v2442
        %v3003 = vpack.c.b16 %v2451, %v2443
        %v3004 = vpack.c.b16 %v2460, %v2452
        %v3005 = vpack.c.b16 %v2461, %v2453
        %v3006 = vpack.c.b16 %v2462, %v2454
        %v3007 = vpack.c.b16 %v2463, %v2455
        %v3008 = vpack.c.b16 %v2464, %v2456
        %v3009 = vpack.c.b16 %v2465, %v2457
        %v3010 = vpack.c.b16 %v2466, %v2458
        %v3011 = vpack.c.b16 %v2467, %v2459
        %v3012 = vpack.c.b16 %v2476, %v2468
        %v3013 = vpack.c.b16 %v2477, %v2469
        %v3014 = vpack.c.b16 %v2478, %v2470
        %v3015 = vpack.c.b16 %v2479, %v2471
        %v3016 = vpack.c.b16 %v2480, %v2472
        %v3017 = vpack.c.b16 %v2481, %v2473
        %v3018 = vpack.c.b16 %v2482, %v2474
        %v3019 = vpack.c.b16 %v2483, %v2475
        %v3020 = vpack.c.b16 %v2492, %v2484
        %v3021 = vpack.c.b16 %v2493, %v2485
        %v3022 = vpack.c.b16 %v2494, %v2486
        %v3023 = vpack.c.b16 %v2495, %v2487
        %v3024 = vpack.c.b16 %v2496, %v2488
        %v3025 = vpack.c.b16 %v2497, %v2489
        %v3026 = vpack.c.b16 %v2498, %v2490
        %v3027 = vpack.c.b16 %v2499, %v2491
        %v3028 = vpack.c.b16 %v2508, %v2500
        %v3029 = vpack.c.b16 %v2509, %v2501
        %v3030 = vpack.c.b16 %v2510, %v2502
        %v3031 = vpack.c.b16 %v2511, %v2503
        %v3032 = vpack.c.b16 %v2512, %v2504
        %v3033 = vpack.c.b16 %v2513, %v2505
        %v3034 = vpack.c.b16 %v2514, %v2506
        %v3035 = vpack.c.b16 %v2515, %v2507
        %v3036 = vpack.c.b16 %v2524, %v2516
        %v3037 = vpack.c.b16 %v2525, %v2517
        %v3038 = vpack.c.b16 %v2526, %v2518
        %v3039 = vpack.c.b16 %v2527, %v2519
        %v3040 = vpack.c.b16 %v2528, %v2520
        %v3041 = vpack.c.b16 %v2529, %v2521
        %v3042 = vpack.c.b16 %v2530, %v2522
        %v3043 = vpack.c.b16 %v2531, %v2523
        %3556 = vmatprep.subr.bf16.mxu0 %v2533
        %3557 = vmatpush1.bf16.msra.mxu0 %v2532
        %3558 = vmatprep.subr.bf16.mxu0 %v2541
        %3559 = vmatpush1.bf16.msra.mxu0 %v2540
        %3560 = vmatprep.subr.bf16.mxu0 %v2549
        %3561 = vmatpush1.bf16.msra.mxu0 %v2548
        %3562 = vmatprep.subr.bf16.mxu0 %v2557
        %3563 = vmatpush1.bf16.msra.mxu0 %v2556
        %3564 = vmatprep.subr.bf16.mxu0 %v2565
        %3565 = vmatpush1.bf16.msra.mxu0 %v2564
        %3566 = vmatprep.subr.bf16.mxu0 %v2573
        %3567 = vmatpush1.bf16.msra.mxu0 %v2572
        %3568 = vmatprep.subr.bf16.mxu0 %v2581
        %3569 = vmatpush1.bf16.msra.mxu0 %v2580
        %3570 = vmatprep.subr.bf16.mxu0 %v2589
        %3571 = vmatpush1.bf16.msra.mxu0 %v2588
        %3572 = vmatprep.subr.bf16.mxu0 %v2597
        %3573 = vmatpush1.bf16.msra.mxu0 %v2596
        %3574 = vmatprep.subr.bf16.mxu0 %v2605
        %3575 = vmatpush1.bf16.msra.mxu0 %v2604
        %3576 = vmatprep.subr.bf16.mxu0 %v2613
        %3577 = vmatpush1.bf16.msra.mxu0 %v2612
        %3578 = vmatprep.subr.bf16.mxu0 %v2621
        %3579 = vmatpush1.bf16.msra.mxu0 %v2620
        %3580 = vmatprep.subr.bf16.mxu0 %v2629
        %3581 = vmatpush1.bf16.msra.mxu0 %v2628
        %3582 = vmatprep.subr.bf16.mxu0 %v2637
        %3583 = vmatpush1.bf16.msra.mxu0 %v2636
        %3584 = vmatprep.subr.bf16.mxu0 %v2645
        %3585 = vmatpush1.bf16.msra.mxu0 %v2644
        %3586 = vmatprep.subr.bf16.mxu0 %v2653
        %3587 = vmatpush1.bf16.msra.mxu0 %v2652
        %3588 = vmatprep.mubr.bf16.mxu0 %v981
        %3589 = vmatmul.mubr.bf16.gmra.mrb[0].mxu0 %v980
        %v3590 = vpop.f32.mrb[0].mxu0
        %v3591 = vadd.f32 0.0, %v3590
        %v3592 = vpop.f32.mrb[0].mxu0
        %v3593 = vadd.f32 0.0, %v3592
        %v3594 = vpop.f32.mrb[0].mxu0
        %v3595 = vpop.f32.mrb[0].mxu0
        %3596 = vdwg.mxu0
        %3597 = vmatprep.subr.bf16.mxu0 %v2661
        %3598 = vmatpush1.bf16.msra.mxu0 %v2660
        %3599 = vmatprep.subr.bf16.mxu0 %v2669
        %3600 = vmatpush1.bf16.msra.mxu0 %v2668
        %3601 = vmatprep.subr.bf16.mxu0 %v2677
        %3602 = vmatpush1.bf16.msra.mxu0 %v2676
        %3603 = vmatprep.subr.bf16.mxu0 %v2685
        %3604 = vmatpush1.bf16.msra.mxu0 %v2684
        %3605 = vmatprep.subr.bf16.mxu0 %v2693
        %3606 = vmatpush1.bf16.msra.mxu0 %v2692
        %3607 = vmatprep.subr.bf16.mxu0 %v2701
        %3608 = vmatpush1.bf16.msra.mxu0 %v2700
        %3609 = vmatprep.subr.bf16.mxu0 %v2709
        %3610 = vmatpush1.bf16.msra.mxu0 %v2708
        %3611 = vmatprep.subr.bf16.mxu0 %v2717
        %3612 = vmatpush1.bf16.msra.mxu0 %v2716
        %3613 = vmatprep.subr.bf16.mxu0 %v2725
        %3614 = vmatpush1.bf16.msra.mxu0 %v2724
        %3615 = vmatprep.subr.bf16.mxu0 %v2733
        %3616 = vmatpush1.bf16.msra.mxu0 %v2732
        %3617 = vmatprep.subr.bf16.mxu0 %v2741
        %3618 = vmatpush1.bf16.msra.mxu0 %v2740
        %3619 = vmatprep.subr.bf16.mxu0 %v2749
        %3620 = vmatpush1.bf16.msra.mxu0 %v2748
        %3621 = vmatprep.subr.bf16.mxu0 %v2757
        %3622 = vmatpush1.bf16.msra.mxu0 %v2756
        %3623 = vmatprep.subr.bf16.mxu0 %v2765
        %3624 = vmatpush1.bf16.msra.mxu0 %v2764
        %3625 = vmatprep.subr.bf16.mxu0 %v2773
        %3626 = vmatpush1.bf16.msra.mxu0 %v2772
        %3627 = vmatprep.subr.bf16.mxu0 %v2781
        %3628 = vmatpush1.bf16.msra.mxu0 %v2780
        %3629 = vmatprep.mubr.bf16.mxu0 %v983
        %3630 = vmatmul.mubr.bf16.gmra.mrb[0].mxu0 %v982
        %v3631 = vpop.f32.mrb[0].mxu0
        %v3632 = vadd.f32 %v3591, %v3631
        %v3633 = vpop.f32.mrb[0].mxu0
        %v3634 = vadd.f32 %v3593, %v3633
        %v3635 = vpop.f32.mrb[0].mxu0
        %v3636 = vpop.f32.mrb[0].mxu0
        %3637 = vdwg.mxu0
        %3638 = vmatprep.subr.bf16.mxu0 %v2789
        %3639 = vmatpush1.bf16.msra.mxu0 %v2788
        %3640 = vmatprep.subr.bf16.mxu0 %v2797
        %3641 = vmatpush1.bf16.msra.mxu0 %v2796
        %3642 = vmatprep.subr.bf16.mxu0 %v2805
        %3643 = vmatpush1.bf16.msra.mxu0 %v2804
        %3644 = vmatprep.subr.bf16.mxu0 %v2813
        %3645 = vmatpush1.bf16.msra.mxu0 %v2812
        %3646 = vmatprep.subr.bf16.mxu0 %v2821
        %3647 = vmatpush1.bf16.msra.mxu0 %v2820
        %3648 = vmatprep.subr.bf16.mxu0 %v2829
        %3649 = vmatpush1.bf16.msra.mxu0 %v2828
        %3650 = vmatprep.subr.bf16.mxu0 %v2837
        %3651 = vmatpush1.bf16.msra.mxu0 %v2836
        %3652 = vmatprep.subr.bf16.mxu0 %v2845
        %3653 = vmatpush1.bf16.msra.mxu0 %v2844
        %3654 = vmatprep.subr.bf16.mxu0 %v2853
        %3655 = vmatpush1.bf16.msra.mxu0 %v2852
        %3656 = vmatprep.subr.bf16.mxu0 %v2861
        %3657 = vmatpush1.bf16.msra.mxu0 %v2860
        %3658 = vmatprep.subr.bf16.mxu0 %v2869
        %3659 = vmatpush1.bf16.msra.mxu0 %v2868
        %3660 = vmatprep.subr.bf16.mxu0 %v2877
        %3661 = vmatpush1.bf16.msra.mxu0 %v2876
        %3662 = vmatprep.subr.bf16.mxu0 %v2885
        %3663 = vmatpush1.bf16.msra.mxu0 %v2884
        %3664 = vmatprep.subr.bf16.mxu0 %v2893
        %3665 = vmatpush1.bf16.msra.mxu0 %v2892
        %3666 = vmatprep.subr.bf16.mxu0 %v2901
        %3667 = vmatpush1.bf16.msra.mxu0 %v2900
        %3668 = vmatprep.subr.bf16.mxu0 %v2909
        %3669 = vmatpush1.bf16.msra.mxu0 %v2908
        %3670 = vmatprep.mubr.bf16.mxu0 %v985
        %3671 = vmatmul.mubr.bf16.gmra.mrb[0].mxu0 %v984
        %v3672 = vpop.f32.mrb[0].mxu0
        %v3673 = vadd.f32 %v3632, %v3672
        %v3674 = vpop.f32.mrb[0].mxu0
        %v3675 = vadd.f32 %v3634, %v3674
        %v3676 = vpop.f32.mrb[0].mxu0
        %v3677 = vpop.f32.mrb[0].mxu0
        %3678 = vdwg.mxu0
        %3679 = vmatprep.subr.bf16.mxu0 %v2917
        %3680 = vmatpush1.bf16.msra.mxu0 %v2916
        %3681 = vmatprep.subr.bf16.mxu0 %v2925
        %3682 = vmatpush1.bf16.msra.mxu0 %v2924
        %3683 = vmatprep.subr.bf16.mxu0 %v2933
        %3684 = vmatpush1.bf16.msra.mxu0 %v2932
        %3685 = vmatprep.subr.bf16.mxu0 %v2941
        %3686 = vmatpush1.bf16.msra.mxu0 %v2940
        %3687 = vmatprep.subr.bf16.mxu0 %v2949
        %3688 = vmatpush1.bf16.msra.mxu0 %v2948
        %3689 = vmatprep.subr.bf16.mxu0 %v2957
        %3690 = vmatpush1.bf16.msra.mxu0 %v2956
        %3691 = vmatprep.subr.bf16.mxu0 %v2965
        %3692 = vmatpush1.bf16.msra.mxu0 %v2964
        %3693 = vmatprep.subr.bf16.mxu0 %v2973
        %3694 = vmatpush1.bf16.msra.mxu0 %v2972
        %3695 = vmatprep.subr.bf16.mxu0 %v2981
        %3696 = vmatpush1.bf16.msra.mxu0 %v2980
        %3697 = vmatprep.subr.bf16.mxu0 %v2989
        %3698 = vmatpush1.bf16.msra.mxu0 %v2988
        %3699 = vmatprep.subr.bf16.mxu0 %v2997
        %3700 = vmatpush1.bf16.msra.mxu0 %v2996
        %3701 = vmatprep.subr.bf16.mxu0 %v3005
        %3702 = vmatpush1.bf16.msra.mxu0 %v3004
        %3703 = vmatprep.subr.bf16.mxu0 %v3013
        %3704 = vmatpush1.bf16.msra.mxu0 %v3012
        %3705 = vmatprep.subr.bf16.mxu0 %v3021
        %3706 = vmatpush1.bf16.msra.mxu0 %v3020
        %3707 = vmatprep.subr.bf16.mxu0 %v3029
        %3708 = vmatpush1.bf16.msra.mxu0 %v3028
        %3709 = vmatprep.subr.bf16.mxu0 %v3037
        %3710 = vmatpush1.bf16.msra.mxu0 %v3036
        %3711 = vmatprep.mubr.bf16.mxu0 %v987
        %3712 = vmatmul.mubr.bf16.gmra.mrb[0].mxu0 %v986
        %v3713 = vpop.f32.mrb[0].mxu0
        %v3714 = vadd.f32 %v3673, %v3713
        %v3715 = vpop.f32.mrb[0].mxu0
        %v3716 = vadd.f32 %v3675, %v3715
        %v3717 = vpop.f32.mrb[0].mxu0
        %v3718 = vpop.f32.mrb[0].mxu0
        %3719 = vdwg.mxu0
        %3720 = vmatprep.subr.bf16.mxu0 %v2535
        %3721 = vmatpush1.bf16.msra.mxu0 %v2534
        %3722 = vmatprep.subr.bf16.mxu0 %v2543
        %3723 = vmatpush1.bf16.msra.mxu0 %v2542
        %3724 = vmatprep.subr.bf16.mxu0 %v2551
        %3725 = vmatpush1.bf16.msra.mxu0 %v2550
        %3726 = vmatprep.subr.bf16.mxu0 %v2559
        %3727 = vmatpush1.bf16.msra.mxu0 %v2558
        %3728 = vmatprep.subr.bf16.mxu0 %v2567
        %3729 = vmatpush1.bf16.msra.mxu0 %v2566
        %3730 = vmatprep.subr.bf16.mxu0 %v2575
        %3731 = vmatpush1.bf16.msra.mxu0 %v2574
        %3732 = vmatprep.subr.bf16.mxu0 %v2583
        %3733 = vmatpush1.bf16.msra.mxu0 %v2582
        %3734 = vmatprep.subr.bf16.mxu0 %v2591
        %3735 = vmatpush1.bf16.msra.mxu0 %v2590
        %3736 = vmatprep.subr.bf16.mxu0 %v2599
        %3737 = vmatpush1.bf16.msra.mxu0 %v2598
        %3738 = vmatprep.subr.bf16.mxu0 %v2607
        %3739 = vmatpush1.bf16.msra.mxu0 %v2606
        %3740 = vmatprep.subr.bf16.mxu0 %v2615
        %3741 = vmatpush1.bf16.msra.mxu0 %v2614
        %3742 = vmatprep.subr.bf16.mxu0 %v2623
        %3743 = vmatpush1.bf16.msra.mxu0 %v2622
        %3744 = vmatprep.subr.bf16.mxu0 %v2631
        %3745 = vmatpush1.bf16.msra.mxu0 %v2630
        %3746 = vmatprep.subr.bf16.mxu0 %v2639
        %3747 = vmatpush1.bf16.msra.mxu0 %v2638
        %3748 = vmatprep.subr.bf16.mxu0 %v2647
        %3749 = vmatpush1.bf16.msra.mxu0 %v2646
        %3750 = vmatprep.subr.bf16.mxu0 %v2655
        %3751 = vmatpush1.bf16.msra.mxu0 %v2654
        %3752 = vmatprep.mubr.bf16.mxu0 %v981
        %3753 = vmatmul.mubr.bf16.gmra.mrb[0].mxu0 %v980
        %v3754 = vpop.f32.mrb[0].mxu0
        %v3755 = vadd.f32 0.0, %v3754
        %v3756 = vpop.f32.mrb[0].mxu0
        %v3757 = vadd.f32 0.0, %v3756
        %v3758 = vpop.f32.mrb[0].mxu0
        %v3759 = vpop.f32.mrb[0].mxu0
        %3760 = vdwg.mxu0
        %3761 = vmatprep.subr.bf16.mxu0 %v2663
        %3762 = vmatpush1.bf16.msra.mxu0 %v2662
        %3763 = vmatprep.subr.bf16.mxu0 %v2671
        %3764 = vmatpush1.bf16.msra.mxu0 %v2670
        %3765 = vmatprep.subr.bf16.mxu0 %v2679
        %3766 = vmatpush1.bf16.msra.mxu0 %v2678
        %3767 = vmatprep.subr.bf16.mxu0 %v2687
        %3768 = vmatpush1.bf16.msra.mxu0 %v2686
        %3769 = vmatprep.subr.bf16.mxu0 %v2695
        %3770 = vmatpush1.bf16.msra.mxu0 %v2694
        %3771 = vmatprep.subr.bf16.mxu0 %v2703
        %3772 = vmatpush1.bf16.msra.mxu0 %v2702
        %3773 = vmatprep.subr.bf16.mxu0 %v2711
        %3774 = vmatpush1.bf16.msra.mxu0 %v2710
        %3775 = vmatprep.subr.bf16.mxu0 %v2719
        %3776 = vmatpush1.bf16.msra.mxu0 %v2718
        %3777 = vmatprep.subr.bf16.mxu0 %v2727
        %3778 = vmatpush1.bf16.msra.mxu0 %v2726
        %3779 = vmatprep.subr.bf16.mxu0 %v2735
        %3780 = vmatpush1.bf16.msra.mxu0 %v2734
        %3781 = vmatprep.subr.bf16.mxu0 %v2743
        %3782 = vmatpush1.bf16.msra.mxu0 %v2742
        %3783 = vmatprep.subr.bf16.mxu0 %v2751
        %3784 = vmatpush1.bf16.msra.mxu0 %v2750
        %3785 = vmatprep.subr.bf16.mxu0 %v2759
        %3786 = vmatpush1.bf16.msra.mxu0 %v2758
        %3787 = vmatprep.subr.bf16.mxu0 %v2767
        %3788 = vmatpush1.bf16.msra.mxu0 %v2766
        %3789 = vmatprep.subr.bf16.mxu0 %v2775
        %3790 = vmatpush1.bf16.msra.mxu0 %v2774
        %3791 = vmatprep.subr.bf16.mxu0 %v2783
        %3792 = vmatpush1.bf16.msra.mxu0 %v2782
        %3793 = vmatprep.mubr.bf16.mxu0 %v983
        %3794 = vmatmul.mubr.bf16.gmra.mrb[0].mxu0 %v982
        %v3795 = vpop.f32.mrb[0].mxu0
        %v3796 = vadd.f32 %v3755, %v3795
        %v3797 = vpop.f32.mrb[0].mxu0
        %v3798 = vadd.f32 %v3757, %v3797
        %v3799 = vpop.f32.mrb[0].mxu0
        %v3800 = vpop.f32.mrb[0].mxu0
        %3801 = vdwg.mxu0
        %3802 = vmatprep.subr.bf16.mxu0 %v2791
        %3803 = vmatpush1.bf16.msra.mxu0 %v2790
        %3804 = vmatprep.subr.bf16.mxu0 %v2799
        %3805 = vmatpush1.bf16.msra.mxu0 %v2798
        %3806 = vmatprep.subr.bf16.mxu0 %v2807
        %3807 = vmatpush1.bf16.msra.mxu0 %v2806
        %3808 = vmatprep.subr.bf16.mxu0 %v2815
        %3809 = vmatpush1.bf16.msra.mxu0 %v2814
        %3810 = vmatprep.subr.bf16.mxu0 %v2823
        %3811 = vmatpush1.bf16.msra.mxu0 %v2822
        %3812 = vmatprep.subr.bf16.mxu0 %v2831
        %3813 = vmatpush1.bf16.msra.mxu0 %v2830
        %3814 = vmatprep.subr.bf16.mxu0 %v2839
        %3815 = vmatpush1.bf16.msra.mxu0 %v2838
        %3816 = vmatprep.subr.bf16.mxu0 %v2847
        %3817 = vmatpush1.bf16.msra.mxu0 %v2846
        %3818 = vmatprep.subr.bf16.mxu0 %v2855
        %3819 = vmatpush1.bf16.msra.mxu0 %v2854
        %3820 = vmatprep.subr.bf16.mxu0 %v2863
        %3821 = vmatpush1.bf16.msra.mxu0 %v2862
        %3822 = vmatprep.subr.bf16.mxu0 %v2871
        %3823 = vmatpush1.bf16.msra.mxu0 %v2870
        %3824 = vmatprep.subr.bf16.mxu0 %v2879
        %3825 = vmatpush1.bf16.msra.mxu0 %v2878
        %3826 = vmatprep.subr.bf16.mxu0 %v2887
        %3827 = vmatpush1.bf16.msra.mxu0 %v2886
        %3828 = vmatprep.subr.bf16.mxu0 %v2895
        %3829 = vmatpush1.bf16.msra.mxu0 %v2894
        %3830 = vmatprep.subr.bf16.mxu0 %v2903
        %3831 = vmatpush1.bf16.msra.mxu0 %v2902
        %3832 = vmatprep.subr.bf16.mxu0 %v2911
        %3833 = vmatpush1.bf16.msra.mxu0 %v2910
        %3834 = vmatprep.mubr.bf16.mxu0 %v985
        %3835 = vmatmul.mubr.bf16.gmra.mrb[0].mxu0 %v984
        %v3836 = vpop.f32.mrb[0].mxu0
        %v3837 = vadd.f32 %v3796, %v3836
        %v3838 = vpop.f32.mrb[0].mxu0
        %v3839 = vadd.f32 %v3798, %v3838
        %v3840 = vpop.f32.mrb[0].mxu0
        %v3841 = vpop.f32.mrb[0].mxu0
        %3842 = vdwg.mxu0
        %3843 = vmatprep.subr.bf16.mxu0 %v2919
        %3844 = vmatpush1.bf16.msra.mxu0 %v2918
        %3845 = vmatprep.subr.bf16.mxu0 %v2927
        %3846 = vmatpush1.bf16.msra.mxu0 %v2926
        %3847 = vmatprep.subr.bf16.mxu0 %v2935
        %3848 = vmatpush1.bf16.msra.mxu0 %v2934
        %3849 = vmatprep.subr.bf16.mxu0 %v2943
        %3850 = vmatpush1.bf16.msra.mxu0 %v2942
        %3851 = vmatprep.subr.bf16.mxu0 %v2951
        %3852 = vmatpush1.bf16.msra.mxu0 %v2950
        %3853 = vmatprep.subr.bf16.mxu0 %v2959
        %3854 = vmatpush1.bf16.msra.mxu0 %v2958
        %3855 = vmatprep.subr.bf16.mxu0 %v2967
        %3856 = vmatpush1.bf16.msra.mxu0 %v2966
        %3857 = vmatprep.subr.bf16.mxu0 %v2975
        %3858 = vmatpush1.bf16.msra.mxu0 %v2974
        %3859 = vmatprep.subr.bf16.mxu0 %v2983
        %3860 = vmatpush1.bf16.msra.mxu0 %v2982
        %3861 = vmatprep.subr.bf16.mxu0 %v2991
        %3862 = vmatpush1.bf16.msra.mxu0 %v2990
        %3863 = vmatprep.subr.bf16.mxu0 %v2999
        %3864 = vmatpush1.bf16.msra.mxu0 %v2998
        %3865 = vmatprep.subr.bf16.mxu0 %v3007
        %3866 = vmatpush1.bf16.msra.mxu0 %v3006
        %3867 = vmatprep.subr.bf16.mxu0 %v3015
        %3868 = vmatpush1.bf16.msra.mxu0 %v3014
        %3869 = vmatprep.subr.bf16.mxu0 %v3023
        %3870 = vmatpush1.bf16.msra.mxu0 %v3022
        %3871 = vmatprep.subr.bf16.mxu0 %v3031
        %3872 = vmatpush1.bf16.msra.mxu0 %v3030
        %3873 = vmatprep.subr.bf16.mxu0 %v3039
        %3874 = vmatpush1.bf16.msra.mxu0 %v3038
        %3875 = vmatprep.mubr.bf16.mxu0 %v987
        %3876 = vmatmul.mubr.bf16.gmra.mrb[0].mxu0 %v986
        %v3877 = vpop.f32.mrb[0].mxu0
        %v3878 = vadd.f32 %v3837, %v3877
        %v3879 = vpop.f32.mrb[0].mxu0
        %v3880 = vadd.f32 %v3839, %v3879
        %v3881 = vpop.f32.mrb[0].mxu0
        %v3882 = vpop.f32.mrb[0].mxu0
        %3883 = vdwg.mxu0
        %3884 = vmatprep.subr.bf16.mxu0 %v2537
        %3885 = vmatpush1.bf16.msra.mxu0 %v2536
        %3886 = vmatprep.subr.bf16.mxu0 %v2545
        %3887 = vmatpush1.bf16.msra.mxu0 %v2544
        %3888 = vmatprep.subr.bf16.mxu0 %v2553
        %3889 = vmatpush1.bf16.msra.mxu0 %v2552
        %3890 = vmatprep.subr.bf16.mxu0 %v2561
        %3891 = vmatpush1.bf16.msra.mxu0 %v2560
        %3892 = vmatprep.subr.bf16.mxu0 %v2569
        %3893 = vmatpush1.bf16.msra.mxu0 %v2568
        %3894 = vmatprep.subr.bf16.mxu0 %v2577
        %3895 = vmatpush1.bf16.msra.mxu0 %v2576
        %3896 = vmatprep.subr.bf16.mxu0 %v2585
        %3897 = vmatpush1.bf16.msra.mxu0 %v2584
        %3898 = vmatprep.subr.bf16.mxu0 %v2593
        %3899 = vmatpush1.bf16.msra.mxu0 %v2592
        %3900 = vmatprep.subr.bf16.mxu0 %v2601
        %3901 = vmatpush1.bf16.msra.mxu0 %v2600
        %3902 = vmatprep.subr.bf16.mxu0 %v2609
        %3903 = vmatpush1.bf16.msra.mxu0 %v2608
        %3904 = vmatprep.subr.bf16.mxu0 %v2617
        %3905 = vmatpush1.bf16.msra.mxu0 %v2616
        %3906 = vmatprep.subr.bf16.mxu0 %v2625
        %3907 = vmatpush1.bf16.msra.mxu0 %v2624
        %3908 = vmatprep.subr.bf16.mxu0 %v2633
        %3909 = vmatpush1.bf16.msra.mxu0 %v2632
        %3910 = vmatprep.subr.bf16.mxu0 %v2641
        %3911 = vmatpush1.bf16.msra.mxu0 %v2640
        %3912 = vmatprep.subr.bf16.mxu0 %v2649
        %3913 = vmatpush1.bf16.msra.mxu0 %v2648
        %3914 = vmatprep.subr.bf16.mxu0 %v2657
        %3915 = vmatpush1.bf16.msra.mxu0 %v2656
        %3916 = vmatprep.mubr.bf16.mxu0 %v981
        %3917 = vmatmul.mubr.bf16.gmra.mrb[0].mxu0 %v980
        %v3918 = vpop.f32.mrb[0].mxu0
        %v3919 = vadd.f32 0.0, %v3918
        %v3920 = vpop.f32.mrb[0].mxu0
        %v3921 = vadd.f32 0.0, %v3920
        %v3922 = vpop.f32.mrb[0].mxu0
        %v3923 = vpop.f32.mrb[0].mxu0
        %3924 = vdwg.mxu0
        %3925 = vmatprep.subr.bf16.mxu0 %v2665
        %3926 = vmatpush1.bf16.msra.mxu0 %v2664
        %3927 = vmatprep.subr.bf16.mxu0 %v2673
        %3928 = vmatpush1.bf16.msra.mxu0 %v2672
        %3929 = vmatprep.subr.bf16.mxu0 %v2681
        %3930 = vmatpush1.bf16.msra.mxu0 %v2680
        %3931 = vmatprep.subr.bf16.mxu0 %v2689
        %3932 = vmatpush1.bf16.msra.mxu0 %v2688
        %3933 = vmatprep.subr.bf16.mxu0 %v2697
        %3934 = vmatpush1.bf16.msra.mxu0 %v2696
        %3935 = vmatprep.subr.bf16.mxu0 %v2705
        %3936 = vmatpush1.bf16.msra.mxu0 %v2704
        %3937 = vmatprep.subr.bf16.mxu0 %v2713
        %3938 = vmatpush1.bf16.msra.mxu0 %v2712
        %3939 = vmatprep.subr.bf16.mxu0 %v2721
        %3940 = vmatpush1.bf16.msra.mxu0 %v2720
        %3941 = vmatprep.subr.bf16.mxu0 %v2729
        %3942 = vmatpush1.bf16.msra.mxu0 %v2728
        %3943 = vmatprep.subr.bf16.mxu0 %v2737
        %3944 = vmatpush1.bf16.msra.mxu0 %v2736
        %3945 = vmatprep.subr.bf16.mxu0 %v2745
        %3946 = vmatpush1.bf16.msra.mxu0 %v2744
        %3947 = vmatprep.subr.bf16.mxu0 %v2753
        %3948 = vmatpush1.bf16.msra.mxu0 %v2752
        %3949 = vmatprep.subr.bf16.mxu0 %v2761
        %3950 = vmatpush1.bf16.msra.mxu0 %v2760
        %3951 = vmatprep.subr.bf16.mxu0 %v2769
        %3952 = vmatpush1.bf16.msra.mxu0 %v2768
        %3953 = vmatprep.subr.bf16.mxu0 %v2777
        %3954 = vmatpush1.bf16.msra.mxu0 %v2776
        %3955 = vmatprep.subr.bf16.mxu0 %v2785
        %3956 = vmatpush1.bf16.msra.mxu0 %v2784
        %3957 = vmatprep.mubr.bf16.mxu0 %v983
        %3958 = vmatmul.mubr.bf16.gmra.mrb[0].mxu0 %v982
        %v3959 = vpop.f32.mrb[0].mxu0
        %v3960 = vadd.f32 %v3919, %v3959
        %v3961 = vpop.f32.mrb[0].mxu0
        %v3962 = vadd.f32 %v3921, %v3961
        %v3963 = vpop.f32.mrb[0].mxu0
        %v3964 = vpop.f32.mrb[0].mxu0
        %3965 = vdwg.mxu0
        %3966 = vmatprep.subr.bf16.mxu0 %v2793
        %3967 = vmatpush1.bf16.msra.mxu0 %v2792
        %3968 = vmatprep.subr.bf16.mxu0 %v2801
        %3969 = vmatpush1.bf16.msra.mxu0 %v2800
        %3970 = vmatprep.subr.bf16.mxu0 %v2809
        %3971 = vmatpush1.bf16.msra.mxu0 %v2808
        %3972 = vmatprep.subr.bf16.mxu0 %v2817
        %3973 = vmatpush1.bf16.msra.mxu0 %v2816
        %3974 = vmatprep.subr.bf16.mxu0 %v2825
        %3975 = vmatpush1.bf16.msra.mxu0 %v2824
        %3976 = vmatprep.subr.bf16.mxu0 %v2833
        %3977 = vmatpush1.bf16.msra.mxu0 %v2832
        %3978 = vmatprep.subr.bf16.mxu0 %v2841
        %3979 = vmatpush1.bf16.msra.mxu0 %v2840
        %3980 = vmatprep.subr.bf16.mxu0 %v2849
        %3981 = vmatpush1.bf16.msra.mxu0 %v2848
        %3982 = vmatprep.subr.bf16.mxu0 %v2857
        %3983 = vmatpush1.bf16.msra.mxu0 %v2856
        %3984 = vmatprep.subr.bf16.mxu0 %v2865
        %3985 = vmatpush1.bf16.msra.mxu0 %v2864
        %3986 = vmatprep.subr.bf16.mxu0 %v2873
        %3987 = vmatpush1.bf16.msra.mxu0 %v2872
        %3988 = vmatprep.subr.bf16.mxu0 %v2881
        %3989 = vmatpush1.bf16.msra.mxu0 %v2880
        %3990 = vmatprep.subr.bf16.mxu0 %v2889
        %3991 = vmatpush1.bf16.msra.mxu0 %v2888
        %3992 = vmatprep.subr.bf16.mxu0 %v2897
        %3993 = vmatpush1.bf16.msra.mxu0 %v2896
        %3994 = vmatprep.subr.bf16.mxu0 %v2905
        %3995 = vmatpush1.bf16.msra.mxu0 %v2904
        %3996 = vmatprep.subr.bf16.mxu0 %v2913
        %3997 = vmatpush1.bf16.msra.mxu0 %v2912
        %3998 = vmatprep.mubr.bf16.mxu0 %v985
        %3999 = vmatmul.mubr.bf16.gmra.mrb[0].mxu0 %v984
        %v4000 = vpop.f32.mrb[0].mxu0
        %v4001 = vadd.f32 %v3960, %v4000
        %v4002 = vpop.f32.mrb[0].mxu0
        %v4003 = vadd.f32 %v3962, %v4002
        %v4004 = vpop.f32.mrb[0].mxu0
        %v4005 = vpop.f32.mrb[0].mxu0
        %4006 = vdwg.mxu0
        %4007 = vmatprep.subr.bf16.mxu0 %v2921
        %4008 = vmatpush1.bf16.msra.mxu0 %v2920
        %4009 = vmatprep.subr.bf16.mxu0 %v2929
        %4010 = vmatpush1.bf16.msra.mxu0 %v2928
        %4011 = vmatprep.subr.bf16.mxu0 %v2937
        %4012 = vmatpush1.bf16.msra.mxu0 %v2936
        %4013 = vmatprep.subr.bf16.mxu0 %v2945
        %4014 = vmatpush1.bf16.msra.mxu0 %v2944
        %4015 = vmatprep.subr.bf16.mxu0 %v2953
        %4016 = vmatpush1.bf16.msra.mxu0 %v2952
        %4017 = vmatprep.subr.bf16.mxu0 %v2961
        %4018 = vmatpush1.bf16.msra.mxu0 %v2960
        %4019 = vmatprep.subr.bf16.mxu0 %v2969
        %4020 = vmatpush1.bf16.msra.mxu0 %v2968
        %4021 = vmatprep.subr.bf16.mxu0 %v2977
        %4022 = vmatpush1.bf16.msra.mxu0 %v2976
        %4023 = vmatprep.subr.bf16.mxu0 %v2985
        %4024 = vmatpush1.bf16.msra.mxu0 %v2984
        %4025 = vmatprep.subr.bf16.mxu0 %v2993
        %4026 = vmatpush1.bf16.msra.mxu0 %v2992
        %4027 = vmatprep.subr.bf16.mxu0 %v3001
        %4028 = vmatpush1.bf16.msra.mxu0 %v3000
        %4029 = vmatprep.subr.bf16.mxu0 %v3009
        %4030 = vmatpush1.bf16.msra.mxu0 %v3008
        %4031 = vmatprep.subr.bf16.mxu0 %v3017
        %4032 = vmatpush1.bf16.msra.mxu0 %v3016
        %4033 = vmatprep.subr.bf16.mxu0 %v3025
        %4034 = vmatpush1.bf16.msra.mxu0 %v3024
        %4035 = vmatprep.subr.bf16.mxu0 %v3033
        %4036 = vmatpush1.bf16.msra.mxu0 %v3032
        %4037 = vmatprep.subr.bf16.mxu0 %v3041
        %4038 = vmatpush1.bf16.msra.mxu0 %v3040
        %4039 = vmatprep.mubr.bf16.mxu0 %v987
        %4040 = vmatmul.mubr.bf16.gmra.mrb[0].mxu0 %v986
        %v4041 = vpop.f32.mrb[0].mxu0
        %v4042 = vadd.f32 %v4001, %v4041
        %v4043 = vpop.f32.mrb[0].mxu0
        %v4044 = vadd.f32 %v4003, %v4043
        %v4045 = vpop.f32.mrb[0].mxu0
        %v4046 = vpop.f32.mrb[0].mxu0
        %4047 = vdwg.mxu0
        %4048 = vmatprep.subr.bf16.mxu0 %v2539
        %4049 = vmatpush1.bf16.msra.mxu0 %v2538
        %4050 = vmatprep.subr.bf16.mxu0 %v2547
        %4051 = vmatpush1.bf16.msra.mxu0 %v2546
        %4052 = vmatprep.subr.bf16.mxu0 %v2555
        %4053 = vmatpush1.bf16.msra.mxu0 %v2554
        %4054 = vmatprep.subr.bf16.mxu0 %v2563
        %4055 = vmatpush1.bf16.msra.mxu0 %v2562
        %4056 = vmatprep.subr.bf16.mxu0 %v2571
        %4057 = vmatpush1.bf16.msra.mxu0 %v2570
        %4058 = vmatprep.subr.bf16.mxu0 %v2579
        %4059 = vmatpush1.bf16.msra.mxu0 %v2578
        %4060 = vmatprep.subr.bf16.mxu0 %v2587
        %4061 = vmatpush1.bf16.msra.mxu0 %v2586
        %4062 = vmatprep.subr.bf16.mxu0 %v2595
        %4063 = vmatpush1.bf16.msra.mxu0 %v2594
        %4064 = vmatprep.subr.bf16.mxu0 %v2603
        %4065 = vmatpush1.bf16.msra.mxu0 %v2602
        %4066 = vmatprep.subr.bf16.mxu0 %v2611
        %4067 = vmatpush1.bf16.msra.mxu0 %v2610
        %4068 = vmatprep.subr.bf16.mxu0 %v2619
        %4069 = vmatpush1.bf16.msra.mxu0 %v2618
        %4070 = vmatprep.subr.bf16.mxu0 %v2627
        %4071 = vmatpush1.bf16.msra.mxu0 %v2626
        %4072 = vmatprep.subr.bf16.mxu0 %v2635
        %4073 = vmatpush1.bf16.msra.mxu0 %v2634
        %4074 = vmatprep.subr.bf16.mxu0 %v2643
        %4075 = vmatpush1.bf16.msra.mxu0 %v2642
        %4076 = vmatprep.subr.bf16.mxu0 %v2651
        %4077 = vmatpush1.bf16.msra.mxu0 %v2650
        %4078 = vmatprep.subr.bf16.mxu0 %v2659
        %4079 = vmatpush1.bf16.msra.mxu0 %v2658
        %4080 = vmatprep.mubr.bf16.mxu0 %v981
        %4081 = vmatmul.mubr.bf16.gmra.mrb[0].mxu0 %v980
        %v4082 = vpop.f32.mrb[0].mxu0
        %v4083 = vadd.f32 0.0, %v4082
        %v4084 = vpop.f32.mrb[0].mxu0
        %v4085 = vadd.f32 0.0, %v4084
        %v4086 = vpop.f32.mrb[0].mxu0
        %v4087 = vpop.f32.mrb[0].mxu0
        %4088 = vdwg.mxu0
        %4089 = vmatprep.subr.bf16.mxu0 %v2667
        %4090 = vmatpush1.bf16.msra.mxu0 %v2666
        %4091 = vmatprep.subr.bf16.mxu0 %v2675
        %4092 = vmatpush1.bf16.msra.mxu0 %v2674
        %4093 = vmatprep.subr.bf16.mxu0 %v2683
        %4094 = vmatpush1.bf16.msra.mxu0 %v2682
        %4095 = vmatprep.subr.bf16.mxu0 %v2691
        %4096 = vmatpush1.bf16.msra.mxu0 %v2690
        %4097 = vmatprep.subr.bf16.mxu0 %v2699
        %4098 = vmatpush1.bf16.msra.mxu0 %v2698
        %4099 = vmatprep.subr.bf16.mxu0 %v2707
        %4100 = vmatpush1.bf16.msra.mxu0 %v2706
        %4101 = vmatprep.subr.bf16.mxu0 %v2715
        %4102 = vmatpush1.bf16.msra.mxu0 %v2714
        %4103 = vmatprep.subr.bf16.mxu0 %v2723
        %4104 = vmatpush1.bf16.msra.mxu0 %v2722
        %4105 = vmatprep.subr.bf16.mxu0 %v2731
        %4106 = vmatpush1.bf16.msra.mxu0 %v2730
        %4107 = vmatprep.subr.bf16.mxu0 %v2739
        %4108 = vmatpush1.bf16.msra.mxu0 %v2738
        %4109 = vmatprep.subr.bf16.mxu0 %v2747
        %4110 = vmatpush1.bf16.msra.mxu0 %v2746
        %4111 = vmatprep.subr.bf16.mxu0 %v2755
        %4112 = vmatpush1.bf16.msra.mxu0 %v2754
        %4113 = vmatprep.subr.bf16.mxu0 %v2763
        %4114 = vmatpush1.bf16.msra.mxu0 %v2762
        %4115 = vmatprep.subr.bf16.mxu0 %v2771
        %4116 = vmatpush1.bf16.msra.mxu0 %v2770
        %4117 = vmatprep.subr.bf16.mxu0 %v2779
        %4118 = vmatpush1.bf16.msra.mxu0 %v2778
        %4119 = vmatprep.subr.bf16.mxu0 %v2787
        %4120 = vmatpush1.bf16.msra.mxu0 %v2786
        %4121 = vmatprep.mubr.bf16.mxu0 %v983
        %4122 = vmatmul.mubr.bf16.gmra.mrb[0].mxu0 %v982
        %v4123 = vpop.f32.mrb[0].mxu0
        %v4124 = vadd.f32 %v4083, %v4123
        %v4125 = vpop.f32.mrb[0].mxu0
        %v4126 = vadd.f32 %v4085, %v4125
        %v4127 = vpop.f32.mrb[0].mxu0
        %v4128 = vpop.f32.mrb[0].mxu0
        %4129 = vdwg.mxu0
        %4130 = vmatprep.subr.bf16.mxu0 %v2795
        %4131 = vmatpush1.bf16.msra.mxu0 %v2794
        %4132 = vmatprep.subr.bf16.mxu0 %v2803
        %4133 = vmatpush1.bf16.msra.mxu0 %v2802
        %4134 = vmatprep.subr.bf16.mxu0 %v2811
        %4135 = vmatpush1.bf16.msra.mxu0 %v2810
        %4136 = vmatprep.subr.bf16.mxu0 %v2819
        %4137 = vmatpush1.bf16.msra.mxu0 %v2818
        %4138 = vmatprep.subr.bf16.mxu0 %v2827
        %4139 = vmatpush1.bf16.msra.mxu0 %v2826
        %4140 = vmatprep.subr.bf16.mxu0 %v2835
        %4141 = vmatpush1.bf16.msra.mxu0 %v2834
        %4142 = vmatprep.subr.bf16.mxu0 %v2843
        %4143 = vmatpush1.bf16.msra.mxu0 %v2842
        %4144 = vmatprep.subr.bf16.mxu0 %v2851
        %4145 = vmatpush1.bf16.msra.mxu0 %v2850
        %4146 = vmatprep.subr.bf16.mxu0 %v2859
        %4147 = vmatpush1.bf16.msra.mxu0 %v2858
        %4148 = vmatprep.subr.bf16.mxu0 %v2867
        %4149 = vmatpush1.bf16.msra.mxu0 %v2866
        %4150 = vmatprep.subr.bf16.mxu0 %v2875
        %4151 = vmatpush1.bf16.msra.mxu0 %v2874
        %4152 = vmatprep.subr.bf16.mxu0 %v2883
        %4153 = vmatpush1.bf16.msra.mxu0 %v2882
        %4154 = vmatprep.subr.bf16.mxu0 %v2891
        %4155 = vmatpush1.bf16.msra.mxu0 %v2890
        %4156 = vmatprep.subr.bf16.mxu0 %v2899
        %4157 = vmatpush1.bf16.msra.mxu0 %v2898
        %4158 = vmatprep.subr.bf16.mxu0 %v2907
        %4159 = vmatpush1.bf16.msra.mxu0 %v2906
        %4160 = vmatprep.subr.bf16.mxu0 %v2915
        %4161 = vmatpush1.bf16.msra.mxu0 %v2914
        %4162 = vmatprep.mubr.bf16.mxu0 %v985
        %4163 = vmatmul.mubr.bf16.gmra.mrb[0].mxu0 %v984
        %v4164 = vpop.f32.mrb[0].mxu0
        %v4165 = vadd.f32 %v4124, %v4164
        %v4166 = vpop.f32.mrb[0].mxu0
        %v4167 = vadd.f32 %v4126, %v4166
        %v4168 = vpop.f32.mrb[0].mxu0
        %v4169 = vpop.f32.mrb[0].mxu0
        %4170 = vdwg.mxu0
        %4171 = vmatprep.subr.bf16.mxu0 %v2923
        %4172 = vmatpush1.bf16.msra.mxu0 %v2922
        %4173 = vmatprep.subr.bf16.mxu0 %v2931
        %4174 = vmatpush1.bf16.msra.mxu0 %v2930
        %4175 = vmatprep.subr.bf16.mxu0 %v2939
        %4176 = vmatpush1.bf16.msra.mxu0 %v2938
        %4177 = vmatprep.subr.bf16.mxu0 %v2947
        %4178 = vmatpush1.bf16.msra.mxu0 %v2946
        %4179 = vmatprep.subr.bf16.mxu0 %v2955
        %4180 = vmatpush1.bf16.msra.mxu0 %v2954
        %4181 = vmatprep.subr.bf16.mxu0 %v2963
        %4182 = vmatpush1.bf16.msra.mxu0 %v2962
        %4183 = vmatprep.subr.bf16.mxu0 %v2971
        %4184 = vmatpush1.bf16.msra.mxu0 %v2970
        %4185 = vmatprep.subr.bf16.mxu0 %v2979
        %4186 = vmatpush1.bf16.msra.mxu0 %v2978
        %4187 = vmatprep.subr.bf16.mxu0 %v2987
        %4188 = vmatpush1.bf16.msra.mxu0 %v2986
        %4189 = vmatprep.subr.bf16.mxu0 %v2995
        %4190 = vmatpush1.bf16.msra.mxu0 %v2994
        %4191 = vmatprep.subr.bf16.mxu0 %v3003
        %4192 = vmatpush1.bf16.msra.mxu0 %v3002
        %4193 = vmatprep.subr.bf16.mxu0 %v3011
        %4194 = vmatpush1.bf16.msra.mxu0 %v3010
        %4195 = vmatprep.subr.bf16.mxu0 %v3019
        %4196 = vmatpush1.bf16.msra.mxu0 %v3018
        %4197 = vmatprep.subr.bf16.mxu0 %v3027
        %4198 = vmatpush1.bf16.msra.mxu0 %v3026
        %4199 = vmatprep.subr.bf16.mxu0 %v3035
        %4200 = vmatpush1.bf16.msra.mxu0 %v3034
        %4201 = vmatprep.subr.bf16.mxu0 %v3043
        %4202 = vmatpush1.bf16.msra.mxu0 %v3042
        %4203 = vmatprep.mubr.bf16.mxu0 %v987
        %4204 = vmatmul.mubr.bf16.gmra.mrb[0].mxu0 %v986
        %v4205 = vpop.f32.mrb[0].mxu0
        %v4206 = vadd.f32 %v4165, %v4205
        %v4207 = vpop.f32.mrb[0].mxu0
        %v4208 = vadd.f32 %v4167, %v4207
        %v4209 = vpop.f32.mrb[0].mxu0
        %v4210 = vpop.f32.mrb[0].mxu0
        %4211 = vdwg.mxu0
        %v4212 = vadd.f32 %v444, %v3714
        %v4213 = vadd.f32 %v445, %v3716
        %v4214 = vadd.f32 %v446, %v3878
        %v4215 = vadd.f32 %v447, %v3880
        %v4216 = vadd.f32 %v448, %v4042
        %v4217 = vadd.f32 %v449, %v4044
        %v4218 = vadd.f32 %v450, %v4206
        %v4219 = vadd.f32 %v451, %v4208
        %4220 = vst [vmem:[#allocation2] sm:$0xff] %v4212
        %4221 = vst [vmem:[#allocation2 + $0x8] sm:$0xff] %v4213
        %4222 = vst [vmem:[#allocation2 + $0x10] sm:$0xff] %v4214
        %4223 = vst [vmem:[#allocation2 + $0x18] sm:$0xff] %v4215
        %4224 = vst [vmem:[#allocation2 + $0x20] sm:$0xff] %v4216
        %4225 = vst [vmem:[#allocation2 + $0x28] sm:$0xff] %v4217
        %4226 = vst [vmem:[#allocation2 + $0x30] sm:$0xff] %v4218
        %4227 = vst [vmem:[#allocation2 + $0x38] sm:$0xff] %v4219
        // Predicated region
        $region61: #{generator_forward.5} parent=39 // pred_check
          %p4228 = pneg %p432
        $region62: #{generator_forward.5} parent=39 // pred_check_branch
          %4230 = sbr.rel (%p4228) target = $region64
        $region63: #{generator_forward.5} parent=39 // pred_region
          %v4231 = vld [vmem:[#allocation2] sm:$0xff]
          %v4232 = vld [vmem:[#allocation2 + $0x8] sm:$0xff]
          %v4233 = vld [vmem:[#allocation2 + $0x10] sm:$0xff]
          %v4234 = vld [vmem:[#allocation2 + $0x18] sm:$0xff]
          %v4235 = vld [vmem:[#allocation2 + $0x20] sm:$0xff]
          %v4236 = vld [vmem:[#allocation2 + $0x28] sm:$0xff]
          %v4237 = vld [vmem:[#allocation2 + $0x30] sm:$0xff]
          %v4238 = vld [vmem:[#allocation2 + $0x38] sm:$0xff]
          %v4239 = vld [vmem:[%s334] sm:$0xff]
          %v4241 = vlaneseq
          %v4242 = vshrl.u32 %v4241, 7
          %v4243 = vsub.s32 0, %v4242
          %v4244 = vrot.slane %v4239, %v4243
          %v4245 = vlaneseq
          %v4246 = vshrl.u32 %v4245, 7
          %v4247 = vsub.s32 1, %v4246
          %v4248 = vrot.slane %v4239, %v4247
          %v4249 = vlaneseq
          %v4250 = vshrl.u32 %v4249, 7
          %v4251 = vsub.s32 2, %v4250
          %v4252 = vrot.slane %v4239, %v4251
          %v4253 = vlaneseq
          %v4254 = vshrl.u32 %v4253, 7
          %v4255 = vsub.s32 3, %v4254
          %v4256 = vrot.slane %v4239, %v4255
          %v4257 = vlaneseq
          %v4258 = vshrl.u32 %v4257, 7
          %v4259 = vsub.s32 4, %v4258
          %v4260 = vrot.slane %v4239, %v4259
          %v4261 = vlaneseq
          %v4262 = vshrl.u32 %v4261, 7
          %v4263 = vsub.s32 5, %v4262
          %v4264 = vrot.slane %v4239, %v4263
          %v4265 = vlaneseq
          %v4266 = vshrl.u32 %v4265, 7
          %v4267 = vsub.s32 6, %v4266
          %v4268 = vrot.slane %v4239, %v4267
          %v4269 = vlaneseq
          %v4270 = vshrl.u32 %v4269, 7
          %v4271 = vsub.s32 7, %v4270
          %v4272 = vrot.slane %v4239, %v4271
          %v4281 = vadd.f32 %v4231, %v4244
          %v4282 = vadd.f32 %v4232, %v4248
          %v4283 = vadd.f32 %v4233, %v4252
          %v4284 = vadd.f32 %v4234, %v4256
          %v4285 = vadd.f32 %v4235, %v4260
          %v4286 = vadd.f32 %v4236, %v4264
          %v4287 = vadd.f32 %v4237, %v4268
          %v4288 = vadd.f32 %v4238, %v4272
          %v4289 = vlaneseq
          %v4290 = vshrl.u32 %v4289, 7
          %vm4291 = vcmp.lt.s32.totalorder %v4290, 2
          %v4292 = vsel %vm4291, %v4281, 0.0
          %v4293 = vsel %vm4291, %v4282, 0.0
          %v4294 = vsel %vm4291, %v4283, 0.0
          %v4295 = vsel %vm4291, %v4284, 0.0
          %v4296 = vsel %vm4291, %v4285, 0.0
          %v4297 = vsel %vm4291, %v4286, 0.0
          %v4298 = vsel %vm4291, %v4287, 0.0
          %v4299 = vsel %vm4291, %v4288, 0.0
          %v4300 = vrot.slane %v4292, 4
          %v4301 = vadd.f32 %v4292, %v4300
          %v4302 = vrot.slane %v4301, 2
          %v4303 = vadd.f32 %v4301, %v4302
          %v4304 = vrot.slane %v4303, 1
          %v4305 = vadd.f32 %v4303, %v4304
          %v4306 = vrot.slane %v4293, 4
          %v4307 = vadd.f32 %v4293, %v4306
          %v4308 = vrot.slane %v4307, 2
          %v4309 = vadd.f32 %v4307, %v4308
          %v4310 = vrot.slane %v4309, 1
          %v4311 = vadd.f32 %v4309, %v4310
          %v4312 = vrot.slane %v4294, 4
          %v4313 = vadd.f32 %v4294, %v4312
          %v4314 = vrot.slane %v4313, 2
          %v4315 = vadd.f32 %v4313, %v4314
          %v4316 = vrot.slane %v4315, 1
          %v4317 = vadd.f32 %v4315, %v4316
          %v4318 = vrot.slane %v4295, 4
          %v4319 = vadd.f32 %v4295, %v4318
          %v4320 = vrot.slane %v4319, 2
          %v4321 = vadd.f32 %v4319, %v4320
          %v4322 = vrot.slane %v4321, 1
          %v4323 = vadd.f32 %v4321, %v4322
          %v4324 = vrot.slane %v4296, 4
          %v4325 = vadd.f32 %v4296, %v4324
          %v4326 = vrot.slane %v4325, 2
          %v4327 = vadd.f32 %v4325, %v4326
          %v4328 = vrot.slane %v4327, 1
          %v4329 = vadd.f32 %v4327, %v4328
          %v4330 = vrot.slane %v4297, 4
          %v4331 = vadd.f32 %v4297, %v4330
          %v4332 = vrot.slane %v4331, 2
          %v4333 = vadd.f32 %v4331, %v4332
          %v4334 = vrot.slane %v4333, 1
          %v4335 = vadd.f32 %v4333, %v4334
          %v4336 = vrot.slane %v4298, 4
          %v4337 = vadd.f32 %v4298, %v4336
          %v4338 = vrot.slane %v4337, 2
          %v4339 = vadd.f32 %v4337, %v4338
          %v4340 = vrot.slane %v4339, 1
          %v4341 = vadd.f32 %v4339, %v4340
          %v4342 = vrot.slane %v4299, 4
          %v4343 = vadd.f32 %v4299, %v4342
          %v4344 = vrot.slane %v4343, 2
          %v4345 = vadd.f32 %v4343, %v4344
          %v4346 = vrot.slane %v4345, 1
          %v4347 = vadd.f32 %v4345, %v4346
          %v4348 = vmul.f32 %v4305, 0.5
          %v4349 = vmul.f32 %v4311, 0.5
          %v4350 = vmul.f32 %v4317, 0.5
          %v4351 = vmul.f32 %v4323, 0.5
          %v4352 = vmul.f32 %v4329, 0.5
          %v4353 = vmul.f32 %v4335, 0.5
          %v4354 = vmul.f32 %v4341, 0.5
          %v4355 = vmul.f32 %v4347, 0.5
          %v4356 = vsub.f32 %v4281, %v4348
          %v4357 = vsub.f32 %v4282, %v4349
          %v4358 = vsub.f32 %v4283, %v4350
          %v4359 = vsub.f32 %v4284, %v4351
          %v4360 = vsub.f32 %v4285, %v4352
          %v4361 = vsub.f32 %v4286, %v4353
          %v4362 = vsub.f32 %v4287, %v4354
          %v4363 = vsub.f32 %v4288, %v4355
          %v4364 = vmul.f32 %v4356, %v4356
          %v4365 = vmul.f32 %v4357, %v4357
          %v4366 = vmul.f32 %v4358, %v4358
          %v4367 = vmul.f32 %v4359, %v4359
          %v4368 = vmul.f32 %v4360, %v4360
          %v4369 = vmul.f32 %v4361, %v4361
          %v4370 = vmul.f32 %v4362, %v4362
          %v4371 = vmul.f32 %v4363, %v4363
          %v4372 = vsel %vm4291, %v4364, 0.0
          %v4373 = vsel %vm4291, %v4365, 0.0
          %v4374 = vsel %vm4291, %v4366, 0.0
          %v4375 = vsel %vm4291, %v4367, 0.0
          %v4376 = vsel %vm4291, %v4368, 0.0
          %v4377 = vsel %vm4291, %v4369, 0.0
          %v4378 = vsel %vm4291, %v4370, 0.0
          %v4379 = vsel %vm4291, %v4371, 0.0
          %v4380 = vrot.slane %v4372, 4
          %v4381 = vadd.f32 %v4372, %v4380
          %v4382 = vrot.slane %v4381, 2
          %v4383 = vadd.f32 %v4381, %v4382
          %v4384 = vrot.slane %v4383, 1
          %v4385 = vadd.f32 %v4383, %v4384
          %v4386 = vrot.slane %v4373, 4
          %v4387 = vadd.f32 %v4373, %v4386
          %v4388 = vrot.slane %v4387, 2
          %v4389 = vadd.f32 %v4387, %v4388
          %v4390 = vrot.slane %v4389, 1
          %v4391 = vadd.f32 %v4389, %v4390
          %v4392 = vrot.slane %v4374, 4
          %v4393 = vadd.f32 %v4374, %v4392
          %v4394 = vrot.slane %v4393, 2
          %v4395 = vadd.f32 %v4393, %v4394
          %v4396 = vrot.slane %v4395, 1
          %v4397 = vadd.f32 %v4395, %v4396
          %v4398 = vrot.slane %v4375, 4
          %v4399 = vadd.f32 %v4375, %v4398
          %v4400 = vrot.slane %v4399, 2
          %v4401 = vadd.f32 %v4399, %v4400
          %v4402 = vrot.slane %v4401, 1
          %v4403 = vadd.f32 %v4401, %v4402
          %v4404 = vrot.slane %v4376, 4
          %v4405 = vadd.f32 %v4376, %v4404
          %v4406 = vrot.slane %v4405, 2
          %v4407 = vadd.f32 %v4405, %v4406
          %v4408 = vrot.slane %v4407, 1
          %v4409 = vadd.f32 %v4407, %v4408
          %v4410 = vrot.slane %v4377, 4
          %v4411 = vadd.f32 %v4377, %v4410
          %v4412 = vrot.slane %v4411, 2
          %v4413 = vadd.f32 %v4411, %v4412
          %v4414 = vrot.slane %v4413, 1
          %v4415 = vadd.f32 %v4413, %v4414
          %v4416 = vrot.slane %v4378, 4
          %v4417 = vadd.f32 %v4378, %v4416
          %v4418 = vrot.slane %v4417, 2
          %v4419 = vadd.f32 %v4417, %v4418
          %v4420 = vrot.slane %v4419, 1
          %v4421 = vadd.f32 %v4419, %v4420
          %v4422 = vrot.slane %v4379, 4
          %v4423 = vadd.f32 %v4379, %v4422
          %v4424 = vrot.slane %v4423, 2
          %v4425 = vadd.f32 %v4423, %v4424
          %v4426 = vrot.slane %v4425, 1
          %v4427 = vadd.f32 %v4425, %v4426
          %v4428 = vmul.f32 %v4385, 0.5
          %v4429 = vmul.f32 %v4391, 0.5
          %v4430 = vmul.f32 %v4397, 0.5
          %v4431 = vmul.f32 %v4403, 0.5
          %v4432 = vmul.f32 %v4409, 0.5
          %v4433 = vmul.f32 %v4415, 0.5
          %v4434 = vmul.f32 %v4421, 0.5
          %v4435 = vmul.f32 %v4427, 0.5
          %v4436 = vadd.f32 %v4428, 1e-05
          %v4437 = vadd.f32 %v4429, 1e-05
          %v4438 = vadd.f32 %v4430, 1e-05
          %v4439 = vadd.f32 %v4431, 1e-05
          %v4440 = vadd.f32 %v4432, 1e-05
          %v4441 = vadd.f32 %v4433, 1e-05
          %v4442 = vadd.f32 %v4434, 1e-05
          %v4443 = vadd.f32 %v4435, 1e-05
          %v4444 = vrsqrt.pop %v4436
          %v4445 = vrsqrt.pop %v4437
          %v4446 = vrsqrt.pop %v4438
          %v4447 = vrsqrt.pop %v4439
          %v4448 = vrsqrt.pop %v4440
          %v4449 = vrsqrt.pop %v4441
          %v4450 = vrsqrt.pop %v4442
          %v4451 = vrsqrt.pop %v4443
          %v4452 = vmul.f32 %v4356, %v4444
          %v4453 = vmul.f32 %v4357, %v4445
          %v4454 = vmul.f32 %v4358, %v4446
          %v4455 = vmul.f32 %v4359, %v4447
          %v4456 = vmul.f32 %v4360, %v4448
          %v4457 = vmul.f32 %v4361, %v4449
          %v4458 = vmul.f32 %v4362, %v4450
          %v4459 = vmul.f32 %v4363, %v4451
          %v4460 = vld [vmem:[%s343] sm:$0xff]
          %v4462 = vlaneseq
          %v4463 = vshrl.u32 %v4462, 7
          %v4464 = vsub.s32 0, %v4463
          %v4465 = vrot.slane %v4460, %v4464
          %v4466 = vlaneseq
          %v4467 = vshrl.u32 %v4466, 7
          %v4468 = vsub.s32 1, %v4467
          %v4469 = vrot.slane %v4460, %v4468
          %v4470 = vlaneseq
          %v4471 = vshrl.u32 %v4470, 7
          %v4472 = vsub.s32 2, %v4471
          %v4473 = vrot.slane %v4460, %v4472
          %v4474 = vlaneseq
          %v4475 = vshrl.u32 %v4474, 7
          %v4476 = vsub.s32 3, %v4475
          %v4477 = vrot.slane %v4460, %v4476
          %v4478 = vlaneseq
          %v4479 = vshrl.u32 %v4478, 7
          %v4480 = vsub.s32 4, %v4479
          %v4481 = vrot.slane %v4460, %v4480
          %v4482 = vlaneseq
          %v4483 = vshrl.u32 %v4482, 7
          %v4484 = vsub.s32 5, %v4483
          %v4485 = vrot.slane %v4460, %v4484
          %v4486 = vlaneseq
          %v4487 = vshrl.u32 %v4486, 7
          %v4488 = vsub.s32 6, %v4487
          %v4489 = vrot.slane %v4460, %v4488
          %v4490 = vlaneseq
          %v4491 = vshrl.u32 %v4490, 7
          %v4492 = vsub.s32 7, %v4491
          %v4493 = vrot.slane %v4460, %v4492
          %v4502 = vmul.f32 %v4452, %v4465
          %v4503 = vmul.f32 %v4453, %v4469
          %v4504 = vmul.f32 %v4454, %v4473
          %v4505 = vmul.f32 %v4455, %v4477
          %v4506 = vmul.f32 %v4456, %v4481
          %v4507 = vmul.f32 %v4457, %v4485
          %v4508 = vmul.f32 %v4458, %v4489
          %v4509 = vmul.f32 %v4459, %v4493
          %v4510 = vld [vmem:[%s352] sm:$0xff]
          %v4512 = vlaneseq
          %v4513 = vshrl.u32 %v4512, 7
          %v4514 = vsub.s32 0, %v4513
          %v4515 = vrot.slane %v4510, %v4514
          %v4516 = vlaneseq
          %v4517 = vshrl.u32 %v4516, 7
          %v4518 = vsub.s32 1, %v4517
          %v4519 = vrot.slane %v4510, %v4518
          %v4520 = vlaneseq
          %v4521 = vshrl.u32 %v4520, 7
          %v4522 = vsub.s32 2, %v4521
          %v4523 = vrot.slane %v4510, %v4522
          %v4524 = vlaneseq
          %v4525 = vshrl.u32 %v4524, 7
          %v4526 = vsub.s32 3, %v4525
          %v4527 = vrot.slane %v4510, %v4526
          %v4528 = vlaneseq
          %v4529 = vshrl.u32 %v4528, 7
          %v4530 = vsub.s32 4, %v4529
          %v4531 = vrot.slane %v4510, %v4530
          %v4532 = vlaneseq
          %v4533 = vshrl.u32 %v4532, 7
          %v4534 = vsub.s32 5, %v4533
          %v4535 = vrot.slane %v4510, %v4534
          %v4536 = vlaneseq
          %v4537 = vshrl.u32 %v4536, 7
          %v4538 = vsub.s32 6, %v4537
          %v4539 = vrot.slane %v4510, %v4538
          %v4540 = vlaneseq
          %v4541 = vshrl.u32 %v4540, 7
          %v4542 = vsub.s32 7, %v4541
          %v4543 = vrot.slane %v4510, %v4542
          %v4552 = vadd.f32 %v4502, %v4515
          %v4553 = vadd.f32 %v4503, %v4519
          %v4554 = vadd.f32 %v4504, %v4523
          %v4555 = vadd.f32 %v4505, %v4527
          %v4556 = vadd.f32 %v4506, %v4531
          %v4557 = vadd.f32 %v4507, %v4535
          %v4558 = vadd.f32 %v4508, %v4539
          %v4559 = vadd.f32 %v4509, %v4543
          %v4560 = vmax.f32 %v4552, 0.0
          %v4561 = vmax.f32 %v4553, 0.0
          %v4562 = vmax.f32 %v4554, 0.0
          %v4563 = vmax.f32 %v4555, 0.0
          %v4564 = vmax.f32 %v4556, 0.0
          %v4565 = vmax.f32 %v4557, 0.0
          %v4566 = vmax.f32 %v4558, 0.0
          %v4567 = vmax.f32 %v4559, 0.0
          %4568 = vst [vmem:[%s430] sm:$0xff] %v4560
          %4569 = vst [vmem:[%s430 + $0x8] sm:$0xff] %v4561
          %4570 = vst [vmem:[%s430 + $0x10] sm:$0xff] %v4562
          %4571 = vst [vmem:[%s430 + $0x18] sm:$0xff] %v4563
          %4572 = vst [vmem:[%s430 + $0x20] sm:$0xff] %v4564
          %4573 = vst [vmem:[%s430 + $0x28] sm:$0xff] %v4565
          %4574 = vst [vmem:[%s430 + $0x30] sm:$0xff] %v4566
          %4575 = vst [vmem:[%s430 + $0x38] sm:$0xff] %v4567
        $region64: #{generator_forward.5} parent=39 // pred_fallthru
          _
        %s4576 = smul.u32 8, %s31
        %p4577 = scmp.lt.s32.totalorder %s30, 0
        %s4578 = scalar_select %p4577, %s30, 0
        %p4579 = scmp.lt.s32.totalorder %s4576, 15
        %s4580 = scalar_select %p4579, %s4576, 15
        %s4581 = smul.addr %s4578, 16
        %s4582 = sadd.s32 %s4580, %s4581
        %s4583 = smul.addr %s4582, 8
        %s4584 = scalar_lea.vmem %s5, %s4583
        // Predicated region
        $region65: #{generator_forward.5} parent=39 // pred_check
          %p4585 = pneg %p198
        $region66: #{generator_forward.5} parent=39 // pred_check_branch
          %4587 = sbr.rel (%p4585) target = $region68
        $region67: #{generator_forward.5} parent=39 // pred_region
          %s4588 = smul.u32 8, %s31
        $region68: #{generator_forward.5} parent=39 // pred_fallthru
          _
      $region40: #{generator_forward.5} parent=5 // pred_fallthru
        _
      %p4589 = scmp.le.s32.totalorder 2, %s20
      // Predicated region
      $region69: #{generator_forward.5} parent=5 // pred_check
        %p4590 = pneg %p4589
      $region70: #{generator_forward.5} parent=5 // pred_check_branch
        %4592 = sbr.rel (%p4590) target = $region72
      $region71: #{generator_forward.5} parent=5 // pred_region
        %s4593 = ssub.s32 %s20, 2
        // Predicated region
        $region73: #{generator_forward.5} parent=71 // pred_check
          %p4594 = pneg %p204
        $region74: #{generator_forward.5} parent=71 // pred_check_branch
          %4596 = sbr.rel (%p4594) target = $region76
        $region75: #{generator_forward.5} parent=71 // pred_region
          %s4597 = smul.u32 8, %s34
          %p4598 = scmp.lt.s32.totalorder %s33, 0
          %s4599 = scalar_select %p4598, %s33, 0
          %p4600 = scmp.lt.s32.totalorder %s4597, 15
          %s4601 = scalar_select %p4600, %s4597, 15
          %s4602 = smul.addr %s4599, 16
          %s4603 = sadd.s32 %s4601, %s4602
          %s4604 = smul.addr %s4603, 8
          %s4605 = scalar_lea.vmem %s5, %s4604
        $region76: #{generator_forward.5} parent=71 // pred_fallthru
          _
      $region72: #{generator_forward.5} parent=5 // pred_fallthru
        _
    $region6: #{generator_forward.5} parent=1 // loop_footer
      %s24 = sadd.s32 1, %s20
    $region7: #{generator_forward.5} parent=1 // loop_footer_branch
      %19 = sbr.rel target = $region3
    $region8: #{generator_forward.5} parent=1 // loop_exit
      _
    %4606 = vsyncpa [#allocation4], 1
    %s4607 = scalar_lea.sflag [#allocation4], 1
    %4608 = vsyncpa %s4607, 1
    %4609 = vsyncpa [#allocation6], 1
    %s4610 = scalar_lea.sflag [#allocation6], 1
    %4611 = vsyncpa %s4610, 1
    %4612 = vsyncpa [#allocation9], 1
    %s4613 = scalar_lea.sflag [#allocation9], 1
    %4614 = vsyncpa %s4613, 1

// kernel: generator_forward.6
$region0: #{generator_forward.6}
  #allocation0 [shape = 'u32[]', space=smem, size = 0x4, offset = 0x4, fixed_abs, tag = 'smem constant byte address 0x4 - core index']
  #allocation1 [shape = 'u32[144,128]{1,0:T(1,128)}', space=vmem, size = 0x12000, scoped, tag = 'internal scratch']
  #allocation2 [shape = 'f32[32,256]{1,0:T(8,128)}', space=vmem, size = 0x8000, scoped, tag = 'scratch operand']
  %s0 = inlined_call_operand.vmem [shape: bf16[32,1152], index: 0, kind: input, shape index: {}]
  %s1 = inlined_call_operand.vmem [shape: bf16[1152,256], index: 1, kind: input, shape index: {}]
  %s2 = inlined_call_operand.vmem [shape: f32[1,256], index: 2, kind: input, shape index: {}]
  %s3 = inlined_call_operand.vmem [shape: f32[1,256], index: 3, kind: input, shape index: {}]
  %s4 = inlined_call_operand.vmem [shape: f32[1,256], index: 4, kind: input, shape index: {}]
  %s5 = inlined_call_operand.vmem [shape: f32[32,256], index: 5, kind: output, shape index: {}]
  %s6 = sld [smem:[#allocation0]]
  $region38: #{generator_forward.6} parent=0
    _
  %s8 = ssub.s32 1, %s6
  %s9 = scalar_select 0, %s8, %s6
  // Predicated region
  $region2: #{generator_forward.6} parent=0 // pred_check
    _
  $region3: #{generator_forward.6} parent=0 // pred_check_branch
    %11 = sbr.rel (0) target = $region5
  $region4: #{generator_forward.6} parent=0 // pred_region
    _
  $region5: #{generator_forward.6} parent=0 // pred_fallthru
    _
  // Predicated region
  $region6: #{generator_forward.6} parent=0 // pred_check
    _
  $region7: #{generator_forward.6} parent=0 // pred_check_branch
    %13 = sbr.rel (0) target = $region9
  $region8: #{generator_forward.6} parent=0 // pred_region
    _
  $region9: #{generator_forward.6} parent=0 // pred_fallthru
    _
  // Predicated region
  $region10: #{generator_forward.6} parent=0 // pred_check
    _
  $region11: #{generator_forward.6} parent=0 // pred_check_branch
    %15 = sbr.rel (0) target = $region13
  $region12: #{generator_forward.6} parent=0 // pred_region
    _
  $region13: #{generator_forward.6} parent=0 // pred_fallthru
    _
  // Predicated region
  $region14: #{generator_forward.6} parent=0 // pred_check
    _
  $region15: #{generator_forward.6} parent=0 // pred_check_branch
    %17 = sbr.rel (0) target = $region17
  $region16: #{generator_forward.6} parent=0 // pred_region
    _
  $region17: #{generator_forward.6} parent=0 // pred_fallthru
    _
  // Predicated region
  $region18: #{generator_forward.6} parent=0 // pred_check
    _
  $region19: #{generator_forward.6} parent=0 // pred_check_branch
    %19 = sbr.rel (0) target = $region21
  $region20: #{generator_forward.6} parent=0 // pred_region
    _
  $region21: #{generator_forward.6} parent=0 // pred_fallthru
    _
  %p21 = scmp.eq.s32.totalorder 0, 0
  // Predicated region
  $region22: #{generator_forward.6} parent=0 // pred_check
    %p22 = pneg %p21
  $region23: #{generator_forward.6} parent=0 // pred_check_branch
    %24 = sbr.rel (%p22) target = $region25
  $region24: #{generator_forward.6} parent=0 // pred_region
    %25 = vst [vmem:[#allocation2] sm:$0xff] 0.0
    %26 = vst [vmem:[#allocation2 + $0x8] sm:$0xff] 0.0
    %27 = vst [vmem:[#allocation2 + $0x10] sm:$0xff] 0.0
    %28 = vst [vmem:[#allocation2 + $0x18] sm:$0xff] 0.0
    %29 = vst [vmem:[#allocation2 + $0x20] sm:$0xff] 0.0
    %30 = vst [vmem:[#allocation2 + $0x28] sm:$0xff] 0.0
    %31 = vst [vmem:[#allocation2 + $0x30] sm:$0xff] 0.0
    %32 = vst [vmem:[#allocation2 + $0x38] sm:$0xff] 0.0
  $region25: #{generator_forward.6} parent=0 // pred_fallthru
    _
  %v33 = vld [vmem:[#allocation2] sm:$0xff]
  %v34 = vld [vmem:[#allocation2 + $0x8] sm:$0xff]
  %v35 = vld [vmem:[#allocation2 + $0x10] sm:$0xff]
  %v36 = vld [vmem:[#allocation2 + $0x18] sm:$0xff]
  %v37 = vld [vmem:[#allocation2 + $0x20] sm:$0xff]
  %v38 = vld [vmem:[#allocation2 + $0x28] sm:$0xff]
  %v39 = vld [vmem:[#allocation2 + $0x30] sm:$0xff]
  %v40 = vld [vmem:[#allocation2 + $0x38] sm:$0xff]
  %v41 = vld [vmem:[%s0] sm:$0xff]
  %v42 = vld [vmem:[%s0 + $0x8] sm:$0xff]
  %v43 = vld [vmem:[%s0 + $0x10] sm:$0xff]
  %v44 = vld [vmem:[%s0 + $0x18] sm:$0xff]
  %v45 = vld [vmem:[%s0 + $0x20] sm:$0xf]
  %v46 = vld [vmem:[%s0 + $0x24] sm:$0xff]
  %v47 = vld [vmem:[%s0 + $0x2c] sm:$0xff]
  %v48 = vld [vmem:[%s0 + $0x34] sm:$0xff]
  %v49 = vld [vmem:[%s0 + $0x3c] sm:$0xff]
  %v50 = vld [vmem:[%s0 + $0x44] sm:$0xf]
  %v51 = vld [vmem:[%s0 + $0x48] sm:$0xff]
  %v52 = vld [vmem:[%s0 + $0x50] sm:$0xff]
  %v53 = vld [vmem:[%s0 + $0x58] sm:$0xff]
  %v54 = vld [vmem:[%s0 + $0x60] sm:$0xff]
  %v55 = vld [vmem:[%s0 + $0x68] sm:$0xf]
  %v56 = vld [vmem:[%s0 + $0x6c] sm:$0xff]
  %v57 = vld [vmem:[%s0 + $0x74] sm:$0xff]
  %v58 = vld [vmem:[%s0 + $0x7c] sm:$0xff]
  %v59 = vld [vmem:[%s0 + $0x84] sm:$0xff]
  %v60 = vld [vmem:[%s0 + $0x8c] sm:$0xf]
  %v61 = vld [vmem:[%s1] sm:$0xff]
  %v62 = vld [vmem:[%s1 + $0x8] sm:$0xff]
  %v63 = vld [vmem:[%s1 + $0x10] sm:$0xff]
  %v64 = vld [vmem:[%s1 + $0x18] sm:$0xff]
  %v65 = vld [vmem:[%s1 + $0x20] sm:$0xff]
  %v66 = vld [vmem:[%s1 + $0x28] sm:$0xff]
  %v67 = vld [vmem:[%s1 + $0x30] sm:$0xff]
  %v68 = vld [vmem:[%s1 + $0x38] sm:$0xff]
  %v69 = vld [vmem:[%s1 + $0x40] sm:$0xff]
  %v70 = vld [vmem:[%s1 + $0x48] sm:$0xff]
  %v71 = vld [vmem:[%s1 + $0x50] sm:$0xff]
  %v72 = vld [vmem:[%s1 + $0x58] sm:$0xff]
  %v73 = vld [vmem:[%s1 + $0x60] sm:$0xff]
  %v74 = vld [vmem:[%s1 + $0x68] sm:$0xff]
  %v75 = vld [vmem:[%s1 + $0x70] sm:$0xff]
  %v76 = vld [vmem:[%s1 + $0x78] sm:$0xff]
  %v77 = vld [vmem:[%s1 + $0x80] sm:$0xff]
  %v78 = vld [vmem:[%s1 + $0x88] sm:$0xff]
  %v79 = vld [vmem:[%s1 + $0x90] sm:$0xff]
  %v80 = vld [vmem:[%s1 + $0x98] sm:$0xff]
  %v81 = vld [vmem:[%s1 + $0xa0] sm:$0xff]
  %v82 = vld [vmem:[%s1 + $0xa8] sm:$0xff]
  %v83 = vld [vmem:[%s1 + $0xb0] sm:$0xff]
  %v84 = vld [vmem:[%s1 + $0xb8] sm:$0xff]
  %v85 = vld [vmem:[%s1 + $0xc0] sm:$0xff]
  %v86 = vld [vmem:[%s1 + $0xc8] sm:$0xff]
  %v87 = vld [vmem:[%s1 + $0xd0] sm:$0xff]
  %v88 = vld [vmem:[%s1 + $0xd8] sm:$0xff]
  %v89 = vld [vmem:[%s1 + $0xe0] sm:$0xff]
  %v90 = vld [vmem:[%s1 + $0xe8] sm:$0xff]
  %v91 = vld [vmem:[%s1 + $0xf0] sm:$0xff]
  %v92 = vld [vmem:[%s1 + $0xf8] sm:$0xff]
  %v93 = vld [vmem:[%s1 + $0x100] sm:$0xff]
  %v94 = vld [vmem:[%s1 + $0x108] sm:$0xff]
  %v95 = vld [vmem:[%s1 + $0x110] sm:$0xff]
  %v96 = vld [vmem:[%s1 + $0x118] sm:$0xff]
  %v97 = vld [vmem:[%s1 + $0x120] sm:$0xff]
  %v98 = vld [vmem:[%s1 + $0x128] sm:$0xff]
  %v99 = vld [vmem:[%s1 + $0x130] sm:$0xff]
  %v100 = vld [vmem:[%s1 + $0x138] sm:$0xff]
  %v101 = vld [vmem:[%s1 + $0x140] sm:$0xff]
  %v102 = vld [vmem:[%s1 + $0x148] sm:$0xff]
  %v103 = vld [vmem:[%s1 + $0x150] sm:$0xff]
  %v104 = vld [vmem:[%s1 + $0x158] sm:$0xff]
  %v105 = vld [vmem:[%s1 + $0x160] sm:$0xff]
  %v106 = vld [vmem:[%s1 + $0x168] sm:$0xff]
  %v107 = vld [vmem:[%s1 + $0x170] sm:$0xff]
  %v108 = vld [vmem:[%s1 + $0x178] sm:$0xff]
  %v109 = vld [vmem:[%s1 + $0x180] sm:$0xff]
  %v110 = vld [vmem:[%s1 + $0x188] sm:$0xff]
  %v111 = vld [vmem:[%s1 + $0x190] sm:$0xff]
  %v112 = vld [vmem:[%s1 + $0x198] sm:$0xff]
  %v113 = vld [vmem:[%s1 + $0x1a0] sm:$0xff]
  %v114 = vld [vmem:[%s1 + $0x1a8] sm:$0xff]
  %v115 = vld [vmem:[%s1 + $0x1b0] sm:$0xff]
  %v116 = vld [vmem:[%s1 + $0x1b8] sm:$0xff]
  %v117 = vld [vmem:[%s1 + $0x1c0] sm:$0xff]
  %v118 = vld [vmem:[%s1 + $0x1c8] sm:$0xff]
  %v119 = vld [vmem:[%s1 + $0x1d0] sm:$0xff]
  %v120 = vld [vmem:[%s1 + $0x1d8] sm:$0xff]
  %v121 = vld [vmem:[%s1 + $0x1e0] sm:$0xff]
  %v122 = vld [vmem:[%s1 + $0x1e8] sm:$0xff]
  %v123 = vld [vmem:[%s1 + $0x1f0] sm:$0xff]
  %v124 = vld [vmem:[%s1 + $0x1f8] sm:$0xff]
  %v125 = vld [vmem:[%s1 + $0x200] sm:$0xff]
  %v126 = vld [vmem:[%s1 + $0x208] sm:$0xff]
  %v127 = vld [vmem:[%s1 + $0x210] sm:$0xff]
  %v128 = vld [vmem:[%s1 + $0x218] sm:$0xff]
  %v129 = vld [vmem:[%s1 + $0x220] sm:$0xff]
  %v130 = vld [vmem:[%s1 + $0x228] sm:$0xff]
  %v131 = vld [vmem:[%s1 + $0x230] sm:$0xff]
  %v132 = vld [vmem:[%s1 + $0x238] sm:$0xff]
  %v133 = vld [vmem:[%s1 + $0x240] sm:$0xff]
  %v134 = vld [vmem:[%s1 + $0x248] sm:$0xff]
  %v135 = vld [vmem:[%s1 + $0x250] sm:$0xff]
  %v136 = vld [vmem:[%s1 + $0x258] sm:$0xff]
  %v137 = vld [vmem:[%s1 + $0x260] sm:$0xff]
  %v138 = vld [vmem:[%s1 + $0x268] sm:$0xff]
  %v139 = vld [vmem:[%s1 + $0x270] sm:$0xff]
  %v140 = vld [vmem:[%s1 + $0x278] sm:$0xff]
  %v141 = vld [vmem:[%s1 + $0x280] sm:$0xff]
  %v142 = vld [vmem:[%s1 + $0x288] sm:$0xff]
  %v143 = vld [vmem:[%s1 + $0x290] sm:$0xff]
  %v144 = vld [vmem:[%s1 + $0x298] sm:$0xff]
  %v145 = vld [vmem:[%s1 + $0x2a0] sm:$0xff]
  %v146 = vld [vmem:[%s1 + $0x2a8] sm:$0xff]
  %v147 = vld [vmem:[%s1 + $0x2b0] sm:$0xff]
  %v148 = vld [vmem:[%s1 + $0x2b8] sm:$0xff]
  %v149 = vld [vmem:[%s1 + $0x2c0] sm:$0xff]
  %v150 = vld [vmem:[%s1 + $0x2c8] sm:$0xff]
  %v151 = vld [vmem:[%s1 + $0x2d0] sm:$0xff]
  %v152 = vld [vmem:[%s1 + $0x2d8] sm:$0xff]
  %v153 = vld [vmem:[%s1 + $0x2e0] sm:$0xff]
  %v154 = vld [vmem:[%s1 + $0x2e8] sm:$0xff]
  %v155 = vld [vmem:[%s1 + $0x2f0] sm:$0xff]
  %v156 = vld [vmem:[%s1 + $0x2f8] sm:$0xff]
  %v157 = vld [vmem:[%s1 + $0x300] sm:$0xff]
  %v158 = vld [vmem:[%s1 + $0x308] sm:$0xff]
  %v159 = vld [vmem:[%s1 + $0x310] sm:$0xff]
  %v160 = vld [vmem:[%s1 + $0x318] sm:$0xff]
  %v161 = vld [vmem:[%s1 + $0x320] sm:$0xff]
  %v162 = vld [vmem:[%s1 + $0x328] sm:$0xff]
  %v163 = vld [vmem:[%s1 + $0x330] sm:$0xff]
  %v164 = vld [vmem:[%s1 + $0x338] sm:$0xff]
  %v165 = vld [vmem:[%s1 + $0x340] sm:$0xff]
  %v166 = vld [vmem:[%s1 + $0x348] sm:$0xff]
  %v167 = vld [vmem:[%s1 + $0x350] sm:$0xff]
  %v168 = vld [vmem:[%s1 + $0x358] sm:$0xff]
  %v169 = vld [vmem:[%s1 + $0x360] sm:$0xff]
  %v170 = vld [vmem:[%s1 + $0x368] sm:$0xff]
  %v171 = vld [vmem:[%s1 + $0x370] sm:$0xff]
  %v172 = vld [vmem:[%s1 + $0x378] sm:$0xff]
  %v173 = vld [vmem:[%s1 + $0x380] sm:$0xff]
  %v174 = vld [vmem:[%s1 + $0x388] sm:$0xff]
  %v175 = vld [vmem:[%s1 + $0x390] sm:$0xff]
  %v176 = vld [vmem:[%s1 + $0x398] sm:$0xff]
  %v177 = vld [vmem:[%s1 + $0x3a0] sm:$0xff]
  %v178 = vld [vmem:[%s1 + $0x3a8] sm:$0xff]
  %v179 = vld [vmem:[%s1 + $0x3b0] sm:$0xff]
  %v180 = vld [vmem:[%s1 + $0x3b8] sm:$0xff]
  %v181 = vld [vmem:[%s1 + $0x3c0] sm:$0xff]
  %v182 = vld [vmem:[%s1 + $0x3c8] sm:$0xff]
  %v183 = vld [vmem:[%s1 + $0x3d0] sm:$0xff]
  %v184 = vld [vmem:[%s1 + $0x3d8] sm:$0xff]
  %v185 = vld [vmem:[%s1 + $0x3e0] sm:$0xff]
  %v186 = vld [vmem:[%s1 + $0x3e8] sm:$0xff]
  %v187 = vld [vmem:[%s1 + $0x3f0] sm:$0xff]
  %v188 = vld [vmem:[%s1 + $0x3f8] sm:$0xff]
  %v189 = vld [vmem:[%s1 + $0x400] sm:$0xff]
  %v190 = vld [vmem:[%s1 + $0x408] sm:$0xff]
  %v191 = vld [vmem:[%s1 + $0x410] sm:$0xff]
  %v192 = vld [vmem:[%s1 + $0x418] sm:$0xff]
  %v193 = vld [vmem:[%s1 + $0x420] sm:$0xff]
  %v194 = vld [vmem:[%s1 + $0x428] sm:$0xff]
  %v195 = vld [vmem:[%s1 + $0x430] sm:$0xff]
  %v196 = vld [vmem:[%s1 + $0x438] sm:$0xff]
  %v197 = vld [vmem:[%s1 + $0x440] sm:$0xff]
  %v198 = vld [vmem:[%s1 + $0x448] sm:$0xff]
  %v199 = vld [vmem:[%s1 + $0x450] sm:$0xff]
  %v200 = vld [vmem:[%s1 + $0x458] sm:$0xff]
  %v201 = vld [vmem:[%s1 + $0x460] sm:$0xff]
  %v202 = vld [vmem:[%s1 + $0x468] sm:$0xff]
  %v203 = vld [vmem:[%s1 + $0x470] sm:$0xff]
  %v204 = vld [vmem:[%s1 + $0x478] sm:$0xff]
  %v225 = vunpack.c.l.b16 %v41
  %v226 = vunpack.c.h.b16 %v41
  %v227 = vunpack.c.l.b16 %v42
  %v228 = vunpack.c.h.b16 %v42
  %v229 = vunpack.c.l.b16 %v43
  %v230 = vunpack.c.h.b16 %v43
  %v231 = vunpack.c.l.b16 %v44
  %v232 = vunpack.c.h.b16 %v44
  %v233 = vunpack.c.l.b16 %v45
  %v234 = vunpack.c.l.b16 %v46
  %v235 = vunpack.c.h.b16 %v46
  %v236 = vunpack.c.l.b16 %v47
  %v237 = vunpack.c.h.b16 %v47
  %v238 = vunpack.c.l.b16 %v48
  %v239 = vunpack.c.h.b16 %v48
  %v240 = vunpack.c.l.b16 %v49
  %v241 = vunpack.c.h.b16 %v49
  %v242 = vunpack.c.l.b16 %v50
  %v243 = vunpack.c.l.b16 %v51
  %v244 = vunpack.c.h.b16 %v51
  %v245 = vunpack.c.l.b16 %v52
  %v246 = vunpack.c.h.b16 %v52
  %v247 = vunpack.c.l.b16 %v53
  %v248 = vunpack.c.h.b16 %v53
  %v249 = vunpack.c.l.b16 %v54
  %v250 = vunpack.c.h.b16 %v54
  %v251 = vunpack.c.l.b16 %v55
  %v252 = vunpack.c.l.b16 %v56
  %v253 = vunpack.c.h.b16 %v56
  %v254 = vunpack.c.l.b16 %v57
  %v255 = vunpack.c.h.b16 %v57
  %v256 = vunpack.c.l.b16 %v58
  %v257 = vunpack.c.h.b16 %v58
  %v258 = vunpack.c.l.b16 %v59
  %v259 = vunpack.c.h.b16 %v59
  %v260 = vunpack.c.l.b16 %v60
  %v261 = vpack.c.b16 %v234, %v225
  %v262 = vpack.c.b16 %v235, %v226
  %v263 = vpack.c.b16 %v236, %v227
  %v264 = vpack.c.b16 %v237, %v228
  %v265 = vpack.c.b16 %v238, %v229
  %v266 = vpack.c.b16 %v239, %v230
  %v267 = vpack.c.b16 %v240, %v231
  %v268 = vpack.c.b16 %v241, %v232
  %v269 = vpack.c.b16 %v242, %v233
  %v270 = vpack.c.b16 %v252, %v243
  %v271 = vpack.c.b16 %v253, %v244
  %v272 = vpack.c.b16 %v254, %v245
  %v273 = vpack.c.b16 %v255, %v246
  %v274 = vpack.c.b16 %v256, %v247
  %v275 = vpack.c.b16 %v257, %v248
  %v276 = vpack.c.b16 %v258, %v249
  %v277 = vpack.c.b16 %v259, %v250
  %v278 = vpack.c.b16 %v260, %v251
  %v441 = vunpack.c.l.b16 %v61
  %v442 = vunpack.c.h.b16 %v61
  %v443 = vunpack.c.l.b16 %v62
  %v444 = vunpack.c.h.b16 %v62
  %v445 = vunpack.c.l.b16 %v63
  %v446 = vunpack.c.h.b16 %v63
  %v447 = vunpack.c.l.b16 %v64
  %v448 = vunpack.c.h.b16 %v64
  %v449 = vunpack.c.l.b16 %v65
  %v450 = vunpack.c.h.b16 %v65
  %v451 = vunpack.c.l.b16 %v66
  %v452 = vunpack.c.h.b16 %v66
  %v453 = vunpack.c.l.b16 %v67
  %v454 = vunpack.c.h.b16 %v67
  %v455 = vunpack.c.l.b16 %v68
  %v456 = vunpack.c.h.b16 %v68
  %v457 = vunpack.c.l.b16 %v69
  %v458 = vunpack.c.h.b16 %v69
  %v459 = vunpack.c.l.b16 %v70
  %v460 = vunpack.c.h.b16 %v70
  %v461 = vunpack.c.l.b16 %v71
  %v462 = vunpack.c.h.b16 %v71
  %v463 = vunpack.c.l.b16 %v72
  %v464 = vunpack.c.h.b16 %v72
  %v465 = vunpack.c.l.b16 %v73
  %v466 = vunpack.c.h.b16 %v73
  %v467 = vunpack.c.l.b16 %v74
  %v468 = vunpack.c.h.b16 %v74
  %v469 = vunpack.c.l.b16 %v75
  %v470 = vunpack.c.h.b16 %v75
  %v471 = vunpack.c.l.b16 %v76
  %v472 = vunpack.c.h.b16 %v76
  %v473 = vunpack.c.l.b16 %v77
  %v474 = vunpack.c.h.b16 %v77
  %v475 = vunpack.c.l.b16 %v78
  %v476 = vunpack.c.h.b16 %v78
  %v477 = vunpack.c.l.b16 %v79
  %v478 = vunpack.c.h.b16 %v79
  %v479 = vunpack.c.l.b16 %v80
  %v480 = vunpack.c.h.b16 %v80
  %v481 = vunpack.c.l.b16 %v81
  %v482 = vunpack.c.h.b16 %v81
  %v483 = vunpack.c.l.b16 %v82
  %v484 = vunpack.c.h.b16 %v82
  %v485 = vunpack.c.l.b16 %v83
  %v486 = vunpack.c.h.b16 %v83
  %v487 = vunpack.c.l.b16 %v84
  %v488 = vunpack.c.h.b16 %v84
  %v489 = vunpack.c.l.b16 %v85
  %v490 = vunpack.c.h.b16 %v85
  %v491 = vunpack.c.l.b16 %v86
  %v492 = vunpack.c.h.b16 %v86
  %v493 = vunpack.c.l.b16 %v87
  %v494 = vunpack.c.h.b16 %v87
  %v495 = vunpack.c.l.b16 %v88
  %v496 = vunpack.c.h.b16 %v88
  %v497 = vunpack.c.l.b16 %v89
  %v498 = vunpack.c.h.b16 %v89
  %v499 = vunpack.c.l.b16 %v90
  %v500 = vunpack.c.h.b16 %v90
  %v501 = vunpack.c.l.b16 %v91
  %v502 = vunpack.c.h.b16 %v91
  %v503 = vunpack.c.l.b16 %v92
  %v504 = vunpack.c.h.b16 %v92
  %v505 = vunpack.c.l.b16 %v93
  %v506 = vunpack.c.h.b16 %v93
  %v507 = vunpack.c.l.b16 %v94
  %v508 = vunpack.c.h.b16 %v94
  %v509 = vunpack.c.l.b16 %v95
  %v510 = vunpack.c.h.b16 %v95
  %v511 = vunpack.c.l.b16 %v96
  %v512 = vunpack.c.h.b16 %v96
  %v513 = vunpack.c.l.b16 %v97
  %v514 = vunpack.c.h.b16 %v97
  %v515 = vunpack.c.l.b16 %v98
  %v516 = vunpack.c.h.b16 %v98
  %v517 = vunpack.c.l.b16 %v99
  %v518 = vunpack.c.h.b16 %v99
  %v519 = vunpack.c.l.b16 %v100
  %v520 = vunpack.c.h.b16 %v100
  %v521 = vunpack.c.l.b16 %v101
  %v522 = vunpack.c.h.b16 %v101
  %v523 = vunpack.c.l.b16 %v102
  %v524 = vunpack.c.h.b16 %v102
  %v525 = vunpack.c.l.b16 %v103
  %v526 = vunpack.c.h.b16 %v103
  %v527 = vunpack.c.l.b16 %v104
  %v528 = vunpack.c.h.b16 %v104
  %v529 = vunpack.c.l.b16 %v105
  %v530 = vunpack.c.h.b16 %v105
  %v531 = vunpack.c.l.b16 %v106
  %v532 = vunpack.c.h.b16 %v106
  %v533 = vunpack.c.l.b16 %v107
  %v534 = vunpack.c.h.b16 %v107
  %v535 = vunpack.c.l.b16 %v108
  %v536 = vunpack.c.h.b16 %v108
  %v537 = vunpack.c.l.b16 %v109
  %v538 = vunpack.c.h.b16 %v109
  %v539 = vunpack.c.l.b16 %v110
  %v540 = vunpack.c.h.b16 %v110
  %v541 = vunpack.c.l.b16 %v111
  %v542 = vunpack.c.h.b16 %v111
  %v543 = vunpack.c.l.b16 %v112
  %v544 = vunpack.c.h.b16 %v112
  %v545 = vunpack.c.l.b16 %v113
  %v546 = vunpack.c.h.b16 %v113
  %v547 = vunpack.c.l.b16 %v114
  %v548 = vunpack.c.h.b16 %v114
  %v549 = vunpack.c.l.b16 %v115
  %v550 = vunpack.c.h.b16 %v115
  %v551 = vunpack.c.l.b16 %v116
  %v552 = vunpack.c.h.b16 %v116
  %v553 = vunpack.c.l.b16 %v117
  %v554 = vunpack.c.h.b16 %v117
  %v555 = vunpack.c.l.b16 %v118
  %v556 = vunpack.c.h.b16 %v118
  %v557 = vunpack.c.l.b16 %v119
  %v558 = vunpack.c.h.b16 %v119
  %v559 = vunpack.c.l.b16 %v120
  %v560 = vunpack.c.h.b16 %v120
  %v561 = vunpack.c.l.b16 %v121
  %v562 = vunpack.c.h.b16 %v121
  %v563 = vunpack.c.l.b16 %v122
  %v564 = vunpack.c.h.b16 %v122
  %v565 = vunpack.c.l.b16 %v123
  %v566 = vunpack.c.h.b16 %v123
  %v567 = vunpack.c.l.b16 %v124
  %v568 = vunpack.c.h.b16 %v124
  %v569 = vunpack.c.l.b16 %v125
  %v570 = vunpack.c.h.b16 %v125
  %v571 = vunpack.c.l.b16 %v126
  %v572 = vunpack.c.h.b16 %v126
  %v573 = vunpack.c.l.b16 %v127
  %v574 = vunpack.c.h.b16 %v127
  %v575 = vunpack.c.l.b16 %v128
  %v576 = vunpack.c.h.b16 %v128
  %v577 = vunpack.c.l.b16 %v129
  %v578 = vunpack.c.h.b16 %v129
  %v579 = vunpack.c.l.b16 %v130
  %v580 = vunpack.c.h.b16 %v130
  %v581 = vunpack.c.l.b16 %v131
  %v582 = vunpack.c.h.b16 %v131
  %v583 = vunpack.c.l.b16 %v132
  %v584 = vunpack.c.h.b16 %v132
  %v585 = vunpack.c.l.b16 %v133
  %v586 = vunpack.c.h.b16 %v133
  %v587 = vunpack.c.l.b16 %v134
  %v588 = vunpack.c.h.b16 %v134
  %v589 = vunpack.c.l.b16 %v135
  %v590 = vunpack.c.h.b16 %v135
  %v591 = vunpack.c.l.b16 %v136
  %v592 = vunpack.c.h.b16 %v136
  %v593 = vunpack.c.l.b16 %v137
  %v594 = vunpack.c.h.b16 %v137
  %v595 = vunpack.c.l.b16 %v138
  %v596 = vunpack.c.h.b16 %v138
  %v597 = vunpack.c.l.b16 %v139
  %v598 = vunpack.c.h.b16 %v139
  %v599 = vunpack.c.l.b16 %v140
  %v600 = vunpack.c.h.b16 %v140
  %v601 = vunpack.c.l.b16 %v141
  %v602 = vunpack.c.h.b16 %v141
  %v603 = vunpack.c.l.b16 %v142
  %v604 = vunpack.c.h.b16 %v142
  %v605 = vunpack.c.l.b16 %v143
  %v606 = vunpack.c.h.b16 %v143
  %v607 = vunpack.c.l.b16 %v144
  %v608 = vunpack.c.h.b16 %v144
  %v609 = vunpack.c.l.b16 %v145
  %v610 = vunpack.c.h.b16 %v145
  %v611 = vunpack.c.l.b16 %v146
  %v612 = vunpack.c.h.b16 %v146
  %v613 = vunpack.c.l.b16 %v147
  %v614 = vunpack.c.h.b16 %v147
  %v615 = vunpack.c.l.b16 %v148
  %v616 = vunpack.c.h.b16 %v148
  %v617 = vunpack.c.l.b16 %v149
  %v618 = vunpack.c.h.b16 %v149
  %v619 = vunpack.c.l.b16 %v150
  %v620 = vunpack.c.h.b16 %v150
  %v621 = vunpack.c.l.b16 %v151
  %v622 = vunpack.c.h.b16 %v151
  %v623 = vunpack.c.l.b16 %v152
  %v624 = vunpack.c.h.b16 %v152
  %v625 = vunpack.c.l.b16 %v153
  %v626 = vunpack.c.h.b16 %v153
  %v627 = vunpack.c.l.b16 %v154
  %v628 = vunpack.c.h.b16 %v154
  %v629 = vunpack.c.l.b16 %v155
  %v630 = vunpack.c.h.b16 %v155
  %v631 = vunpack.c.l.b16 %v156
  %v632 = vunpack.c.h.b16 %v156
  %v633 = vunpack.c.l.b16 %v157
  %v634 = vunpack.c.h.b16 %v157
  %v635 = vunpack.c.l.b16 %v158
  %v636 = vunpack.c.h.b16 %v158
  %v637 = vunpack.c.l.b16 %v159
  %v638 = vunpack.c.h.b16 %v159
  %v639 = vunpack.c.l.b16 %v160
  %v640 = vunpack.c.h.b16 %v160
  %v641 = vunpack.c.l.b16 %v161
  %v642 = vunpack.c.h.b16 %v161
  %v643 = vunpack.c.l.b16 %v162
  %v644 = vunpack.c.h.b16 %v162
  %v645 = vunpack.c.l.b16 %v163
  %v646 = vunpack.c.h.b16 %v163
  %v647 = vunpack.c.l.b16 %v164
  %v648 = vunpack.c.h.b16 %v164
  %v649 = vunpack.c.l.b16 %v165
  %v650 = vunpack.c.h.b16 %v165
  %v651 = vunpack.c.l.b16 %v166
  %v652 = vunpack.c.h.b16 %v166
  %v653 = vunpack.c.l.b16 %v167
  %v654 = vunpack.c.h.b16 %v167
  %v655 = vunpack.c.l.b16 %v168
  %v656 = vunpack.c.h.b16 %v168
  %v657 = vunpack.c.l.b16 %v169
  %v658 = vunpack.c.h.b16 %v169
  %v659 = vunpack.c.l.b16 %v170
  %v660 = vunpack.c.h.b16 %v170
  %v661 = vunpack.c.l.b16 %v171
  %v662 = vunpack.c.h.b16 %v171
  %v663 = vunpack.c.l.b16 %v172
  %v664 = vunpack.c.h.b16 %v172
  %v665 = vunpack.c.l.b16 %v173
  %v666 = vunpack.c.h.b16 %v173
  %v667 = vunpack.c.l.b16 %v174
  %v668 = vunpack.c.h.b16 %v174
  %v669 = vunpack.c.l.b16 %v175
  %v670 = vunpack.c.h.b16 %v175
  %v671 = vunpack.c.l.b16 %v176
  %v672 = vunpack.c.h.b16 %v176
  %v673 = vunpack.c.l.b16 %v177
  %v674 = vunpack.c.h.b16 %v177
  %v675 = vunpack.c.l.b16 %v178
  %v676 = vunpack.c.h.b16 %v178
  %v677 = vunpack.c.l.b16 %v179
  %v678 = vunpack.c.h.b16 %v179
  %v679 = vunpack.c.l.b16 %v180
  %v680 = vunpack.c.h.b16 %v180
  %v681 = vunpack.c.l.b16 %v181
  %v682 = vunpack.c.h.b16 %v181
  %v683 = vunpack.c.l.b16 %v182
  %v684 = vunpack.c.h.b16 %v182
  %v685 = vunpack.c.l.b16 %v183
  %v686 = vunpack.c.h.b16 %v183
  %v687 = vunpack.c.l.b16 %v184
  %v688 = vunpack.c.h.b16 %v184
  %v689 = vunpack.c.l.b16 %v185
  %v690 = vunpack.c.h.b16 %v185
  %v691 = vunpack.c.l.b16 %v186
  %v692 = vunpack.c.h.b16 %v186
  %v693 = vunpack.c.l.b16 %v187
  %v694 = vunpack.c.h.b16 %v187
  %v695 = vunpack.c.l.b16 %v188
  %v696 = vunpack.c.h.b16 %v188
  %v697 = vunpack.c.l.b16 %v189
  %v698 = vunpack.c.h.b16 %v189
  %v699 = vunpack.c.l.b16 %v190
  %v700 = vunpack.c.h.b16 %v190
  %v701 = vunpack.c.l.b16 %v191
  %v702 = vunpack.c.h.b16 %v191
  %v703 = vunpack.c.l.b16 %v192
  %v704 = vunpack.c.h.b16 %v192
  %v705 = vunpack.c.l.b16 %v193
  %v706 = vunpack.c.h.b16 %v193
  %v707 = vunpack.c.l.b16 %v194
  %v708 = vunpack.c.h.b16 %v194
  %v709 = vunpack.c.l.b16 %v195
  %v710 = vunpack.c.h.b16 %v195
  %v711 = vunpack.c.l.b16 %v196
  %v712 = vunpack.c.h.b16 %v196
  %v713 = vunpack.c.l.b16 %v197
  %v714 = vunpack.c.h.b16 %v197
  %v715 = vunpack.c.l.b16 %v198
  %v716 = vunpack.c.h.b16 %v198
  %v717 = vunpack.c.l.b16 %v199
  %v718 = vunpack.c.h.b16 %v199
  %v719 = vunpack.c.l.b16 %v200
  %v720 = vunpack.c.h.b16 %v200
  %v721 = vunpack.c.l.b16 %v201
  %v722 = vunpack.c.h.b16 %v201
  %v723 = vunpack.c.l.b16 %v202
  %v724 = vunpack.c.h.b16 %v202
  %v725 = vunpack.c.l.b16 %v203
  %v726 = vunpack.c.h.b16 %v203
  %v727 = vunpack.c.l.b16 %v204
  %v728 = vunpack.c.h.b16 %v204
  %v729 = vpack.c.b16 %v443, %v441
  %v730 = vpack.c.b16 %v444, %v442
  %v731 = vpack.c.b16 %v447, %v445
  %v732 = vpack.c.b16 %v448, %v446
  %v733 = vpack.c.b16 %v451, %v449
  %v734 = vpack.c.b16 %v452, %v450
  %v735 = vpack.c.b16 %v455, %v453
  %v736 = vpack.c.b16 %v456, %v454
  %v737 = vpack.c.b16 %v459, %v457
  %v738 = vpack.c.b16 %v460, %v458
  %v739 = vpack.c.b16 %v463, %v461
  %v740 = vpack.c.b16 %v464, %v462
  %v741 = vpack.c.b16 %v467, %v465
  %v742 = vpack.c.b16 %v468, %v466
  %v743 = vpack.c.b16 %v471, %v469
  %v744 = vpack.c.b16 %v472, %v470
  %v745 = vpack.c.b16 %v475, %v473
  %v746 = vpack.c.b16 %v476, %v474
  %v747 = vpack.c.b16 %v479, %v477
  %v748 = vpack.c.b16 %v480, %v478
  %v749 = vpack.c.b16 %v483, %v481
  %v750 = vpack.c.b16 %v484, %v482
  %v751 = vpack.c.b16 %v487, %v485
  %v752 = vpack.c.b16 %v488, %v486
  %v753 = vpack.c.b16 %v491, %v489
  %v754 = vpack.c.b16 %v492, %v490
  %v755 = vpack.c.b16 %v495, %v493
  %v756 = vpack.c.b16 %v496, %v494
  %v757 = vpack.c.b16 %v499, %v497
  %v758 = vpack.c.b16 %v500, %v498
  %v759 = vpack.c.b16 %v503, %v501
  %v760 = vpack.c.b16 %v504, %v502
  %v761 = vpack.c.b16 %v507, %v505
  %v762 = vpack.c.b16 %v508, %v506
  %v763 = vpack.c.b16 %v511, %v509
  %v764 = vpack.c.b16 %v512, %v510
  %v765 = vpack.c.b16 %v515, %v513
  %v766 = vpack.c.b16 %v516, %v514
  %v767 = vpack.c.b16 %v519, %v517
  %v768 = vpack.c.b16 %v520, %v518
  %v769 = vpack.c.b16 %v523, %v521
  %v770 = vpack.c.b16 %v524, %v522
  %v771 = vpack.c.b16 %v527, %v525
  %v772 = vpack.c.b16 %v528, %v526
  %v773 = vpack.c.b16 %v531, %v529
  %v774 = vpack.c.b16 %v532, %v530
  %v775 = vpack.c.b16 %v535, %v533
  %v776 = vpack.c.b16 %v536, %v534
  %v777 = vpack.c.b16 %v539, %v537
  %v778 = vpack.c.b16 %v540, %v538
  %v779 = vpack.c.b16 %v543, %v541
  %v780 = vpack.c.b16 %v544, %v542
  %v781 = vpack.c.b16 %v547, %v545
  %v782 = vpack.c.b16 %v548, %v546
  %v783 = vpack.c.b16 %v551, %v549
  %v784 = vpack.c.b16 %v552, %v550
  %v785 = vpack.c.b16 %v555, %v553
  %v786 = vpack.c.b16 %v556, %v554
  %v787 = vpack.c.b16 %v559, %v557
  %v788 = vpack.c.b16 %v560, %v558
  %v789 = vpack.c.b16 %v563, %v561
  %v790 = vpack.c.b16 %v564, %v562
  %v791 = vpack.c.b16 %v567, %v565
  %v792 = vpack.c.b16 %v568, %v566
  %v793 = vpack.c.b16 %v571, %v569
  %v794 = vpack.c.b16 %v572, %v570
  %v795 = vpack.c.b16 %v575, %v573
  %v796 = vpack.c.b16 %v576, %v574
  %v797 = vpack.c.b16 %v579, %v577
  %v798 = vpack.c.b16 %v580, %v578
  %v799 = vpack.c.b16 %v583, %v581
  %v800 = vpack.c.b16 %v584, %v582
  %v801 = vpack.c.b16 %v587, %v585
  %v802 = vpack.c.b16 %v588, %v586
  %v803 = vpack.c.b16 %v591, %v589
  %v804 = vpack.c.b16 %v592, %v590
  %v805 = vpack.c.b16 %v595, %v593
  %v806 = vpack.c.b16 %v596, %v594
  %v807 = vpack.c.b16 %v599, %v597
  %v808 = vpack.c.b16 %v600, %v598
  %v809 = vpack.c.b16 %v603, %v601
  %v810 = vpack.c.b16 %v604, %v602
  %v811 = vpack.c.b16 %v607, %v605
  %v812 = vpack.c.b16 %v608, %v606
  %v813 = vpack.c.b16 %v611, %v609
  %v814 = vpack.c.b16 %v612, %v610
  %v815 = vpack.c.b16 %v615, %v613
  %v816 = vpack.c.b16 %v616, %v614
  %v817 = vpack.c.b16 %v619, %v617
  %v818 = vpack.c.b16 %v620, %v618
  %v819 = vpack.c.b16 %v623, %v621
  %v820 = vpack.c.b16 %v624, %v622
  %v821 = vpack.c.b16 %v627, %v625
  %v822 = vpack.c.b16 %v628, %v626
  %v823 = vpack.c.b16 %v631, %v629
  %v824 = vpack.c.b16 %v632, %v630
  %v825 = vpack.c.b16 %v635, %v633
  %v826 = vpack.c.b16 %v636, %v634
  %v827 = vpack.c.b16 %v639, %v637
  %v828 = vpack.c.b16 %v640, %v638
  %v829 = vpack.c.b16 %v643, %v641
  %v830 = vpack.c.b16 %v644, %v642
  %v831 = vpack.c.b16 %v647, %v645
  %v832 = vpack.c.b16 %v648, %v646
  %v833 = vpack.c.b16 %v651, %v649
  %v834 = vpack.c.b16 %v652, %v650
  %v835 = vpack.c.b16 %v655, %v653
  %v836 = vpack.c.b16 %v656, %v654
  %v837 = vpack.c.b16 %v659, %v657
  %v838 = vpack.c.b16 %v660, %v658
  %v839 = vpack.c.b16 %v663, %v661
  %v840 = vpack.c.b16 %v664, %v662
  %v841 = vpack.c.b16 %v667, %v665
  %v842 = vpack.c.b16 %v668, %v666
  %v843 = vpack.c.b16 %v671, %v669
  %v844 = vpack.c.b16 %v672, %v670
  %v845 = vpack.c.b16 %v675, %v673
  %v846 = vpack.c.b16 %v676, %v674
  %v847 = vpack.c.b16 %v679, %v677
  %v848 = vpack.c.b16 %v680, %v678
  %v849 = vpack.c.b16 %v683, %v681
  %v850 = vpack.c.b16 %v684, %v682
  %v851 = vpack.c.b16 %v687, %v685
  %v852 = vpack.c.b16 %v688, %v686
  %v853 = vpack.c.b16 %v691, %v689
  %v854 = vpack.c.b16 %v692, %v690
  %v855 = vpack.c.b16 %v695, %v693
  %v856 = vpack.c.b16 %v696, %v694
  %v857 = vpack.c.b16 %v699, %v697
  %v858 = vpack.c.b16 %v700, %v698
  %v859 = vpack.c.b16 %v703, %v701
  %v860 = vpack.c.b16 %v704, %v702
  %v861 = vpack.c.b16 %v707, %v705
  %v862 = vpack.c.b16 %v708, %v706
  %v863 = vpack.c.b16 %v711, %v709
  %v864 = vpack.c.b16 %v712, %v710
  %v865 = vpack.c.b16 %v715, %v713
  %v866 = vpack.c.b16 %v716, %v714
  %v867 = vpack.c.b16 %v719, %v717
  %v868 = vpack.c.b16 %v720, %v718
  %v869 = vpack.c.b16 %v723, %v721
  %v870 = vpack.c.b16 %v724, %v722
  %v871 = vpack.c.b16 %v727, %v725
  %v872 = vpack.c.b16 %v728, %v726
  %1017 = vmatprep.subr.bf16.mxu0 %v730
  %1018 = vmatpush1.bf16.msra.mxu0 %v729
  %1019 = vmatprep.subr.bf16.mxu0 %v732
  %1020 = vmatpush1.bf16.msra.mxu0 %v731
  %1021 = vmatprep.subr.bf16.mxu0 %v734
  %1022 = vmatpush1.bf16.msra.mxu0 %v733
  %1023 = vmatprep.subr.bf16.mxu0 %v736
  %1024 = vmatpush1.bf16.msra.mxu0 %v735
  %1025 = vmatprep.subr.bf16.mxu0 %v738
  %1026 = vmatpush1.bf16.msra.mxu0 %v737
  %1027 = vmatprep.subr.bf16.mxu0 %v740
  %1028 = vmatpush1.bf16.msra.mxu0 %v739
  %1029 = vmatprep.subr.bf16.mxu0 %v742
  %1030 = vmatpush1.bf16.msra.mxu0 %v741
  %1031 = vmatprep.subr.bf16.mxu0 %v744
  %1032 = vmatpush1.bf16.msra.mxu0 %v743
  %1033 = vmatprep.subr.bf16.mxu0 %v746
  %1034 = vmatpush1.bf16.msra.mxu0 %v745
  %1035 = vmatprep.subr.bf16.mxu0 %v748
  %1036 = vmatpush1.bf16.msra.mxu0 %v747
  %1037 = vmatprep.subr.bf16.mxu0 %v750
  %1038 = vmatpush1.bf16.msra.mxu0 %v749
  %1039 = vmatprep.subr.bf16.mxu0 %v752
  %1040 = vmatpush1.bf16.msra.mxu0 %v751
  %1041 = vmatprep.subr.bf16.mxu0 %v754
  %1042 = vmatpush1.bf16.msra.mxu0 %v753
  %1043 = vmatprep.subr.bf16.mxu0 %v756
  %1044 = vmatpush1.bf16.msra.mxu0 %v755
  %1045 = vmatprep.subr.bf16.mxu0 %v758
  %1046 = vmatpush1.bf16.msra.mxu0 %v757
  %1047 = vmatprep.subr.bf16.mxu0 %v760
  %1048 = vmatpush1.bf16.msra.mxu0 %v759
  %1049 = vmatprep.mubr.bf16.mxu0 %v262
  %1050 = vmatmul.mubr.bf16.gmra.mrb[0].mxu0 %v261
  %v1051 = vpop.f32.mrb[0].mxu0
  %v1052 = vadd.f32 0.0, %v1051
  %v1053 = vpop.f32.mrb[0].mxu0
  %v1054 = vadd.f32 0.0, %v1053
  %v1055 = vpop.f32.mrb[0].mxu0
  %v1056 = vadd.f32 0.0, %v1055
  %v1057 = vpop.f32.mrb[0].mxu0
  %v1058 = vadd.f32 0.0, %v1057
  %1059 = vmatprep.mubr.bf16.mxu0 %v271
  %1060 = vmatmul.mubr.bf16.gmra.mrb[0].mxu0 %v270
  %v1061 = vpop.f32.mrb[0].mxu0
  %v1062 = vadd.f32 0.0, %v1061
  %v1063 = vpop.f32.mrb[0].mxu0
  %v1064 = vadd.f32 0.0, %v1063
  %v1065 = vpop.f32.mrb[0].mxu0
  %v1066 = vadd.f32 0.0, %v1065
  %v1067 = vpop.f32.mrb[0].mxu0
  %v1068 = vadd.f32 0.0, %v1067
  %1069 = vdwg.mxu0
  %1070 = vmatprep.subr.bf16.mxu0 %v762
  %1071 = vmatpush1.bf16.msra.mxu0 %v761
  %1072 = vmatprep.subr.bf16.mxu0 %v764
  %1073 = vmatpush1.bf16.msra.mxu0 %v763
  %1074 = vmatprep.subr.bf16.mxu0 %v766
  %1075 = vmatpush1.bf16.msra.mxu0 %v765
  %1076 = vmatprep.subr.bf16.mxu0 %v768
  %1077 = vmatpush1.bf16.msra.mxu0 %v767
  %1078 = vmatprep.subr.bf16.mxu0 %v770
  %1079 = vmatpush1.bf16.msra.mxu0 %v769
  %1080 = vmatprep.subr.bf16.mxu0 %v772
  %1081 = vmatpush1.bf16.msra.mxu0 %v771
  %1082 = vmatprep.subr.bf16.mxu0 %v774
  %1083 = vmatpush1.bf16.msra.mxu0 %v773
  %1084 = vmatprep.subr.bf16.mxu0 %v776
  %1085 = vmatpush1.bf16.msra.mxu0 %v775
  %1086 = vmatprep.subr.bf16.mxu0 %v778
  %1087 = vmatpush1.bf16.msra.mxu0 %v777
  %1088 = vmatprep.subr.bf16.mxu0 %v780
  %1089 = vmatpush1.bf16.msra.mxu0 %v779
  %1090 = vmatprep.subr.bf16.mxu0 %v782
  %1091 = vmatpush1.bf16.msra.mxu0 %v781
  %1092 = vmatprep.subr.bf16.mxu0 %v784
  %1093 = vmatpush1.bf16.msra.mxu0 %v783
  %1094 = vmatprep.subr.bf16.mxu0 %v786
  %1095 = vmatpush1.bf16.msra.mxu0 %v785
  %1096 = vmatprep.subr.bf16.mxu0 %v788
  %1097 = vmatpush1.bf16.msra.mxu0 %v787
  %1098 = vmatprep.subr.bf16.mxu0 %v790
  %1099 = vmatpush1.bf16.msra.mxu0 %v789
  %1100 = vmatprep.subr.bf16.mxu0 %v792
  %1101 = vmatpush1.bf16.msra.mxu0 %v791
  %1102 = vmatprep.mubr.bf16.mxu0 %v264
  %1103 = vmatmul.mubr.bf16.gmra.mrb[0].mxu0 %v263
  %v1104 = vpop.f32.mrb[0].mxu0
  %v1105 = vadd.f32 %v1052, %v1104
  %v1106 = vpop.f32.mrb[0].mxu0
  %v1107 = vadd.f32 %v1054, %v1106
  %v1108 = vpop.f32.mrb[0].mxu0
  %v1109 = vadd.f32 %v1056, %v1108
  %v1110 = vpop.f32.mrb[0].mxu0
  %v1111 = vadd.f32 %v1058, %v1110
  %1112 = vmatprep.mubr.bf16.mxu0 %v273
  %1113 = vmatmul.mubr.bf16.gmra.mrb[0].mxu0 %v272
  %v1114 = vpop.f32.mrb[0].mxu0
  %v1115 = vadd.f32 %v1062, %v1114
  %v1116 = vpop.f32.mrb[0].mxu0
  %v1117 = vadd.f32 %v1064, %v1116
  %v1118 = vpop.f32.mrb[0].mxu0
  %v1119 = vadd.f32 %v1066, %v1118
  %v1120 = vpop.f32.mrb[0].mxu0
  %v1121 = vadd.f32 %v1068, %v1120
  %1122 = vdwg.mxu0
  %1123 = vmatprep.subr.bf16.mxu0 %v794
  %1124 = vmatpush1.bf16.msra.mxu0 %v793
  %1125 = vmatprep.subr.bf16.mxu0 %v796
  %1126 = vmatpush1.bf16.msra.mxu0 %v795
  %1127 = vmatprep.subr.bf16.mxu0 %v798
  %1128 = vmatpush1.bf16.msra.mxu0 %v797
  %1129 = vmatprep.subr.bf16.mxu0 %v800
  %1130 = vmatpush1.bf16.msra.mxu0 %v799
  %1131 = vmatprep.subr.bf16.mxu0 %v802
  %1132 = vmatpush1.bf16.msra.mxu0 %v801
  %1133 = vmatprep.subr.bf16.mxu0 %v804
  %1134 = vmatpush1.bf16.msra.mxu0 %v803
  %1135 = vmatprep.subr.bf16.mxu0 %v806
  %1136 = vmatpush1.bf16.msra.mxu0 %v805
  %1137 = vmatprep.subr.bf16.mxu0 %v808
  %1138 = vmatpush1.bf16.msra.mxu0 %v807
  %1139 = vmatprep.subr.bf16.mxu0 %v810
  %1140 = vmatpush1.bf16.msra.mxu0 %v809
  %1141 = vmatprep.subr.bf16.mxu0 %v812
  %1142 = vmatpush1.bf16.msra.mxu0 %v811
  %1143 = vmatprep.subr.bf16.mxu0 %v814
  %1144 = vmatpush1.bf16.msra.mxu0 %v813
  %1145 = vmatprep.subr.bf16.mxu0 %v816
  %1146 = vmatpush1.bf16.msra.mxu0 %v815
  %1147 = vmatprep.subr.bf16.mxu0 %v818
  %1148 = vmatpush1.bf16.msra.mxu0 %v817
  %1149 = vmatprep.subr.bf16.mxu0 %v820
  %1150 = vmatpush1.bf16.msra.mxu0 %v819
  %1151 = vmatprep.subr.bf16.mxu0 %v822
  %1152 = vmatpush1.bf16.msra.mxu0 %v821
  %1153 = vmatprep.subr.bf16.mxu0 %v824
  %1154 = vmatpush1.bf16.msra.mxu0 %v823
  %1155 = vmatprep.mubr.bf16.mxu0 %v266
  %1156 = vmatmul.mubr.bf16.gmra.mrb[0].mxu0 %v265
  %v1157 = vpop.f32.mrb[0].mxu0
  %v1158 = vadd.f32 %v1105, %v1157
  %v1159 = vpop.f32.mrb[0].mxu0
  %v1160 = vadd.f32 %v1107, %v1159
  %v1161 = vpop.f32.mrb[0].mxu0
  %v1162 = vadd.f32 %v1109, %v1161
  %v1163 = vpop.f32.mrb[0].mxu0
  %v1164 = vadd.f32 %v1111, %v1163
  %1165 = vmatprep.mubr.bf16.mxu0 %v275
  %1166 = vmatmul.mubr.bf16.gmra.mrb[0].mxu0 %v274
  %v1167 = vpop.f32.mrb[0].mxu0
  %v1168 = vadd.f32 %v1115, %v1167
  %v1169 = vpop.f32.mrb[0].mxu0
  %v1170 = vadd.f32 %v1117, %v1169
  %v1171 = vpop.f32.mrb[0].mxu0
  %v1172 = vadd.f32 %v1119, %v1171
  %v1173 = vpop.f32.mrb[0].mxu0
  %v1174 = vadd.f32 %v1121, %v1173
  %1175 = vdwg.mxu0
  %1176 = vmatprep.subr.bf16.mxu0 %v826
  %1177 = vmatpush1.bf16.msra.mxu0 %v825
  %1178 = vmatprep.subr.bf16.mxu0 %v828
  %1179 = vmatpush1.bf16.msra.mxu0 %v827
  %1180 = vmatprep.subr.bf16.mxu0 %v830
  %1181 = vmatpush1.bf16.msra.mxu0 %v829
  %1182 = vmatprep.subr.bf16.mxu0 %v832
  %1183 = vmatpush1.bf16.msra.mxu0 %v831
  %1184 = vmatprep.subr.bf16.mxu0 %v834
  %1185 = vmatpush1.bf16.msra.mxu0 %v833
  %1186 = vmatprep.subr.bf16.mxu0 %v836
  %1187 = vmatpush1.bf16.msra.mxu0 %v835
  %1188 = vmatprep.subr.bf16.mxu0 %v838
  %1189 = vmatpush1.bf16.msra.mxu0 %v837
  %1190 = vmatprep.subr.bf16.mxu0 %v840
  %1191 = vmatpush1.bf16.msra.mxu0 %v839
  %1192 = vmatprep.subr.bf16.mxu0 %v842
  %1193 = vmatpush1.bf16.msra.mxu0 %v841
  %1194 = vmatprep.subr.bf16.mxu0 %v844
  %1195 = vmatpush1.bf16.msra.mxu0 %v843
  %1196 = vmatprep.subr.bf16.mxu0 %v846
  %1197 = vmatpush1.bf16.msra.mxu0 %v845
  %1198 = vmatprep.subr.bf16.mxu0 %v848
  %1199 = vmatpush1.bf16.msra.mxu0 %v847
  %1200 = vmatprep.subr.bf16.mxu0 %v850
  %1201 = vmatpush1.bf16.msra.mxu0 %v849
  %1202 = vmatprep.subr.bf16.mxu0 %v852
  %1203 = vmatpush1.bf16.msra.mxu0 %v851
  %1204 = vmatprep.subr.bf16.mxu0 %v854
  %1205 = vmatpush1.bf16.msra.mxu0 %v853
  %1206 = vmatprep.subr.bf16.mxu0 %v856
  %1207 = vmatpush1.bf16.msra.mxu0 %v855
  %1208 = vmatprep.mubr.bf16.mxu0 %v268
  %1209 = vmatmul.mubr.bf16.gmra.mrb[0].mxu0 %v267
  %v1210 = vpop.f32.mrb[0].mxu0
  %v1211 = vadd.f32 %v1158, %v1210
  %v1212 = vpop.f32.mrb[0].mxu0
  %v1213 = vadd.f32 %v1160, %v1212
  %v1214 = vpop.f32.mrb[0].mxu0
  %v1215 = vadd.f32 %v1162, %v1214
  %v1216 = vpop.f32.mrb[0].mxu0
  %v1217 = vadd.f32 %v1164, %v1216
  %1218 = vmatprep.mubr.bf16.mxu0 %v277
  %1219 = vmatmul.mubr.bf16.gmra.mrb[0].mxu0 %v276
  %v1220 = vpop.f32.mrb[0].mxu0
  %v1221 = vadd.f32 %v1168, %v1220
  %v1222 = vpop.f32.mrb[0].mxu0
  %v1223 = vadd.f32 %v1170, %v1222
  %v1224 = vpop.f32.mrb[0].mxu0
  %v1225 = vadd.f32 %v1172, %v1224
  %v1226 = vpop.f32.mrb[0].mxu0
  %v1227 = vadd.f32 %v1174, %v1226
  %1228 = vdwg.mxu0
  %1229 = vmatprep.subr.bf16.mxu0 %v858
  %1230 = vmatpush1.bf16.msra.mxu0 %v857
  %1231 = vmatprep.subr.bf16.mxu0 %v860
  %1232 = vmatpush1.bf16.msra.mxu0 %v859
  %1233 = vmatprep.subr.bf16.mxu0 %v862
  %1234 = vmatpush1.bf16.msra.mxu0 %v861
  %1235 = vmatprep.subr.bf16.mxu0 %v864
  %1236 = vmatpush1.bf16.msra.mxu0 %v863
  %1237 = vmatprep.subr.bf16.mxu0 %v866
  %1238 = vmatpush1.bf16.msra.mxu0 %v865
  %1239 = vmatprep.subr.bf16.mxu0 %v868
  %1240 = vmatpush1.bf16.msra.mxu0 %v867
  %1241 = vmatprep.subr.bf16.mxu0 %v870
  %1242 = vmatpush1.bf16.msra.mxu0 %v869
  %1243 = vmatprep.subr.bf16.mxu0 %v872
  %1244 = vmatpush1.bf16.msra.mxu0 %v871
  %1245 = vmatprep.subr.bf16.mxu0 0
  %1246 = vmatpush1.bf16.msra.mxu0 0
  %1247 = vmatprep.subr.bf16.mxu0 0
  %1248 = vmatpush1.bf16.msra.mxu0 0
  %1249 = vmatprep.subr.bf16.mxu0 0
  %1250 = vmatpush1.bf16.msra.mxu0 0
  %1251 = vmatprep.subr.bf16.mxu0 0
  %1252 = vmatpush1.bf16.msra.mxu0 0
  %1253 = vmatprep.subr.bf16.mxu0 0
  %1254 = vmatpush1.bf16.msra.mxu0 0
  %1255 = vmatprep.subr.bf16.mxu0 0
  %1256 = vmatpush1.bf16.msra.mxu0 0
  %1257 = vmatprep.subr.bf16.mxu0 0
  %1258 = vmatpush1.bf16.msra.mxu0 0
  %1259 = vmatprep.subr.bf16.mxu0 0
  %1260 = vmatpush1.bf16.msra.mxu0 0
  %1261 = vmatprep.mubr.bf16.mxu0 0
  %1262 = vmatmul.mubr.bf16.gmra.mrb[0].mxu0 %v269
  %v1263 = vpop.f32.mrb[0].mxu0
  %v1264 = vadd.f32 %v1211, %v1263
  %v1265 = vpop.f32.mrb[0].mxu0
  %v1266 = vadd.f32 %v1213, %v1265
  %v1267 = vpop.f32.mrb[0].mxu0
  %v1268 = vadd.f32 %v1215, %v1267
  %v1269 = vpop.f32.mrb[0].mxu0
  %v1270 = vadd.f32 %v1217, %v1269
  %1271 = vmatprep.mubr.bf16.mxu0 0
  %1272 = vmatmul.mubr.bf16.gmra.mrb[0].mxu0 %v278
  %v1273 = vpop.f32.mrb[0].mxu0
  %v1274 = vadd.f32 %v1221, %v1273
  %v1275 = vpop.f32.mrb[0].mxu0
  %v1276 = vadd.f32 %v1223, %v1275
  %v1277 = vpop.f32.mrb[0].mxu0
  %v1278 = vadd.f32 %v1225, %v1277
  %v1279 = vpop.f32.mrb[0].mxu0
  %v1280 = vadd.f32 %v1227, %v1279
  %1281 = vdwg.mxu0
  %v1282 = vadd.f32 %v33, %v1264
  %v1283 = vadd.f32 %v34, %v1266
  %v1284 = vadd.f32 %v35, %v1268
  %v1285 = vadd.f32 %v36, %v1270
  %v1286 = vadd.f32 %v37, %v1274
  %v1287 = vadd.f32 %v38, %v1276
  %v1288 = vadd.f32 %v39, %v1278
  %v1289 = vadd.f32 %v40, %v1280
  %1290 = vst [vmem:[#allocation2] sm:$0xff] %v1282
  %1291 = vst [vmem:[#allocation2 + $0x8] sm:$0xff] %v1283
  %1292 = vst [vmem:[#allocation2 + $0x10] sm:$0xff] %v1284
  %1293 = vst [vmem:[#allocation2 + $0x18] sm:$0xff] %v1285
  %1294 = vst [vmem:[#allocation2 + $0x20] sm:$0xff] %v1286
  %1295 = vst [vmem:[#allocation2 + $0x28] sm:$0xff] %v1287
  %1296 = vst [vmem:[#allocation2 + $0x30] sm:$0xff] %v1288
  %1297 = vst [vmem:[#allocation2 + $0x38] sm:$0xff] %v1289
  // Predicated region
  $region26: #{generator_forward.6} parent=0 // pred_check
    %p1298 = pneg %p21
  $region27: #{generator_forward.6} parent=0 // pred_check_branch
    %1300 = sbr.rel (%p1298) target = $region29
  $region28: #{generator_forward.6} parent=0 // pred_region
    %v1301 = vld [vmem:[#allocation2] sm:$0xff]
    %v1302 = vld [vmem:[#allocation2 + $0x8] sm:$0xff]
    %v1303 = vld [vmem:[#allocation2 + $0x10] sm:$0xff]
    %v1304 = vld [vmem:[#allocation2 + $0x18] sm:$0xff]
    %v1305 = vld [vmem:[#allocation2 + $0x20] sm:$0xff]
    %v1306 = vld [vmem:[#allocation2 + $0x28] sm:$0xff]
    %v1307 = vld [vmem:[#allocation2 + $0x30] sm:$0xff]
    %v1308 = vld [vmem:[#allocation2 + $0x38] sm:$0xff]
    %v1309 = vld [vmem:[%s2] sm:$0x3]
    %v1311 = vlaneseq
    %v1312 = vshrl.u32 %v1311, 7
    %v1313 = vsub.s32 0, %v1312
    %v1314 = vrot.slane %v1309, %v1313
    %v1315 = vlaneseq
    %v1316 = vshrl.u32 %v1315, 7
    %v1317 = vsub.s32 1, %v1316
    %v1318 = vrot.slane %v1309, %v1317
    %v1321 = vadd.f32 %v1301, %v1314
    %v1322 = vadd.f32 %v1302, %v1318
    %v1323 = vadd.f32 %v1303, %v1314
    %v1324 = vadd.f32 %v1304, %v1318
    %v1325 = vadd.f32 %v1305, %v1314
    %v1326 = vadd.f32 %v1306, %v1318
    %v1327 = vadd.f32 %v1307, %v1314
    %v1328 = vadd.f32 %v1308, %v1318
    %v1329 = vlaneseq
    %v1330 = vshrl.u32 %v1329, 7
    %v1331 = vadd.s32 %v1330, 8
    %v1332 = vadd.s32 %v1330, 16
    %v1333 = vadd.s32 %v1330, 24
    %v1334 = vadd.s32 %v1330, 32
    %v1335 = vadd.s32 %v1330, 40
    %v1336 = vadd.s32 %v1330, 48
    %v1337 = vadd.s32 %v1330, 56
    %v1338 = vadd.s32 %v1330, 64
    %v1339 = vadd.s32 %v1330, 72
    %v1340 = vadd.s32 %v1330, 80
    %v1341 = vadd.s32 %v1330, 88
    %v1342 = vadd.s32 %v1330, 96
    %v1343 = vadd.s32 %v1330, 104
    %v1344 = vadd.s32 %v1330, 112
    %v1345 = vadd.s32 %v1330, 120
    %v1346 = vadd.s32 %v1330, 128
    %v1347 = vadd.s32 %v1330, 136
    %v1348 = vadd.s32 %v1330, 144
    %v1349 = vadd.s32 %v1330, 152
    %v1350 = vadd.s32 %v1330, 160
    %v1351 = vadd.s32 %v1330, 168
    %v1352 = vadd.s32 %v1330, 176
    %v1353 = vadd.s32 %v1330, 184
    %v1354 = vadd.s32 %v1330, 192
    %v1355 = vadd.s32 %v1330, 200
    %v1356 = vadd.s32 %v1330, 208
    %v1357 = vadd.s32 %v1330, 216
    %v1358 = vadd.s32 %v1330, 224
    %v1359 = vadd.s32 %v1330, 232
    %v1360 = vadd.s32 %v1330, 240
    %v1361 = vadd.s32 %v1330, 248
    %v1362 = vlaneseq
    %v1363 = vand.u32 %v1362, 127
    %v1364 = vadd.s32 %v1363, 128
    %vm1365 = vcmp.lt.s32.totalorder %v1330, 0
    %v1366 = vsub.s32 0, %v1330
    %v1367 = vsel %vm1365, %v1366, %v1330
    %v1368 = vshrl.u32 %v1367, 6
    %v1369 = vand.u32 %v1367, 63
    %v1370 = vsub.s32 0, %v1369
    %v1371 = vsel %vm1365, %v1370, %v1369
    %vm1372 = vcmp.lt.s32.totalorder %v1331, 0
    %v1373 = vsub.s32 0, %v1331
    %v1374 = vsel %vm1372, %v1373, %v1331
    %v1375 = vshrl.u32 %v1374, 6
    %v1376 = vand.u32 %v1374, 63
    %v1377 = vsub.s32 0, %v1376
    %v1378 = vsel %vm1372, %v1377, %v1376
    %vm1379 = vcmp.lt.s32.totalorder %v1332, 0
    %v1380 = vsub.s32 0, %v1332
    %v1381 = vsel %vm1379, %v1380, %v1332
    %v1382 = vshrl.u32 %v1381, 6
    %v1383 = vand.u32 %v1381, 63
    %v1384 = vsub.s32 0, %v1383
    %v1385 = vsel %vm1379, %v1384, %v1383
    %vm1386 = vcmp.lt.s32.totalorder %v1333, 0
    %v1387 = vsub.s32 0, %v1333
    %v1388 = vsel %vm1386, %v1387, %v1333
    %v1389 = vshrl.u32 %v1388, 6
    %v1390 = vand.u32 %v1388, 63
    %v1391 = vsub.s32 0, %v1390
    %v1392 = vsel %vm1386, %v1391, %v1390
    %vm1393 = vcmp.lt.s32.totalorder %v1334, 0
    %v1394 = vsub.s32 0, %v1334
    %v1395 = vsel %vm1393, %v1394, %v1334
    %v1396 = vshrl.u32 %v1395, 6
    %v1397 = vand.u32 %v1395, 63
    %v1398 = vsub.s32 0, %v1397
    %v1399 = vsel %vm1393, %v1398, %v1397
    %vm1400 = vcmp.lt.s32.totalorder %v1335, 0
    %v1401 = vsub.s32 0, %v1335
    %v1402 = vsel %vm1400, %v1401, %v1335
    %v1403 = vshrl.u32 %v1402, 6
    %v1404 = vand.u32 %v1402, 63
    %v1405 = vsub.s32 0, %v1404
    %v1406 = vsel %vm1400, %v1405, %v1404
    %vm1407 = vcmp.lt.s32.totalorder %v1336, 0
    %v1408 = vsub.s32 0, %v1336
    %v1409 = vsel %vm1407, %v1408, %v1336
    %v1410 = vshrl.u32 %v1409, 6
    %v1411 = vand.u32 %v1409, 63
    %v1412 = vsub.s32 0, %v1411
    %v1413 = vsel %vm1407, %v1412, %v1411
    %vm1414 = vcmp.lt.s32.totalorder %v1337, 0
    %v1415 = vsub.s32 0, %v1337
    %v1416 = vsel %vm1414, %v1415, %v1337
    %v1417 = vshrl.u32 %v1416, 6
    %v1418 = vand.u32 %v1416, 63
    %v1419 = vsub.s32 0, %v1418
    %v1420 = vsel %vm1414, %v1419, %v1418
    %vm1421 = vcmp.lt.s32.totalorder %v1338, 0
    %v1422 = vsub.s32 0, %v1338
    %v1423 = vsel %vm1421, %v1422, %v1338
    %v1424 = vshrl.u32 %v1423, 6
    %v1425 = vand.u32 %v1423, 63
    %v1426 = vsub.s32 0, %v1425
    %v1427 = vsel %vm1421, %v1426, %v1425
    %vm1428 = vcmp.lt.s32.totalorder %v1339, 0
    %v1429 = vsub.s32 0, %v1339
    %v1430 = vsel %vm1428, %v1429, %v1339
    %v1431 = vshrl.u32 %v1430, 6
    %v1432 = vand.u32 %v1430, 63
    %v1433 = vsub.s32 0, %v1432
    %v1434 = vsel %vm1428, %v1433, %v1432
    %vm1435 = vcmp.lt.s32.totalorder %v1340, 0
    %v1436 = vsub.s32 0, %v1340
    %v1437 = vsel %vm1435, %v1436, %v1340
    %v1438 = vshrl.u32 %v1437, 6
    %v1439 = vand.u32 %v1437, 63
    %v1440 = vsub.s32 0, %v1439
    %v1441 = vsel %vm1435, %v1440, %v1439
    %vm1442 = vcmp.lt.s32.totalorder %v1341, 0
    %v1443 = vsub.s32 0, %v1341
    %v1444 = vsel %vm1442, %v1443, %v1341
    %v1445 = vshrl.u32 %v1444, 6
    %v1446 = vand.u32 %v1444, 63
    %v1447 = vsub.s32 0, %v1446
    %v1448 = vsel %vm1442, %v1447, %v1446
    %vm1449 = vcmp.lt.s32.totalorder %v1342, 0
    %v1450 = vsub.s32 0, %v1342
    %v1451 = vsel %vm1449, %v1450, %v1342
    %v1452 = vshrl.u32 %v1451, 6
    %v1453 = vand.u32 %v1451, 63
    %v1454 = vsub.s32 0, %v1453
    %v1455 = vsel %vm1449, %v1454, %v1453
    %vm1456 = vcmp.lt.s32.totalorder %v1343, 0
    %v1457 = vsub.s32 0, %v1343
    %v1458 = vsel %vm1456, %v1457, %v1343
    %v1459 = vshrl.u32 %v1458, 6
    %v1460 = vand.u32 %v1458, 63
    %v1461 = vsub.s32 0, %v1460
    %v1462 = vsel %vm1456, %v1461, %v1460
    %vm1463 = vcmp.lt.s32.totalorder %v1344, 0
    %v1464 = vsub.s32 0, %v1344
    %v1465 = vsel %vm1463, %v1464, %v1344
    %v1466 = vshrl.u32 %v1465, 6
    %v1467 = vand.u32 %v1465, 63
    %v1468 = vsub.s32 0, %v1467
    %v1469 = vsel %vm1463, %v1468, %v1467
    %vm1470 = vcmp.lt.s32.totalorder %v1345, 0
    %v1471 = vsub.s32 0, %v1345
    %v1472 = vsel %vm1470, %v1471, %v1345
    %v1473 = vshrl.u32 %v1472, 6
    %v1474 = vand.u32 %v1472, 63
    %v1475 = vsub.s32 0, %v1474
    %v1476 = vsel %vm1470, %v1475, %v1474
    %vm1477 = vcmp.lt.s32.totalorder %v1346, 0
    %v1478 = vsub.s32 0, %v1346
    %v1479 = vsel %vm1477, %v1478, %v1346
    %v1480 = vshrl.u32 %v1479, 6
    %v1481 = vand.u32 %v1479, 63
    %v1482 = vsub.s32 0, %v1481
    %v1483 = vsel %vm1477, %v1482, %v1481
    %vm1484 = vcmp.lt.s32.totalorder %v1347, 0
    %v1485 = vsub.s32 0, %v1347
    %v1486 = vsel %vm1484, %v1485, %v1347
    %v1487 = vshrl.u32 %v1486, 6
    %v1488 = vand.u32 %v1486, 63
    %v1489 = vsub.s32 0, %v1488
    %v1490 = vsel %vm1484, %v1489, %v1488
    %vm1491 = vcmp.lt.s32.totalorder %v1348, 0
    %v1492 = vsub.s32 0, %v1348
    %v1493 = vsel %vm1491, %v1492, %v1348
    %v1494 = vshrl.u32 %v1493, 6
    %v1495 = vand.u32 %v1493, 63
    %v1496 = vsub.s32 0, %v1495
    %v1497 = vsel %vm1491, %v1496, %v1495
    %vm1498 = vcmp.lt.s32.totalorder %v1349, 0
    %v1499 = vsub.s32 0, %v1349
    %v1500 = vsel %vm1498, %v1499, %v1349
    %v1501 = vshrl.u32 %v1500, 6
    %v1502 = vand.u32 %v1500, 63
    %v1503 = vsub.s32 0, %v1502
    %v1504 = vsel %vm1498, %v1503, %v1502
    %vm1505 = vcmp.lt.s32.totalorder %v1350, 0
    %v1506 = vsub.s32 0, %v1350
    %v1507 = vsel %vm1505, %v1506, %v1350
    %v1508 = vshrl.u32 %v1507, 6
    %v1509 = vand.u32 %v1507, 63
    %v1510 = vsub.s32 0, %v1509
    %v1511 = vsel %vm1505, %v1510, %v1509
    %vm1512 = vcmp.lt.s32.totalorder %v1351, 0
    %v1513 = vsub.s32 0, %v1351
    %v1514 = vsel %vm1512, %v1513, %v1351
    %v1515 = vshrl.u32 %v1514, 6
    %v1516 = vand.u32 %v1514, 63
    %v1517 = vsub.s32 0, %v1516
    %v1518 = vsel %vm1512, %v1517, %v1516
    %vm1519 = vcmp.lt.s32.totalorder %v1352, 0
    %v1520 = vsub.s32 0, %v1352
    %v1521 = vsel %vm1519, %v1520, %v1352
    %v1522 = vshrl.u32 %v1521, 6
    %v1523 = vand.u32 %v1521, 63
    %v1524 = vsub.s32 0, %v1523
    %v1525 = vsel %vm1519, %v1524, %v1523
    %vm1526 = vcmp.lt.s32.totalorder %v1353, 0
    %v1527 = vsub.s32 0, %v1353
    %v1528 = vsel %vm1526, %v1527, %v1353
    %v1529 = vshrl.u32 %v1528, 6
    %v1530 = vand.u32 %v1528, 63
    %v1531 = vsub.s32 0, %v1530
    %v1532 = vsel %vm1526, %v1531, %v1530
    %vm1533 = vcmp.lt.s32.totalorder %v1354, 0
    %v1534 = vsub.s32 0, %v1354
    %v1535 = vsel %vm1533, %v1534, %v1354
    %v1536 = vshrl.u32 %v1535, 6
    %v1537 = vand.u32 %v1535, 63
    %v1538 = vsub.s32 0, %v1537
    %v1539 = vsel %vm1533, %v1538, %v1537
    %vm1540 = vcmp.lt.s32.totalorder %v1355, 0
    %v1541 = vsub.s32 0, %v1355
    %v1542 = vsel %vm1540, %v1541, %v1355
    %v1543 = vshrl.u32 %v1542, 6
    %v1544 = vand.u32 %v1542, 63
    %v1545 = vsub.s32 0, %v1544
    %v1546 = vsel %vm1540, %v1545, %v1544
    %vm1547 = vcmp.lt.s32.totalorder %v1356, 0
    %v1548 = vsub.s32 0, %v1356
    %v1549 = vsel %vm1547, %v1548, %v1356
    %v1550 = vshrl.u32 %v1549, 6
    %v1551 = vand.u32 %v1549, 63
    %v1552 = vsub.s32 0, %v1551
    %v1553 = vsel %vm1547, %v1552, %v1551
    %vm1554 = vcmp.lt.s32.totalorder %v1357, 0
    %v1555 = vsub.s32 0, %v1357
    %v1556 = vsel %vm1554, %v1555, %v1357
    %v1557 = vshrl.u32 %v1556, 6
    %v1558 = vand.u32 %v1556, 63
    %v1559 = vsub.s32 0, %v1558
    %v1560 = vsel %vm1554, %v1559, %v1558
    %vm1561 = vcmp.lt.s32.totalorder %v1358, 0
    %v1562 = vsub.s32 0, %v1358
    %v1563 = vsel %vm1561, %v1562, %v1358
    %v1564 = vshrl.u32 %v1563, 6
    %v1565 = vand.u32 %v1563, 63
    %v1566 = vsub.s32 0, %v1565
    %v1567 = vsel %vm1561, %v1566, %v1565
    %vm1568 = vcmp.lt.s32.totalorder %v1359, 0
    %v1569 = vsub.s32 0, %v1359
    %v1570 = vsel %vm1568, %v1569, %v1359
    %v1571 = vshrl.u32 %v1570, 6
    %v1572 = vand.u32 %v1570, 63
    %v1573 = vsub.s32 0, %v1572
    %v1574 = vsel %vm1568, %v1573, %v1572
    %vm1575 = vcmp.lt.s32.totalorder %v1360, 0
    %v1576 = vsub.s32 0, %v1360
    %v1577 = vsel %vm1575, %v1576, %v1360
    %v1578 = vshrl.u32 %v1577, 6
    %v1579 = vand.u32 %v1577, 63
    %v1580 = vsub.s32 0, %v1579
    %v1581 = vsel %vm1575, %v1580, %v1579
    %vm1582 = vcmp.lt.s32.totalorder %v1361, 0
    %v1583 = vsub.s32 0, %v1361
    %v1584 = vsel %vm1582, %v1583, %v1361
    %v1585 = vshrl.u32 %v1584, 6
    %v1586 = vand.u32 %v1584, 63
    %v1587 = vsub.s32 0, %v1586
    %v1588 = vsel %vm1582, %v1587, %v1586
    %vm1589 = vcmp.lt.s32.totalorder %v1363, 0
    %v1590 = vsub.s32 0, %v1363
    %v1591 = vsel %vm1589, %v1590, %v1363
    %v1592 = vshrl.u32 %v1591, 6
    %v1593 = vand.u32 %v1591, 63
    %v1594 = vsub.s32 0, %v1593
    %v1595 = vsel %vm1589, %v1594, %v1593
    %vm1596 = vcmp.lt.s32.totalorder %v1364, 0
    %v1597 = vsub.s32 0, %v1364
    %v1598 = vsel %vm1596, %v1597, %v1364
    %v1599 = vshrl.u32 %v1598, 6
    %v1600 = vand.u32 %v1598, 63
    %v1601 = vsub.s32 0, %v1600
    %v1602 = vsel %vm1596, %v1601, %v1600
    %vm1603 = vcmp.eq.s32.totalorder %v1371, %v1595
    %vm1604 = vcmp.eq.s32.totalorder %v1371, %v1602
    %vm1605 = vcmp.eq.s32.totalorder %v1378, %v1595
    %vm1606 = vcmp.eq.s32.totalorder %v1378, %v1602
    %vm1607 = vcmp.eq.s32.totalorder %v1385, %v1595
    %vm1608 = vcmp.eq.s32.totalorder %v1385, %v1602
    %vm1609 = vcmp.eq.s32.totalorder %v1392, %v1595
    %vm1610 = vcmp.eq.s32.totalorder %v1392, %v1602
    %vm1611 = vcmp.eq.s32.totalorder %v1399, %v1595
    %vm1612 = vcmp.eq.s32.totalorder %v1399, %v1602
    %vm1613 = vcmp.eq.s32.totalorder %v1406, %v1595
    %vm1614 = vcmp.eq.s32.totalorder %v1406, %v1602
    %vm1615 = vcmp.eq.s32.totalorder %v1413, %v1595
    %vm1616 = vcmp.eq.s32.totalorder %v1413, %v1602
    %vm1617 = vcmp.eq.s32.totalorder %v1420, %v1595
    %vm1618 = vcmp.eq.s32.totalorder %v1420, %v1602
    %vm1619 = vcmp.eq.s32.totalorder %v1427, %v1595
    %vm1620 = vcmp.eq.s32.totalorder %v1427, %v1602
    %vm1621 = vcmp.eq.s32.totalorder %v1434, %v1595
    %vm1622 = vcmp.eq.s32.totalorder %v1434, %v1602
    %vm1623 = vcmp.eq.s32.totalorder %v1441, %v1595
    %vm1624 = vcmp.eq.s32.totalorder %v1441, %v1602
    %vm1625 = vcmp.eq.s32.totalorder %v1448, %v1595
    %vm1626 = vcmp.eq.s32.totalorder %v1448, %v1602
    %vm1627 = vcmp.eq.s32.totalorder %v1455, %v1595
    %vm1628 = vcmp.eq.s32.totalorder %v1455, %v1602
    %vm1629 = vcmp.eq.s32.totalorder %v1462, %v1595
    %vm1630 = vcmp.eq.s32.totalorder %v1462, %v1602
    %vm1631 = vcmp.eq.s32.totalorder %v1469, %v1595
    %vm1632 = vcmp.eq.s32.totalorder %v1469, %v1602
    %vm1633 = vcmp.eq.s32.totalorder %v1476, %v1595
    %vm1634 = vcmp.eq.s32.totalorder %v1476, %v1602
    %vm1635 = vcmp.eq.s32.totalorder %v1483, %v1595
    %vm1636 = vcmp.eq.s32.totalorder %v1483, %v1602
    %vm1637 = vcmp.eq.s32.totalorder %v1490, %v1595
    %vm1638 = vcmp.eq.s32.totalorder %v1490, %v1602
    %vm1639 = vcmp.eq.s32.totalorder %v1497, %v1595
    %vm1640 = vcmp.eq.s32.totalorder %v1497, %v1602
    %vm1641 = vcmp.eq.s32.totalorder %v1504, %v1595
    %vm1642 = vcmp.eq.s32.totalorder %v1504, %v1602
    %vm1643 = vcmp.eq.s32.totalorder %v1511, %v1595
    %vm1644 = vcmp.eq.s32.totalorder %v1511, %v1602
    %vm1645 = vcmp.eq.s32.totalorder %v1518, %v1595
    %vm1646 = vcmp.eq.s32.totalorder %v1518, %v1602
    %vm1647 = vcmp.eq.s32.totalorder %v1525, %v1595
    %vm1648 = vcmp.eq.s32.totalorder %v1525, %v1602
    %vm1649 = vcmp.eq.s32.totalorder %v1532, %v1595
    %vm1650 = vcmp.eq.s32.totalorder %v1532, %v1602
    %vm1651 = vcmp.eq.s32.totalorder %v1539, %v1595
    %vm1652 = vcmp.eq.s32.totalorder %v1539, %v1602
    %vm1653 = vcmp.eq.s32.totalorder %v1546, %v1595
    %vm1654 = vcmp.eq.s32.totalorder %v1546, %v1602
    %vm1655 = vcmp.eq.s32.totalorder %v1553, %v1595
    %vm1656 = vcmp.eq.s32.totalorder %v1553, %v1602
    %vm1657 = vcmp.eq.s32.totalorder %v1560, %v1595
    %vm1658 = vcmp.eq.s32.totalorder %v1560, %v1602
    %vm1659 = vcmp.eq.s32.totalorder %v1567, %v1595
    %vm1660 = vcmp.eq.s32.totalorder %v1567, %v1602
    %vm1661 = vcmp.eq.s32.totalorder %v1574, %v1595
    %vm1662 = vcmp.eq.s32.totalorder %v1574, %v1602
    %vm1663 = vcmp.eq.s32.totalorder %v1581, %v1595
    %vm1664 = vcmp.eq.s32.totalorder %v1581, %v1602
    %vm1665 = vcmp.eq.s32.totalorder %v1588, %v1595
    %vm1666 = vcmp.eq.s32.totalorder %v1588, %v1602
    %v1667 = vsel %vm1603, 1, 0
    %v1668 = vsel %vm1604, 1, 0
    %v1669 = vsel %vm1605, 1, 0
    %v1670 = vsel %vm1606, 1, 0
    %v1671 = vsel %vm1607, 1, 0
    %v1672 = vsel %vm1608, 1, 0
    %v1673 = vsel %vm1609, 1, 0
    %v1674 = vsel %vm1610, 1, 0
    %v1675 = vsel %vm1611, 1, 0
    %v1676 = vsel %vm1612, 1, 0
    %v1677 = vsel %vm1613, 1, 0
    %v1678 = vsel %vm1614, 1, 0
    %v1679 = vsel %vm1615, 1, 0
    %v1680 = vsel %vm1616, 1, 0
    %v1681 = vsel %vm1617, 1, 0
    %v1682 = vsel %vm1618, 1, 0
    %v1683 = vsel %vm1619, 1, 0
    %v1684 = vsel %vm1620, 1, 0
    %v1685 = vsel %vm1621, 1, 0
    %v1686 = vsel %vm1622, 1, 0
    %v1687 = vsel %vm1623, 1, 0
    %v1688 = vsel %vm1624, 1, 0
    %v1689 = vsel %vm1625, 1, 0
    %v1690 = vsel %vm1626, 1, 0
    %v1691 = vsel %vm1627, 1, 0
    %v1692 = vsel %vm1628, 1, 0
    %v1693 = vsel %vm1629, 1, 0
    %v1694 = vsel %vm1630, 1, 0
    %v1695 = vsel %vm1631, 1, 0
    %v1696 = vsel %vm1632, 1, 0
    %v1697 = vsel %vm1633, 1, 0
    %v1698 = vsel %vm1634, 1, 0
    %v1699 = vsel %vm1635, 1, 0
    %v1700 = vsel %vm1636, 1, 0
    %v1701 = vsel %vm1637, 1, 0
    %v1702 = vsel %vm1638, 1, 0
    %v1703 = vsel %vm1639, 1, 0
    %v1704 = vsel %vm1640, 1, 0
    %v1705 = vsel %vm1641, 1, 0
    %v1706 = vsel %vm1642, 1, 0
    %v1707 = vsel %vm1643, 1, 0
    %v1708 = vsel %vm1644, 1, 0
    %v1709 = vsel %vm1645, 1, 0
    %v1710 = vsel %vm1646, 1, 0
    %v1711 = vsel %vm1647, 1, 0
    %v1712 = vsel %vm1648, 1, 0
    %v1713 = vsel %vm1649, 1, 0
    %v1714 = vsel %vm1650, 1, 0
    %v1715 = vsel %vm1651, 1, 0
    %v1716 = vsel %vm1652, 1, 0
    %v1717 = vsel %vm1653, 1, 0
    %v1718 = vsel %vm1654, 1, 0
    %v1719 = vsel %vm1655, 1, 0
    %v1720 = vsel %vm1656, 1, 0
    %v1721 = vsel %vm1657, 1, 0
    %v1722 = vsel %vm1658, 1, 0
    %v1723 = vsel %vm1659, 1, 0
    %v1724 = vsel %vm1660, 1, 0
    %v1725 = vsel %vm1661, 1, 0
    %v1726 = vsel %vm1662, 1, 0
    %v1727 = vsel %vm1663, 1, 0
    %v1728 = vsel %vm1664, 1, 0
    %v1729 = vsel %vm1665, 1, 0
    %v1730 = vsel %vm1666, 1, 0
    %v1731 = vcvt.s32.f32 %v1667
    %v1732 = vcvt.s32.f32 %v1668
    %v1733 = vcvt.s32.f32 %v1669
    %v1734 = vcvt.s32.f32 %v1670
    %v1735 = vcvt.s32.f32 %v1671
    %v1736 = vcvt.s32.f32 %v1672
    %v1737 = vcvt.s32.f32 %v1673
    %v1738 = vcvt.s32.f32 %v1674
    %v1739 = vcvt.s32.f32 %v1675
    %v1740 = vcvt.s32.f32 %v1676
    %v1741 = vcvt.s32.f32 %v1677
    %v1742 = vcvt.s32.f32 %v1678
    %v1743 = vcvt.s32.f32 %v1679
    %v1744 = vcvt.s32.f32 %v1680
    %v1745 = vcvt.s32.f32 %v1681
    %v1746 = vcvt.s32.f32 %v1682
    %v1747 = vcvt.s32.f32 %v1683
    %v1748 = vcvt.s32.f32 %v1684
    %v1749 = vcvt.s32.f32 %v1685
    %v1750 = vcvt.s32.f32 %v1686
    %v1751 = vcvt.s32.f32 %v1687
    %v1752 = vcvt.s32.f32 %v1688
    %v1753 = vcvt.s32.f32 %v1689
    %v1754 = vcvt.s32.f32 %v1690
    %v1755 = vcvt.s32.f32 %v1691
    %v1756 = vcvt.s32.f32 %v1692
    %v1757 = vcvt.s32.f32 %v1693
    %v1758 = vcvt.s32.f32 %v1694
    %v1759 = vcvt.s32.f32 %v1695
    %v1760 = vcvt.s32.f32 %v1696
    %v1761 = vcvt.s32.f32 %v1697
    %v1762 = vcvt.s32.f32 %v1698
    %v1763 = vcvt.s32.f32 %v1699
    %v1764 = vcvt.s32.f32 %v1700
    %v1765 = vcvt.s32.f32 %v1701
    %v1766 = vcvt.s32.f32 %v1702
    %v1767 = vcvt.s32.f32 %v1703
    %v1768 = vcvt.s32.f32 %v1704
    %v1769 = vcvt.s32.f32 %v1705
    %v1770 = vcvt.s32.f32 %v1706
    %v1771 = vcvt.s32.f32 %v1707
    %v1772 = vcvt.s32.f32 %v1708
    %v1773 = vcvt.s32.f32 %v1709
    %v1774 = vcvt.s32.f32 %v1710
    %v1775 = vcvt.s32.f32 %v1711
    %v1776 = vcvt.s32.f32 %v1712
    %v1777 = vcvt.s32.f32 %v1713
    %v1778 = vcvt.s32.f32 %v1714
    %v1779 = vcvt.s32.f32 %v1715
    %v1780 = vcvt.s32.f32 %v1716
    %v1781 = vcvt.s32.f32 %v1717
    %v1782 = vcvt.s32.f32 %v1718
    %v1783 = vcvt.s32.f32 %v1719
    %v1784 = vcvt.s32.f32 %v1720
    %v1785 = vcvt.s32.f32 %v1721
    %v1786 = vcvt.s32.f32 %v1722
    %v1787 = vcvt.s32.f32 %v1723
    %v1788 = vcvt.s32.f32 %v1724
    %v1789 = vcvt.s32.f32 %v1725
    %v1790 = vcvt.s32.f32 %v1726
    %v1791 = vcvt.s32.f32 %v1727
    %v1792 = vcvt.s32.f32 %v1728
    %v1793 = vcvt.s32.f32 %v1729
    %v1794 = vcvt.s32.f32 %v1730
    %1795 = vmatprep.subr.mxu0 %v1732
    %1796 = vmatpush1.msra.mxu0 %v1731
    %1797 = vmatprep.subr.mxu0 %v1734
    %1798 = vmatpush1.msra.mxu0 %v1733
    %1799 = vmatprep.subr.mxu0 %v1736
    %1800 = vmatpush1.msra.mxu0 %v1735
    %1801 = vmatprep.subr.mxu0 %v1738
    %1802 = vmatpush1.msra.mxu0 %v1737
    %1803 = vmatprep.subr.mxu0 %v1740
    %1804 = vmatpush1.msra.mxu0 %v1739
    %1805 = vmatprep.subr.mxu0 %v1742
    %1806 = vmatpush1.msra.mxu0 %v1741
    %1807 = vmatprep.subr.mxu0 %v1744
    %1808 = vmatpush1.msra.mxu0 %v1743
    %1809 = vmatprep.subr.mxu0 %v1746
    %1810 = vmatpush1.msra.mxu0 %v1745
    %1811 = vmatprep.subr.mxu0 %v1748
    %1812 = vmatpush1.msra.mxu0 %v1747
    %1813 = vmatprep.subr.mxu0 %v1750
    %1814 = vmatpush1.msra.mxu0 %v1749
    %1815 = vmatprep.subr.mxu0 %v1752
    %1816 = vmatpush1.msra.mxu0 %v1751
    %1817 = vmatprep.subr.mxu0 %v1754
    %1818 = vmatpush1.msra.mxu0 %v1753
    %1819 = vmatprep.subr.mxu0 %v1756
    %1820 = vmatpush1.msra.mxu0 %v1755
    %1821 = vmatprep.subr.mxu0 %v1758
    %1822 = vmatpush1.msra.mxu0 %v1757
    %1823 = vmatprep.subr.mxu0 %v1760
    %1824 = vmatpush1.msra.mxu0 %v1759
    %1825 = vmatprep.subr.mxu0 %v1762
    %1826 = vmatpush1.msra.mxu0 %v1761
    %1827 = vmatprep.subr.mxu0 %v1764
    %1828 = vmatpush1.msra.mxu0 %v1763
    %1829 = vmatprep.subr.mxu0 %v1766
    %1830 = vmatpush1.msra.mxu0 %v1765
    %1831 = vmatprep.subr.mxu0 %v1768
    %1832 = vmatpush1.msra.mxu0 %v1767
    %1833 = vmatprep.subr.mxu0 %v1770
    %1834 = vmatpush1.msra.mxu0 %v1769
    %1835 = vmatprep.subr.mxu0 %v1772
    %1836 = vmatpush1.msra.mxu0 %v1771
    %1837 = vmatprep.subr.mxu0 %v1774
    %1838 = vmatpush1.msra.mxu0 %v1773
    %1839 = vmatprep.subr.mxu0 %v1776
    %1840 = vmatpush1.msra.mxu0 %v1775
    %1841 = vmatprep.subr.mxu0 %v1778
    %1842 = vmatpush1.msra.mxu0 %v1777
    %1843 = vmatprep.subr.mxu0 %v1780
    %1844 = vmatpush1.msra.mxu0 %v1779
    %1845 = vmatprep.subr.mxu0 %v1782
    %1846 = vmatpush1.msra.mxu0 %v1781
    %1847 = vmatprep.subr.mxu0 %v1784
    %1848 = vmatpush1.msra.mxu0 %v1783
    %1849 = vmatprep.subr.mxu0 %v1786
    %1850 = vmatpush1.msra.mxu0 %v1785
    %1851 = vmatprep.subr.mxu0 %v1788
    %1852 = vmatpush1.msra.mxu0 %v1787
    %1853 = vmatprep.subr.mxu0 %v1790
    %1854 = vmatpush1.msra.mxu0 %v1789
    %1855 = vmatprep.subr.mxu0 %v1792
    %1856 = vmatpush1.msra.mxu0 %v1791
    %1857 = vmatprep.subr.mxu0 %v1794
    %1858 = vmatpush1.msra.mxu0 %v1793
    %1859 = vmatprep.mubr.f32.mxu0 %v1322
    %1860 = vmatmul.mubr.f32.gmra.mrb[0].mxu0 %v1321
    %v1861 = vpop.f32.mrb[0].mxu0
    %v1862 = vadd.f32 0.0, %v1861
    %v1863 = vpop.f32.mrb[0].mxu0
    %v1864 = vadd.f32 0.0, %v1863
    %1865 = vmatprep.mubr.f32.mxu0 %v1324
    %1866 = vmatmul.mubr.f32.gmra.mrb[0].mxu0 %v1323
    %v1867 = vpop.f32.mrb[0].mxu0
    %v1868 = vadd.f32 0.0, %v1867
    %v1869 = vpop.f32.mrb[0].mxu0
    %v1870 = vadd.f32 0.0, %v1869
    %1871 = vmatprep.mubr.f32.mxu0 %v1326
    %1872 = vmatmul.mubr.f32.gmra.mrb[0].mxu0 %v1325
    %v1873 = vpop.f32.mrb[0].mxu0
    %v1874 = vadd.f32 0.0, %v1873
    %v1875 = vpop.f32.mrb[0].mxu0
    %v1876 = vadd.f32 0.0, %v1875
    %1877 = vmatprep.mubr.f32.mxu0 %v1328
    %1878 = vmatmul.mubr.f32.gmra.mrb[0].mxu0 %v1327
    %v1879 = vpop.f32.mrb[0].mxu0
    %v1880 = vadd.f32 0.0, %v1879
    %v1881 = vpop.f32.mrb[0].mxu0
    %v1882 = vadd.f32 0.0, %v1881
    %1883 = vdwg.mxu0
    %v1884 = vadd.f32 %v1862, %v1868
    %v1885 = vadd.f32 %v1884, %v1874
    %v1886 = vadd.f32 %v1885, %v1880
    %v1887 = vrot.slane %v1886, 4
    %v1888 = vadd.f32 %v1886, %v1887
    %v1889 = vrot.slane %v1888, 2
    %v1890 = vadd.f32 %v1888, %v1889
    %v1891 = vrot.slane %v1890, 1
    %v1892 = vadd.f32 %v1890, %v1891
    %v1893 = vadd.f32 %v1864, %v1870
    %v1894 = vadd.f32 %v1893, %v1876
    %v1895 = vadd.f32 %v1894, %v1882
    %v1896 = vrot.slane %v1895, 4
    %v1897 = vadd.f32 %v1895, %v1896
    %v1898 = vrot.slane %v1897, 2
    %v1899 = vadd.f32 %v1897, %v1898
    %v1900 = vrot.slane %v1899, 1
    %v1901 = vadd.f32 %v1899, %v1900
    %v1902 = vmul.f32 %v1892, 0.0078125
    %v1903 = vmul.f32 %v1901, 0.0078125
    %v1904 = vsub.f32 %v1321, %v1902
    %v1905 = vsub.f32 %v1322, %v1903
    %v1906 = vsub.f32 %v1323, %v1902
    %v1907 = vsub.f32 %v1324, %v1903
    %v1908 = vsub.f32 %v1325, %v1902
    %v1909 = vsub.f32 %v1326, %v1903
    %v1910 = vsub.f32 %v1327, %v1902
    %v1911 = vsub.f32 %v1328, %v1903
    %v1912 = vmul.f32 %v1904, %v1904
    %v1913 = vmul.f32 %v1905, %v1905
    %v1914 = vmul.f32 %v1906, %v1906
    %v1915 = vmul.f32 %v1907, %v1907
    %v1916 = vmul.f32 %v1908, %v1908
    %v1917 = vmul.f32 %v1909, %v1909
    %v1918 = vmul.f32 %v1910, %v1910
    %v1919 = vmul.f32 %v1911, %v1911
    %1920 = vmatprep.subr.mxu0 %v1732
    %1921 = vmatpush1.msra.mxu0 %v1731
    %1922 = vmatprep.subr.mxu0 %v1734
    %1923 = vmatpush1.msra.mxu0 %v1733
    %1924 = vmatprep.subr.mxu0 %v1736
    %1925 = vmatpush1.msra.mxu0 %v1735
    %1926 = vmatprep.subr.mxu0 %v1738
    %1927 = vmatpush1.msra.mxu0 %v1737
    %1928 = vmatprep.subr.mxu0 %v1740
    %1929 = vmatpush1.msra.mxu0 %v1739
    %1930 = vmatprep.subr.mxu0 %v1742
    %1931 = vmatpush1.msra.mxu0 %v1741
    %1932 = vmatprep.subr.mxu0 %v1744
    %1933 = vmatpush1.msra.mxu0 %v1743
    %1934 = vmatprep.subr.mxu0 %v1746
    %1935 = vmatpush1.msra.mxu0 %v1745
    %1936 = vmatprep.subr.mxu0 %v1748
    %1937 = vmatpush1.msra.mxu0 %v1747
    %1938 = vmatprep.subr.mxu0 %v1750
    %1939 = vmatpush1.msra.mxu0 %v1749
    %1940 = vmatprep.subr.mxu0 %v1752
    %1941 = vmatpush1.msra.mxu0 %v1751
    %1942 = vmatprep.subr.mxu0 %v1754
    %1943 = vmatpush1.msra.mxu0 %v1753
    %1944 = vmatprep.subr.mxu0 %v1756
    %1945 = vmatpush1.msra.mxu0 %v1755
    %1946 = vmatprep.subr.mxu0 %v1758
    %1947 = vmatpush1.msra.mxu0 %v1757
    %1948 = vmatprep.subr.mxu0 %v1760
    %1949 = vmatpush1.msra.mxu0 %v1759
    %1950 = vmatprep.subr.mxu0 %v1762
    %1951 = vmatpush1.msra.mxu0 %v1761
    %1952 = vmatprep.subr.mxu0 %v1764
    %1953 = vmatpush1.msra.mxu0 %v1763
    %1954 = vmatprep.subr.mxu0 %v1766
    %1955 = vmatpush1.msra.mxu0 %v1765
    %1956 = vmatprep.subr.mxu0 %v1768
    %1957 = vmatpush1.msra.mxu0 %v1767
    %1958 = vmatprep.subr.mxu0 %v1770
    %1959 = vmatpush1.msra.mxu0 %v1769
    %1960 = vmatprep.subr.mxu0 %v1772
    %1961 = vmatpush1.msra.mxu0 %v1771
    %1962 = vmatprep.subr.mxu0 %v1774
    %1963 = vmatpush1.msra.mxu0 %v1773
    %1964 = vmatprep.subr.mxu0 %v1776
    %1965 = vmatpush1.msra.mxu0 %v1775
    %1966 = vmatprep.subr.mxu0 %v1778
    %1967 = vmatpush1.msra.mxu0 %v1777
    %1968 = vmatprep.subr.mxu0 %v1780
    %1969 = vmatpush1.msra.mxu0 %v1779
    %1970 = vmatprep.subr.mxu0 %v1782
    %1971 = vmatpush1.msra.mxu0 %v1781
    %1972 = vmatprep.subr.mxu0 %v1784
    %1973 = vmatpush1.msra.mxu0 %v1783
    %1974 = vmatprep.subr.mxu0 %v1786
    %1975 = vmatpush1.msra.mxu0 %v1785
    %1976 = vmatprep.subr.mxu0 %v1788
    %1977 = vmatpush1.msra.mxu0 %v1787
    %1978 = vmatprep.subr.mxu0 %v1790
    %1979 = vmatpush1.msra.mxu0 %v1789
    %1980 = vmatprep.subr.mxu0 %v1792
    %1981 = vmatpush1.msra.mxu0 %v1791
    %1982 = vmatprep.subr.mxu0 %v1794
    %1983 = vmatpush1.msra.mxu0 %v1793
    %1984 = vmatprep.mubr.f32.mxu0 %v1913
    %1985 = vmatmul.mubr.f32.gmra.mrb[0].mxu0 %v1912
    %v1986 = vpop.f32.mrb[0].mxu0
    %v1987 = vadd.f32 0.0, %v1986
    %v1988 = vpop.f32.mrb[0].mxu0
    %v1989 = vadd.f32 0.0, %v1988
    %1990 = vmatprep.mubr.f32.mxu0 %v1915
    %1991 = vmatmul.mubr.f32.gmra.mrb[0].mxu0 %v1914
    %v1992 = vpop.f32.mrb[0].mxu0
    %v1993 = vadd.f32 0.0, %v1992
    %v1994 = vpop.f32.mrb[0].mxu0
    %v1995 = vadd.f32 0.0, %v1994
    %1996 = vmatprep.mubr.f32.mxu0 %v1917
    %1997 = vmatmul.mubr.f32.gmra.mrb[0].mxu0 %v1916
    %v1998 = vpop.f32.mrb[0].mxu0
    %v1999 = vadd.f32 0.0, %v1998
    %v2000 = vpop.f32.mrb[0].mxu0
    %v2001 = vadd.f32 0.0, %v2000
    %2002 = vmatprep.mubr.f32.mxu0 %v1919
    %2003 = vmatmul.mubr.f32.gmra.mrb[0].mxu0 %v1918
    %v2004 = vpop.f32.mrb[0].mxu0
    %v2005 = vadd.f32 0.0, %v2004
    %v2006 = vpop.f32.mrb[0].mxu0
    %v2007 = vadd.f32 0.0, %v2006
    %2008 = vdwg.mxu0
    %v2009 = vadd.f32 %v1987, %v1993
    %v2010 = vadd.f32 %v2009, %v1999
    %v2011 = vadd.f32 %v2010, %v2005
    %v2012 = vrot.slane %v2011, 4
    %v2013 = vadd.f32 %v2011, %v2012
    %v2014 = vrot.slane %v2013, 2
    %v2015 = vadd.f32 %v2013, %v2014
    %v2016 = vrot.slane %v2015, 1
    %v2017 = vadd.f32 %v2015, %v2016
    %v2018 = vadd.f32 %v1989, %v1995
    %v2019 = vadd.f32 %v2018, %v2001
    %v2020 = vadd.f32 %v2019, %v2007
    %v2021 = vrot.slane %v2020, 4
    %v2022 = vadd.f32 %v2020, %v2021
    %v2023 = vrot.slane %v2022, 2
    %v2024 = vadd.f32 %v2022, %v2023
    %v2025 = vrot.slane %v2024, 1
    %v2026 = vadd.f32 %v2024, %v2025
    %v2027 = vmul.f32 %v2017, 0.0078125
    %v2028 = vmul.f32 %v2026, 0.0078125
    %v2029 = vadd.f32 %v2027, 1e-05
    %v2030 = vadd.f32 %v2028, 1e-05
    %v2031 = vrsqrt.pop %v2029
    %v2032 = vrsqrt.pop %v2030
    %v2033 = vmul.f32 %v1904, %v2031
    %v2034 = vmul.f32 %v1905, %v2032
    %v2035 = vmul.f32 %v1906, %v2031
    %v2036 = vmul.f32 %v1907, %v2032
    %v2037 = vmul.f32 %v1908, %v2031
    %v2038 = vmul.f32 %v1909, %v2032
    %v2039 = vmul.f32 %v1910, %v2031
    %v2040 = vmul.f32 %v1911, %v2032
    %v2041 = vld [vmem:[%s3] sm:$0x3]
    %v2043 = vlaneseq
    %v2044 = vshrl.u32 %v2043, 7
    %v2045 = vsub.s32 0, %v2044
    %v2046 = vrot.slane %v2041, %v2045
    %v2047 = vlaneseq
    %v2048 = vshrl.u32 %v2047, 7
    %v2049 = vsub.s32 1, %v2048
    %v2050 = vrot.slane %v2041, %v2049
    %v2053 = vmul.f32 %v2033, %v2046
    %v2054 = vmul.f32 %v2034, %v2050
    %v2055 = vmul.f32 %v2035, %v2046
    %v2056 = vmul.f32 %v2036, %v2050
    %v2057 = vmul.f32 %v2037, %v2046
    %v2058 = vmul.f32 %v2038, %v2050
    %v2059 = vmul.f32 %v2039, %v2046
    %v2060 = vmul.f32 %v2040, %v2050
    %v2061 = vld [vmem:[%s4] sm:$0x3]
    %v2063 = vlaneseq
    %v2064 = vshrl.u32 %v2063, 7
    %v2065 = vsub.s32 0, %v2064
    %v2066 = vrot.slane %v2061, %v2065
    %v2067 = vlaneseq
    %v2068 = vshrl.u32 %v2067, 7
    %v2069 = vsub.s32 1, %v2068
    %v2070 = vrot.slane %v2061, %v2069
    %v2073 = vadd.f32 %v2053, %v2066
    %v2074 = vadd.f32 %v2054, %v2070
    %v2075 = vadd.f32 %v2055, %v2066
    %v2076 = vadd.f32 %v2056, %v2070
    %v2077 = vadd.f32 %v2057, %v2066
    %v2078 = vadd.f32 %v2058, %v2070
    %v2079 = vadd.f32 %v2059, %v2066
    %v2080 = vadd.f32 %v2060, %v2070
    %v2081 = vmax.f32 %v2073, 0.0
    %v2082 = vmax.f32 %v2074, 0.0
    %v2083 = vmax.f32 %v2075, 0.0
    %v2084 = vmax.f32 %v2076, 0.0
    %v2085 = vmax.f32 %v2077, 0.0
    %v2086 = vmax.f32 %v2078, 0.0
    %v2087 = vmax.f32 %v2079, 0.0
    %v2088 = vmax.f32 %v2080, 0.0
    %2089 = vst [vmem:[%s5] sm:$0xff] %v2081
    %2090 = vst [vmem:[%s5 + $0x8] sm:$0xff] %v2082
    %2091 = vst [vmem:[%s5 + $0x10] sm:$0xff] %v2083
    %2092 = vst [vmem:[%s5 + $0x18] sm:$0xff] %v2084
    %2093 = vst [vmem:[%s5 + $0x20] sm:$0xff] %v2085
    %2094 = vst [vmem:[%s5 + $0x28] sm:$0xff] %v2086
    %2095 = vst [vmem:[%s5 + $0x30] sm:$0xff] %v2087
    %2096 = vst [vmem:[%s5 + $0x38] sm:$0xff] %v2088
  $region29: #{generator_forward.6} parent=0 // pred_fallthru
    _
  // Predicated region
  $region30: #{generator_forward.6} parent=0 // pred_check
    _
  $region31: #{generator_forward.6} parent=0 // pred_check_branch
    %2098 = sbr.rel (0) target = $region33
  $region32: #{generator_forward.6} parent=0 // pred_region
    _
  $region33: #{generator_forward.6} parent=0 // pred_fallthru
    _
  // Predicated region
  $region34: #{generator_forward.6} parent=0 // pred_check
    _
  $region35: #{generator_forward.6} parent=0 // pred_check_branch
    %2100 = sbr.rel (0) target = $region37
  $region36: #{generator_forward.6} parent=0 // pred_region
    _
  $region37: #{generator_forward.6} parent=0 // pred_fallthru
    _

// kernel: generator_forward.7
$region0: #{generator_forward.7}
  #allocation0 [shape = 'u32[]', space=smem, size = 0x4, offset = 0x4, fixed_abs, tag = 'smem constant byte address 0x4 - core index']
  #allocation1 [shape = 'u32[144,128]{1,0:T(1,128)}', space=vmem, size = 0x12000, scoped, tag = 'internal scratch']
  #allocation2 [shape = 'f32[128,128]{1,0:T(8,128)}', space=vmem, size = 0x10000, scoped, tag = 'scratch operand']
  %s0 = inlined_call_operand.vmem [shape: bf16[128,640], index: 0, kind: input, shape index: {}]
  %s1 = inlined_call_operand.vmem [shape: bf16[640,128], index: 1, kind: input, shape index: {}]
  %s2 = inlined_call_operand.vmem [shape: f32[1,128], index: 2, kind: input, shape index: {}]
  %s3 = inlined_call_operand.vmem [shape: f32[128,128], index: 3, kind: output, shape index: {}]
  %s4 = sld [smem:[#allocation0]]
  $region30: #{generator_forward.7} parent=0
    _
  %s6 = ssub.s32 1, %s4
  %s7 = scalar_select 0, %s6, %s4
  // Predicated region
  $region2: #{generator_forward.7} parent=0 // pred_check
    _
  $region3: #{generator_forward.7} parent=0 // pred_check_branch
    %9 = sbr.rel (0) target = $region5
  $region4: #{generator_forward.7} parent=0 // pred_region
    _
  $region5: #{generator_forward.7} parent=0 // pred_fallthru
    _
  // Predicated region
  $region6: #{generator_forward.7} parent=0 // pred_check
    _
  $region7: #{generator_forward.7} parent=0 // pred_check_branch
    %11 = sbr.rel (0) target = $region9
  $region8: #{generator_forward.7} parent=0 // pred_region
    _
  $region9: #{generator_forward.7} parent=0 // pred_fallthru
    _
  // Predicated region
  $region10: #{generator_forward.7} parent=0 // pred_check
    _
  $region11: #{generator_forward.7} parent=0 // pred_check_branch
    %13 = sbr.rel (0) target = $region13
  $region12: #{generator_forward.7} parent=0 // pred_region
    _
  $region13: #{generator_forward.7} parent=0 // pred_fallthru
    _
  %p15 = scmp.eq.s32.totalorder 0, 0
  // Predicated region
  $region14: #{generator_forward.7} parent=0 // pred_check
    %p16 = pneg %p15
  $region15: #{generator_forward.7} parent=0 // pred_check_branch
    %18 = sbr.rel (%p16) target = $region17
  $region16: #{generator_forward.7} parent=0 // pred_region
    %19 = vst [vmem:[#allocation2] sm:$0xff] 0.0
    %20 = vst [vmem:[#allocation2 + $0x8] sm:$0xff] 0.0
    %21 = vst [vmem:[#allocation2 + $0x10] sm:$0xff] 0.0
    %22 = vst [vmem:[#allocation2 + $0x18] sm:$0xff] 0.0
    %23 = vst [vmem:[#allocation2 + $0x20] sm:$0xff] 0.0
    %24 = vst [vmem:[#allocation2 + $0x28] sm:$0xff] 0.0
    %25 = vst [vmem:[#allocation2 + $0x30] sm:$0xff] 0.0
    %26 = vst [vmem:[#allocation2 + $0x38] sm:$0xff] 0.0
    %27 = vst [vmem:[#allocation2 + $0x40] sm:$0xff] 0.0
    %28 = vst [vmem:[#allocation2 + $0x48] sm:$0xff] 0.0
    %29 = vst [vmem:[#allocation2 + $0x50] sm:$0xff] 0.0
    %30 = vst [vmem:[#allocation2 + $0x58] sm:$0xff] 0.0
    %31 = vst [vmem:[#allocation2 + $0x60] sm:$0xff] 0.0
    %32 = vst [vmem:[#allocation2 + $0x68] sm:$0xff] 0.0
    %33 = vst [vmem:[#allocation2 + $0x70] sm:$0xff] 0.0
    %34 = vst [vmem:[#allocation2 + $0x78] sm:$0xff] 0.0
  $region17: #{generator_forward.7} parent=0 // pred_fallthru
    _
  %v35 = vld [vmem:[#allocation2] sm:$0xff]
  %v36 = vld [vmem:[#allocation2 + $0x8] sm:$0xff]
  %v37 = vld [vmem:[#allocation2 + $0x10] sm:$0xff]
  %v38 = vld [vmem:[#allocation2 + $0x18] sm:$0xff]
  %v39 = vld [vmem:[#allocation2 + $0x20] sm:$0xff]
  %v40 = vld [vmem:[#allocation2 + $0x28] sm:$0xff]
  %v41 = vld [vmem:[#allocation2 + $0x30] sm:$0xff]
  %v42 = vld [vmem:[#allocation2 + $0x38] sm:$0xff]
  %v43 = vld [vmem:[#allocation2 + $0x40] sm:$0xff]
  %v44 = vld [vmem:[#allocation2 + $0x48] sm:$0xff]
  %v45 = vld [vmem:[#allocation2 + $0x50] sm:$0xff]
  %v46 = vld [vmem:[#allocation2 + $0x58] sm:$0xff]
  %v47 = vld [vmem:[#allocation2 + $0x60] sm:$0xff]
  %v48 = vld [vmem:[#allocation2 + $0x68] sm:$0xff]
  %v49 = vld [vmem:[#allocation2 + $0x70] sm:$0xff]
  %v50 = vld [vmem:[#allocation2 + $0x78] sm:$0xff]
  %v51 = vld [vmem:[%s0] sm:$0xff]
  %v52 = vld [vmem:[%s0 + $0x8] sm:$0xff]
  %v53 = vld [vmem:[%s0 + $0x10] sm:$0xf]
  %v54 = vld [vmem:[%s0 + $0x14] sm:$0xff]
  %v55 = vld [vmem:[%s0 + $0x1c] sm:$0xff]
  %v56 = vld [vmem:[%s0 + $0x24] sm:$0xf]
  %v57 = vld [vmem:[%s0 + $0x28] sm:$0xff]
  %v58 = vld [vmem:[%s0 + $0x30] sm:$0xff]
  %v59 = vld [vmem:[%s0 + $0x38] sm:$0xf]
  %v60 = vld [vmem:[%s0 + $0x3c] sm:$0xff]
  %v61 = vld [vmem:[%s0 + $0x44] sm:$0xff]
  %v62 = vld [vmem:[%s0 + $0x4c] sm:$0xf]
  %v63 = vld [vmem:[%s0 + $0x50] sm:$0xff]
  %v64 = vld [vmem:[%s0 + $0x58] sm:$0xff]
  %v65 = vld [vmem:[%s0 + $0x60] sm:$0xf]
  %v66 = vld [vmem:[%s0 + $0x64] sm:$0xff]
  %v67 = vld [vmem:[%s0 + $0x6c] sm:$0xff]
  %v68 = vld [vmem:[%s0 + $0x74] sm:$0xf]
  %v69 = vld [vmem:[%s0 + $0x78] sm:$0xff]
  %v70 = vld [vmem:[%s0 + $0x80] sm:$0xff]
  %v71 = vld [vmem:[%s0 + $0x88] sm:$0xf]
  %v72 = vld [vmem:[%s0 + $0x8c] sm:$0xff]
  %v73 = vld [vmem:[%s0 + $0x94] sm:$0xff]
  %v74 = vld [vmem:[%s0 + $0x9c] sm:$0xf]
  %v75 = vld [vmem:[%s0 + $0xa0] sm:$0xff]
  %v76 = vld [vmem:[%s0 + $0xa8] sm:$0xff]
  %v77 = vld [vmem:[%s0 + $0xb0] sm:$0xf]
  %v78 = vld [vmem:[%s0 + $0xb4] sm:$0xff]
  %v79 = vld [vmem:[%s0 + $0xbc] sm:$0xff]
  %v80 = vld [vmem:[%s0 + $0xc4] sm:$0xf]
  %v81 = vld [vmem:[%s0 + $0xc8] sm:$0xff]
  %v82 = vld [vmem:[%s0 + $0xd0] sm:$0xff]
  %v83 = vld [vmem:[%s0 + $0xd8] sm:$0xf]
  %v84 = vld [vmem:[%s0 + $0xdc] sm:$0xff]
  %v85 = vld [vmem:[%s0 + $0xe4] sm:$0xff]
  %v86 = vld [vmem:[%s0 + $0xec] sm:$0xf]
  %v87 = vld [vmem:[%s0 + $0xf0] sm:$0xff]
  %v88 = vld [vmem:[%s0 + $0xf8] sm:$0xff]
  %v89 = vld [vmem:[%s0 + $0x100] sm:$0xf]
  %v90 = vld [vmem:[%s0 + $0x104] sm:$0xff]
  %v91 = vld [vmem:[%s0 + $0x10c] sm:$0xff]
  %v92 = vld [vmem:[%s0 + $0x114] sm:$0xf]
  %v93 = vld [vmem:[%s0 + $0x118] sm:$0xff]
  %v94 = vld [vmem:[%s0 + $0x120] sm:$0xff]
  %v95 = vld [vmem:[%s0 + $0x128] sm:$0xf]
  %v96 = vld [vmem:[%s0 + $0x12c] sm:$0xff]
  %v97 = vld [vmem:[%s0 + $0x134] sm:$0xff]
  %v98 = vld [vmem:[%s0 + $0x13c] sm:$0xf]
  %v99 = vld [vmem:[%s1] sm:$0xf]
  %v100 = vld [vmem:[%s1 + $0x4] sm:$0xf]
  %v101 = vld [vmem:[%s1 + $0x8] sm:$0xf]
  %v102 = vld [vmem:[%s1 + $0xc] sm:$0xf]
  %v103 = vld [vmem:[%s1 + $0x10] sm:$0xf]
  %v104 = vld [vmem:[%s1 + $0x14] sm:$0xf]
  %v105 = vld [vmem:[%s1 + $0x18] sm:$0xf]
  %v106 = vld [vmem:[%s1 + $0x1c] sm:$0xf]
  %v107 = vld [vmem:[%s1 + $0x20] sm:$0xf]
  %v108 = vld [vmem:[%s1 + $0x24] sm:$0xf]
  %v109 = vld [vmem:[%s1 + $0x28] sm:$0xf]
  %v110 = vld [vmem:[%s1 + $0x2c] sm:$0xf]
  %v111 = vld [vmem:[%s1 + $0x30] sm:$0xf]
  %v112 = vld [vmem:[%s1 + $0x34] sm:$0xf]
  %v113 = vld [vmem:[%s1 + $0x38] sm:$0xf]
  %v114 = vld [vmem:[%s1 + $0x3c] sm:$0xf]
  %v115 = vld [vmem:[%s1 + $0x40] sm:$0xf]
  %v116 = vld [vmem:[%s1 + $0x44] sm:$0xf]
  %v117 = vld [vmem:[%s1 + $0x48] sm:$0xf]
  %v118 = vld [vmem:[%s1 + $0x4c] sm:$0xf]
  %v119 = vld [vmem:[%s1 + $0x50] sm:$0xf]
  %v120 = vld [vmem:[%s1 + $0x54] sm:$0xf]
  %v121 = vld [vmem:[%s1 + $0x58] sm:$0xf]
  %v122 = vld [vmem:[%s1 + $0x5c] sm:$0xf]
  %v123 = vld [vmem:[%s1 + $0x60] sm:$0xf]
  %v124 = vld [vmem:[%s1 + $0x64] sm:$0xf]
  %v125 = vld [vmem:[%s1 + $0x68] sm:$0xf]
  %v126 = vld [vmem:[%s1 + $0x6c] sm:$0xf]
  %v127 = vld [vmem:[%s1 + $0x70] sm:$0xf]
  %v128 = vld [vmem:[%s1 + $0x74] sm:$0xf]
  %v129 = vld [vmem:[%s1 + $0x78] sm:$0xf]
  %v130 = vld [vmem:[%s1 + $0x7c] sm:$0xf]
  %v131 = vld [vmem:[%s1 + $0x80] sm:$0xf]
  %v132 = vld [vmem:[%s1 + $0x84] sm:$0xf]
  %v133 = vld [vmem:[%s1 + $0x88] sm:$0xf]
  %v134 = vld [vmem:[%s1 + $0x8c] sm:$0xf]
  %v135 = vld [vmem:[%s1 + $0x90] sm:$0xf]
  %v136 = vld [vmem:[%s1 + $0x94] sm:$0xf]
  %v137 = vld [vmem:[%s1 + $0x98] sm:$0xf]
  %v138 = vld [vmem:[%s1 + $0x9c] sm:$0xf]
  %v139 = vld [vmem:[%s1 + $0xa0] sm:$0xf]
  %v140 = vld [vmem:[%s1 + $0xa4] sm:$0xf]
  %v141 = vld [vmem:[%s1 + $0xa8] sm:$0xf]
  %v142 = vld [vmem:[%s1 + $0xac] sm:$0xf]
  %v143 = vld [vmem:[%s1 + $0xb0] sm:$0xf]
  %v144 = vld [vmem:[%s1 + $0xb4] sm:$0xf]
  %v145 = vld [vmem:[%s1 + $0xb8] sm:$0xf]
  %v146 = vld [vmem:[%s1 + $0xbc] sm:$0xf]
  %v147 = vld [vmem:[%s1 + $0xc0] sm:$0xf]
  %v148 = vld [vmem:[%s1 + $0xc4] sm:$0xf]
  %v149 = vld [vmem:[%s1 + $0xc8] sm:$0xf]
  %v150 = vld [vmem:[%s1 + $0xcc] sm:$0xf]
  %v151 = vld [vmem:[%s1 + $0xd0] sm:$0xf]
  %v152 = vld [vmem:[%s1 + $0xd4] sm:$0xf]
  %v153 = vld [vmem:[%s1 + $0xd8] sm:$0xf]
  %v154 = vld [vmem:[%s1 + $0xdc] sm:$0xf]
  %v155 = vld [vmem:[%s1 + $0xe0] sm:$0xf]
  %v156 = vld [vmem:[%s1 + $0xe4] sm:$0xf]
  %v157 = vld [vmem:[%s1 + $0xe8] sm:$0xf]
  %v158 = vld [vmem:[%s1 + $0xec] sm:$0xf]
  %v159 = vld [vmem:[%s1 + $0xf0] sm:$0xf]
  %v160 = vld [vmem:[%s1 + $0xf4] sm:$0xf]
  %v161 = vld [vmem:[%s1 + $0xf8] sm:$0xf]
  %v162 = vld [vmem:[%s1 + $0xfc] sm:$0xf]
  %v163 = vld [vmem:[%s1 + $0x100] sm:$0xf]
  %v164 = vld [vmem:[%s1 + $0x104] sm:$0xf]
  %v165 = vld [vmem:[%s1 + $0x108] sm:$0xf]
  %v166 = vld [vmem:[%s1 + $0x10c] sm:$0xf]
  %v167 = vld [vmem:[%s1 + $0x110] sm:$0xf]
  %v168 = vld [vmem:[%s1 + $0x114] sm:$0xf]
  %v169 = vld [vmem:[%s1 + $0x118] sm:$0xf]
  %v170 = vld [vmem:[%s1 + $0x11c] sm:$0xf]
  %v171 = vld [vmem:[%s1 + $0x120] sm:$0xf]
  %v172 = vld [vmem:[%s1 + $0x124] sm:$0xf]
  %v173 = vld [vmem:[%s1 + $0x128] sm:$0xf]
  %v174 = vld [vmem:[%s1 + $0x12c] sm:$0xf]
  %v175 = vld [vmem:[%s1 + $0x130] sm:$0xf]
  %v176 = vld [vmem:[%s1 + $0x134] sm:$0xf]
  %v177 = vld [vmem:[%s1 + $0x138] sm:$0xf]
  %v178 = vld [vmem:[%s1 + $0x13c] sm:$0xf]
  %v227 = vunpack.c.l.b16 %v51
  %v228 = vunpack.c.h.b16 %v51
  %v229 = vunpack.c.l.b16 %v52
  %v230 = vunpack.c.h.b16 %v52
  %v231 = vunpack.c.l.b16 %v53
  %v232 = vunpack.c.l.b16 %v54
  %v233 = vunpack.c.h.b16 %v54
  %v234 = vunpack.c.l.b16 %v55
  %v235 = vunpack.c.h.b16 %v55
  %v236 = vunpack.c.l.b16 %v56
  %v237 = vunpack.c.l.b16 %v57
  %v238 = vunpack.c.h.b16 %v57
  %v239 = vunpack.c.l.b16 %v58
  %v240 = vunpack.c.h.b16 %v58
  %v241 = vunpack.c.l.b16 %v59
  %v242 = vunpack.c.l.b16 %v60
  %v243 = vunpack.c.h.b16 %v60
  %v244 = vunpack.c.l.b16 %v61
  %v245 = vunpack.c.h.b16 %v61
  %v246 = vunpack.c.l.b16 %v62
  %v247 = vunpack.c.l.b16 %v63
  %v248 = vunpack.c.h.b16 %v63
  %v249 = vunpack.c.l.b16 %v64
  %v250 = vunpack.c.h.b16 %v64
  %v251 = vunpack.c.l.b16 %v65
  %v252 = vunpack.c.l.b16 %v66
  %v253 = vunpack.c.h.b16 %v66
  %v254 = vunpack.c.l.b16 %v67
  %v255 = vunpack.c.h.b16 %v67
  %v256 = vunpack.c.l.b16 %v68
  %v257 = vunpack.c.l.b16 %v69
  %v258 = vunpack.c.h.b16 %v69
  %v259 = vunpack.c.l.b16 %v70
  %v260 = vunpack.c.h.b16 %v70
  %v261 = vunpack.c.l.b16 %v71
  %v262 = vunpack.c.l.b16 %v72
  %v263 = vunpack.c.h.b16 %v72
  %v264 = vunpack.c.l.b16 %v73
  %v265 = vunpack.c.h.b16 %v73
  %v266 = vunpack.c.l.b16 %v74
  %v267 = vunpack.c.l.b16 %v75
  %v268 = vunpack.c.h.b16 %v75
  %v269 = vunpack.c.l.b16 %v76
  %v270 = vunpack.c.h.b16 %v76
  %v271 = vunpack.c.l.b16 %v77
  %v272 = vunpack.c.l.b16 %v78
  %v273 = vunpack.c.h.b16 %v78
  %v274 = vunpack.c.l.b16 %v79
  %v275 = vunpack.c.h.b16 %v79
  %v276 = vunpack.c.l.b16 %v80
  %v277 = vunpack.c.l.b16 %v81
  %v278 = vunpack.c.h.b16 %v81
  %v279 = vunpack.c.l.b16 %v82
  %v280 = vunpack.c.h.b16 %v82
  %v281 = vunpack.c.l.b16 %v83
  %v282 = vunpack.c.l.b16 %v84
  %v283 = vunpack.c.h.b16 %v84
  %v284 = vunpack.c.l.b16 %v85
  %v285 = vunpack.c.h.b16 %v85
  %v286 = vunpack.c.l.b16 %v86
  %v287 = vunpack.c.l.b16 %v87
  %v288 = vunpack.c.h.b16 %v87
  %v289 = vunpack.c.l.b16 %v88
  %v290 = vunpack.c.h.b16 %v88
  %v291 = vunpack.c.l.b16 %v89
  %v292 = vunpack.c.l.b16 %v90
  %v293 = vunpack.c.h.b16 %v90
  %v294 = vunpack.c.l.b16 %v91
  %v295 = vunpack.c.h.b16 %v91
  %v296 = vunpack.c.l.b16 %v92
  %v297 = vunpack.c.l.b16 %v93
  %v298 = vunpack.c.h.b16 %v93
  %v299 = vunpack.c.l.b16 %v94
  %v300 = vunpack.c.h.b16 %v94
  %v301 = vunpack.c.l.b16 %v95
  %v302 = vunpack.c.l.b16 %v96
  %v303 = vunpack.c.h.b16 %v96
  %v304 = vunpack.c.l.b16 %v97
  %v305 = vunpack.c.h.b16 %v97
  %v306 = vunpack.c.l.b16 %v98
  %v307 = vpack.c.b16 %v232, %v227
  %v308 = vpack.c.b16 %v233, %v228
  %v309 = vpack.c.b16 %v234, %v229
  %v310 = vpack.c.b16 %v235, %v230
  %v311 = vpack.c.b16 %v236, %v231
  %v312 = vpack.c.b16 %v242, %v237
  %v313 = vpack.c.b16 %v243, %v238
  %v314 = vpack.c.b16 %v244, %v239
  %v315 = vpack.c.b16 %v245, %v240
  %v316 = vpack.c.b16 %v246, %v241
  %v317 = vpack.c.b16 %v252, %v247
  %v318 = vpack.c.b16 %v253, %v248
  %v319 = vpack.c.b16 %v254, %v249
  %v320 = vpack.c.b16 %v255, %v250
  %v321 = vpack.c.b16 %v256, %v251
  %v322 = vpack.c.b16 %v262, %v257
  %v323 = vpack.c.b16 %v263, %v258
  %v324 = vpack.c.b16 %v264, %v259
  %v325 = vpack.c.b16 %v265, %v260
  %v326 = vpack.c.b16 %v266, %v261
  %v327 = vpack.c.b16 %v272, %v267
  %v328 = vpack.c.b16 %v273, %v268
  %v329 = vpack.c.b16 %v274, %v269
  %v330 = vpack.c.b16 %v275, %v270
  %v331 = vpack.c.b16 %v276, %v271
  %v332 = vpack.c.b16 %v282, %v277
  %v333 = vpack.c.b16 %v283, %v278
  %v334 = vpack.c.b16 %v284, %v279
  %v335 = vpack.c.b16 %v285, %v280
  %v336 = vpack.c.b16 %v286, %v281
  %v337 = vpack.c.b16 %v292, %v287
  %v338 = vpack.c.b16 %v293, %v288
  %v339 = vpack.c.b16 %v294, %v289
  %v340 = vpack.c.b16 %v295, %v290
  %v341 = vpack.c.b16 %v296, %v291
  %v342 = vpack.c.b16 %v302, %v297
  %v343 = vpack.c.b16 %v303, %v298
  %v344 = vpack.c.b16 %v304, %v299
  %v345 = vpack.c.b16 %v305, %v300
  %v346 = vpack.c.b16 %v306, %v301
  %v467 = vunpack.c.l.b16 %v99
  %v468 = vunpack.c.l.b16 %v100
  %v469 = vunpack.c.l.b16 %v101
  %v470 = vunpack.c.l.b16 %v102
  %v471 = vunpack.c.l.b16 %v103
  %v472 = vunpack.c.l.b16 %v104
  %v473 = vunpack.c.l.b16 %v105
  %v474 = vunpack.c.l.b16 %v106
  %v475 = vunpack.c.l.b16 %v107
  %v476 = vunpack.c.l.b16 %v108
  %v477 = vunpack.c.l.b16 %v109
  %v478 = vunpack.c.l.b16 %v110
  %v479 = vunpack.c.l.b16 %v111
  %v480 = vunpack.c.l.b16 %v112
  %v481 = vunpack.c.l.b16 %v113
  %v482 = vunpack.c.l.b16 %v114
  %v483 = vunpack.c.l.b16 %v115
  %v484 = vunpack.c.l.b16 %v116
  %v485 = vunpack.c.l.b16 %v117
  %v486 = vunpack.c.l.b16 %v118
  %v487 = vunpack.c.l.b16 %v119
  %v488 = vunpack.c.l.b16 %v120
  %v489 = vunpack.c.l.b16 %v121
  %v490 = vunpack.c.l.b16 %v122
  %v491 = vunpack.c.l.b16 %v123
  %v492 = vunpack.c.l.b16 %v124
  %v493 = vunpack.c.l.b16 %v125
  %v494 = vunpack.c.l.b16 %v126
  %v495 = vunpack.c.l.b16 %v127
  %v496 = vunpack.c.l.b16 %v128
  %v497 = vunpack.c.l.b16 %v129
  %v498 = vunpack.c.l.b16 %v130
  %v499 = vunpack.c.l.b16 %v131
  %v500 = vunpack.c.l.b16 %v132
  %v501 = vunpack.c.l.b16 %v133
  %v502 = vunpack.c.l.b16 %v134
  %v503 = vunpack.c.l.b16 %v135
  %v504 = vunpack.c.l.b16 %v136
  %v505 = vunpack.c.l.b16 %v137
  %v506 = vunpack.c.l.b16 %v138
  %v507 = vunpack.c.l.b16 %v139
  %v508 = vunpack.c.l.b16 %v140
  %v509 = vunpack.c.l.b16 %v141
  %v510 = vunpack.c.l.b16 %v142
  %v511 = vunpack.c.l.b16 %v143
  %v512 = vunpack.c.l.b16 %v144
  %v513 = vunpack.c.l.b16 %v145
  %v514 = vunpack.c.l.b16 %v146
  %v515 = vunpack.c.l.b16 %v147
  %v516 = vunpack.c.l.b16 %v148
  %v517 = vunpack.c.l.b16 %v149
  %v518 = vunpack.c.l.b16 %v150
  %v519 = vunpack.c.l.b16 %v151
  %v520 = vunpack.c.l.b16 %v152
  %v521 = vunpack.c.l.b16 %v153
  %v522 = vunpack.c.l.b16 %v154
  %v523 = vunpack.c.l.b16 %v155
  %v524 = vunpack.c.l.b16 %v156
  %v525 = vunpack.c.l.b16 %v157
  %v526 = vunpack.c.l.b16 %v158
  %v527 = vunpack.c.l.b16 %v159
  %v528 = vunpack.c.l.b16 %v160
  %v529 = vunpack.c.l.b16 %v161
  %v530 = vunpack.c.l.b16 %v162
  %v531 = vunpack.c.l.b16 %v163
  %v532 = vunpack.c.l.b16 %v164
  %v533 = vunpack.c.l.b16 %v165
  %v534 = vunpack.c.l.b16 %v166
  %v535 = vunpack.c.l.b16 %v167
  %v536 = vunpack.c.l.b16 %v168
  %v537 = vunpack.c.l.b16 %v169
  %v538 = vunpack.c.l.b16 %v170
  %v539 = vunpack.c.l.b16 %v171
  %v540 = vunpack.c.l.b16 %v172
  %v541 = vunpack.c.l.b16 %v173
  %v542 = vunpack.c.l.b16 %v174
  %v543 = vunpack.c.l.b16 %v175
  %v544 = vunpack.c.l.b16 %v176
  %v545 = vunpack.c.l.b16 %v177
  %v546 = vunpack.c.l.b16 %v178
  %v547 = vpack.c.b16 %v468, %v467
  %v548 = vpack.c.b16 %v470, %v469
  %v549 = vpack.c.b16 %v472, %v471
  %v550 = vpack.c.b16 %v474, %v473
  %v551 = vpack.c.b16 %v476, %v475
  %v552 = vpack.c.b16 %v478, %v477
  %v553 = vpack.c.b16 %v480, %v479
  %v554 = vpack.c.b16 %v482, %v481
  %v555 = vpack.c.b16 %v484, %v483
  %v556 = vpack.c.b16 %v486, %v485
  %v557 = vpack.c.b16 %v488, %v487
  %v558 = vpack.c.b16 %v490, %v489
  %v559 = vpack.c.b16 %v492, %v491
  %v560 = vpack.c.b16 %v494, %v493
  %v561 = vpack.c.b16 %v496, %v495
  %v562 = vpack.c.b16 %v498, %v497
  %v563 = vpack.c.b16 %v500, %v499
  %v564 = vpack.c.b16 %v502, %v501
  %v565 = vpack.c.b16 %v504, %v503
  %v566 = vpack.c.b16 %v506, %v505
  %v567 = vpack.c.b16 %v508, %v507
  %v568 = vpack.c.b16 %v510, %v509
  %v569 = vpack.c.b16 %v512, %v511
  %v570 = vpack.c.b16 %v514, %v513
  %v571 = vpack.c.b16 %v516, %v515
  %v572 = vpack.c.b16 %v518, %v517
  %v573 = vpack.c.b16 %v520, %v519
  %v574 = vpack.c.b16 %v522, %v521
  %v575 = vpack.c.b16 %v524, %v523
  %v576 = vpack.c.b16 %v526, %v525
  %v577 = vpack.c.b16 %v528, %v527
  %v578 = vpack.c.b16 %v530, %v529
  %v579 = vpack.c.b16 %v532, %v531
  %v580 = vpack.c.b16 %v534, %v533
  %v581 = vpack.c.b16 %v536, %v535
  %v582 = vpack.c.b16 %v538, %v537
  %v583 = vpack.c.b16 %v540, %v539
  %v584 = vpack.c.b16 %v542, %v541
  %v585 = vpack.c.b16 %v544, %v543
  %v586 = vpack.c.b16 %v546, %v545
  %627 = vmatprep.subr.bf16.mxu0 0
  %628 = vmatpush1.bf16.msra.mxu0 %v547
  %629 = vmatprep.subr.bf16.mxu0 0
  %630 = vmatpush1.bf16.msra.mxu0 %v548
  %631 = vmatprep.subr.bf16.mxu0 0
  %632 = vmatpush1.bf16.msra.mxu0 %v549
  %633 = vmatprep.subr.bf16.mxu0 0
  %634 = vmatpush1.bf16.msra.mxu0 %v550
  %635 = vmatprep.subr.bf16.mxu0 0
  %636 = vmatpush1.bf16.msra.mxu0 %v551
  %637 = vmatprep.subr.bf16.mxu0 0
  %638 = vmatpush1.bf16.msra.mxu0 %v552
  %639 = vmatprep.subr.bf16.mxu0 0
  %640 = vmatpush1.bf16.msra.mxu0 %v553
  %641 = vmatprep.subr.bf16.mxu0 0
  %642 = vmatpush1.bf16.msra.mxu0 %v554
  %643 = vmatprep.subr.bf16.mxu0 0
  %644 = vmatpush1.bf16.msra.mxu0 %v555
  %645 = vmatprep.subr.bf16.mxu0 0
  %646 = vmatpush1.bf16.msra.mxu0 %v556
  %647 = vmatprep.subr.bf16.mxu0 0
  %648 = vmatpush1.bf16.msra.mxu0 %v557
  %649 = vmatprep.subr.bf16.mxu0 0
  %650 = vmatpush1.bf16.msra.mxu0 %v558
  %651 = vmatprep.subr.bf16.mxu0 0
  %652 = vmatpush1.bf16.msra.mxu0 %v559
  %653 = vmatprep.subr.bf16.mxu0 0
  %654 = vmatpush1.bf16.msra.mxu0 %v560
  %655 = vmatprep.subr.bf16.mxu0 0
  %656 = vmatpush1.bf16.msra.mxu0 %v561
  %657 = vmatprep.subr.bf16.mxu0 0
  %658 = vmatpush1.bf16.msra.mxu0 %v562
  %659 = vmatprep.mubr.bf16.mxu0 %v308
  %660 = vmatmul.mubr.bf16.gmra.mrb[0].mxu0 %v307
  %v661 = vpop.f32.mrb[0].mxu0
  %v662 = vadd.f32 0.0, %v661
  %v663 = vpop.f32.mrb[0].mxu0
  %v664 = vpop.f32.mrb[0].mxu0
  %v665 = vadd.f32 0.0, %v664
  %v666 = vpop.f32.mrb[0].mxu0
  %667 = vmatprep.mubr.bf16.mxu0 %v313
  %668 = vmatmul.mubr.bf16.gmra.mrb[0].mxu0 %v312
  %v669 = vpop.f32.mrb[0].mxu0
  %v670 = vadd.f32 0.0, %v669
  %v671 = vpop.f32.mrb[0].mxu0
  %v672 = vpop.f32.mrb[0].mxu0
  %v673 = vadd.f32 0.0, %v672
  %v674 = vpop.f32.mrb[0].mxu0
  %675 = vmatprep.mubr.bf16.mxu0 %v318
  %676 = vmatmul.mubr.bf16.gmra.mrb[0].mxu0 %v317
  %v677 = vpop.f32.mrb[0].mxu0
  %v678 = vadd.f32 0.0, %v677
  %v679 = vpop.f32.mrb[0].mxu0
  %v680 = vpop.f32.mrb[0].mxu0
  %v681 = vadd.f32 0.0, %v680
  %v682 = vpop.f32.mrb[0].mxu0
  %683 = vmatprep.mubr.bf16.mxu0 %v323
  %684 = vmatmul.mubr.bf16.gmra.mrb[0].mxu0 %v322
  %v685 = vpop.f32.mrb[0].mxu0
  %v686 = vadd.f32 0.0, %v685
  %v687 = vpop.f32.mrb[0].mxu0
  %v688 = vpop.f32.mrb[0].mxu0
  %v689 = vadd.f32 0.0, %v688
  %v690 = vpop.f32.mrb[0].mxu0
  %691 = vmatprep.mubr.bf16.mxu0 %v328
  %692 = vmatmul.mubr.bf16.gmra.mrb[0].mxu0 %v327
  %v693 = vpop.f32.mrb[0].mxu0
  %v694 = vadd.f32 0.0, %v693
  %v695 = vpop.f32.mrb[0].mxu0
  %v696 = vpop.f32.mrb[0].mxu0
  %v697 = vadd.f32 0.0, %v696
  %v698 = vpop.f32.mrb[0].mxu0
  %699 = vmatprep.mubr.bf16.mxu0 %v333
  %700 = vmatmul.mubr.bf16.gmra.mrb[0].mxu0 %v332
  %v701 = vpop.f32.mrb[0].mxu0
  %v702 = vadd.f32 0.0, %v701
  %v703 = vpop.f32.mrb[0].mxu0
  %v704 = vpop.f32.mrb[0].mxu0
  %v705 = vadd.f32 0.0, %v704
  %v706 = vpop.f32.mrb[0].mxu0
  %707 = vmatprep.mubr.bf16.mxu0 %v338
  %708 = vmatmul.mubr.bf16.gmra.mrb[0].mxu0 %v337
  %v709 = vpop.f32.mrb[0].mxu0
  %v710 = vadd.f32 0.0, %v709
  %v711 = vpop.f32.mrb[0].mxu0
  %v712 = vpop.f32.mrb[0].mxu0
  %v713 = vadd.f32 0.0, %v712
  %v714 = vpop.f32.mrb[0].mxu0
  %715 = vmatprep.mubr.bf16.mxu0 %v343
  %716 = vmatmul.mubr.bf16.gmra.mrb[0].mxu0 %v342
  %v717 = vpop.f32.mrb[0].mxu0
  %v718 = vadd.f32 0.0, %v717
  %v719 = vpop.f32.mrb[0].mxu0
  %v720 = vpop.f32.mrb[0].mxu0
  %v721 = vadd.f32 0.0, %v720
  %v722 = vpop.f32.mrb[0].mxu0
  %723 = vdwg.mxu0
  %724 = vmatprep.subr.bf16.mxu0 0
  %725 = vmatpush1.bf16.msra.mxu0 %v563
  %726 = vmatprep.subr.bf16.mxu0 0
  %727 = vmatpush1.bf16.msra.mxu0 %v564
  %728 = vmatprep.subr.bf16.mxu0 0
  %729 = vmatpush1.bf16.msra.mxu0 %v565
  %730 = vmatprep.subr.bf16.mxu0 0
  %731 = vmatpush1.bf16.msra.mxu0 %v566
  %732 = vmatprep.subr.bf16.mxu0 0
  %733 = vmatpush1.bf16.msra.mxu0 %v567
  %734 = vmatprep.subr.bf16.mxu0 0
  %735 = vmatpush1.bf16.msra.mxu0 %v568
  %736 = vmatprep.subr.bf16.mxu0 0
  %737 = vmatpush1.bf16.msra.mxu0 %v569
  %738 = vmatprep.subr.bf16.mxu0 0
  %739 = vmatpush1.bf16.msra.mxu0 %v570
  %740 = vmatprep.subr.bf16.mxu0 0
  %741 = vmatpush1.bf16.msra.mxu0 %v571
  %742 = vmatprep.subr.bf16.mxu0 0
  %743 = vmatpush1.bf16.msra.mxu0 %v572
  %744 = vmatprep.subr.bf16.mxu0 0
  %745 = vmatpush1.bf16.msra.mxu0 %v573
  %746 = vmatprep.subr.bf16.mxu0 0
  %747 = vmatpush1.bf16.msra.mxu0 %v574
  %748 = vmatprep.subr.bf16.mxu0 0
  %749 = vmatpush1.bf16.msra.mxu0 %v575
  %750 = vmatprep.subr.bf16.mxu0 0
  %751 = vmatpush1.bf16.msra.mxu0 %v576
  %752 = vmatprep.subr.bf16.mxu0 0
  %753 = vmatpush1.bf16.msra.mxu0 %v577
  %754 = vmatprep.subr.bf16.mxu0 0
  %755 = vmatpush1.bf16.msra.mxu0 %v578
  %756 = vmatprep.mubr.bf16.mxu0 %v310
  %757 = vmatmul.mubr.bf16.gmra.mrb[0].mxu0 %v309
  %v758 = vpop.f32.mrb[0].mxu0
  %v759 = vadd.f32 %v662, %v758
  %v760 = vpop.f32.mrb[0].mxu0
  %v761 = vpop.f32.mrb[0].mxu0
  %v762 = vadd.f32 %v665, %v761
  %v763 = vpop.f32.mrb[0].mxu0
  %764 = vmatprep.mubr.bf16.mxu0 %v315
  %765 = vmatmul.mubr.bf16.gmra.mrb[0].mxu0 %v314
  %v766 = vpop.f32.mrb[0].mxu0
  %v767 = vadd.f32 %v670, %v766
  %v768 = vpop.f32.mrb[0].mxu0
  %v769 = vpop.f32.mrb[0].mxu0
  %v770 = vadd.f32 %v673, %v769
  %v771 = vpop.f32.mrb[0].mxu0
  %772 = vmatprep.mubr.bf16.mxu0 %v320
  %773 = vmatmul.mubr.bf16.gmra.mrb[0].mxu0 %v319
  %v774 = vpop.f32.mrb[0].mxu0
  %v775 = vadd.f32 %v678, %v774
  %v776 = vpop.f32.mrb[0].mxu0
  %v777 = vpop.f32.mrb[0].mxu0
  %v778 = vadd.f32 %v681, %v777
  %v779 = vpop.f32.mrb[0].mxu0
  %780 = vmatprep.mubr.bf16.mxu0 %v325
  %781 = vmatmul.mubr.bf16.gmra.mrb[0].mxu0 %v324
  %v782 = vpop.f32.mrb[0].mxu0
  %v783 = vadd.f32 %v686, %v782
  %v784 = vpop.f32.mrb[0].mxu0
  %v785 = vpop.f32.mrb[0].mxu0
  %v786 = vadd.f32 %v689, %v785
  %v787 = vpop.f32.mrb[0].mxu0
  %788 = vmatprep.mubr.bf16.mxu0 %v330
  %789 = vmatmul.mubr.bf16.gmra.mrb[0].mxu0 %v329
  %v790 = vpop.f32.mrb[0].mxu0
  %v791 = vadd.f32 %v694, %v790
  %v792 = vpop.f32.mrb[0].mxu0
  %v793 = vpop.f32.mrb[0].mxu0
  %v794 = vadd.f32 %v697, %v793
  %v795 = vpop.f32.mrb[0].mxu0
  %796 = vmatprep.mubr.bf16.mxu0 %v335
  %797 = vmatmul.mubr.bf16.gmra.mrb[0].mxu0 %v334
  %v798 = vpop.f32.mrb[0].mxu0
  %v799 = vadd.f32 %v702, %v798
  %v800 = vpop.f32.mrb[0].mxu0
  %v801 = vpop.f32.mrb[0].mxu0
  %v802 = vadd.f32 %v705, %v801
  %v803 = vpop.f32.mrb[0].mxu0
  %804 = vmatprep.mubr.bf16.mxu0 %v340
  %805 = vmatmul.mubr.bf16.gmra.mrb[0].mxu0 %v339
  %v806 = vpop.f32.mrb[0].mxu0
  %v807 = vadd.f32 %v710, %v806
  %v808 = vpop.f32.mrb[0].mxu0
  %v809 = vpop.f32.mrb[0].mxu0
  %v810 = vadd.f32 %v713, %v809
  %v811 = vpop.f32.mrb[0].mxu0
  %812 = vmatprep.mubr.bf16.mxu0 %v345
  %813 = vmatmul.mubr.bf16.gmra.mrb[0].mxu0 %v344
  %v814 = vpop.f32.mrb[0].mxu0
  %v815 = vadd.f32 %v718, %v814
  %v816 = vpop.f32.mrb[0].mxu0
  %v817 = vpop.f32.mrb[0].mxu0
  %v818 = vadd.f32 %v721, %v817
  %v819 = vpop.f32.mrb[0].mxu0
  %820 = vdwg.mxu0
  %821 = vmatprep.subr.bf16.mxu0 0
  %822 = vmatpush1.bf16.msra.mxu0 %v579
  %823 = vmatprep.subr.bf16.mxu0 0
  %824 = vmatpush1.bf16.msra.mxu0 %v580
  %825 = vmatprep.subr.bf16.mxu0 0
  %826 = vmatpush1.bf16.msra.mxu0 %v581
  %827 = vmatprep.subr.bf16.mxu0 0
  %828 = vmatpush1.bf16.msra.mxu0 %v582
  %829 = vmatprep.subr.bf16.mxu0 0
  %830 = vmatpush1.bf16.msra.mxu0 %v583
  %831 = vmatprep.subr.bf16.mxu0 0
  %832 = vmatpush1.bf16.msra.mxu0 %v584
  %833 = vmatprep.subr.bf16.mxu0 0
  %834 = vmatpush1.bf16.msra.mxu0 %v585
  %835 = vmatprep.subr.bf16.mxu0 0
  %836 = vmatpush1.bf16.msra.mxu0 %v586
  %837 = vmatprep.subr.bf16.mxu0 0
  %838 = vmatpush1.bf16.msra.mxu0 0
  %839 = vmatprep.subr.bf16.mxu0 0
  %840 = vmatpush1.bf16.msra.mxu0 0
  %841 = vmatprep.subr.bf16.mxu0 0
  %842 = vmatpush1.bf16.msra.mxu0 0
  %843 = vmatprep.subr.bf16.mxu0 0
  %844 = vmatpush1.bf16.msra.mxu0 0
  %845 = vmatprep.subr.bf16.mxu0 0
  %846 = vmatpush1.bf16.msra.mxu0 0
  %847 = vmatprep.subr.bf16.mxu0 0
  %848 = vmatpush1.bf16.msra.mxu0 0
  %849 = vmatprep.subr.bf16.mxu0 0
  %850 = vmatpush1.bf16.msra.mxu0 0
  %851 = vmatprep.subr.bf16.mxu0 0
  %852 = vmatpush1.bf16.msra.mxu0 0
  %853 = vmatprep.mubr.bf16.mxu0 0
  %854 = vmatmul.mubr.bf16.gmra.mrb[0].mxu0 %v311
  %v855 = vpop.f32.mrb[0].mxu0
  %v856 = vadd.f32 %v759, %v855
  %v857 = vpop.f32.mrb[0].mxu0
  %v858 = vpop.f32.mrb[0].mxu0
  %v859 = vadd.f32 %v762, %v858
  %v860 = vpop.f32.mrb[0].mxu0
  %861 = vmatprep.mubr.bf16.mxu0 0
  %862 = vmatmul.mubr.bf16.gmra.mrb[0].mxu0 %v316
  %v863 = vpop.f32.mrb[0].mxu0
  %v864 = vadd.f32 %v767, %v863
  %v865 = vpop.f32.mrb[0].mxu0
  %v866 = vpop.f32.mrb[0].mxu0
  %v867 = vadd.f32 %v770, %v866
  %v868 = vpop.f32.mrb[0].mxu0
  %869 = vmatprep.mubr.bf16.mxu0 0
  %870 = vmatmul.mubr.bf16.gmra.mrb[0].mxu0 %v321
  %v871 = vpop.f32.mrb[0].mxu0
  %v872 = vadd.f32 %v775, %v871
  %v873 = vpop.f32.mrb[0].mxu0
  %v874 = vpop.f32.mrb[0].mxu0
  %v875 = vadd.f32 %v778, %v874
  %v876 = vpop.f32.mrb[0].mxu0
  %877 = vmatprep.mubr.bf16.mxu0 0
  %878 = vmatmul.mubr.bf16.gmra.mrb[0].mxu0 %v326
  %v879 = vpop.f32.mrb[0].mxu0
  %v880 = vadd.f32 %v783, %v879
  %v881 = vpop.f32.mrb[0].mxu0
  %v882 = vpop.f32.mrb[0].mxu0
  %v883 = vadd.f32 %v786, %v882
  %v884 = vpop.f32.mrb[0].mxu0
  %885 = vmatprep.mubr.bf16.mxu0 0
  %886 = vmatmul.mubr.bf16.gmra.mrb[0].mxu0 %v331
  %v887 = vpop.f32.mrb[0].mxu0
  %v888 = vadd.f32 %v791, %v887
  %v889 = vpop.f32.mrb[0].mxu0
  %v890 = vpop.f32.mrb[0].mxu0
  %v891 = vadd.f32 %v794, %v890
  %v892 = vpop.f32.mrb[0].mxu0
  %893 = vmatprep.mubr.bf16.mxu0 0
  %894 = vmatmul.mubr.bf16.gmra.mrb[0].mxu0 %v336
  %v895 = vpop.f32.mrb[0].mxu0
  %v896 = vadd.f32 %v799, %v895
  %v897 = vpop.f32.mrb[0].mxu0
  %v898 = vpop.f32.mrb[0].mxu0
  %v899 = vadd.f32 %v802, %v898
  %v900 = vpop.f32.mrb[0].mxu0
  %901 = vmatprep.mubr.bf16.mxu0 0
  %902 = vmatmul.mubr.bf16.gmra.mrb[0].mxu0 %v341
  %v903 = vpop.f32.mrb[0].mxu0
  %v904 = vadd.f32 %v807, %v903
  %v905 = vpop.f32.mrb[0].mxu0
  %v906 = vpop.f32.mrb[0].mxu0
  %v907 = vadd.f32 %v810, %v906
  %v908 = vpop.f32.mrb[0].mxu0
  %909 = vmatprep.mubr.bf16.mxu0 0
  %910 = vmatmul.mubr.bf16.gmra.mrb[0].mxu0 %v346
  %v911 = vpop.f32.mrb[0].mxu0
  %v912 = vadd.f32 %v815, %v911
  %v913 = vpop.f32.mrb[0].mxu0
  %v914 = vpop.f32.mrb[0].mxu0
  %v915 = vadd.f32 %v818, %v914
  %v916 = vpop.f32.mrb[0].mxu0
  %917 = vdwg.mxu0
  %v918 = vadd.f32 %v35, %v856
  %v919 = vadd.f32 %v36, %v859
  %v920 = vadd.f32 %v37, %v864
  %v921 = vadd.f32 %v38, %v867
  %v922 = vadd.f32 %v39, %v872
  %v923 = vadd.f32 %v40, %v875
  %v924 = vadd.f32 %v41, %v880
  %v925 = vadd.f32 %v42, %v883
  %v926 = vadd.f32 %v43, %v888
  %v927 = vadd.f32 %v44, %v891
  %v928 = vadd.f32 %v45, %v896
  %v929 = vadd.f32 %v46, %v899
  %v930 = vadd.f32 %v47, %v904
  %v931 = vadd.f32 %v48, %v907
  %v932 = vadd.f32 %v49, %v912
  %v933 = vadd.f32 %v50, %v915
  %934 = vst [vmem:[#allocation2] sm:$0xff] %v918
  %935 = vst [vmem:[#allocation2 + $0x8] sm:$0xff] %v919
  %936 = vst [vmem:[#allocation2 + $0x10] sm:$0xff] %v920
  %937 = vst [vmem:[#allocation2 + $0x18] sm:$0xff] %v921
  %938 = vst [vmem:[#allocation2 + $0x20] sm:$0xff] %v922
  %939 = vst [vmem:[#allocation2 + $0x28] sm:$0xff] %v923
  %940 = vst [vmem:[#allocation2 + $0x30] sm:$0xff] %v924
  %941 = vst [vmem:[#allocation2 + $0x38] sm:$0xff] %v925
  %942 = vst [vmem:[#allocation2 + $0x40] sm:$0xff] %v926
  %943 = vst [vmem:[#allocation2 + $0x48] sm:$0xff] %v927
  %944 = vst [vmem:[#allocation2 + $0x50] sm:$0xff] %v928
  %945 = vst [vmem:[#allocation2 + $0x58] sm:$0xff] %v929
  %946 = vst [vmem:[#allocation2 + $0x60] sm:$0xff] %v930
  %947 = vst [vmem:[#allocation2 + $0x68] sm:$0xff] %v931
  %948 = vst [vmem:[#allocation2 + $0x70] sm:$0xff] %v932
  %949 = vst [vmem:[#allocation2 + $0x78] sm:$0xff] %v933
  // Predicated region
  $region18: #{generator_forward.7} parent=0 // pred_check
    %p950 = pneg %p15
  $region19: #{generator_forward.7} parent=0 // pred_check_branch
    %952 = sbr.rel (%p950) target = $region21
  $region20: #{generator_forward.7} parent=0 // pred_region
    %v953 = vld [vmem:[#allocation2] sm:$0xff]
    %v954 = vld [vmem:[#allocation2 + $0x8] sm:$0xff]
    %v955 = vld [vmem:[#allocation2 + $0x10] sm:$0xff]
    %v956 = vld [vmem:[#allocation2 + $0x18] sm:$0xff]
    %v957 = vld [vmem:[#allocation2 + $0x20] sm:$0xff]
    %v958 = vld [vmem:[#allocation2 + $0x28] sm:$0xff]
    %v959 = vld [vmem:[#allocation2 + $0x30] sm:$0xff]
    %v960 = vld [vmem:[#allocation2 + $0x38] sm:$0xff]
    %v961 = vld [vmem:[#allocation2 + $0x40] sm:$0xff]
    %v962 = vld [vmem:[#allocation2 + $0x48] sm:$0xff]
    %v963 = vld [vmem:[#allocation2 + $0x50] sm:$0xff]
    %v964 = vld [vmem:[#allocation2 + $0x58] sm:$0xff]
    %v965 = vld [vmem:[#allocation2 + $0x60] sm:$0xff]
    %v966 = vld [vmem:[#allocation2 + $0x68] sm:$0xff]
    %v967 = vld [vmem:[#allocation2 + $0x70] sm:$0xff]
    %v968 = vld [vmem:[#allocation2 + $0x78] sm:$0xff]
    %v969 = vld [vmem:[%s2] sm:$0x1]
    %v971 = vlaneseq
    %v972 = vshrl.u32 %v971, 7
    %v973 = vsub.s32 0, %v972
    %v974 = vrot.slane %v969, %v973
    %v976 = vadd.f32 %v953, %v974
    %v977 = vadd.f32 %v954, %v974
    %v978 = vadd.f32 %v955, %v974
    %v979 = vadd.f32 %v956, %v974
    %v980 = vadd.f32 %v957, %v974
    %v981 = vadd.f32 %v958, %v974
    %v982 = vadd.f32 %v959, %v974
    %v983 = vadd.f32 %v960, %v974
    %v984 = vadd.f32 %v961, %v974
    %v985 = vadd.f32 %v962, %v974
    %v986 = vadd.f32 %v963, %v974
    %v987 = vadd.f32 %v964, %v974
    %v988 = vadd.f32 %v965, %v974
    %v989 = vadd.f32 %v966, %v974
    %v990 = vadd.f32 %v967, %v974
    %v991 = vadd.f32 %v968, %v974
    %v992 = vtanh.pop %v976
    %v993 = vtanh.pop %v977
    %v994 = vtanh.pop %v978
    %v995 = vtanh.pop %v979
    %v996 = vtanh.pop %v980
    %v997 = vtanh.pop %v981
    %v998 = vtanh.pop %v982
    %v999 = vtanh.pop %v983
    %v1000 = vtanh.pop %v984
    %v1001 = vtanh.pop %v985
    %v1002 = vtanh.pop %v986
    %v1003 = vtanh.pop %v987
    %v1004 = vtanh.pop %v988
    %v1005 = vtanh.pop %v989
    %v1006 = vtanh.pop %v990
    %v1007 = vtanh.pop %v991
    %1008 = vst [vmem:[%s3] sm:$0xff] %v992
    %1009 = vst [vmem:[%s3 + $0x8] sm:$0xff] %v993
    %1010 = vst [vmem:[%s3 + $0x10] sm:$0xff] %v994
    %1011 = vst [vmem:[%s3 + $0x18] sm:$0xff] %v995
    %1012 = vst [vmem:[%s3 + $0x20] sm:$0xff] %v996
    %1013 = vst [vmem:[%s3 + $0x28] sm:$0xff] %v997
    %1014 = vst [vmem:[%s3 + $0x30] sm:$0xff] %v998
    %1015 = vst [vmem:[%s3 + $0x38] sm:$0xff] %v999
    %1016 = vst [vmem:[%s3 + $0x40] sm:$0xff] %v1000
    %1017 = vst [vmem:[%s3 + $0x48] sm:$0xff] %v1001
    %1018 = vst [vmem:[%s3 + $0x50] sm:$0xff] %v1002
    %1019 = vst [vmem:[%s3 + $0x58] sm:$0xff] %v1003
    %1020 = vst [vmem:[%s3 + $0x60] sm:$0xff] %v1004
    %1021 = vst [vmem:[%s3 + $0x68] sm:$0xff] %v1005
    %1022 = vst [vmem:[%s3 + $0x70] sm:$0xff] %v1006
    %1023 = vst [vmem:[%s3 + $0x78] sm:$0xff] %v1007
  $region21: #{generator_forward.7} parent=0 // pred_fallthru
    _
  // Predicated region
  $region22: #{generator_forward.7} parent=0 // pred_check
    _
  $region23: #{generator_forward.7} parent=0 // pred_check_branch
    %1025 = sbr.rel (0) target = $region25
  $region24: #{generator_forward.7} parent=0 // pred_region
    _
  $region25: #{generator_forward.7} parent=0 // pred_fallthru
    _
  // Predicated region
  $region26: #{generator_forward.7} parent=0 // pred_check
    _
  $region27: #{generator_forward.7} parent=0 // pred_check_branch
    %1027 = sbr.rel (0) target = $region29
  $region28: #{generator_forward.7} parent=0 // pred_region
    _
  $region29: #{generator_forward.7} parent=0 // pred_fallthru
    _

</llo_original>
